<compile_context>
chip_gen: v7x
topology: tpu7x:2x2x1
jax: 0.10.0
libtpu: 0.0.40
codegen_flags: <defaults>
</compile_context>

<pallas_src>
import functools

import jax
import jax.numpy as jnp
import numpy as np
from jax.experimental import pallas as pl
from jax.experimental.pallas import tpu as pltpu


# ------------------------------ Fused kernel --------------------------------

def _edge_block_matmul(h, w_ref, *, num_edges, rows, cin):
    """sum_e h[e*rows:(e+1)*rows, :] @ w_ref[e*cin:(e+1)*cin, :]  (f32 acc).

    h is the row-stacked (E*rows, cin) result of the folded A@X matmul; w_ref
    is the edge-major (E*cin, cout) GraphConv weight living in VMEM scratch.
    """
    cout = w_ref.shape[-1]
    acc = jnp.zeros((rows, cout), jnp.float32)
    for e in range(num_edges):  # static unroll, E is tiny
        acc = acc + jnp.dot(
            h[e * rows:(e + 1) * rows, :],
            w_ref[pl.ds(e * cin, cin), :],
            preferred_element_type=jnp.float32)
    return acc


def _fused_forward_kernel(
    # auto-pipelined VMEM blocks (tiny: activations + biases)
    v_ref, a_ref,
    emb1_b, gcn1_b, gcn2_b, gcn3_b, emb2_b, gcn4_b, gcn5_b, cls_b,
    # raw HBM weight refs (memory_space=pl.ANY) -- DMA'd manually below
    emb1_w_hbm, gcn1_w_hbm, gcn2_w_hbm, gcn3_w_hbm,
    emb2_w_hbm, gcn4_w_hbm, gcn5_w_hbm, cls_w_hbm,
    # output
    o_ref,
    # scratch: single-buffered VMEM weight copies + DMA completion semaphores
    emb1_w, gcn1_w, gcn2_w, gcn3_w, emb2_w, gcn4_w, gcn5_w, cls_w,
    sem,
    *, num_edges, rows, net_size):
    E, M, C = num_edges, rows, net_size
    Ch = C // 2

    # Kick off ALL weight DMAs at kernel entry, in order of first use, so the
    # HBM load of late-layer weights overlaps with early-layer compute.
    hbm_refs = (emb1_w_hbm, gcn1_w_hbm, gcn2_w_hbm, gcn3_w_hbm,
                emb2_w_hbm, gcn4_w_hbm, gcn5_w_hbm, cls_w_hbm)
    vmem_refs = (emb1_w, gcn1_w, gcn2_w, gcn3_w, emb2_w, gcn4_w, gcn5_w, cls_w)
    copies = [pltpu.make_async_copy(h, v, sem.at[k])
              for k, (h, v) in enumerate(zip(hbm_refs, vmem_refs))]
    for c in copies:
        c.start()

    x = v_ref[...]            # (M, Din)   M = batches_per_block * num_nodes
    a2 = a_ref[...]           # (E*M, M)   edge-major block-diagonal adjacency

    # emb1 + ReLU (dropout == identity in eval mode)
    copies[0].wait()
    emb = jnp.dot(x, emb1_w[...], preferred_element_type=jnp.float32)
    emb = jnp.maximum(emb + emb1_b[...], 0.0)                       # (M, C)

    # gcn1: single folded A@X, then per-edge weight accumulation
    h_emb = jnp.dot(a2, emb, preferred_element_type=jnp.float32)    # (E*M, C)
    copies[1].wait()
    g1 = jnp.maximum(
        _edge_block_matmul(h_emb, gcn1_w, num_edges=E, rows=M, cin=C)
        + gcn1_b[...], 0.0)                                         # (M, C)

    # gcn2 (h_g1 is reused by gcn3)
    h_g1 = jnp.dot(a2, g1, preferred_element_type=jnp.float32)      # (E*M, C)
    copies[2].wait()
    g2 = jnp.maximum(
        _edge_block_matmul(h_g1, gcn2_w, num_edges=E, rows=M, cin=C)
        + gcn2_b[...], 0.0)                                         # (M, C)

    # gcn3 on concat([g2, g1]) -- split-weight form, no concatenate needed.
    h_g2 = jnp.dot(a2, g2, preferred_element_type=jnp.float32)      # (E*M, C)
    copies[3].wait()
    acc3 = jnp.zeros((M, C), jnp.float32)
    for e in range(E):
        base = e * 2 * C
        acc3 = acc3 + jnp.dot(h_g2[e * M:(e + 1) * M, :],
                              gcn3_w[pl.ds(base, C), :],
                              preferred_element_type=jnp.float32)
        acc3 = acc3 + jnp.dot(h_g1[e * M:(e + 1) * M, :],
                              gcn3_w[pl.ds(base + C, C), :],
                              preferred_element_type=jnp.float32)
    g3 = jnp.maximum(acc3 + gcn3_b[...], 0.0)                       # (M, C)

    # emb2 on concat([g3, g1]) -- split-weight form.
    copies[4].wait()
    nv = (jnp.dot(g3, emb2_w[pl.ds(0, C), :], preferred_element_type=jnp.float32)
          + jnp.dot(g1, emb2_w[pl.ds(C, C), :], preferred_element_type=jnp.float32)
          + emb2_b[...])
    nv = jnp.maximum(nv, 0.0)                                       # (M, Ch)
    # TODO(synk): NodeSelfAtten path (use_self_atten=True) not implemented.

    # gcn4
    h_nv = jnp.dot(a2, nv, preferred_element_type=jnp.float32)      # (E*M, Ch)
    copies[5].wait()
    g4 = jnp.maximum(
        _edge_block_matmul(h_nv, gcn4_w, num_edges=E, rows=M, cin=Ch)
        + gcn4_b[...], 0.0)                                         # (M, Ch)

    # gcn5
    h_g4 = jnp.dot(a2, g4, preferred_element_type=jnp.float32)      # (E*M, Ch)
    copies[6].wait()
    g5 = jnp.maximum(
        _edge_block_matmul(h_g4, gcn5_w, num_edges=E, rows=M, cin=Ch)
        + gcn5_b[...], 0.0)                                         # (M, Ch)

    # classifier (lane-padded output; wrapper slices the real output_dim)
    copies[7].wait()
    out = jnp.dot(g5, cls_w[...], preferred_element_type=jnp.float32) + cls_b[...]
    o_ref[...] = out.astype(o_ref.dtype)


# ------------------------------ Model wrapper --------------------------------

def _default_num_blocks(batch):
    """v7x has 2 TensorCores -> split the batch across them. Single-TC chips
    (v5e/v6e) prefer one block so the whole batch folds into the matmul M
    dimension and every weight is DMA'd exactly once."""
    try:
        kind = jax.devices()[0].device_kind.lower()
    except Exception:
        kind = ""
    if "v7" in kind and batch >= 2 and batch % 2 == 0:
        return 2
    return 1


def init_params(key, input_dim, output_dim, num_edges, net_size):
    half = net_size // 2
    layer_shapes = {
        "emb1": (input_dim, net_size),
        "gcn1": (num_edges * net_size, net_size),
        "gcn2": (num_edges * net_size, net_size),
        "gcn3": (num_edges * net_size * 2, net_size),
        "emb2": (net_size * 2, half),
        "gcn4": (num_edges * half, half),
        "gcn5": (num_edges * half, half),
        "cls": (half, output_dim),
    }
    params = {}
    for name, (fin, fout) in layer_shapes.items():
        key, kw, kb = jax.random.split(key, 3)
        bound = 1.0 / np.sqrt(fin)  # PyTorch-style uniform fan-in init
        params[name + "_w"] = jax.random.uniform(
            kw, (fin, fout), jnp.float32, -bound, bound)
        params[name + "_b"] = jax.random.uniform(
            kb, (1, fout), jnp.float32, -bound, bound)
    # Lane-dense padded classifier weights, built ONCE here (hoisted out of
    # the per-call forward, per perf review) so XLA never re-materializes them.
    dout_pad = ((output_dim + 127) // 128) * 128
    params["cls_w_pad"] = jnp.pad(params["cls_w"],
                                  ((0, 0), (0, dout_pad - output_dim)))
    params["cls_b_pad"] = jnp.pad(params["cls_b"],
                                  ((0, 0), (0, dout_pad - output_dim)))
    return params


def model_forward(params, V, A, num_blocks=None):
    B, N, Din = V.shape
    E = A.shape[1]
    C = params["gcn1_w"].shape[1]            # net_size
    Ch = params["cls_w"].shape[0]            # net_size // 2
    Dout = params["cls_w"].shape[1]
    Dout_pad = params["cls_w_pad"].shape[1]

    if num_blocks is None:
        num_blocks = _default_num_blocks(B)
    if B % num_blocks != 0:
        num_blocks = 1
    bb = B // num_blocks                     # batches folded into one grid step
    M = bb * N                               # node rows per grid step

    # Fold the batch into the matmul M dimension: activations become
    # (num_blocks, bb*N, C) and the adjacency becomes an edge-major
    # block-diagonal matrix so A@X for all folded batches is ONE matmul:
    #   a_fold[k, e*M + b*N + i, b*N + j] = A[k*bb + b, e, i, j]
    V3 = V.reshape(num_blocks, M, Din)
    A_r = A.reshape(num_blocks, bb, E, N, N)
    eye = jnp.eye(bb, dtype=A.dtype)
    a_fold = jnp.einsum("kbeij,bc->kebicj", A_r, eye).reshape(
        num_blocks, E * M, M)

    weight_args = [params["emb1_w"], params["gcn1_w"], params["gcn2_w"],
                   params["gcn3_w"], params["emb2_w"], params["gcn4_w"],
                   params["gcn5_w"], params["cls_w_pad"]]
    bias_args = [params["emb1_b"], params["gcn1_b"], params["gcn2_b"],
                 params["gcn3_b"], params["emb2_b"], params["gcn4_b"],
                 params["gcn5_b"], params["cls_b_pad"]]

    in_specs = (
        [pl.BlockSpec((None, M, Din), lambda i: (i, 0, 0)),        # V per block
         pl.BlockSpec((None, E * M, M), lambda i: (i, 0, 0))]      # A per block
        + [pl.BlockSpec(b.shape, lambda i: (0, 0)) for b in bias_args]
        # Big weight matrices stay in HBM; the kernel DMAs them into
        # single-buffered VMEM scratch, overlapped with early-layer compute.
        + [pl.BlockSpec(memory_space=pl.ANY) for _ in weight_args]
    )

    scratch_shapes = ([pltpu.VMEM(w.shape, jnp.float32) for w in weight_args]
                      + [pltpu.SemaphoreType.DMA((len(weight_args),))])

    # Advisory cost estimate (trace-time-only Python math under jit).
    flops_per_block = (
        2 * M * Din * C                      # emb1
        + 3 * (2 * E * M * M * C)            # A@X for gcn1, gcn2, gcn3(new half)
        + 2 * (2 * M * E * C * C)            # gcn1, gcn2 weight stage
        + 2 * M * E * 2 * C * C              # gcn3 weight stage
        + 2 * M * 2 * C * Ch                 # emb2
        + 2 * (2 * E * M * M * Ch)           # A@X for gcn4, gcn5
        + 2 * (2 * M * E * Ch * Ch)          # gcn4, gcn5 weight stage
        + 2 * M * Ch * Dout_pad              # classifier
    )
    bytes_weights = sum(int(np.prod(w.shape)) * 4
                        for w in weight_args + bias_args)
    bytes_accessed = int(num_blocks * bytes_weights + V.size * 4
                         + a_fold.size * 4 + num_blocks * M * Dout_pad * 4)
    cost = pl.CostEstimate(flops=int(num_blocks * flops_per_block),
                           transcendentals=0, bytes_accessed=bytes_accessed)

    out = pl.pallas_call(
        functools.partial(_fused_forward_kernel,
                          num_edges=E, rows=M, net_size=C),
        out_shape=jax.ShapeDtypeStruct((num_blocks, M, Dout_pad), V.dtype),
        grid=(num_blocks,),
        in_specs=in_specs,
        out_specs=pl.BlockSpec((None, M, Dout_pad), lambda i: (i, 0, 0)),
        scratch_shapes=scratch_shapes,
        compiler_params=pltpu.CompilerParams(
            dimension_semantics=("parallel",),     # v7x: one block per TC
            # ~6 MiB actually used; 32 MiB stays below the ~48 MiB safe cap on
            # v7x (64 MiB physical) and above the 16 MiB v5e scoped default.
            vmem_limit_bytes=32 * 1024 * 1024),
        cost_estimate=cost,
    )(V3, a_fold, *bias_args, *weight_args)

    return out.reshape(B, N, Dout_pad)[:, :, :Dout]


# --------------------------- Pure-JAX reference ------------------------------

def _ref_linear(x, w, b, relu):
    y = jnp.matmul(x, w, precision=jax.lax.Precision.HIGHEST) + b
    return jnp.maximum(y, 0.0) if relu else y


def _ref_gcn(x, a, w, b, relu):
    B, N, Cin = x.shape
    E = a.shape[1]
    h = jnp.einsum("benm,bmc->benc", a, x,
                   precision=jax.lax.Precision.HIGHEST)      # (B, E, N, Cin)
    h = jnp.transpose(h, (0, 2, 1, 3)).reshape(B, N, E * Cin)
    y = jnp.matmul(h, w, precision=jax.lax.Precision.HIGHEST) + b
    return jnp.maximum(y, 0.0) if relu else y


def reference_forward(params, V, A):
    emb = _ref_linear(V, params["emb1_w"], params["emb1_b"], True)
    g1 = _ref_gcn(emb, A, params["gcn1_w"], params["gcn1_b"], True)
    g2 = _ref_gcn(g1, A, params["gcn2_w"], params["gcn2_b"], True)
    new_v = jnp.concatenate([g2, g1], axis=-1)
    g3 = _ref_gcn(new_v, A, params["gcn3_w"], params["gcn3_b"], True)
    new_v = jnp.concatenate([g3, g1], axis=-1)
    new_v = _ref_linear(new_v, params["emb2_w"], params["emb2_b"], True)
    g4 = _ref_gcn(new_v, A, params["gcn4_w"], params["gcn4_b"], True)
    g5 = _ref_gcn(g4, A, params["gcn5_w"], params["gcn5_b"], True)
    return _ref_linear(g5, params["cls_w"], params["cls_b"], False)


# ---------------------------------- Main -------------------------------------

if __name__ == "__main__":
    B, N = 2, 16                 # batch, num graph nodes
    input_dim = 32
    output_dim = 8
    num_edges = 4
    net_size = 256

    key = jax.random.PRNGKey(0)
    key, kp, kv, ka = jax.random.split(key, 4)

    params = init_params(kp, input_dim, output_dim, num_edges, net_size)
    V = jax.random.normal(kv, (B, N, input_dim), jnp.float32)
    A = jax.random.uniform(ka, (B, num_edges, N, N), jnp.float32) / N

    out = jax.jit(model_forward)(params, V, A)
    out = jax.block_until_ready(out)

    ref = reference_forward(params, V, A)
    assert out.shape == (B, N, output_dim)
    np.testing.assert_allclose(np.asarray(out), np.asarray(ref),
                               rtol=1e-3, atol=1e-3)
    print("KERNEL_OK")
</pallas_src>

<mosaic_0001>
module attributes {stable_mosaic.version = 11 : i64} {
  func.func @_fused_forward_kernel(%arg0: i32, %arg1: memref<1x32x32xf32, #tpu.memory_space<vmem>>, %arg2: memref<1x128x32xf32, #tpu.memory_space<vmem>>, %arg3: memref<1x256xf32, #tpu.memory_space<vmem>>, %arg4: memref<1x256xf32, #tpu.memory_space<vmem>>, %arg5: memref<1x256xf32, #tpu.memory_space<vmem>>, %arg6: memref<1x256xf32, #tpu.memory_space<vmem>>, %arg7: memref<1x128xf32, #tpu.memory_space<vmem>>, %arg8: memref<1x128xf32, #tpu.memory_space<vmem>>, %arg9: memref<1x128xf32, #tpu.memory_space<vmem>>, %arg10: memref<1x128xf32, #tpu.memory_space<vmem>>, %arg11: memref<32x256xf32, #tpu.memory_space<any>>, %arg12: memref<1024x256xf32, #tpu.memory_space<any>>, %arg13: memref<1024x256xf32, #tpu.memory_space<any>>, %arg14: memref<2048x256xf32, #tpu.memory_space<any>>, %arg15: memref<512x128xf32, #tpu.memory_space<any>>, %arg16: memref<512x128xf32, #tpu.memory_space<any>>, %arg17: memref<512x128xf32, #tpu.memory_space<any>>, %arg18: memref<128x128xf32, #tpu.memory_space<any>>, %arg19: memref<1x32x128xf32, #tpu.memory_space<vmem>>, %arg20: memref<32x256xf32, #tpu.memory_space<vmem>>, %arg21: memref<1024x256xf32, #tpu.memory_space<vmem>>, %arg22: memref<1024x256xf32, #tpu.memory_space<vmem>>, %arg23: memref<2048x256xf32, #tpu.memory_space<vmem>>, %arg24: memref<512x128xf32, #tpu.memory_space<vmem>>, %arg25: memref<512x128xf32, #tpu.memory_space<vmem>>, %arg26: memref<512x128xf32, #tpu.memory_space<vmem>>, %arg27: memref<128x128xf32, #tpu.memory_space<vmem>>, %arg28: memref<8x!tpu.dma_semaphore, #tpu.memory_space<semaphore_mem>>) attributes {dimension_semantics = [#tpu.dimension_semantics<parallel>], iteration_bounds = array<i64: 1>, scalar_prefetch = 0 : i64, scratch_operands = 9 : i64, tpu.core_type = #tpu.core_type<tc>, window_params = [{transform_indices = @transform_0, window_bounds = array<i64: 1, 32, 32>}, {transform_indices = @transform_1, window_bounds = array<i64: 1, 128, 32>}, {pipeline_mode = #tpu.pipeline_mode<synchronous>, transform_indices = @transform_2, window_bounds = array<i64: 1, 256>}, {pipeline_mode = #tpu.pipeline_mode<synchronous>, transform_indices = @transform_3, window_bounds = array<i64: 1, 256>}, {pipeline_mode = #tpu.pipeline_mode<synchronous>, transform_indices = @transform_4, window_bounds = array<i64: 1, 256>}, {pipeline_mode = #tpu.pipeline_mode<synchronous>, transform_indices = @transform_5, window_bounds = array<i64: 1, 256>}, {pipeline_mode = #tpu.pipeline_mode<synchronous>, transform_indices = @transform_6, window_bounds = array<i64: 1, 128>}, {pipeline_mode = #tpu.pipeline_mode<synchronous>, transform_indices = @transform_7, window_bounds = array<i64: 1, 128>}, {pipeline_mode = #tpu.pipeline_mode<synchronous>, transform_indices = @transform_8, window_bounds = array<i64: 1, 128>}, {pipeline_mode = #tpu.pipeline_mode<synchronous>, transform_indices = @transform_9, window_bounds = array<i64: 1, 128>}, {}, {}, {}, {}, {}, {}, {}, {}, {transform_indices = @transform_18, window_bounds = array<i64: 1, 32, 128>}]} {
    %c0_i32 = arith.constant 0 : i32
    %0 = tpu.memref_slice %arg28[%c0_i32] : memref<8x!tpu.dma_semaphore, #tpu.memory_space<semaphore_mem>> -> memref<1x!tpu.dma_semaphore, #tpu.memory_space<semaphore_mem>>
    %1 = tpu.memref_squeeze %0 : memref<1x!tpu.dma_semaphore, #tpu.memory_space<semaphore_mem>> -> memref<!tpu.dma_semaphore, #tpu.memory_space<semaphore_mem>>
    tpu.enqueue_dma source(%arg11 : memref<32x256xf32, #tpu.memory_space<any>>) target(%arg20 : memref<32x256xf32, #tpu.memory_space<vmem>>) target_semaphore(%1 : memref<!tpu.dma_semaphore, #tpu.memory_space<semaphore_mem>>)
    %c1_i32 = arith.constant 1 : i32
    %2 = tpu.memref_slice %arg28[%c1_i32] : memref<8x!tpu.dma_semaphore, #tpu.memory_space<semaphore_mem>> -> memref<1x!tpu.dma_semaphore, #tpu.memory_space<semaphore_mem>>
    %3 = tpu.memref_squeeze %2 : memref<1x!tpu.dma_semaphore, #tpu.memory_space<semaphore_mem>> -> memref<!tpu.dma_semaphore, #tpu.memory_space<semaphore_mem>>
    tpu.enqueue_dma source(%arg12 : memref<1024x256xf32, #tpu.memory_space<any>>) target(%arg21 : memref<1024x256xf32, #tpu.memory_space<vmem>>) target_semaphore(%3 : memref<!tpu.dma_semaphore, #tpu.memory_space<semaphore_mem>>)
    %c2_i32 = arith.constant 2 : i32
    %4 = tpu.memref_slice %arg28[%c2_i32] : memref<8x!tpu.dma_semaphore, #tpu.memory_space<semaphore_mem>> -> memref<1x!tpu.dma_semaphore, #tpu.memory_space<semaphore_mem>>
    %5 = tpu.memref_squeeze %4 : memref<1x!tpu.dma_semaphore, #tpu.memory_space<semaphore_mem>> -> memref<!tpu.dma_semaphore, #tpu.memory_space<semaphore_mem>>
    tpu.enqueue_dma source(%arg13 : memref<1024x256xf32, #tpu.memory_space<any>>) target(%arg22 : memref<1024x256xf32, #tpu.memory_space<vmem>>) target_semaphore(%5 : memref<!tpu.dma_semaphore, #tpu.memory_space<semaphore_mem>>)
    %c3_i32 = arith.constant 3 : i32
    %6 = tpu.memref_slice %arg28[%c3_i32] : memref<8x!tpu.dma_semaphore, #tpu.memory_space<semaphore_mem>> -> memref<1x!tpu.dma_semaphore, #tpu.memory_space<semaphore_mem>>
    %7 = tpu.memref_squeeze %6 : memref<1x!tpu.dma_semaphore, #tpu.memory_space<semaphore_mem>> -> memref<!tpu.dma_semaphore, #tpu.memory_space<semaphore_mem>>
    tpu.enqueue_dma source(%arg14 : memref<2048x256xf32, #tpu.memory_space<any>>) target(%arg23 : memref<2048x256xf32, #tpu.memory_space<vmem>>) target_semaphore(%7 : memref<!tpu.dma_semaphore, #tpu.memory_space<semaphore_mem>>)
    %c4_i32 = arith.constant 4 : i32
    %8 = tpu.memref_slice %arg28[%c4_i32] : memref<8x!tpu.dma_semaphore, #tpu.memory_space<semaphore_mem>> -> memref<1x!tpu.dma_semaphore, #tpu.memory_space<semaphore_mem>>
    %9 = tpu.memref_squeeze %8 : memref<1x!tpu.dma_semaphore, #tpu.memory_space<semaphore_mem>> -> memref<!tpu.dma_semaphore, #tpu.memory_space<semaphore_mem>>
    tpu.enqueue_dma source(%arg15 : memref<512x128xf32, #tpu.memory_space<any>>) target(%arg24 : memref<512x128xf32, #tpu.memory_space<vmem>>) target_semaphore(%9 : memref<!tpu.dma_semaphore, #tpu.memory_space<semaphore_mem>>)
    %c5_i32 = arith.constant 5 : i32
    %10 = tpu.memref_slice %arg28[%c5_i32] : memref<8x!tpu.dma_semaphore, #tpu.memory_space<semaphore_mem>> -> memref<1x!tpu.dma_semaphore, #tpu.memory_space<semaphore_mem>>
    %11 = tpu.memref_squeeze %10 : memref<1x!tpu.dma_semaphore, #tpu.memory_space<semaphore_mem>> -> memref<!tpu.dma_semaphore, #tpu.memory_space<semaphore_mem>>
    tpu.enqueue_dma source(%arg16 : memref<512x128xf32, #tpu.memory_space<any>>) target(%arg25 : memref<512x128xf32, #tpu.memory_space<vmem>>) target_semaphore(%11 : memref<!tpu.dma_semaphore, #tpu.memory_space<semaphore_mem>>)
    %c6_i32 = arith.constant 6 : i32
    %12 = tpu.memref_slice %arg28[%c6_i32] : memref<8x!tpu.dma_semaphore, #tpu.memory_space<semaphore_mem>> -> memref<1x!tpu.dma_semaphore, #tpu.memory_space<semaphore_mem>>
    %13 = tpu.memref_squeeze %12 : memref<1x!tpu.dma_semaphore, #tpu.memory_space<semaphore_mem>> -> memref<!tpu.dma_semaphore, #tpu.memory_space<semaphore_mem>>
    tpu.enqueue_dma source(%arg17 : memref<512x128xf32, #tpu.memory_space<any>>) target(%arg26 : memref<512x128xf32, #tpu.memory_space<vmem>>) target_semaphore(%13 : memref<!tpu.dma_semaphore, #tpu.memory_space<semaphore_mem>>)
    %c7_i32 = arith.constant 7 : i32
    %14 = tpu.memref_slice %arg28[%c7_i32] : memref<8x!tpu.dma_semaphore, #tpu.memory_space<semaphore_mem>> -> memref<1x!tpu.dma_semaphore, #tpu.memory_space<semaphore_mem>>
    %15 = tpu.memref_squeeze %14 : memref<1x!tpu.dma_semaphore, #tpu.memory_space<semaphore_mem>> -> memref<!tpu.dma_semaphore, #tpu.memory_space<semaphore_mem>>
    tpu.enqueue_dma source(%arg18 : memref<128x128xf32, #tpu.memory_space<any>>) target(%arg27 : memref<128x128xf32, #tpu.memory_space<vmem>>) target_semaphore(%15 : memref<!tpu.dma_semaphore, #tpu.memory_space<semaphore_mem>>)
    %c0 = arith.constant 0 : index
    %c0_0 = arith.constant 0 : index
    %c0_1 = arith.constant 0 : index
    %16 = vector.load %arg1[%c0, %c0_0, %c0_1] : memref<1x32x32xf32, #tpu.memory_space<vmem>>, vector<1x32x32xf32>
    %17 = vector.shape_cast %16 : vector<1x32x32xf32> to vector<32x32xf32>
    %c0_2 = arith.constant 0 : index
    %c0_3 = arith.constant 0 : index
    %c0_4 = arith.constant 0 : index
    %18 = vector.load %arg2[%c0_2, %c0_3, %c0_4] : memref<1x128x32xf32, #tpu.memory_space<vmem>>, vector<1x128x32xf32>
    %19 = vector.shape_cast %18 : vector<1x128x32xf32> to vector<128x32xf32>
    %c0_i32_5 = arith.constant 0 : i32
    %20 = tpu.memref_slice %arg28[%c0_i32_5] : memref<8x!tpu.dma_semaphore, #tpu.memory_space<semaphore_mem>> -> memref<1x!tpu.dma_semaphore, #tpu.memory_space<semaphore_mem>>
    %21 = tpu.memref_squeeze %20 : memref<1x!tpu.dma_semaphore, #tpu.memory_space<semaphore_mem>> -> memref<!tpu.dma_semaphore, #tpu.memory_space<semaphore_mem>>
    tpu.wait_dma2 semaphore(%21 : memref<!tpu.dma_semaphore, #tpu.memory_space<semaphore_mem>>) src(%arg11 : memref<32x256xf32, #tpu.memory_space<any>>) dst(%arg20 : memref<32x256xf32, #tpu.memory_space<vmem>>)
    %c0_6 = arith.constant 0 : index
    %c0_7 = arith.constant 0 : index
    %22 = vector.load %arg20[%c0_6, %c0_7] : memref<32x256xf32, #tpu.memory_space<vmem>>, vector<32x256xf32>
    %cst = arith.constant dense<0.000000e+00> : vector<32x256xf32>
    %23 = tpu.matmul %17, %22, %cst {dimension_numbers = #tpu.dot_dimension_numbers<[1], [0], [0], [1], [0, 0, 1, 1], [], []>} : vector<32x32xf32>, vector<32x256xf32>, vector<32x256xf32> -> vector<32x256xf32>
    %c0_8 = arith.constant 0 : index
    %c0_9 = arith.constant 0 : index
    %24 = vector.load %arg3[%c0_8, %c0_9] : memref<1x256xf32, #tpu.memory_space<vmem>>, vector<1x256xf32>
    %25 = vector.broadcast %24 : vector<1x256xf32> to vector<32x256xf32>
    %26 = arith.addf %23, %25 : vector<32x256xf32>
    %cst_10 = arith.constant 0.000000e+00 : f32
    %27 = vector.broadcast %cst_10 : f32 to vector<32x256xf32>
    %28 = arith.maximumf %26, %27 : vector<32x256xf32>
    %cst_11 = arith.constant dense<0.000000e+00> : vector<128x256xf32>
    %29 = tpu.matmul %19, %28, %cst_11 {dimension_numbers = #tpu.dot_dimension_numbers<[1], [0], [0], [1], [0, 0, 1, 1], [], []>} : vector<128x32xf32>, vector<32x256xf32>, vector<128x256xf32> -> vector<128x256xf32>
    %c1_i32_12 = arith.constant 1 : i32
    %30 = tpu.memref_slice %arg28[%c1_i32_12] : memref<8x!tpu.dma_semaphore, #tpu.memory_space<semaphore_mem>> -> memref<1x!tpu.dma_semaphore, #tpu.memory_space<semaphore_mem>>
    %31 = tpu.memref_squeeze %30 : memref<1x!tpu.dma_semaphore, #tpu.memory_space<semaphore_mem>> -> memref<!tpu.dma_semaphore, #tpu.memory_space<semaphore_mem>>
    tpu.wait_dma2 semaphore(%31 : memref<!tpu.dma_semaphore, #tpu.memory_space<semaphore_mem>>) src(%arg12 : memref<1024x256xf32, #tpu.memory_space<any>>) dst(%arg21 : memref<1024x256xf32, #tpu.memory_space<vmem>>)
    %cst_13 = arith.constant 0.000000e+00 : f32
    %32 = vector.broadcast %cst_13 : f32 to vector<32x256xf32>
    %33 = vector.extract_strided_slice %29 {offsets = [0, 0], sizes = [32, 256], strides = [1, 1]} : vector<128x256xf32> to vector<32x256xf32>
    %c0_14 = arith.constant 0 : index
    %c0_15 = arith.constant 0 : index
    %34 = vector.load %arg21[%c0_14, %c0_15] : memref<1024x256xf32, #tpu.memory_space<vmem>>, vector<256x256xf32>
    %cst_16 = arith.constant dense<0.000000e+00> : vector<32x256xf32>
    %35 = tpu.matmul %33, %34, %cst_16 {dimension_numbers = #tpu.dot_dimension_numbers<[1], [0], [0], [1], [0, 0, 1, 1], [], []>} : vector<32x256xf32>, vector<256x256xf32>, vector<32x256xf32> -> vector<32x256xf32>
    %36 = arith.addf %32, %35 : vector<32x256xf32>
    %37 = vector.extract_strided_slice %29 {offsets = [32, 0], sizes = [32, 256], strides = [1, 1]} : vector<128x256xf32> to vector<32x256xf32>
    %c256 = arith.constant 256 : index
    %c0_17 = arith.constant 0 : index
    %38 = vector.load %arg21[%c256, %c0_17] : memref<1024x256xf32, #tpu.memory_space<vmem>>, vector<256x256xf32>
    %cst_18 = arith.constant dense<0.000000e+00> : vector<32x256xf32>
    %39 = tpu.matmul %37, %38, %cst_18 {dimension_numbers = #tpu.dot_dimension_numbers<[1], [0], [0], [1], [0, 0, 1, 1], [], []>} : vector<32x256xf32>, vector<256x256xf32>, vector<32x256xf32> -> vector<32x256xf32>
    %40 = arith.addf %36, %39 : vector<32x256xf32>
    %41 = vector.extract_strided_slice %29 {offsets = [64, 0], sizes = [32, 256], strides = [1, 1]} : vector<128x256xf32> to vector<32x256xf32>
    %c512 = arith.constant 512 : index
    %c0_19 = arith.constant 0 : index
    %42 = vector.load %arg21[%c512, %c0_19] : memref<1024x256xf32, #tpu.memory_space<vmem>>, vector<256x256xf32>
    %cst_20 = arith.constant dense<0.000000e+00> : vector<32x256xf32>
    %43 = tpu.matmul %41, %42, %cst_20 {dimension_numbers = #tpu.dot_dimension_numbers<[1], [0], [0], [1], [0, 0, 1, 1], [], []>} : vector<32x256xf32>, vector<256x256xf32>, vector<32x256xf32> -> vector<32x256xf32>
    %44 = arith.addf %40, %43 : vector<32x256xf32>
    %45 = vector.extract_strided_slice %29 {offsets = [96, 0], sizes = [32, 256], strides = [1, 1]} : vector<128x256xf32> to vector<32x256xf32>
    %c768 = arith.constant 768 : index
    %c0_21 = arith.constant 0 : index
    %46 = vector.load %arg21[%c768, %c0_21] : memref<1024x256xf32, #tpu.memory_space<vmem>>, vector<256x256xf32>
    %cst_22 = arith.constant dense<0.000000e+00> : vector<32x256xf32>
    %47 = tpu.matmul %45, %46, %cst_22 {dimension_numbers = #tpu.dot_dimension_numbers<[1], [0], [0], [1], [0, 0, 1, 1], [], []>} : vector<32x256xf32>, vector<256x256xf32>, vector<32x256xf32> -> vector<32x256xf32>
    %48 = arith.addf %44, %47 : vector<32x256xf32>
    %c0_23 = arith.constant 0 : index
    %c0_24 = arith.constant 0 : index
    %49 = vector.load %arg4[%c0_23, %c0_24] : memref<1x256xf32, #tpu.memory_space<vmem>>, vector<1x256xf32>
    %50 = vector.broadcast %49 : vector<1x256xf32> to vector<32x256xf32>
    %51 = arith.addf %48, %50 : vector<32x256xf32>
    %cst_25 = arith.constant 0.000000e+00 : f32
    %52 = vector.broadcast %cst_25 : f32 to vector<32x256xf32>
    %53 = arith.maximumf %51, %52 : vector<32x256xf32>
    %cst_26 = arith.constant dense<0.000000e+00> : vector<128x256xf32>
    %54 = tpu.matmul %19, %53, %cst_26 {dimension_numbers = #tpu.dot_dimension_numbers<[1], [0], [0], [1], [0, 0, 1, 1], [], []>} : vector<128x32xf32>, vector<32x256xf32>, vector<128x256xf32> -> vector<128x256xf32>
    %c2_i32_27 = arith.constant 2 : i32
    %55 = tpu.memref_slice %arg28[%c2_i32_27] : memref<8x!tpu.dma_semaphore, #tpu.memory_space<semaphore_mem>> -> memref<1x!tpu.dma_semaphore, #tpu.memory_space<semaphore_mem>>
    %56 = tpu.memref_squeeze %55 : memref<1x!tpu.dma_semaphore, #tpu.memory_space<semaphore_mem>> -> memref<!tpu.dma_semaphore, #tpu.memory_space<semaphore_mem>>
    tpu.wait_dma2 semaphore(%56 : memref<!tpu.dma_semaphore, #tpu.memory_space<semaphore_mem>>) src(%arg13 : memref<1024x256xf32, #tpu.memory_space<any>>) dst(%arg22 : memref<1024x256xf32, #tpu.memory_space<vmem>>)
    %cst_28 = arith.constant 0.000000e+00 : f32
    %57 = vector.broadcast %cst_28 : f32 to vector<32x256xf32>
    %58 = vector.extract_strided_slice %54 {offsets = [0, 0], sizes = [32, 256], strides = [1, 1]} : vector<128x256xf32> to vector<32x256xf32>
    %c0_29 = arith.constant 0 : index
    %c0_30 = arith.constant 0 : index
    %59 = vector.load %arg22[%c0_29, %c0_30] : memref<1024x256xf32, #tpu.memory_space<vmem>>, vector<256x256xf32>
    %cst_31 = arith.constant dense<0.000000e+00> : vector<32x256xf32>
    %60 = tpu.matmul %58, %59, %cst_31 {dimension_numbers = #tpu.dot_dimension_numbers<[1], [0], [0], [1], [0, 0, 1, 1], [], []>} : vector<32x256xf32>, vector<256x256xf32>, vector<32x256xf32> -> vector<32x256xf32>
    %61 = arith.addf %57, %60 : vector<32x256xf32>
    %62 = vector.extract_strided_slice %54 {offsets = [32, 0], sizes = [32, 256], strides = [1, 1]} : vector<128x256xf32> to vector<32x256xf32>
    %c256_32 = arith.constant 256 : index
    %c0_33 = arith.constant 0 : index
    %63 = vector.load %arg22[%c256_32, %c0_33] : memref<1024x256xf32, #tpu.memory_space<vmem>>, vector<256x256xf32>
    %cst_34 = arith.constant dense<0.000000e+00> : vector<32x256xf32>
    %64 = tpu.matmul %62, %63, %cst_34 {dimension_numbers = #tpu.dot_dimension_numbers<[1], [0], [0], [1], [0, 0, 1, 1], [], []>} : vector<32x256xf32>, vector<256x256xf32>, vector<32x256xf32> -> vector<32x256xf32>
    %65 = arith.addf %61, %64 : vector<32x256xf32>
    %66 = vector.extract_strided_slice %54 {offsets = [64, 0], sizes = [32, 256], strides = [1, 1]} : vector<128x256xf32> to vector<32x256xf32>
    %c512_35 = arith.constant 512 : index
    %c0_36 = arith.constant 0 : index
    %67 = vector.load %arg22[%c512_35, %c0_36] : memref<1024x256xf32, #tpu.memory_space<vmem>>, vector<256x256xf32>
    %cst_37 = arith.constant dense<0.000000e+00> : vector<32x256xf32>
    %68 = tpu.matmul %66, %67, %cst_37 {dimension_numbers = #tpu.dot_dimension_numbers<[1], [0], [0], [1], [0, 0, 1, 1], [], []>} : vector<32x256xf32>, vector<256x256xf32>, vector<32x256xf32> -> vector<32x256xf32>
    %69 = arith.addf %65, %68 : vector<32x256xf32>
    %70 = vector.extract_strided_slice %54 {offsets = [96, 0], sizes = [32, 256], strides = [1, 1]} : vector<128x256xf32> to vector<32x256xf32>
    %c768_38 = arith.constant 768 : index
    %c0_39 = arith.constant 0 : index
    %71 = vector.load %arg22[%c768_38, %c0_39] : memref<1024x256xf32, #tpu.memory_space<vmem>>, vector<256x256xf32>
    %cst_40 = arith.constant dense<0.000000e+00> : vector<32x256xf32>
    %72 = tpu.matmul %70, %71, %cst_40 {dimension_numbers = #tpu.dot_dimension_numbers<[1], [0], [0], [1], [0, 0, 1, 1], [], []>} : vector<32x256xf32>, vector<256x256xf32>, vector<32x256xf32> -> vector<32x256xf32>
    %73 = arith.addf %69, %72 : vector<32x256xf32>
    %c0_41 = arith.constant 0 : index
    %c0_42 = arith.constant 0 : index
    %74 = vector.load %arg5[%c0_41, %c0_42] : memref<1x256xf32, #tpu.memory_space<vmem>>, vector<1x256xf32>
    %75 = vector.broadcast %74 : vector<1x256xf32> to vector<32x256xf32>
    %76 = arith.addf %73, %75 : vector<32x256xf32>
    %cst_43 = arith.constant 0.000000e+00 : f32
    %77 = vector.broadcast %cst_43 : f32 to vector<32x256xf32>
    %78 = arith.maximumf %76, %77 : vector<32x256xf32>
    %cst_44 = arith.constant dense<0.000000e+00> : vector<128x256xf32>
    %79 = tpu.matmul %19, %78, %cst_44 {dimension_numbers = #tpu.dot_dimension_numbers<[1], [0], [0], [1], [0, 0, 1, 1], [], []>} : vector<128x32xf32>, vector<32x256xf32>, vector<128x256xf32> -> vector<128x256xf32>
    %c3_i32_45 = arith.constant 3 : i32
    %80 = tpu.memref_slice %arg28[%c3_i32_45] : memref<8x!tpu.dma_semaphore, #tpu.memory_space<semaphore_mem>> -> memref<1x!tpu.dma_semaphore, #tpu.memory_space<semaphore_mem>>
    %81 = tpu.memref_squeeze %80 : memref<1x!tpu.dma_semaphore, #tpu.memory_space<semaphore_mem>> -> memref<!tpu.dma_semaphore, #tpu.memory_space<semaphore_mem>>
    tpu.wait_dma2 semaphore(%81 : memref<!tpu.dma_semaphore, #tpu.memory_space<semaphore_mem>>) src(%arg14 : memref<2048x256xf32, #tpu.memory_space<any>>) dst(%arg23 : memref<2048x256xf32, #tpu.memory_space<vmem>>)
    %cst_46 = arith.constant 0.000000e+00 : f32
    %82 = vector.broadcast %cst_46 : f32 to vector<32x256xf32>
    %83 = vector.extract_strided_slice %79 {offsets = [0, 0], sizes = [32, 256], strides = [1, 1]} : vector<128x256xf32> to vector<32x256xf32>
    %c0_47 = arith.constant 0 : index
    %c0_48 = arith.constant 0 : index
    %84 = vector.load %arg23[%c0_47, %c0_48] : memref<2048x256xf32, #tpu.memory_space<vmem>>, vector<256x256xf32>
    %cst_49 = arith.constant dense<0.000000e+00> : vector<32x256xf32>
    %85 = tpu.matmul %83, %84, %cst_49 {dimension_numbers = #tpu.dot_dimension_numbers<[1], [0], [0], [1], [0, 0, 1, 1], [], []>} : vector<32x256xf32>, vector<256x256xf32>, vector<32x256xf32> -> vector<32x256xf32>
    %86 = arith.addf %82, %85 : vector<32x256xf32>
    %87 = vector.extract_strided_slice %54 {offsets = [0, 0], sizes = [32, 256], strides = [1, 1]} : vector<128x256xf32> to vector<32x256xf32>
    %c256_50 = arith.constant 256 : index
    %c0_51 = arith.constant 0 : index
    %88 = vector.load %arg23[%c256_50, %c0_51] : memref<2048x256xf32, #tpu.memory_space<vmem>>, vector<256x256xf32>
    %cst_52 = arith.constant dense<0.000000e+00> : vector<32x256xf32>
    %89 = tpu.matmul %87, %88, %cst_52 {dimension_numbers = #tpu.dot_dimension_numbers<[1], [0], [0], [1], [0, 0, 1, 1], [], []>} : vector<32x256xf32>, vector<256x256xf32>, vector<32x256xf32> -> vector<32x256xf32>
    %90 = arith.addf %86, %89 : vector<32x256xf32>
    %91 = vector.extract_strided_slice %79 {offsets = [32, 0], sizes = [32, 256], strides = [1, 1]} : vector<128x256xf32> to vector<32x256xf32>
    %c512_53 = arith.constant 512 : index
    %c0_54 = arith.constant 0 : index
    %92 = vector.load %arg23[%c512_53, %c0_54] : memref<2048x256xf32, #tpu.memory_space<vmem>>, vector<256x256xf32>
    %cst_55 = arith.constant dense<0.000000e+00> : vector<32x256xf32>
    %93 = tpu.matmul %91, %92, %cst_55 {dimension_numbers = #tpu.dot_dimension_numbers<[1], [0], [0], [1], [0, 0, 1, 1], [], []>} : vector<32x256xf32>, vector<256x256xf32>, vector<32x256xf32> -> vector<32x256xf32>
    %94 = arith.addf %90, %93 : vector<32x256xf32>
    %95 = vector.extract_strided_slice %54 {offsets = [32, 0], sizes = [32, 256], strides = [1, 1]} : vector<128x256xf32> to vector<32x256xf32>
    %c768_56 = arith.constant 768 : index
    %c0_57 = arith.constant 0 : index
    %96 = vector.load %arg23[%c768_56, %c0_57] : memref<2048x256xf32, #tpu.memory_space<vmem>>, vector<256x256xf32>
    %cst_58 = arith.constant dense<0.000000e+00> : vector<32x256xf32>
    %97 = tpu.matmul %95, %96, %cst_58 {dimension_numbers = #tpu.dot_dimension_numbers<[1], [0], [0], [1], [0, 0, 1, 1], [], []>} : vector<32x256xf32>, vector<256x256xf32>, vector<32x256xf32> -> vector<32x256xf32>
    %98 = arith.addf %94, %97 : vector<32x256xf32>
    %99 = vector.extract_strided_slice %79 {offsets = [64, 0], sizes = [32, 256], strides = [1, 1]} : vector<128x256xf32> to vector<32x256xf32>
    %c1024 = arith.constant 1024 : index
    %c0_59 = arith.constant 0 : index
    %100 = vector.load %arg23[%c1024, %c0_59] : memref<2048x256xf32, #tpu.memory_space<vmem>>, vector<256x256xf32>
    %cst_60 = arith.constant dense<0.000000e+00> : vector<32x256xf32>
    %101 = tpu.matmul %99, %100, %cst_60 {dimension_numbers = #tpu.dot_dimension_numbers<[1], [0], [0], [1], [0, 0, 1, 1], [], []>} : vector<32x256xf32>, vector<256x256xf32>, vector<32x256xf32> -> vector<32x256xf32>
    %102 = arith.addf %98, %101 : vector<32x256xf32>
    %103 = vector.extract_strided_slice %54 {offsets = [64, 0], sizes = [32, 256], strides = [1, 1]} : vector<128x256xf32> to vector<32x256xf32>
    %c1280 = arith.constant 1280 : index
    %c0_61 = arith.constant 0 : index
    %104 = vector.load %arg23[%c1280, %c0_61] : memref<2048x256xf32, #tpu.memory_space<vmem>>, vector<256x256xf32>
    %cst_62 = arith.constant dense<0.000000e+00> : vector<32x256xf32>
    %105 = tpu.matmul %103, %104, %cst_62 {dimension_numbers = #tpu.dot_dimension_numbers<[1], [0], [0], [1], [0, 0, 1, 1], [], []>} : vector<32x256xf32>, vector<256x256xf32>, vector<32x256xf32> -> vector<32x256xf32>
    %106 = arith.addf %102, %105 : vector<32x256xf32>
    %107 = vector.extract_strided_slice %79 {offsets = [96, 0], sizes = [32, 256], strides = [1, 1]} : vector<128x256xf32> to vector<32x256xf32>
    %c1536 = arith.constant 1536 : index
    %c0_63 = arith.constant 0 : index
    %108 = vector.load %arg23[%c1536, %c0_63] : memref<2048x256xf32, #tpu.memory_space<vmem>>, vector<256x256xf32>
    %cst_64 = arith.constant dense<0.000000e+00> : vector<32x256xf32>
    %109 = tpu.matmul %107, %108, %cst_64 {dimension_numbers = #tpu.dot_dimension_numbers<[1], [0], [0], [1], [0, 0, 1, 1], [], []>} : vector<32x256xf32>, vector<256x256xf32>, vector<32x256xf32> -> vector<32x256xf32>
    %110 = arith.addf %106, %109 : vector<32x256xf32>
    %111 = vector.extract_strided_slice %54 {offsets = [96, 0], sizes = [32, 256], strides = [1, 1]} : vector<128x256xf32> to vector<32x256xf32>
    %c1792 = arith.constant 1792 : index
    %c0_65 = arith.constant 0 : index
    %112 = vector.load %arg23[%c1792, %c0_65] : memref<2048x256xf32, #tpu.memory_space<vmem>>, vector<256x256xf32>
    %cst_66 = arith.constant dense<0.000000e+00> : vector<32x256xf32>
    %113 = tpu.matmul %111, %112, %cst_66 {dimension_numbers = #tpu.dot_dimension_numbers<[1], [0], [0], [1], [0, 0, 1, 1], [], []>} : vector<32x256xf32>, vector<256x256xf32>, vector<32x256xf32> -> vector<32x256xf32>
    %114 = arith.addf %110, %113 : vector<32x256xf32>
    %c0_67 = arith.constant 0 : index
    %c0_68 = arith.constant 0 : index
    %115 = vector.load %arg6[%c0_67, %c0_68] : memref<1x256xf32, #tpu.memory_space<vmem>>, vector<1x256xf32>
    %116 = vector.broadcast %115 : vector<1x256xf32> to vector<32x256xf32>
    %117 = arith.addf %114, %116 : vector<32x256xf32>
    %cst_69 = arith.constant 0.000000e+00 : f32
    %118 = vector.broadcast %cst_69 : f32 to vector<32x256xf32>
    %119 = arith.maximumf %117, %118 : vector<32x256xf32>
    %c4_i32_70 = arith.constant 4 : i32
    %120 = tpu.memref_slice %arg28[%c4_i32_70] : memref<8x!tpu.dma_semaphore, #tpu.memory_space<semaphore_mem>> -> memref<1x!tpu.dma_semaphore, #tpu.memory_space<semaphore_mem>>
    %121 = tpu.memref_squeeze %120 : memref<1x!tpu.dma_semaphore, #tpu.memory_space<semaphore_mem>> -> memref<!tpu.dma_semaphore, #tpu.memory_space<semaphore_mem>>
    tpu.wait_dma2 semaphore(%121 : memref<!tpu.dma_semaphore, #tpu.memory_space<semaphore_mem>>) src(%arg15 : memref<512x128xf32, #tpu.memory_space<any>>) dst(%arg24 : memref<512x128xf32, #tpu.memory_space<vmem>>)
    %c0_71 = arith.constant 0 : index
    %c0_72 = arith.constant 0 : index
    %122 = vector.load %arg24[%c0_71, %c0_72] : memref<512x128xf32, #tpu.memory_space<vmem>>, vector<256x128xf32>
    %cst_73 = arith.constant dense<0.000000e+00> : vector<32x128xf32>
    %123 = tpu.matmul %119, %122, %cst_73 {dimension_numbers = #tpu.dot_dimension_numbers<[1], [0], [0], [1], [0, 0, 1, 1], [], []>} : vector<32x256xf32>, vector<256x128xf32>, vector<32x128xf32> -> vector<32x128xf32>
    %c256_74 = arith.constant 256 : index
    %c0_75 = arith.constant 0 : index
    %124 = vector.load %arg24[%c256_74, %c0_75] : memref<512x128xf32, #tpu.memory_space<vmem>>, vector<256x128xf32>
    %cst_76 = arith.constant dense<0.000000e+00> : vector<32x128xf32>
    %125 = tpu.matmul %53, %124, %cst_76 {dimension_numbers = #tpu.dot_dimension_numbers<[1], [0], [0], [1], [0, 0, 1, 1], [], []>} : vector<32x256xf32>, vector<256x128xf32>, vector<32x128xf32> -> vector<32x128xf32>
    %126 = arith.addf %123, %125 : vector<32x128xf32>
    %c0_77 = arith.constant 0 : index
    %c0_78 = arith.constant 0 : index
    %127 = vector.load %arg7[%c0_77, %c0_78] : memref<1x128xf32, #tpu.memory_space<vmem>>, vector<1x128xf32>
    %128 = vector.broadcast %127 : vector<1x128xf32> to vector<32x128xf32>
    %129 = arith.addf %126, %128 : vector<32x128xf32>
    %cst_79 = arith.constant 0.000000e+00 : f32
    %130 = vector.broadcast %cst_79 : f32 to vector<32x128xf32>
    %131 = arith.maximumf %129, %130 : vector<32x128xf32>
    %cst_80 = arith.constant dense<0.000000e+00> : vector<128x128xf32>
    %132 = tpu.matmul %19, %131, %cst_80 {dimension_numbers = #tpu.dot_dimension_numbers<[1], [0], [0], [1], [0, 0, 1, 1], [], []>} : vector<128x32xf32>, vector<32x128xf32>, vector<128x128xf32> -> vector<128x128xf32>
    %c5_i32_81 = arith.constant 5 : i32
    %133 = tpu.memref_slice %arg28[%c5_i32_81] : memref<8x!tpu.dma_semaphore, #tpu.memory_space<semaphore_mem>> -> memref<1x!tpu.dma_semaphore, #tpu.memory_space<semaphore_mem>>
    %134 = tpu.memref_squeeze %133 : memref<1x!tpu.dma_semaphore, #tpu.memory_space<semaphore_mem>> -> memref<!tpu.dma_semaphore, #tpu.memory_space<semaphore_mem>>
    tpu.wait_dma2 semaphore(%134 : memref<!tpu.dma_semaphore, #tpu.memory_space<semaphore_mem>>) src(%arg16 : memref<512x128xf32, #tpu.memory_space<any>>) dst(%arg25 : memref<512x128xf32, #tpu.memory_space<vmem>>)
    %cst_82 = arith.constant 0.000000e+00 : f32
    %135 = vector.broadcast %cst_82 : f32 to vector<32x128xf32>
    %136 = vector.extract_strided_slice %132 {offsets = [0, 0], sizes = [32, 128], strides = [1, 1]} : vector<128x128xf32> to vector<32x128xf32>
    %c0_83 = arith.constant 0 : index
    %c0_84 = arith.constant 0 : index
    %137 = vector.load %arg25[%c0_83, %c0_84] : memref<512x128xf32, #tpu.memory_space<vmem>>, vector<128x128xf32>
    %cst_85 = arith.constant dense<0.000000e+00> : vector<32x128xf32>
    %138 = tpu.matmul %136, %137, %cst_85 {dimension_numbers = #tpu.dot_dimension_numbers<[1], [0], [0], [1], [0, 0, 1, 1], [], []>} : vector<32x128xf32>, vector<128x128xf32>, vector<32x128xf32> -> vector<32x128xf32>
    %139 = arith.addf %135, %138 : vector<32x128xf32>
    %140 = vector.extract_strided_slice %132 {offsets = [32, 0], sizes = [32, 128], strides = [1, 1]} : vector<128x128xf32> to vector<32x128xf32>
    %c128 = arith.constant 128 : index
    %c0_86 = arith.constant 0 : index
    %141 = vector.load %arg25[%c128, %c0_86] : memref<512x128xf32, #tpu.memory_space<vmem>>, vector<128x128xf32>
    %cst_87 = arith.constant dense<0.000000e+00> : vector<32x128xf32>
    %142 = tpu.matmul %140, %141, %cst_87 {dimension_numbers = #tpu.dot_dimension_numbers<[1], [0], [0], [1], [0, 0, 1, 1], [], []>} : vector<32x128xf32>, vector<128x128xf32>, vector<32x128xf32> -> vector<32x128xf32>
    %143 = arith.addf %139, %142 : vector<32x128xf32>
    %144 = vector.extract_strided_slice %132 {offsets = [64, 0], sizes = [32, 128], strides = [1, 1]} : vector<128x128xf32> to vector<32x128xf32>
    %c256_88 = arith.constant 256 : index
    %c0_89 = arith.constant 0 : index
    %145 = vector.load %arg25[%c256_88, %c0_89] : memref<512x128xf32, #tpu.memory_space<vmem>>, vector<128x128xf32>
    %cst_90 = arith.constant dense<0.000000e+00> : vector<32x128xf32>
    %146 = tpu.matmul %144, %145, %cst_90 {dimension_numbers = #tpu.dot_dimension_numbers<[1], [0], [0], [1], [0, 0, 1, 1], [], []>} : vector<32x128xf32>, vector<128x128xf32>, vector<32x128xf32> -> vector<32x128xf32>
    %147 = arith.addf %143, %146 : vector<32x128xf32>
    %148 = vector.extract_strided_slice %132 {offsets = [96, 0], sizes = [32, 128], strides = [1, 1]} : vector<128x128xf32> to vector<32x128xf32>
    %c384 = arith.constant 384 : index
    %c0_91 = arith.constant 0 : index
    %149 = vector.load %arg25[%c384, %c0_91] : memref<512x128xf32, #tpu.memory_space<vmem>>, vector<128x128xf32>
    %cst_92 = arith.constant dense<0.000000e+00> : vector<32x128xf32>
    %150 = tpu.matmul %148, %149, %cst_92 {dimension_numbers = #tpu.dot_dimension_numbers<[1], [0], [0], [1], [0, 0, 1, 1], [], []>} : vector<32x128xf32>, vector<128x128xf32>, vector<32x128xf32> -> vector<32x128xf32>
    %151 = arith.addf %147, %150 : vector<32x128xf32>
    %c0_93 = arith.constant 0 : index
    %c0_94 = arith.constant 0 : index
    %152 = vector.load %arg8[%c0_93, %c0_94] : memref<1x128xf32, #tpu.memory_space<vmem>>, vector<1x128xf32>
    %153 = vector.broadcast %152 : vector<1x128xf32> to vector<32x128xf32>
    %154 = arith.addf %151, %153 : vector<32x128xf32>
    %cst_95 = arith.constant 0.000000e+00 : f32
    %155 = vector.broadcast %cst_95 : f32 to vector<32x128xf32>
    %156 = arith.maximumf %154, %155 : vector<32x128xf32>
    %cst_96 = arith.constant dense<0.000000e+00> : vector<128x128xf32>
    %157 = tpu.matmul %19, %156, %cst_96 {dimension_numbers = #tpu.dot_dimension_numbers<[1], [0], [0], [1], [0, 0, 1, 1], [], []>} : vector<128x32xf32>, vector<32x128xf32>, vector<128x128xf32> -> vector<128x128xf32>
    %c6_i32_97 = arith.constant 6 : i32
    %158 = tpu.memref_slice %arg28[%c6_i32_97] : memref<8x!tpu.dma_semaphore, #tpu.memory_space<semaphore_mem>> -> memref<1x!tpu.dma_semaphore, #tpu.memory_space<semaphore_mem>>
    %159 = tpu.memref_squeeze %158 : memref<1x!tpu.dma_semaphore, #tpu.memory_space<semaphore_mem>> -> memref<!tpu.dma_semaphore, #tpu.memory_space<semaphore_mem>>
    tpu.wait_dma2 semaphore(%159 : memref<!tpu.dma_semaphore, #tpu.memory_space<semaphore_mem>>) src(%arg17 : memref<512x128xf32, #tpu.memory_space<any>>) dst(%arg26 : memref<512x128xf32, #tpu.memory_space<vmem>>)
    %cst_98 = arith.constant 0.000000e+00 : f32
    %160 = vector.broadcast %cst_98 : f32 to vector<32x128xf32>
    %161 = vector.extract_strided_slice %157 {offsets = [0, 0], sizes = [32, 128], strides = [1, 1]} : vector<128x128xf32> to vector<32x128xf32>
    %c0_99 = arith.constant 0 : index
    %c0_100 = arith.constant 0 : index
    %162 = vector.load %arg26[%c0_99, %c0_100] : memref<512x128xf32, #tpu.memory_space<vmem>>, vector<128x128xf32>
    %cst_101 = arith.constant dense<0.000000e+00> : vector<32x128xf32>
    %163 = tpu.matmul %161, %162, %cst_101 {dimension_numbers = #tpu.dot_dimension_numbers<[1], [0], [0], [1], [0, 0, 1, 1], [], []>} : vector<32x128xf32>, vector<128x128xf32>, vector<32x128xf32> -> vector<32x128xf32>
    %164 = arith.addf %160, %163 : vector<32x128xf32>
    %165 = vector.extract_strided_slice %157 {offsets = [32, 0], sizes = [32, 128], strides = [1, 1]} : vector<128x128xf32> to vector<32x128xf32>
    %c128_102 = arith.constant 128 : index
    %c0_103 = arith.constant 0 : index
    %166 = vector.load %arg26[%c128_102, %c0_103] : memref<512x128xf32, #tpu.memory_space<vmem>>, vector<128x128xf32>
    %cst_104 = arith.constant dense<0.000000e+00> : vector<32x128xf32>
    %167 = tpu.matmul %165, %166, %cst_104 {dimension_numbers = #tpu.dot_dimension_numbers<[1], [0], [0], [1], [0, 0, 1, 1], [], []>} : vector<32x128xf32>, vector<128x128xf32>, vector<32x128xf32> -> vector<32x128xf32>
    %168 = arith.addf %164, %167 : vector<32x128xf32>
    %169 = vector.extract_strided_slice %157 {offsets = [64, 0], sizes = [32, 128], strides = [1, 1]} : vector<128x128xf32> to vector<32x128xf32>
    %c256_105 = arith.constant 256 : index
    %c0_106 = arith.constant 0 : index
    %170 = vector.load %arg26[%c256_105, %c0_106] : memref<512x128xf32, #tpu.memory_space<vmem>>, vector<128x128xf32>
    %cst_107 = arith.constant dense<0.000000e+00> : vector<32x128xf32>
    %171 = tpu.matmul %169, %170, %cst_107 {dimension_numbers = #tpu.dot_dimension_numbers<[1], [0], [0], [1], [0, 0, 1, 1], [], []>} : vector<32x128xf32>, vector<128x128xf32>, vector<32x128xf32> -> vector<32x128xf32>
    %172 = arith.addf %168, %171 : vector<32x128xf32>
    %173 = vector.extract_strided_slice %157 {offsets = [96, 0], sizes = [32, 128], strides = [1, 1]} : vector<128x128xf32> to vector<32x128xf32>
    %c384_108 = arith.constant 384 : index
    %c0_109 = arith.constant 0 : index
    %174 = vector.load %arg26[%c384_108, %c0_109] : memref<512x128xf32, #tpu.memory_space<vmem>>, vector<128x128xf32>
    %cst_110 = arith.constant dense<0.000000e+00> : vector<32x128xf32>
    %175 = tpu.matmul %173, %174, %cst_110 {dimension_numbers = #tpu.dot_dimension_numbers<[1], [0], [0], [1], [0, 0, 1, 1], [], []>} : vector<32x128xf32>, vector<128x128xf32>, vector<32x128xf32> -> vector<32x128xf32>
    %176 = arith.addf %172, %175 : vector<32x128xf32>
    %c0_111 = arith.constant 0 : index
    %c0_112 = arith.constant 0 : index
    %177 = vector.load %arg9[%c0_111, %c0_112] : memref<1x128xf32, #tpu.memory_space<vmem>>, vector<1x128xf32>
    %178 = vector.broadcast %177 : vector<1x128xf32> to vector<32x128xf32>
    %179 = arith.addf %176, %178 : vector<32x128xf32>
    %cst_113 = arith.constant 0.000000e+00 : f32
    %180 = vector.broadcast %cst_113 : f32 to vector<32x128xf32>
    %181 = arith.maximumf %179, %180 : vector<32x128xf32>
    %c7_i32_114 = arith.constant 7 : i32
    %182 = tpu.memref_slice %arg28[%c7_i32_114] : memref<8x!tpu.dma_semaphore, #tpu.memory_space<semaphore_mem>> -> memref<1x!tpu.dma_semaphore, #tpu.memory_space<semaphore_mem>>
    %183 = tpu.memref_squeeze %182 : memref<1x!tpu.dma_semaphore, #tpu.memory_space<semaphore_mem>> -> memref<!tpu.dma_semaphore, #tpu.memory_space<semaphore_mem>>
    tpu.wait_dma2 semaphore(%183 : memref<!tpu.dma_semaphore, #tpu.memory_space<semaphore_mem>>) src(%arg18 : memref<128x128xf32, #tpu.memory_space<any>>) dst(%arg27 : memref<128x128xf32, #tpu.memory_space<vmem>>)
    %c0_115 = arith.constant 0 : index
    %c0_116 = arith.constant 0 : index
    %184 = vector.load %arg27[%c0_115, %c0_116] : memref<128x128xf32, #tpu.memory_space<vmem>>, vector<128x128xf32>
    %cst_117 = arith.constant dense<0.000000e+00> : vector<32x128xf32>
    %185 = tpu.matmul %181, %184, %cst_117 {dimension_numbers = #tpu.dot_dimension_numbers<[1], [0], [0], [1], [0, 0, 1, 1], [], []>} : vector<32x128xf32>, vector<128x128xf32>, vector<32x128xf32> -> vector<32x128xf32>
    %c0_118 = arith.constant 0 : index
    %c0_119 = arith.constant 0 : index
    %186 = vector.load %arg10[%c0_118, %c0_119] : memref<1x128xf32, #tpu.memory_space<vmem>>, vector<1x128xf32>
    %187 = vector.broadcast %186 : vector<1x128xf32> to vector<32x128xf32>
    %188 = arith.addf %185, %187 : vector<32x128xf32>
    %c0_120 = arith.constant 0 : index
    %c0_121 = arith.constant 0 : index
    %c0_122 = arith.constant 0 : index
    %189 = vector.load %arg19[%c0_120, %c0_121, %c0_122] : memref<1x32x128xf32, #tpu.memory_space<vmem>>, vector<1x32x128xf32>
    %190 = vector.shape_cast %189 : vector<1x32x128xf32> to vector<32x128xf32>
    %191 = vector.shape_cast %188 : vector<32x128xf32> to vector<1x32x128xf32>
    tpu.vector_store %arg19[%c0_120, %c0_121, %c0_122], %191 {strides = array<i32>} : memref<1x32x128xf32, #tpu.memory_space<vmem>>, vector<1x32x128xf32>,
    return
  }
  func.func @transform_0(%arg0: i32) -> (i32, i32, i32) {
    %c0_i32 = arith.constant 0 : i32
    %c0_i32_0 = arith.constant 0 : i32
    %c0_i32_1 = arith.constant 0 : i32
    return %arg0, %c0_i32, %c0_i32_0 : i32, i32, i32
  }
  func.func @transform_1(%arg0: i32) -> (i32, i32, i32) {
    %c0_i32 = arith.constant 0 : i32
    %c0_i32_0 = arith.constant 0 : i32
    %c0_i32_1 = arith.constant 0 : i32
    return %arg0, %c0_i32, %c0_i32_0 : i32, i32, i32
  }
  func.func @transform_2(%arg0: i32) -> (i32, i32) {
    %c0_i32 = arith.constant 0 : i32
    %c0_i32_0 = arith.constant 0 : i32
    %c0_i32_1 = arith.constant 0 : i32
    return %c0_i32, %c0_i32_0 : i32, i32
  }
  func.func @transform_3(%arg0: i32) -> (i32, i32) {
    %c0_i32 = arith.constant 0 : i32
    %c0_i32_0 = arith.constant 0 : i32
    %c0_i32_1 = arith.constant 0 : i32
    return %c0_i32, %c0_i32_0 : i32, i32
  }
  func.func @transform_4(%arg0: i32) -> (i32, i32) {
    %c0_i32 = arith.constant 0 : i32
    %c0_i32_0 = arith.constant 0 : i32
    %c0_i32_1 = arith.constant 0 : i32
    return %c0_i32, %c0_i32_0 : i32, i32
  }
  func.func @transform_5(%arg0: i32) -> (i32, i32) {
    %c0_i32 = arith.constant 0 : i32
    %c0_i32_0 = arith.constant 0 : i32
    %c0_i32_1 = arith.constant 0 : i32
    return %c0_i32, %c0_i32_0 : i32, i32
  }
  func.func @transform_6(%arg0: i32) -> (i32, i32) {
    %c0_i32 = arith.constant 0 : i32
    %c0_i32_0 = arith.constant 0 : i32
    %c0_i32_1 = arith.constant 0 : i32
    return %c0_i32, %c0_i32_0 : i32, i32
  }
  func.func @transform_7(%arg0: i32) -> (i32, i32) {
    %c0_i32 = arith.constant 0 : i32
    %c0_i32_0 = arith.constant 0 : i32
    %c0_i32_1 = arith.constant 0 : i32
    return %c0_i32, %c0_i32_0 : i32, i32
  }
  func.func @transform_8(%arg0: i32) -> (i32, i32) {
    %c0_i32 = arith.constant 0 : i32
    %c0_i32_0 = arith.constant 0 : i32
    %c0_i32_1 = arith.constant 0 : i32
    return %c0_i32, %c0_i32_0 : i32, i32
  }
  func.func @transform_9(%arg0: i32) -> (i32, i32) {
    %c0_i32 = arith.constant 0 : i32
    %c0_i32_0 = arith.constant 0 : i32
    %c0_i32_1 = arith.constant 0 : i32
    return %c0_i32, %c0_i32_0 : i32, i32
  }
  func.func @transform_18(%arg0: i32) -> (i32, i32, i32) {
    %c0_i32 = arith.constant 0 : i32
    %c0_i32_0 = arith.constant 0 : i32
    %c0_i32_1 = arith.constant 0 : i32
    return %arg0, %c0_i32, %c0_i32_0 : i32, i32, i32
  }
}

</mosaic_0001>

<llo_original>
// kernel: model_forward.1
$region0: #{model_forward.1}
  #allocation0 [shape = 'u32[]', space=smem, size = 0x4, offset = 0x4, fixed_abs, tag = 'smem constant byte address 0x4 - core index']
  #allocation1 [shape = 'u32[144,128]{1,0:T(1,128)}', space=vmem, size = 0x12000, scoped, tag = 'internal scratch']
  #allocation2 [shape = 'f32[32,256]{1,0:T(8,128)}', space=vmem, size = 0x8000, scoped, tag = 'scratch operand']
  #allocation3 [shape = 'f32[1024,256]{1,0:T(8,128)}', space=vmem, size = 0x100000, scoped, tag = 'scratch operand']
  #allocation4 [shape = 'f32[1024,256]{1,0:T(8,128)}', space=vmem, size = 0x100000, scoped, tag = 'scratch operand']
  #allocation5 [shape = 'f32[2048,256]{1,0:T(8,128)}', space=vmem, size = 0x200000, scoped, tag = 'scratch operand']
  #allocation6 [shape = 'f32[512,128]{1,0:T(8,128)}', space=vmem, size = 0x40000, scoped, tag = 'scratch operand']
  #allocation7 [shape = 'f32[512,128]{1,0:T(8,128)}', space=vmem, size = 0x40000, scoped, tag = 'scratch operand']
  #allocation8 [shape = 'f32[512,128]{1,0:T(8,128)}', space=vmem, size = 0x40000, scoped, tag = 'scratch operand']
  #allocation9 [shape = 'f32[128,128]{1,0:T(8,128)}', space=vmem, size = 0x10000, scoped, tag = 'scratch operand']
  #allocation10 [shape = 's32[8]{0}', space=sflag, size = 0x20, scoped, tag = 'scratch operand']
  #allocation25 [shape = 's32[]', space=sflag, size = 0x4, offset = 0, fixed_abs, tag = 'sflag constant byte address 0x0 - dummy sync flag']
  #allocation26 [shape = 's32[]', space=sflag, size = 0x4, offset = 0, fixed_abs, tag = 'sflag constant byte address 0x0 - dummy sync flag']
  #allocation27 [shape = 'u32[]', space=smem, size = 0x4, offset = 0x44, fixed_abs, tag = 'smem constant byte address 0x44 - assertion arg 0']
  #allocation28 [shape = 'u32[]', space=smem, size = 0x4, offset = 0x48, fixed_abs, tag = 'smem constant byte address 0x48 - assertion arg 1']
  #allocation29 [shape = 's32[]', space=sflag, size = 0x4, offset = 0, fixed_abs, tag = 'sflag constant byte address 0x0 - dummy sync flag']
  #allocation30 [shape = 's32[]', space=sflag, size = 0x4, offset = 0, fixed_abs, tag = 'sflag constant byte address 0x0 - dummy sync flag']
  #allocation31 [shape = 's32[]', space=sflag, size = 0x4, offset = 0, fixed_abs, tag = 'sflag constant byte address 0x0 - dummy sync flag']
  #allocation32 [shape = 's32[]', space=sflag, size = 0x4, offset = 0, fixed_abs, tag = 'sflag constant byte address 0x0 - dummy sync flag']
  #allocation33 [shape = 's32[]', space=sflag, size = 0x4, offset = 0, fixed_abs, tag = 'sflag constant byte address 0x0 - dummy sync flag']
  #allocation34 [shape = 's32[]', space=sflag, size = 0x4, offset = 0, fixed_abs, tag = 'sflag constant byte address 0x0 - dummy sync flag']
  #allocation35 [shape = 's32[]', space=sflag, size = 0x4, offset = 0, fixed_abs, tag = 'sflag constant byte address 0x0 - dummy sync flag']
  #allocation36 [shape = 's32[]', space=sflag, size = 0x4, offset = 0, fixed_abs, tag = 'sflag constant byte address 0x0 - dummy sync flag']
  #allocation37 [shape = 's32[]', space=sflag, size = 0x4, offset = 0, fixed_abs, tag = 'sflag constant byte address 0x0 - dummy sync flag']
  #allocation38 [shape = 's32[]', space=sflag, size = 0x4, offset = 0, fixed_abs, tag = 'sflag constant byte address 0x0 - dummy sync flag']
  #allocation39 [shape = 's32[]', space=sflag, size = 0x4, offset = 0, fixed_abs, tag = 'sflag constant byte address 0x0 - dummy sync flag']
  #allocation40 [shape = 's32[]', space=sflag, size = 0x4, offset = 0, fixed_abs, tag = 'sflag constant byte address 0x0 - dummy sync flag']
  #allocation41 [shape = 's32[]', space=sflag, size = 0x4, offset = 0, fixed_abs, tag = 'sflag constant byte address 0x0 - dummy sync flag']
  #allocation42 [shape = 's32[]', space=sflag, size = 0x4, offset = 0, fixed_abs, tag = 'sflag constant byte address 0x0 - dummy sync flag']
  %s0 = inlined_call_operand.hbm [shape: f32[1,32,32], index: 0, kind: input, shape index: {}]
  %s1 = inlined_call_operand.vmem [shape: f32[1,128,32], index: 1, kind: input, shape index: {}]
  %s2 = inlined_call_operand.hbm [shape: f32[1,256], index: 2, kind: input, shape index: {}]
  %s3 = inlined_call_operand.hbm [shape: f32[1,256], index: 3, kind: input, shape index: {}]
  %s4 = inlined_call_operand.hbm [shape: f32[1,256], index: 4, kind: input, shape index: {}]
  %s5 = inlined_call_operand.hbm [shape: f32[1,256], index: 5, kind: input, shape index: {}]
  %s6 = inlined_call_operand.hbm [shape: f32[1,128], index: 6, kind: input, shape index: {}]
  %s7 = inlined_call_operand.hbm [shape: f32[1,128], index: 7, kind: input, shape index: {}]
  %s8 = inlined_call_operand.hbm [shape: f32[1,128], index: 8, kind: input, shape index: {}]
  %s9 = inlined_call_operand.hbm [shape: f32[1,128], index: 9, kind: input, shape index: {}]
  %s10 = inlined_call_operand.hbm [shape: f32[32,256], index: 10, kind: input, shape index: {}]
  %s11 = inlined_call_operand.hbm [shape: f32[1024,256], index: 11, kind: input, shape index: {}]
  %s12 = inlined_call_operand.hbm [shape: f32[1024,256], index: 12, kind: input, shape index: {}]
  %s13 = inlined_call_operand.hbm [shape: f32[2048,256], index: 13, kind: input, shape index: {}]
  %s14 = inlined_call_operand.hbm [shape: f32[512,128], index: 14, kind: input, shape index: {}]
  %s15 = inlined_call_operand.hbm [shape: f32[512,128], index: 15, kind: input, shape index: {}]
  %s16 = inlined_call_operand.hbm [shape: f32[512,128], index: 16, kind: input, shape index: {}]
  %s17 = inlined_call_operand.hbm [shape: f32[128,128], index: 17, kind: input, shape index: {}]
  %s18 = inlined_call_operand.vmem [shape: f32[1,32,128], index: 18, kind: output, shape index: {}]
  %s19 = sld [smem:[#allocation0]]
  $region118: #{model_forward.1} parent=0
    _
  %s21 = ssub.s32 1, %s19
  %s22 = scalar_select 0, %s21, %s19
  $region1: #{model_forward.1} parent=0
    #allocation11 [shape = 'u8[16384]{0}', space=vmem, size = 0x4000, scoped, tag = 'input window, operand 0, single buffered']
    #allocation12 [shape = 's32[1]{0}', space=sflag, size = 0x4, scoped, tag = 'scoped memory for model_forward.1']
    #allocation13 [shape = 'u8[1024]{0}', space=vmem, size = 0x400, scoped, tag = 'input window, operand 2, single buffered']
    #allocation14 [shape = 's32[1]{0}', space=sflag, size = 0x4, scoped, tag = 'scoped memory for model_forward.1']
    #allocation15 [shape = 'u8[1024]{0}', space=vmem, size = 0x400, scoped, tag = 'input window, operand 3, single buffered']
    #allocation16 [shape = 'u8[1024]{0}', space=vmem, size = 0x400, scoped, tag = 'input window, operand 4, single buffered']
    #allocation17 [shape = 's32[1]{0}', space=sflag, size = 0x4, scoped, tag = 'scoped memory for model_forward.1']
    #allocation18 [shape = 'u8[1024]{0}', space=vmem, size = 0x400, scoped, tag = 'input window, operand 5, single buffered']
    #allocation19 [shape = 'u8[512]{0}', space=vmem, size = 0x400, scoped, tag = 'input window, operand 6, single buffered']
    #allocation20 [shape = 's32[1]{0}', space=sflag, size = 0x4, scoped, tag = 'scoped memory for model_forward.1']
    #allocation21 [shape = 'u8[512]{0}', space=vmem, size = 0x400, scoped, tag = 'input window, operand 7, single buffered']
    #allocation22 [shape = 'u8[512]{0}', space=vmem, size = 0x400, scoped, tag = 'input window, operand 8, single buffered']
    #allocation23 [shape = 's32[1]{0}', space=sflag, size = 0x4, scoped, tag = 'scoped memory for model_forward.1']
    #allocation24 [shape = 'u8[512]{0}', space=vmem, size = 0x400, scoped, tag = 'input window, operand 9, single buffered']
    %23 = vsyncpa [#allocation12], 0
    %24 = vsyncpa [#allocation14], 0
    %25 = vsyncpa [#allocation17], 0
    %26 = vsyncpa [#allocation20], 0
    %27 = vsyncpa [#allocation23], 0
    // Predicated region
    $region2: #{model_forward.1} parent=1 // pred_check
      _
    $region3: #{model_forward.1} parent=1 // pred_check_branch
      %29 = sbr.rel (0) target = $region5
    $region4: #{model_forward.1} parent=1 // pred_region
      %s31 = ssub.s32 512, 512
      %32 = vsyncadd [#allocation12], %s31
      %s33 = sshll.u32 [#allocation11], 4
      %s34 = int_to_ptr.vmem [resolvable:$true] %s33
      %39 = dma.hbm_to_vmem [thread:$0]  %s0, 512, %s34, [#allocation12], 128, 128, 8
    $region5: #{model_forward.1} parent=1 // pred_fallthru
      _
    // Predicated region
    $region6: #{model_forward.1} parent=1 // pred_check
      _
    $region7: #{model_forward.1} parent=1 // pred_check_branch
      %41 = sbr.rel (0) target = $region9
    $region8: #{model_forward.1} parent=1 // pred_region
      _
    $region9: #{model_forward.1} parent=1 // pred_fallthru
      _
    // Predicated region
    $region10: #{model_forward.1} parent=1 // pred_check
      _
    $region11: #{model_forward.1} parent=1 // pred_check_branch
      %43 = sbr.rel (0) target = $region13
    $region12: #{model_forward.1} parent=1 // pred_region
      %s45 = ssub.s32 32, 32
      %46 = vsyncadd [#allocation14], %s45
      %s48 = sshll.u32 [#allocation13], 4
      %s49 = int_to_ptr.vmem [resolvable:$true] %s48
      %51 = dma.hbm_to_vmem [thread:$0]  %s2, 32, %s49, [#allocation14]
    $region13: #{model_forward.1} parent=1 // pred_fallthru
      _
    // Predicated region
    $region14: #{model_forward.1} parent=1 // pred_check
      _
    $region15: #{model_forward.1} parent=1 // pred_check_branch
      %53 = sbr.rel (0) target = $region17
    $region16: #{model_forward.1} parent=1 // pred_region
      %s55 = ssub.s32 32, 32
      %56 = vsyncadd [#allocation14], %s55
      %s58 = sshll.u32 [#allocation15], 4
      %s59 = int_to_ptr.vmem [resolvable:$true] %s58
      %61 = dma.hbm_to_vmem [thread:$0]  %s3, 32, %s59, [#allocation14]
    $region17: #{model_forward.1} parent=1 // pred_fallthru
      _
    // Predicated region
    $region18: #{model_forward.1} parent=1 // pred_check
      _
    $region19: #{model_forward.1} parent=1 // pred_check_branch
      %63 = sbr.rel (0) target = $region21
    $region20: #{model_forward.1} parent=1 // pred_region
      %s65 = ssub.s32 32, 32
      %66 = vsyncadd [#allocation17], %s65
      %s68 = sshll.u32 [#allocation16], 4
      %s69 = int_to_ptr.vmem [resolvable:$true] %s68
      %71 = dma.hbm_to_vmem [thread:$0]  %s4, 32, %s69, [#allocation17]
    $region21: #{model_forward.1} parent=1 // pred_fallthru
      _
    // Predicated region
    $region22: #{model_forward.1} parent=1 // pred_check
      _
    $region23: #{model_forward.1} parent=1 // pred_check_branch
      %73 = sbr.rel (0) target = $region25
    $region24: #{model_forward.1} parent=1 // pred_region
      %s75 = ssub.s32 32, 32
      %76 = vsyncadd [#allocation17], %s75
      %s78 = sshll.u32 [#allocation18], 4
      %s79 = int_to_ptr.vmem [resolvable:$true] %s78
      %81 = dma.hbm_to_vmem [thread:$0]  %s5, 32, %s79, [#allocation17]
    $region25: #{model_forward.1} parent=1 // pred_fallthru
      _
    // Predicated region
    $region26: #{model_forward.1} parent=1 // pred_check
      _
    $region27: #{model_forward.1} parent=1 // pred_check_branch
      %83 = sbr.rel (0) target = $region29
    $region28: #{model_forward.1} parent=1 // pred_region
      %s85 = ssub.s32 16, 16
      %86 = vsyncadd [#allocation20], %s85
      %s88 = sshll.u32 [#allocation19], 4
      %s89 = int_to_ptr.vmem [resolvable:$true] %s88
      %91 = dma.hbm_to_vmem [thread:$0]  %s6, 16, %s89, [#allocation20]
    $region29: #{model_forward.1} parent=1 // pred_fallthru
      _
    // Predicated region
    $region30: #{model_forward.1} parent=1 // pred_check
      _
    $region31: #{model_forward.1} parent=1 // pred_check_branch
      %93 = sbr.rel (0) target = $region33
    $region32: #{model_forward.1} parent=1 // pred_region
      %s95 = ssub.s32 16, 16
      %96 = vsyncadd [#allocation20], %s95
      %s98 = sshll.u32 [#allocation21], 4
      %s99 = int_to_ptr.vmem [resolvable:$true] %s98
      %101 = dma.hbm_to_vmem [thread:$0]  %s7, 16, %s99, [#allocation20]
    $region33: #{model_forward.1} parent=1 // pred_fallthru
      _
    // Predicated region
    $region34: #{model_forward.1} parent=1 // pred_check
      _
    $region35: #{model_forward.1} parent=1 // pred_check_branch
      %103 = sbr.rel (0) target = $region37
    $region36: #{model_forward.1} parent=1 // pred_region
      %s105 = ssub.s32 16, 16
      %106 = vsyncadd [#allocation23], %s105
      %s108 = sshll.u32 [#allocation22], 4
      %s109 = int_to_ptr.vmem [resolvable:$true] %s108
      %111 = dma.hbm_to_vmem [thread:$0]  %s8, 16, %s109, [#allocation23]
    $region37: #{model_forward.1} parent=1 // pred_fallthru
      _
    // Predicated region
    $region38: #{model_forward.1} parent=1 // pred_check
      _
    $region39: #{model_forward.1} parent=1 // pred_check_branch
      %113 = sbr.rel (0) target = $region41
    $region40: #{model_forward.1} parent=1 // pred_region
      %s115 = ssub.s32 16, 16
      %116 = vsyncadd [#allocation23], %s115
      %s118 = sshll.u32 [#allocation24], 4
      %s119 = int_to_ptr.vmem [resolvable:$true] %s118
      %121 = dma.hbm_to_vmem [thread:$0]  %s9, 16, %s119, [#allocation23]
    $region41: #{model_forward.1} parent=1 // pred_fallthru
      _
    // Predicated region
    $region42: #{model_forward.1} parent=1 // pred_check
      _
    $region43: #{model_forward.1} parent=1 // pred_check_branch
      %123 = sbr.rel (0) target = $region45
    $region44: #{model_forward.1} parent=1 // pred_region
      %124 = dma.done [#allocation12], 512
    $region45: #{model_forward.1} parent=1 // pred_fallthru
      _
    // Predicated region
    $region46: #{model_forward.1} parent=1 // pred_check
      _
    $region47: #{model_forward.1} parent=1 // pred_check_branch
      %126 = sbr.rel (0) target = $region49
    $region48: #{model_forward.1} parent=1 // pred_region
      %127 = dma.done [#allocation14], 32
    $region49: #{model_forward.1} parent=1 // pred_fallthru
      _
    // Predicated region
    $region50: #{model_forward.1} parent=1 // pred_check
      _
    $region51: #{model_forward.1} parent=1 // pred_check_branch
      %129 = sbr.rel (0) target = $region53
    $region52: #{model_forward.1} parent=1 // pred_region
      %130 = dma.done [#allocation14], 32
    $region53: #{model_forward.1} parent=1 // pred_fallthru
      _
    // Predicated region
    $region54: #{model_forward.1} parent=1 // pred_check
      _
    $region55: #{model_forward.1} parent=1 // pred_check_branch
      %132 = sbr.rel (0) target = $region57
    $region56: #{model_forward.1} parent=1 // pred_region
      %133 = dma.done [#allocation17], 32
    $region57: #{model_forward.1} parent=1 // pred_fallthru
      _
    // Predicated region
    $region58: #{model_forward.1} parent=1 // pred_check
      _
    $region59: #{model_forward.1} parent=1 // pred_check_branch
      %135 = sbr.rel (0) target = $region61
    $region60: #{model_forward.1} parent=1 // pred_region
      %136 = dma.done [#allocation17], 32
    $region61: #{model_forward.1} parent=1 // pred_fallthru
      _
    // Predicated region
    $region62: #{model_forward.1} parent=1 // pred_check
      _
    $region63: #{model_forward.1} parent=1 // pred_check_branch
      %138 = sbr.rel (0) target = $region65
    $region64: #{model_forward.1} parent=1 // pred_region
      %139 = dma.done [#allocation20], 16
    $region65: #{model_forward.1} parent=1 // pred_fallthru
      _
    // Predicated region
    $region66: #{model_forward.1} parent=1 // pred_check
      _
    $region67: #{model_forward.1} parent=1 // pred_check_branch
      %141 = sbr.rel (0) target = $region69
    $region68: #{model_forward.1} parent=1 // pred_region
      %142 = dma.done [#allocation20], 16
    $region69: #{model_forward.1} parent=1 // pred_fallthru
      _
    // Predicated region
    $region70: #{model_forward.1} parent=1 // pred_check
      _
    $region71: #{model_forward.1} parent=1 // pred_check_branch
      %144 = sbr.rel (0) target = $region73
    $region72: #{model_forward.1} parent=1 // pred_region
      %145 = dma.done [#allocation23], 16
    $region73: #{model_forward.1} parent=1 // pred_fallthru
      _
    // Predicated region
    $region74: #{model_forward.1} parent=1 // pred_check
      _
    $region75: #{model_forward.1} parent=1 // pred_check_branch
      %147 = sbr.rel (0) target = $region77
    $region76: #{model_forward.1} parent=1 // pred_region
      %148 = dma.done [#allocation23], 16
    $region77: #{model_forward.1} parent=1 // pred_fallthru
      _
    // Predicated region
    $region78: #{model_forward.1} parent=1 // pred_check
      _
    $region79: #{model_forward.1} parent=1 // pred_check_branch
      %150 = sbr.rel target = $region81
    $region80: #{model_forward.1} parent=1 // pred_region
      %151 = sst [smem:[#allocation27]] [#allocation26]
      %152 = sst [smem:[#allocation28]] [#allocation25]
    $region81: #{model_forward.1} parent=1 // pred_fallthru
      _
    %154 = shalt.err (0)
    %s156 = sshll.u32 [#allocation2], 4
    %s157 = int_to_ptr.vmem [resolvable:$true] %s156
    %159 = dma.hbm_to_vmem [thread:$0]  %s10, 1024, %s157, [#allocation10]
    %s160 = scalar_lea.sflag [#allocation10], 1
    // Predicated region
    $region82: #{model_forward.1} parent=1 // pred_check
      _
    $region83: #{model_forward.1} parent=1 // pred_check_branch
      %162 = sbr.rel target = $region85
    $region84: #{model_forward.1} parent=1 // pred_region
      %163 = sst [smem:[#allocation27]] [#allocation30]
      %164 = sst [smem:[#allocation28]] [#allocation29]
    $region85: #{model_forward.1} parent=1 // pred_fallthru
      _
    %166 = shalt.err (0)
    %s168 = sshll.u32 [#allocation3], 4
    %s169 = int_to_ptr.vmem [resolvable:$true] %s168
    %171 = dma.hbm_to_vmem [thread:$0]  %s11, 32768, %s169, %s160
    %s172 = scalar_lea.sflag [#allocation10], 2
    // Predicated region
    $region86: #{model_forward.1} parent=1 // pred_check
      _
    $region87: #{model_forward.1} parent=1 // pred_check_branch
      %174 = sbr.rel target = $region89
    $region88: #{model_forward.1} parent=1 // pred_region
      %175 = sst [smem:[#allocation27]] [#allocation32]
      %176 = sst [smem:[#allocation28]] [#allocation31]
    $region89: #{model_forward.1} parent=1 // pred_fallthru
      _
    %178 = shalt.err (0)
    %s180 = sshll.u32 [#allocation4], 4
    %s181 = int_to_ptr.vmem [resolvable:$true] %s180
    %183 = dma.hbm_to_vmem [thread:$0]  %s12, 32768, %s181, %s172
    %s184 = scalar_lea.sflag [#allocation10], 3
    // Predicated region
    $region90: #{model_forward.1} parent=1 // pred_check
      _
    $region91: #{model_forward.1} parent=1 // pred_check_branch
      %186 = sbr.rel target = $region93
    $region92: #{model_forward.1} parent=1 // pred_region
      %187 = sst [smem:[#allocation27]] [#allocation34]
      %188 = sst [smem:[#allocation28]] [#allocation33]
    $region93: #{model_forward.1} parent=1 // pred_fallthru
      _
    %190 = shalt.err (0)
    %s192 = sshll.u32 [#allocation5], 4
    %s193 = int_to_ptr.vmem [resolvable:$true] %s192
    %195 = dma.hbm_to_vmem [thread:$0]  %s13, 65536, %s193, %s184
    %s196 = scalar_lea.sflag [#allocation10], 4
    // Predicated region
    $region94: #{model_forward.1} parent=1 // pred_check
      _
    $region95: #{model_forward.1} parent=1 // pred_check_branch
      %198 = sbr.rel target = $region97
    $region96: #{model_forward.1} parent=1 // pred_region
      %199 = sst [smem:[#allocation27]] [#allocation36]
      %200 = sst [smem:[#allocation28]] [#allocation35]
    $region97: #{model_forward.1} parent=1 // pred_fallthru
      _
    %202 = shalt.err (0)
    %s204 = sshll.u32 [#allocation6], 4
    %s205 = int_to_ptr.vmem [resolvable:$true] %s204
    %207 = dma.hbm_to_vmem [thread:$0]  %s14, 8192, %s205, %s196
    %s208 = scalar_lea.sflag [#allocation10], 5
    // Predicated region
    $region98: #{model_forward.1} parent=1 // pred_check
      _
    $region99: #{model_forward.1} parent=1 // pred_check_branch
      %210 = sbr.rel target = $region101
    $region100: #{model_forward.1} parent=1 // pred_region
      %211 = sst [smem:[#allocation27]] [#allocation38]
      %212 = sst [smem:[#allocation28]] [#allocation37]
    $region101: #{model_forward.1} parent=1 // pred_fallthru
      _
    %214 = shalt.err (0)
    %s216 = sshll.u32 [#allocation7], 4
    %s217 = int_to_ptr.vmem [resolvable:$true] %s216
    %219 = dma.hbm_to_vmem [thread:$0]  %s15, 8192, %s217, %s208
    %s220 = scalar_lea.sflag [#allocation10], 6
    // Predicated region
    $region102: #{model_forward.1} parent=1 // pred_check
      _
    $region103: #{model_forward.1} parent=1 // pred_check_branch
      %222 = sbr.rel target = $region105
    $region104: #{model_forward.1} parent=1 // pred_region
      %223 = sst [smem:[#allocation27]] [#allocation40]
      %224 = sst [smem:[#allocation28]] [#allocation39]
    $region105: #{model_forward.1} parent=1 // pred_fallthru
      _
    %226 = shalt.err (0)
    %s228 = sshll.u32 [#allocation8], 4
    %s229 = int_to_ptr.vmem [resolvable:$true] %s228
    %231 = dma.hbm_to_vmem [thread:$0]  %s16, 8192, %s229, %s220
    %s232 = scalar_lea.sflag [#allocation10], 7
    // Predicated region
    $region106: #{model_forward.1} parent=1 // pred_check
      _
    $region107: #{model_forward.1} parent=1 // pred_check_branch
      %234 = sbr.rel target = $region109
    $region108: #{model_forward.1} parent=1 // pred_region
      %235 = sst [smem:[#allocation27]] [#allocation42]
      %236 = sst [smem:[#allocation28]] [#allocation41]
    $region109: #{model_forward.1} parent=1 // pred_fallthru
      _
    %238 = shalt.err (0)
    %s240 = sshll.u32 [#allocation9], 4
    %s241 = int_to_ptr.vmem [resolvable:$true] %s240
    %243 = dma.hbm_to_vmem [thread:$0]  %s17, 2048, %s241, %s232
    %v244 = vld [vmem:[#allocation11] sm:$0xff]
    %v245 = vld [vmem:[#allocation11 + $0x8] sm:$0xff]
    %v246 = vld [vmem:[#allocation11 + $0x10] sm:$0xff]
    %v247 = vld [vmem:[#allocation11 + $0x18] sm:$0xff]
    %v248 = vld [vmem:[%s1] sm:$0xff]
    %v249 = vld [vmem:[%s1 + $0x8] sm:$0xff]
    %v250 = vld [vmem:[%s1 + $0x10] sm:$0xff]
    %v251 = vld [vmem:[%s1 + $0x18] sm:$0xff]
    %v252 = vld [vmem:[%s1 + $0x20] sm:$0xff]
    %v253 = vld [vmem:[%s1 + $0x28] sm:$0xff]
    %v254 = vld [vmem:[%s1 + $0x30] sm:$0xff]
    %v255 = vld [vmem:[%s1 + $0x38] sm:$0xff]
    %v256 = vld [vmem:[%s1 + $0x40] sm:$0xff]
    %v257 = vld [vmem:[%s1 + $0x48] sm:$0xff]
    %v258 = vld [vmem:[%s1 + $0x50] sm:$0xff]
    %v259 = vld [vmem:[%s1 + $0x58] sm:$0xff]
    %v260 = vld [vmem:[%s1 + $0x60] sm:$0xff]
    %v261 = vld [vmem:[%s1 + $0x68] sm:$0xff]
    %v262 = vld [vmem:[%s1 + $0x70] sm:$0xff]
    %v263 = vld [vmem:[%s1 + $0x78] sm:$0xff]
    %s264 = smul.u32 8, 4
    %s265 = smul.u32 %s264, 2
    %s266 = sshll.u32 %s265, 4
    %267 = dma.done [#allocation10], %s266
    %v268 = vld [vmem:[#allocation2] sm:$0xff]
    %v269 = vld [vmem:[#allocation2 + $0x8] sm:$0xff]
    %v270 = vld [vmem:[#allocation2 + $0x10] sm:$0xff]
    %v271 = vld [vmem:[#allocation2 + $0x18] sm:$0xff]
    %v272 = vld [vmem:[#allocation2 + $0x20] sm:$0xff]
    %v273 = vld [vmem:[#allocation2 + $0x28] sm:$0xff]
    %v274 = vld [vmem:[#allocation2 + $0x30] sm:$0xff]
    %v275 = vld [vmem:[#allocation2 + $0x38] sm:$0xff]
    %v276 = vld [vmem:[#allocation13] sm:$0x3]
    %v278 = vlaneseq
    %v279 = vshrl.u32 %v278, 7
    %v280 = vsub.s32 0, %v279
    %v281 = vrot.slane %v276, %v280
    %v282 = vlaneseq
    %v283 = vshrl.u32 %v282, 7
    %v284 = vsub.s32 1, %v283
    %v285 = vrot.slane %v276, %v284
    %vm288 = vcmask 261120
    %v290 = vsel %vm288, %v244, 0
    %v293 = vsel %vm288, %v245, 0
    %v296 = vsel %vm288, %v246, 0
    %v299 = vsel %vm288, %v247, 0
    %301 = vmatprep.subr.mxu0 %v269
    %302 = vmatpush1.msra.mxu0 %v268
    %303 = vmatprep.subr.mxu0 %v271
    %304 = vmatpush1.msra.mxu0 %v270
    %305 = vmatprep.subr.mxu0 %v273
    %306 = vmatpush1.msra.mxu0 %v272
    %307 = vmatprep.subr.mxu0 %v275
    %308 = vmatpush1.msra.mxu0 %v274
    %309 = vmatprep.subr.mxu0 0.0
    %310 = vmatpush1.msra.mxu0 0.0
    %311 = vmatprep.subr.mxu0 0.0
    %312 = vmatpush1.msra.mxu0 0.0
    %313 = vmatprep.subr.mxu0 0.0
    %314 = vmatpush1.msra.mxu0 0.0
    %315 = vmatprep.subr.mxu0 0.0
    %316 = vmatpush1.msra.mxu0 0.0
    %317 = vmatprep.subr.mxu0 0.0
    %318 = vmatpush1.msra.mxu0 0.0
    %319 = vmatprep.subr.mxu0 0.0
    %320 = vmatpush1.msra.mxu0 0.0
    %321 = vmatprep.subr.mxu0 0.0
    %322 = vmatpush1.msra.mxu0 0.0
    %323 = vmatprep.subr.mxu0 0.0
    %324 = vmatpush1.msra.mxu0 0.0
    %325 = vmatprep.subr.mxu0 0.0
    %326 = vmatpush1.msra.mxu0 0.0
    %327 = vmatprep.subr.mxu0 0.0
    %328 = vmatpush1.msra.mxu0 0.0
    %329 = vmatprep.subr.mxu0 0.0
    %330 = vmatpush1.msra.mxu0 0.0
    %331 = vmatprep.subr.mxu0 0.0
    %332 = vmatpush1.msra.mxu0 0.0
    %333 = vmatprep.subr.mxu0 0.0
    %334 = vmatpush1.msra.mxu0 0.0
    %335 = vmatprep.subr.mxu0 0.0
    %336 = vmatpush1.msra.mxu0 0.0
    %337 = vmatprep.subr.mxu0 0.0
    %338 = vmatpush1.msra.mxu0 0.0
    %339 = vmatprep.subr.mxu0 0.0
    %340 = vmatpush1.msra.mxu0 0.0
    %341 = vmatprep.subr.mxu0 0.0
    %342 = vmatpush1.msra.mxu0 0.0
    %343 = vmatprep.subr.mxu0 0.0
    %344 = vmatpush1.msra.mxu0 0.0
    %345 = vmatprep.subr.mxu0 0.0
    %346 = vmatpush1.msra.mxu0 0.0
    %347 = vmatprep.subr.mxu0 0.0
    %348 = vmatpush1.msra.mxu0 0.0
    %349 = vmatprep.subr.mxu0 0.0
    %350 = vmatpush1.msra.mxu0 0.0
    %351 = vmatprep.subr.mxu0 0.0
    %352 = vmatpush1.msra.mxu0 0.0
    %353 = vmatprep.subr.mxu0 0.0
    %354 = vmatpush1.msra.mxu0 0.0
    %355 = vmatprep.subr.mxu0 0.0
    %356 = vmatpush1.msra.mxu0 0.0
    %357 = vmatprep.subr.mxu0 0.0
    %358 = vmatpush1.msra.mxu0 0.0
    %359 = vmatprep.subr.mxu0 0.0
    %360 = vmatpush1.msra.mxu0 0.0
    %361 = vmatprep.subr.mxu0 0.0
    %362 = vmatpush1.msra.mxu0 0.0
    %363 = vmatprep.subr.mxu0 0.0
    %364 = vmatpush1.msra.mxu0 0.0
    %365 = vmatprep.mubr.f32.mxu0 0.0
    %366 = vmatmul.mubr.f32.gmra.mrb[0].mxu0 %v290
    %v367 = vpop.f32.mrb[0].mxu0
    %v368 = vadd.f32 %v281, %v367
    %v369 = vpop.f32.mrb[0].mxu0
    %v370 = vadd.f32 %v285, %v369
    %371 = vmatprep.mubr.f32.mxu0 0.0
    %372 = vmatmul.mubr.f32.gmra.mrb[0].mxu0 %v293
    %v373 = vpop.f32.mrb[0].mxu0
    %v374 = vadd.f32 %v281, %v373
    %v375 = vpop.f32.mrb[0].mxu0
    %v376 = vadd.f32 %v285, %v375
    %377 = vmatprep.mubr.f32.mxu0 0.0
    %378 = vmatmul.mubr.f32.gmra.mrb[0].mxu0 %v296
    %v379 = vpop.f32.mrb[0].mxu0
    %v380 = vadd.f32 %v281, %v379
    %v381 = vpop.f32.mrb[0].mxu0
    %v382 = vadd.f32 %v285, %v381
    %383 = vmatprep.mubr.f32.mxu0 0.0
    %384 = vmatmul.mubr.f32.gmra.mrb[0].mxu0 %v299
    %v385 = vpop.f32.mrb[0].mxu0
    %v386 = vadd.f32 %v281, %v385
    %v387 = vpop.f32.mrb[0].mxu0
    %v388 = vadd.f32 %v285, %v387
    %389 = vdwg.mxu0
    %v390 = vmax.f32 %v368, 0.0
    %v391 = vmax.f32 %v370, 0.0
    %v392 = vmax.f32 %v374, 0.0
    %v393 = vmax.f32 %v376, 0.0
    %v394 = vmax.f32 %v380, 0.0
    %v395 = vmax.f32 %v382, 0.0
    %v396 = vmax.f32 %v386, 0.0
    %v397 = vmax.f32 %v388, 0.0
    %v399 = vsel %vm288, %v248, 0
    %v402 = vsel %vm288, %v249, 0
    %v405 = vsel %vm288, %v250, 0
    %v408 = vsel %vm288, %v251, 0
    %v411 = vsel %vm288, %v252, 0
    %v414 = vsel %vm288, %v253, 0
    %v417 = vsel %vm288, %v254, 0
    %v420 = vsel %vm288, %v255, 0
    %v423 = vsel %vm288, %v256, 0
    %v426 = vsel %vm288, %v257, 0
    %v429 = vsel %vm288, %v258, 0
    %v432 = vsel %vm288, %v259, 0
    %v435 = vsel %vm288, %v260, 0
    %v438 = vsel %vm288, %v261, 0
    %v441 = vsel %vm288, %v262, 0
    %v444 = vsel %vm288, %v263, 0
    %446 = vmatprep.subr.mxu0 %v391
    %447 = vmatpush1.msra.mxu0 %v390
    %448 = vmatprep.subr.mxu0 %v393
    %449 = vmatpush1.msra.mxu0 %v392
    %450 = vmatprep.subr.mxu0 %v395
    %451 = vmatpush1.msra.mxu0 %v394
    %452 = vmatprep.subr.mxu0 %v397
    %453 = vmatpush1.msra.mxu0 %v396
    %454 = vmatprep.subr.mxu0 0.0
    %455 = vmatpush1.msra.mxu0 0.0
    %456 = vmatprep.subr.mxu0 0.0
    %457 = vmatpush1.msra.mxu0 0.0
    %458 = vmatprep.subr.mxu0 0.0
    %459 = vmatpush1.msra.mxu0 0.0
    %460 = vmatprep.subr.mxu0 0.0
    %461 = vmatpush1.msra.mxu0 0.0
    %462 = vmatprep.subr.mxu0 0.0
    %463 = vmatpush1.msra.mxu0 0.0
    %464 = vmatprep.subr.mxu0 0.0
    %465 = vmatpush1.msra.mxu0 0.0
    %466 = vmatprep.subr.mxu0 0.0
    %467 = vmatpush1.msra.mxu0 0.0
    %468 = vmatprep.subr.mxu0 0.0
    %469 = vmatpush1.msra.mxu0 0.0
    %470 = vmatprep.subr.mxu0 0.0
    %471 = vmatpush1.msra.mxu0 0.0
    %472 = vmatprep.subr.mxu0 0.0
    %473 = vmatpush1.msra.mxu0 0.0
    %474 = vmatprep.subr.mxu0 0.0
    %475 = vmatpush1.msra.mxu0 0.0
    %476 = vmatprep.subr.mxu0 0.0
    %477 = vmatpush1.msra.mxu0 0.0
    %478 = vmatprep.subr.mxu0 0.0
    %479 = vmatpush1.msra.mxu0 0.0
    %480 = vmatprep.subr.mxu0 0.0
    %481 = vmatpush1.msra.mxu0 0.0
    %482 = vmatprep.subr.mxu0 0.0
    %483 = vmatpush1.msra.mxu0 0.0
    %484 = vmatprep.subr.mxu0 0.0
    %485 = vmatpush1.msra.mxu0 0.0
    %486 = vmatprep.subr.mxu0 0.0
    %487 = vmatpush1.msra.mxu0 0.0
    %488 = vmatprep.subr.mxu0 0.0
    %489 = vmatpush1.msra.mxu0 0.0
    %490 = vmatprep.subr.mxu0 0.0
    %491 = vmatpush1.msra.mxu0 0.0
    %492 = vmatprep.subr.mxu0 0.0
    %493 = vmatpush1.msra.mxu0 0.0
    %494 = vmatprep.subr.mxu0 0.0
    %495 = vmatpush1.msra.mxu0 0.0
    %496 = vmatprep.subr.mxu0 0.0
    %497 = vmatpush1.msra.mxu0 0.0
    %498 = vmatprep.subr.mxu0 0.0
    %499 = vmatpush1.msra.mxu0 0.0
    %500 = vmatprep.subr.mxu0 0.0
    %501 = vmatpush1.msra.mxu0 0.0
    %502 = vmatprep.subr.mxu0 0.0
    %503 = vmatpush1.msra.mxu0 0.0
    %504 = vmatprep.subr.mxu0 0.0
    %505 = vmatpush1.msra.mxu0 0.0
    %506 = vmatprep.subr.mxu0 0.0
    %507 = vmatpush1.msra.mxu0 0.0
    %508 = vmatprep.subr.mxu0 0.0
    %509 = vmatpush1.msra.mxu0 0.0
    %510 = vmatprep.mubr.f32.mxu0 0.0
    %511 = vmatmul.mubr.f32.gmra.mrb[0].mxu0 %v399
    %v512 = vpop.f32.mrb[0].mxu0
    %v513 = vadd.f32 0.0, %v512
    %v514 = vpop.f32.mrb[0].mxu0
    %v515 = vadd.f32 0.0, %v514
    %516 = vmatprep.mubr.f32.mxu0 0.0
    %517 = vmatmul.mubr.f32.gmra.mrb[0].mxu0 %v402
    %v518 = vpop.f32.mrb[0].mxu0
    %v519 = vadd.f32 0.0, %v518
    %v520 = vpop.f32.mrb[0].mxu0
    %v521 = vadd.f32 0.0, %v520
    %522 = vmatprep.mubr.f32.mxu0 0.0
    %523 = vmatmul.mubr.f32.gmra.mrb[0].mxu0 %v405
    %v524 = vpop.f32.mrb[0].mxu0
    %v525 = vadd.f32 0.0, %v524
    %v526 = vpop.f32.mrb[0].mxu0
    %v527 = vadd.f32 0.0, %v526
    %528 = vmatprep.mubr.f32.mxu0 0.0
    %529 = vmatmul.mubr.f32.gmra.mrb[0].mxu0 %v408
    %v530 = vpop.f32.mrb[0].mxu0
    %v531 = vadd.f32 0.0, %v530
    %v532 = vpop.f32.mrb[0].mxu0
    %v533 = vadd.f32 0.0, %v532
    %534 = vmatprep.mubr.f32.mxu0 0.0
    %535 = vmatmul.mubr.f32.gmra.mrb[0].mxu0 %v411
    %v536 = vpop.f32.mrb[0].mxu0
    %v537 = vadd.f32 0.0, %v536
    %v538 = vpop.f32.mrb[0].mxu0
    %v539 = vadd.f32 0.0, %v538
    %540 = vmatprep.mubr.f32.mxu0 0.0
    %541 = vmatmul.mubr.f32.gmra.mrb[0].mxu0 %v414
    %v542 = vpop.f32.mrb[0].mxu0
    %v543 = vadd.f32 0.0, %v542
    %v544 = vpop.f32.mrb[0].mxu0
    %v545 = vadd.f32 0.0, %v544
    %546 = vmatprep.mubr.f32.mxu0 0.0
    %547 = vmatmul.mubr.f32.gmra.mrb[0].mxu0 %v417
    %v548 = vpop.f32.mrb[0].mxu0
    %v549 = vadd.f32 0.0, %v548
    %v550 = vpop.f32.mrb[0].mxu0
    %v551 = vadd.f32 0.0, %v550
    %552 = vmatprep.mubr.f32.mxu0 0.0
    %553 = vmatmul.mubr.f32.gmra.mrb[0].mxu0 %v420
    %v554 = vpop.f32.mrb[0].mxu0
    %v555 = vadd.f32 0.0, %v554
    %v556 = vpop.f32.mrb[0].mxu0
    %v557 = vadd.f32 0.0, %v556
    %558 = vmatprep.mubr.f32.mxu0 0.0
    %559 = vmatmul.mubr.f32.gmra.mrb[0].mxu0 %v423
    %v560 = vpop.f32.mrb[0].mxu0
    %v561 = vadd.f32 0.0, %v560
    %v562 = vpop.f32.mrb[0].mxu0
    %v563 = vadd.f32 0.0, %v562
    %564 = vmatprep.mubr.f32.mxu0 0.0
    %565 = vmatmul.mubr.f32.gmra.mrb[0].mxu0 %v426
    %v566 = vpop.f32.mrb[0].mxu0
    %v567 = vadd.f32 0.0, %v566
    %v568 = vpop.f32.mrb[0].mxu0
    %v569 = vadd.f32 0.0, %v568
    %570 = vmatprep.mubr.f32.mxu0 0.0
    %571 = vmatmul.mubr.f32.gmra.mrb[0].mxu0 %v429
    %v572 = vpop.f32.mrb[0].mxu0
    %v573 = vadd.f32 0.0, %v572
    %v574 = vpop.f32.mrb[0].mxu0
    %v575 = vadd.f32 0.0, %v574
    %576 = vmatprep.mubr.f32.mxu0 0.0
    %577 = vmatmul.mubr.f32.gmra.mrb[0].mxu0 %v432
    %v578 = vpop.f32.mrb[0].mxu0
    %v579 = vadd.f32 0.0, %v578
    %v580 = vpop.f32.mrb[0].mxu0
    %v581 = vadd.f32 0.0, %v580
    %582 = vmatprep.mubr.f32.mxu0 0.0
    %583 = vmatmul.mubr.f32.gmra.mrb[0].mxu0 %v435
    %v584 = vpop.f32.mrb[0].mxu0
    %v585 = vadd.f32 0.0, %v584
    %v586 = vpop.f32.mrb[0].mxu0
    %v587 = vadd.f32 0.0, %v586
    %588 = vmatprep.mubr.f32.mxu0 0.0
    %589 = vmatmul.mubr.f32.gmra.mrb[0].mxu0 %v438
    %v590 = vpop.f32.mrb[0].mxu0
    %v591 = vadd.f32 0.0, %v590
    %v592 = vpop.f32.mrb[0].mxu0
    %v593 = vadd.f32 0.0, %v592
    %594 = vmatprep.mubr.f32.mxu0 0.0
    %595 = vmatmul.mubr.f32.gmra.mrb[0].mxu0 %v441
    %v596 = vpop.f32.mrb[0].mxu0
    %v597 = vadd.f32 0.0, %v596
    %v598 = vpop.f32.mrb[0].mxu0
    %v599 = vadd.f32 0.0, %v598
    %600 = vmatprep.mubr.f32.mxu0 0.0
    %601 = vmatmul.mubr.f32.gmra.mrb[0].mxu0 %v444
    %v602 = vpop.f32.mrb[0].mxu0
    %v603 = vadd.f32 0.0, %v602
    %v604 = vpop.f32.mrb[0].mxu0
    %v605 = vadd.f32 0.0, %v604
    %606 = vdwg.mxu0
    %s607 = smul.u32 8, 128
    %s608 = smul.u32 %s607, 2
    %s609 = sshll.u32 %s608, 4
    %610 = dma.done %s160, %s609
    %v611 = vld [vmem:[#allocation3] sm:$0xff]
    %v612 = vld [vmem:[#allocation3 + $0x8] sm:$0xff]
    %v613 = vld [vmem:[#allocation3 + $0x10] sm:$0xff]
    %v614 = vld [vmem:[#allocation3 + $0x18] sm:$0xff]
    %v615 = vld [vmem:[#allocation3 + $0x20] sm:$0xff]
    %v616 = vld [vmem:[#allocation3 + $0x28] sm:$0xff]
    %v617 = vld [vmem:[#allocation3 + $0x30] sm:$0xff]
    %v618 = vld [vmem:[#allocation3 + $0x38] sm:$0xff]
    %v619 = vld [vmem:[#allocation3 + $0x40] sm:$0xff]
    %v620 = vld [vmem:[#allocation3 + $0x48] sm:$0xff]
    %v621 = vld [vmem:[#allocation3 + $0x50] sm:$0xff]
    %v622 = vld [vmem:[#allocation3 + $0x58] sm:$0xff]
    %v623 = vld [vmem:[#allocation3 + $0x60] sm:$0xff]
    %v624 = vld [vmem:[#allocation3 + $0x68] sm:$0xff]
    %v625 = vld [vmem:[#allocation3 + $0x70] sm:$0xff]
    %v626 = vld [vmem:[#allocation3 + $0x78] sm:$0xff]
    %v627 = vld [vmem:[#allocation3 + $0x80] sm:$0xff]
    %v628 = vld [vmem:[#allocation3 + $0x88] sm:$0xff]
    %v629 = vld [vmem:[#allocation3 + $0x90] sm:$0xff]
    %v630 = vld [vmem:[#allocation3 + $0x98] sm:$0xff]
    %v631 = vld [vmem:[#allocation3 + $0xa0] sm:$0xff]
    %v632 = vld [vmem:[#allocation3 + $0xa8] sm:$0xff]
    %v633 = vld [vmem:[#allocation3 + $0xb0] sm:$0xff]
    %v634 = vld [vmem:[#allocation3 + $0xb8] sm:$0xff]
    %v635 = vld [vmem:[#allocation3 + $0xc0] sm:$0xff]
    %v636 = vld [vmem:[#allocation3 + $0xc8] sm:$0xff]
    %v637 = vld [vmem:[#allocation3 + $0xd0] sm:$0xff]
    %v638 = vld [vmem:[#allocation3 + $0xd8] sm:$0xff]
    %v639 = vld [vmem:[#allocation3 + $0xe0] sm:$0xff]
    %v640 = vld [vmem:[#allocation3 + $0xe8] sm:$0xff]
    %v641 = vld [vmem:[#allocation3 + $0xf0] sm:$0xff]
    %v642 = vld [vmem:[#allocation3 + $0xf8] sm:$0xff]
    %v643 = vld [vmem:[#allocation3 + $0x100] sm:$0xff]
    %v644 = vld [vmem:[#allocation3 + $0x108] sm:$0xff]
    %v645 = vld [vmem:[#allocation3 + $0x110] sm:$0xff]
    %v646 = vld [vmem:[#allocation3 + $0x118] sm:$0xff]
    %v647 = vld [vmem:[#allocation3 + $0x120] sm:$0xff]
    %v648 = vld [vmem:[#allocation3 + $0x128] sm:$0xff]
    %v649 = vld [vmem:[#allocation3 + $0x130] sm:$0xff]
    %v650 = vld [vmem:[#allocation3 + $0x138] sm:$0xff]
    %v651 = vld [vmem:[#allocation3 + $0x140] sm:$0xff]
    %v652 = vld [vmem:[#allocation3 + $0x148] sm:$0xff]
    %v653 = vld [vmem:[#allocation3 + $0x150] sm:$0xff]
    %v654 = vld [vmem:[#allocation3 + $0x158] sm:$0xff]
    %v655 = vld [vmem:[#allocation3 + $0x160] sm:$0xff]
    %v656 = vld [vmem:[#allocation3 + $0x168] sm:$0xff]
    %v657 = vld [vmem:[#allocation3 + $0x170] sm:$0xff]
    %v658 = vld [vmem:[#allocation3 + $0x178] sm:$0xff]
    %v659 = vld [vmem:[#allocation3 + $0x180] sm:$0xff]
    %v660 = vld [vmem:[#allocation3 + $0x188] sm:$0xff]
    %v661 = vld [vmem:[#allocation3 + $0x190] sm:$0xff]
    %v662 = vld [vmem:[#allocation3 + $0x198] sm:$0xff]
    %v663 = vld [vmem:[#allocation3 + $0x1a0] sm:$0xff]
    %v664 = vld [vmem:[#allocation3 + $0x1a8] sm:$0xff]
    %v665 = vld [vmem:[#allocation3 + $0x1b0] sm:$0xff]
    %v666 = vld [vmem:[#allocation3 + $0x1b8] sm:$0xff]
    %v667 = vld [vmem:[#allocation3 + $0x1c0] sm:$0xff]
    %v668 = vld [vmem:[#allocation3 + $0x1c8] sm:$0xff]
    %v669 = vld [vmem:[#allocation3 + $0x1d0] sm:$0xff]
    %v670 = vld [vmem:[#allocation3 + $0x1d8] sm:$0xff]
    %v671 = vld [vmem:[#allocation3 + $0x1e0] sm:$0xff]
    %v672 = vld [vmem:[#allocation3 + $0x1e8] sm:$0xff]
    %v673 = vld [vmem:[#allocation3 + $0x1f0] sm:$0xff]
    %v674 = vld [vmem:[#allocation3 + $0x1f8] sm:$0xff]
    %v675 = vld [vmem:[#allocation3 + $0x200] sm:$0xff]
    %v676 = vld [vmem:[#allocation3 + $0x208] sm:$0xff]
    %v677 = vld [vmem:[#allocation3 + $0x210] sm:$0xff]
    %v678 = vld [vmem:[#allocation3 + $0x218] sm:$0xff]
    %v679 = vld [vmem:[#allocation3 + $0x220] sm:$0xff]
    %v680 = vld [vmem:[#allocation3 + $0x228] sm:$0xff]
    %v681 = vld [vmem:[#allocation3 + $0x230] sm:$0xff]
    %v682 = vld [vmem:[#allocation3 + $0x238] sm:$0xff]
    %v683 = vld [vmem:[#allocation3 + $0x240] sm:$0xff]
    %v684 = vld [vmem:[#allocation3 + $0x248] sm:$0xff]
    %v685 = vld [vmem:[#allocation3 + $0x250] sm:$0xff]
    %v686 = vld [vmem:[#allocation3 + $0x258] sm:$0xff]
    %v687 = vld [vmem:[#allocation3 + $0x260] sm:$0xff]
    %v688 = vld [vmem:[#allocation3 + $0x268] sm:$0xff]
    %v689 = vld [vmem:[#allocation3 + $0x270] sm:$0xff]
    %v690 = vld [vmem:[#allocation3 + $0x278] sm:$0xff]
    %v691 = vld [vmem:[#allocation3 + $0x280] sm:$0xff]
    %v692 = vld [vmem:[#allocation3 + $0x288] sm:$0xff]
    %v693 = vld [vmem:[#allocation3 + $0x290] sm:$0xff]
    %v694 = vld [vmem:[#allocation3 + $0x298] sm:$0xff]
    %v695 = vld [vmem:[#allocation3 + $0x2a0] sm:$0xff]
    %v696 = vld [vmem:[#allocation3 + $0x2a8] sm:$0xff]
    %v697 = vld [vmem:[#allocation3 + $0x2b0] sm:$0xff]
    %v698 = vld [vmem:[#allocation3 + $0x2b8] sm:$0xff]
    %v699 = vld [vmem:[#allocation3 + $0x2c0] sm:$0xff]
    %v700 = vld [vmem:[#allocation3 + $0x2c8] sm:$0xff]
    %v701 = vld [vmem:[#allocation3 + $0x2d0] sm:$0xff]
    %v702 = vld [vmem:[#allocation3 + $0x2d8] sm:$0xff]
    %v703 = vld [vmem:[#allocation3 + $0x2e0] sm:$0xff]
    %v704 = vld [vmem:[#allocation3 + $0x2e8] sm:$0xff]
    %v705 = vld [vmem:[#allocation3 + $0x2f0] sm:$0xff]
    %v706 = vld [vmem:[#allocation3 + $0x2f8] sm:$0xff]
    %v707 = vld [vmem:[#allocation3 + $0x300] sm:$0xff]
    %v708 = vld [vmem:[#allocation3 + $0x308] sm:$0xff]
    %v709 = vld [vmem:[#allocation3 + $0x310] sm:$0xff]
    %v710 = vld [vmem:[#allocation3 + $0x318] sm:$0xff]
    %v711 = vld [vmem:[#allocation3 + $0x320] sm:$0xff]
    %v712 = vld [vmem:[#allocation3 + $0x328] sm:$0xff]
    %v713 = vld [vmem:[#allocation3 + $0x330] sm:$0xff]
    %v714 = vld [vmem:[#allocation3 + $0x338] sm:$0xff]
    %v715 = vld [vmem:[#allocation3 + $0x340] sm:$0xff]
    %v716 = vld [vmem:[#allocation3 + $0x348] sm:$0xff]
    %v717 = vld [vmem:[#allocation3 + $0x350] sm:$0xff]
    %v718 = vld [vmem:[#allocation3 + $0x358] sm:$0xff]
    %v719 = vld [vmem:[#allocation3 + $0x360] sm:$0xff]
    %v720 = vld [vmem:[#allocation3 + $0x368] sm:$0xff]
    %v721 = vld [vmem:[#allocation3 + $0x370] sm:$0xff]
    %v722 = vld [vmem:[#allocation3 + $0x378] sm:$0xff]
    %v723 = vld [vmem:[#allocation3 + $0x380] sm:$0xff]
    %v724 = vld [vmem:[#allocation3 + $0x388] sm:$0xff]
    %v725 = vld [vmem:[#allocation3 + $0x390] sm:$0xff]
    %v726 = vld [vmem:[#allocation3 + $0x398] sm:$0xff]
    %v727 = vld [vmem:[#allocation3 + $0x3a0] sm:$0xff]
    %v728 = vld [vmem:[#allocation3 + $0x3a8] sm:$0xff]
    %v729 = vld [vmem:[#allocation3 + $0x3b0] sm:$0xff]
    %v730 = vld [vmem:[#allocation3 + $0x3b8] sm:$0xff]
    %v731 = vld [vmem:[#allocation3 + $0x3c0] sm:$0xff]
    %v732 = vld [vmem:[#allocation3 + $0x3c8] sm:$0xff]
    %v733 = vld [vmem:[#allocation3 + $0x3d0] sm:$0xff]
    %v734 = vld [vmem:[#allocation3 + $0x3d8] sm:$0xff]
    %v735 = vld [vmem:[#allocation3 + $0x3e0] sm:$0xff]
    %v736 = vld [vmem:[#allocation3 + $0x3e8] sm:$0xff]
    %v737 = vld [vmem:[#allocation3 + $0x3f0] sm:$0xff]
    %v738 = vld [vmem:[#allocation3 + $0x3f8] sm:$0xff]
    %739 = vmatprep.subr.mxu0 %v676
    %740 = vmatpush1.msra.mxu0 %v675
    %741 = vmatprep.subr.mxu0 %v678
    %742 = vmatpush1.msra.mxu0 %v677
    %743 = vmatprep.subr.mxu0 %v680
    %744 = vmatpush1.msra.mxu0 %v679
    %745 = vmatprep.subr.mxu0 %v682
    %746 = vmatpush1.msra.mxu0 %v681
    %747 = vmatprep.subr.mxu0 %v684
    %748 = vmatpush1.msra.mxu0 %v683
    %749 = vmatprep.subr.mxu0 %v686
    %750 = vmatpush1.msra.mxu0 %v685
    %751 = vmatprep.subr.mxu0 %v688
    %752 = vmatpush1.msra.mxu0 %v687
    %753 = vmatprep.subr.mxu0 %v690
    %754 = vmatpush1.msra.mxu0 %v689
    %755 = vmatprep.subr.mxu0 %v692
    %756 = vmatpush1.msra.mxu0 %v691
    %757 = vmatprep.subr.mxu0 %v694
    %758 = vmatpush1.msra.mxu0 %v693
    %759 = vmatprep.subr.mxu0 %v696
    %760 = vmatpush1.msra.mxu0 %v695
    %761 = vmatprep.subr.mxu0 %v698
    %762 = vmatpush1.msra.mxu0 %v697
    %763 = vmatprep.subr.mxu0 %v700
    %764 = vmatpush1.msra.mxu0 %v699
    %765 = vmatprep.subr.mxu0 %v702
    %766 = vmatpush1.msra.mxu0 %v701
    %767 = vmatprep.subr.mxu0 %v704
    %768 = vmatpush1.msra.mxu0 %v703
    %769 = vmatprep.subr.mxu0 %v706
    %770 = vmatpush1.msra.mxu0 %v705
    %771 = vmatprep.subr.mxu0 %v708
    %772 = vmatpush1.msra.mxu0 %v707
    %773 = vmatprep.subr.mxu0 %v710
    %774 = vmatpush1.msra.mxu0 %v709
    %775 = vmatprep.subr.mxu0 %v712
    %776 = vmatpush1.msra.mxu0 %v711
    %777 = vmatprep.subr.mxu0 %v714
    %778 = vmatpush1.msra.mxu0 %v713
    %779 = vmatprep.subr.mxu0 %v716
    %780 = vmatpush1.msra.mxu0 %v715
    %781 = vmatprep.subr.mxu0 %v718
    %782 = vmatpush1.msra.mxu0 %v717
    %783 = vmatprep.subr.mxu0 %v720
    %784 = vmatpush1.msra.mxu0 %v719
    %785 = vmatprep.subr.mxu0 %v722
    %786 = vmatpush1.msra.mxu0 %v721
    %787 = vmatprep.subr.mxu0 %v724
    %788 = vmatpush1.msra.mxu0 %v723
    %789 = vmatprep.subr.mxu0 %v726
    %790 = vmatpush1.msra.mxu0 %v725
    %791 = vmatprep.subr.mxu0 %v728
    %792 = vmatpush1.msra.mxu0 %v727
    %793 = vmatprep.subr.mxu0 %v730
    %794 = vmatpush1.msra.mxu0 %v729
    %795 = vmatprep.subr.mxu0 %v732
    %796 = vmatpush1.msra.mxu0 %v731
    %797 = vmatprep.subr.mxu0 %v734
    %798 = vmatpush1.msra.mxu0 %v733
    %799 = vmatprep.subr.mxu0 %v736
    %800 = vmatpush1.msra.mxu0 %v735
    %801 = vmatprep.subr.mxu0 %v738
    %802 = vmatpush1.msra.mxu0 %v737
    %803 = vmatprep.mubr.f32.mxu0 %v539
    %804 = vmatmul.mubr.f32.gmra.mrb[0].mxu0 %v537
    %v805 = vpop.f32.mrb[0].mxu0
    %v806 = vadd.f32 0.0, %v805
    %v807 = vpop.f32.mrb[0].mxu0
    %v808 = vadd.f32 0.0, %v807
    %809 = vmatprep.mubr.f32.mxu0 %v545
    %810 = vmatmul.mubr.f32.gmra.mrb[0].mxu0 %v543
    %v811 = vpop.f32.mrb[0].mxu0
    %v812 = vadd.f32 0.0, %v811
    %v813 = vpop.f32.mrb[0].mxu0
    %v814 = vadd.f32 0.0, %v813
    %815 = vmatprep.mubr.f32.mxu0 %v551
    %816 = vmatmul.mubr.f32.gmra.mrb[0].mxu0 %v549
    %v817 = vpop.f32.mrb[0].mxu0
    %v818 = vadd.f32 0.0, %v817
    %v819 = vpop.f32.mrb[0].mxu0
    %v820 = vadd.f32 0.0, %v819
    %821 = vmatprep.mubr.f32.mxu0 %v557
    %822 = vmatmul.mubr.f32.gmra.mrb[0].mxu0 %v555
    %v823 = vpop.f32.mrb[0].mxu0
    %v824 = vadd.f32 0.0, %v823
    %v825 = vpop.f32.mrb[0].mxu0
    %v826 = vadd.f32 0.0, %v825
    %827 = vdwg.mxu0
    %828 = vmatprep.subr.mxu0 %v612
    %829 = vmatpush1.msra.mxu0 %v611
    %830 = vmatprep.subr.mxu0 %v614
    %831 = vmatpush1.msra.mxu0 %v613
    %832 = vmatprep.subr.mxu0 %v616
    %833 = vmatpush1.msra.mxu0 %v615
    %834 = vmatprep.subr.mxu0 %v618
    %835 = vmatpush1.msra.mxu0 %v617
    %836 = vmatprep.subr.mxu0 %v620
    %837 = vmatpush1.msra.mxu0 %v619
    %838 = vmatprep.subr.mxu0 %v622
    %839 = vmatpush1.msra.mxu0 %v621
    %840 = vmatprep.subr.mxu0 %v624
    %841 = vmatpush1.msra.mxu0 %v623
    %842 = vmatprep.subr.mxu0 %v626
    %843 = vmatpush1.msra.mxu0 %v625
    %844 = vmatprep.subr.mxu0 %v628
    %845 = vmatpush1.msra.mxu0 %v627
    %846 = vmatprep.subr.mxu0 %v630
    %847 = vmatpush1.msra.mxu0 %v629
    %848 = vmatprep.subr.mxu0 %v632
    %849 = vmatpush1.msra.mxu0 %v631
    %850 = vmatprep.subr.mxu0 %v634
    %851 = vmatpush1.msra.mxu0 %v633
    %852 = vmatprep.subr.mxu0 %v636
    %853 = vmatpush1.msra.mxu0 %v635
    %854 = vmatprep.subr.mxu0 %v638
    %855 = vmatpush1.msra.mxu0 %v637
    %856 = vmatprep.subr.mxu0 %v640
    %857 = vmatpush1.msra.mxu0 %v639
    %858 = vmatprep.subr.mxu0 %v642
    %859 = vmatpush1.msra.mxu0 %v641
    %860 = vmatprep.subr.mxu0 %v644
    %861 = vmatpush1.msra.mxu0 %v643
    %862 = vmatprep.subr.mxu0 %v646
    %863 = vmatpush1.msra.mxu0 %v645
    %864 = vmatprep.subr.mxu0 %v648
    %865 = vmatpush1.msra.mxu0 %v647
    %866 = vmatprep.subr.mxu0 %v650
    %867 = vmatpush1.msra.mxu0 %v649
    %868 = vmatprep.subr.mxu0 %v652
    %869 = vmatpush1.msra.mxu0 %v651
    %870 = vmatprep.subr.mxu0 %v654
    %871 = vmatpush1.msra.mxu0 %v653
    %872 = vmatprep.subr.mxu0 %v656
    %873 = vmatpush1.msra.mxu0 %v655
    %874 = vmatprep.subr.mxu0 %v658
    %875 = vmatpush1.msra.mxu0 %v657
    %876 = vmatprep.subr.mxu0 %v660
    %877 = vmatpush1.msra.mxu0 %v659
    %878 = vmatprep.subr.mxu0 %v662
    %879 = vmatpush1.msra.mxu0 %v661
    %880 = vmatprep.subr.mxu0 %v664
    %881 = vmatpush1.msra.mxu0 %v663
    %882 = vmatprep.subr.mxu0 %v666
    %883 = vmatpush1.msra.mxu0 %v665
    %884 = vmatprep.subr.mxu0 %v668
    %885 = vmatpush1.msra.mxu0 %v667
    %886 = vmatprep.subr.mxu0 %v670
    %887 = vmatpush1.msra.mxu0 %v669
    %888 = vmatprep.subr.mxu0 %v672
    %889 = vmatpush1.msra.mxu0 %v671
    %890 = vmatprep.subr.mxu0 %v674
    %891 = vmatpush1.msra.mxu0 %v673
    %892 = vmatprep.mubr.f32.mxu0 %v515
    %893 = vmatmul.mubr.f32.gmra.mrb[0].mxu0 %v513
    %v894 = vpop.f32.mrb[0].mxu0
    %v895 = vadd.f32 %v806, %v894
    %v896 = vpop.f32.mrb[0].mxu0
    %v897 = vadd.f32 %v808, %v896
    %898 = vmatprep.mubr.f32.mxu0 %v521
    %899 = vmatmul.mubr.f32.gmra.mrb[0].mxu0 %v519
    %v900 = vpop.f32.mrb[0].mxu0
    %v901 = vadd.f32 %v812, %v900
    %v902 = vpop.f32.mrb[0].mxu0
    %v903 = vadd.f32 %v814, %v902
    %904 = vmatprep.mubr.f32.mxu0 %v527
    %905 = vmatmul.mubr.f32.gmra.mrb[0].mxu0 %v525
    %v906 = vpop.f32.mrb[0].mxu0
    %v907 = vadd.f32 %v818, %v906
    %v908 = vpop.f32.mrb[0].mxu0
    %v909 = vadd.f32 %v820, %v908
    %910 = vmatprep.mubr.f32.mxu0 %v533
    %911 = vmatmul.mubr.f32.gmra.mrb[0].mxu0 %v531
    %v912 = vpop.f32.mrb[0].mxu0
    %v913 = vadd.f32 %v824, %v912
    %v914 = vpop.f32.mrb[0].mxu0
    %v915 = vadd.f32 %v826, %v914
    %916 = vdwg.mxu0
    %v917 = vld [vmem:[#allocation3 + $0x400] sm:$0xff]
    %v918 = vld [vmem:[#allocation3 + $0x408] sm:$0xff]
    %v919 = vld [vmem:[#allocation3 + $0x410] sm:$0xff]
    %v920 = vld [vmem:[#allocation3 + $0x418] sm:$0xff]
    %v921 = vld [vmem:[#allocation3 + $0x420] sm:$0xff]
    %v922 = vld [vmem:[#allocation3 + $0x428] sm:$0xff]
    %v923 = vld [vmem:[#allocation3 + $0x430] sm:$0xff]
    %v924 = vld [vmem:[#allocation3 + $0x438] sm:$0xff]
    %v925 = vld [vmem:[#allocation3 + $0x440] sm:$0xff]
    %v926 = vld [vmem:[#allocation3 + $0x448] sm:$0xff]
    %v927 = vld [vmem:[#allocation3 + $0x450] sm:$0xff]
    %v928 = vld [vmem:[#allocation3 + $0x458] sm:$0xff]
    %v929 = vld [vmem:[#allocation3 + $0x460] sm:$0xff]
    %v930 = vld [vmem:[#allocation3 + $0x468] sm:$0xff]
    %v931 = vld [vmem:[#allocation3 + $0x470] sm:$0xff]
    %v932 = vld [vmem:[#allocation3 + $0x478] sm:$0xff]
    %v933 = vld [vmem:[#allocation3 + $0x480] sm:$0xff]
    %v934 = vld [vmem:[#allocation3 + $0x488] sm:$0xff]
    %v935 = vld [vmem:[#allocation3 + $0x490] sm:$0xff]
    %v936 = vld [vmem:[#allocation3 + $0x498] sm:$0xff]
    %v937 = vld [vmem:[#allocation3 + $0x4a0] sm:$0xff]
    %v938 = vld [vmem:[#allocation3 + $0x4a8] sm:$0xff]
    %v939 = vld [vmem:[#allocation3 + $0x4b0] sm:$0xff]
    %v940 = vld [vmem:[#allocation3 + $0x4b8] sm:$0xff]
    %v941 = vld [vmem:[#allocation3 + $0x4c0] sm:$0xff]
    %v942 = vld [vmem:[#allocation3 + $0x4c8] sm:$0xff]
    %v943 = vld [vmem:[#allocation3 + $0x4d0] sm:$0xff]
    %v944 = vld [vmem:[#allocation3 + $0x4d8] sm:$0xff]
    %v945 = vld [vmem:[#allocation3 + $0x4e0] sm:$0xff]
    %v946 = vld [vmem:[#allocation3 + $0x4e8] sm:$0xff]
    %v947 = vld [vmem:[#allocation3 + $0x4f0] sm:$0xff]
    %v948 = vld [vmem:[#allocation3 + $0x4f8] sm:$0xff]
    %v949 = vld [vmem:[#allocation3 + $0x500] sm:$0xff]
    %v950 = vld [vmem:[#allocation3 + $0x508] sm:$0xff]
    %v951 = vld [vmem:[#allocation3 + $0x510] sm:$0xff]
    %v952 = vld [vmem:[#allocation3 + $0x518] sm:$0xff]
    %v953 = vld [vmem:[#allocation3 + $0x520] sm:$0xff]
    %v954 = vld [vmem:[#allocation3 + $0x528] sm:$0xff]
    %v955 = vld [vmem:[#allocation3 + $0x530] sm:$0xff]
    %v956 = vld [vmem:[#allocation3 + $0x538] sm:$0xff]
    %v957 = vld [vmem:[#allocation3 + $0x540] sm:$0xff]
    %v958 = vld [vmem:[#allocation3 + $0x548] sm:$0xff]
    %v959 = vld [vmem:[#allocation3 + $0x550] sm:$0xff]
    %v960 = vld [vmem:[#allocation3 + $0x558] sm:$0xff]
    %v961 = vld [vmem:[#allocation3 + $0x560] sm:$0xff]
    %v962 = vld [vmem:[#allocation3 + $0x568] sm:$0xff]
    %v963 = vld [vmem:[#allocation3 + $0x570] sm:$0xff]
    %v964 = vld [vmem:[#allocation3 + $0x578] sm:$0xff]
    %v965 = vld [vmem:[#allocation3 + $0x580] sm:$0xff]
    %v966 = vld [vmem:[#allocation3 + $0x588] sm:$0xff]
    %v967 = vld [vmem:[#allocation3 + $0x590] sm:$0xff]
    %v968 = vld [vmem:[#allocation3 + $0x598] sm:$0xff]
    %v969 = vld [vmem:[#allocation3 + $0x5a0] sm:$0xff]
    %v970 = vld [vmem:[#allocation3 + $0x5a8] sm:$0xff]
    %v971 = vld [vmem:[#allocation3 + $0x5b0] sm:$0xff]
    %v972 = vld [vmem:[#allocation3 + $0x5b8] sm:$0xff]
    %v973 = vld [vmem:[#allocation3 + $0x5c0] sm:$0xff]
    %v974 = vld [vmem:[#allocation3 + $0x5c8] sm:$0xff]
    %v975 = vld [vmem:[#allocation3 + $0x5d0] sm:$0xff]
    %v976 = vld [vmem:[#allocation3 + $0x5d8] sm:$0xff]
    %v977 = vld [vmem:[#allocation3 + $0x5e0] sm:$0xff]
    %v978 = vld [vmem:[#allocation3 + $0x5e8] sm:$0xff]
    %v979 = vld [vmem:[#allocation3 + $0x5f0] sm:$0xff]
    %v980 = vld [vmem:[#allocation3 + $0x5f8] sm:$0xff]
    %981 = vmatprep.subr.mxu0 %v918
    %982 = vmatpush1.msra.mxu0 %v917
    %983 = vmatprep.subr.mxu0 %v920
    %984 = vmatpush1.msra.mxu0 %v919
    %985 = vmatprep.subr.mxu0 %v922
    %986 = vmatpush1.msra.mxu0 %v921
    %987 = vmatprep.subr.mxu0 %v924
    %988 = vmatpush1.msra.mxu0 %v923
    %989 = vmatprep.subr.mxu0 %v926
    %990 = vmatpush1.msra.mxu0 %v925
    %991 = vmatprep.subr.mxu0 %v928
    %992 = vmatpush1.msra.mxu0 %v927
    %993 = vmatprep.subr.mxu0 %v930
    %994 = vmatpush1.msra.mxu0 %v929
    %995 = vmatprep.subr.mxu0 %v932
    %996 = vmatpush1.msra.mxu0 %v931
    %997 = vmatprep.subr.mxu0 %v934
    %998 = vmatpush1.msra.mxu0 %v933
    %999 = vmatprep.subr.mxu0 %v936
    %1000 = vmatpush1.msra.mxu0 %v935
    %1001 = vmatprep.subr.mxu0 %v938
    %1002 = vmatpush1.msra.mxu0 %v937
    %1003 = vmatprep.subr.mxu0 %v940
    %1004 = vmatpush1.msra.mxu0 %v939
    %1005 = vmatprep.subr.mxu0 %v942
    %1006 = vmatpush1.msra.mxu0 %v941
    %1007 = vmatprep.subr.mxu0 %v944
    %1008 = vmatpush1.msra.mxu0 %v943
    %1009 = vmatprep.subr.mxu0 %v946
    %1010 = vmatpush1.msra.mxu0 %v945
    %1011 = vmatprep.subr.mxu0 %v948
    %1012 = vmatpush1.msra.mxu0 %v947
    %1013 = vmatprep.subr.mxu0 %v950
    %1014 = vmatpush1.msra.mxu0 %v949
    %1015 = vmatprep.subr.mxu0 %v952
    %1016 = vmatpush1.msra.mxu0 %v951
    %1017 = vmatprep.subr.mxu0 %v954
    %1018 = vmatpush1.msra.mxu0 %v953
    %1019 = vmatprep.subr.mxu0 %v956
    %1020 = vmatpush1.msra.mxu0 %v955
    %1021 = vmatprep.subr.mxu0 %v958
    %1022 = vmatpush1.msra.mxu0 %v957
    %1023 = vmatprep.subr.mxu0 %v960
    %1024 = vmatpush1.msra.mxu0 %v959
    %1025 = vmatprep.subr.mxu0 %v962
    %1026 = vmatpush1.msra.mxu0 %v961
    %1027 = vmatprep.subr.mxu0 %v964
    %1028 = vmatpush1.msra.mxu0 %v963
    %1029 = vmatprep.subr.mxu0 %v966
    %1030 = vmatpush1.msra.mxu0 %v965
    %1031 = vmatprep.subr.mxu0 %v968
    %1032 = vmatpush1.msra.mxu0 %v967
    %1033 = vmatprep.subr.mxu0 %v970
    %1034 = vmatpush1.msra.mxu0 %v969
    %1035 = vmatprep.subr.mxu0 %v972
    %1036 = vmatpush1.msra.mxu0 %v971
    %1037 = vmatprep.subr.mxu0 %v974
    %1038 = vmatpush1.msra.mxu0 %v973
    %1039 = vmatprep.subr.mxu0 %v976
    %1040 = vmatpush1.msra.mxu0 %v975
    %1041 = vmatprep.subr.mxu0 %v978
    %1042 = vmatpush1.msra.mxu0 %v977
    %1043 = vmatprep.subr.mxu0 %v980
    %1044 = vmatpush1.msra.mxu0 %v979
    %1045 = vmatprep.mubr.f32.mxu0 %v563
    %1046 = vmatmul.mubr.f32.gmra.mrb[0].mxu0 %v561
    %v1047 = vpop.f32.mrb[0].mxu0
    %v1048 = vadd.f32 0.0, %v1047
    %v1049 = vpop.f32.mrb[0].mxu0
    %v1050 = vadd.f32 0.0, %v1049
    %1051 = vmatprep.mubr.f32.mxu0 %v569
    %1052 = vmatmul.mubr.f32.gmra.mrb[0].mxu0 %v567
    %v1053 = vpop.f32.mrb[0].mxu0
    %v1054 = vadd.f32 0.0, %v1053
    %v1055 = vpop.f32.mrb[0].mxu0
    %v1056 = vadd.f32 0.0, %v1055
    %1057 = vmatprep.mubr.f32.mxu0 %v575
    %1058 = vmatmul.mubr.f32.gmra.mrb[0].mxu0 %v573
    %v1059 = vpop.f32.mrb[0].mxu0
    %v1060 = vadd.f32 0.0, %v1059
    %v1061 = vpop.f32.mrb[0].mxu0
    %v1062 = vadd.f32 0.0, %v1061
    %1063 = vmatprep.mubr.f32.mxu0 %v581
    %1064 = vmatmul.mubr.f32.gmra.mrb[0].mxu0 %v579
    %v1065 = vpop.f32.mrb[0].mxu0
    %v1066 = vadd.f32 0.0, %v1065
    %v1067 = vpop.f32.mrb[0].mxu0
    %v1068 = vadd.f32 0.0, %v1067
    %1069 = vdwg.mxu0
    %v1070 = vadd.f32 %v895, %v1048
    %v1071 = vadd.f32 %v897, %v1050
    %v1072 = vadd.f32 %v901, %v1054
    %v1073 = vadd.f32 %v903, %v1056
    %v1074 = vadd.f32 %v907, %v1060
    %v1075 = vadd.f32 %v909, %v1062
    %v1076 = vadd.f32 %v913, %v1066
    %v1077 = vadd.f32 %v915, %v1068
    %v1078 = vld [vmem:[#allocation3 + $0x600] sm:$0xff]
    %v1079 = vld [vmem:[#allocation3 + $0x608] sm:$0xff]
    %v1080 = vld [vmem:[#allocation3 + $0x610] sm:$0xff]
    %v1081 = vld [vmem:[#allocation3 + $0x618] sm:$0xff]
    %v1082 = vld [vmem:[#allocation3 + $0x620] sm:$0xff]
    %v1083 = vld [vmem:[#allocation3 + $0x628] sm:$0xff]
    %v1084 = vld [vmem:[#allocation3 + $0x630] sm:$0xff]
    %v1085 = vld [vmem:[#allocation3 + $0x638] sm:$0xff]
    %v1086 = vld [vmem:[#allocation3 + $0x640] sm:$0xff]
    %v1087 = vld [vmem:[#allocation3 + $0x648] sm:$0xff]
    %v1088 = vld [vmem:[#allocation3 + $0x650] sm:$0xff]
    %v1089 = vld [vmem:[#allocation3 + $0x658] sm:$0xff]
    %v1090 = vld [vmem:[#allocation3 + $0x660] sm:$0xff]
    %v1091 = vld [vmem:[#allocation3 + $0x668] sm:$0xff]
    %v1092 = vld [vmem:[#allocation3 + $0x670] sm:$0xff]
    %v1093 = vld [vmem:[#allocation3 + $0x678] sm:$0xff]
    %v1094 = vld [vmem:[#allocation3 + $0x680] sm:$0xff]
    %v1095 = vld [vmem:[#allocation3 + $0x688] sm:$0xff]
    %v1096 = vld [vmem:[#allocation3 + $0x690] sm:$0xff]
    %v1097 = vld [vmem:[#allocation3 + $0x698] sm:$0xff]
    %v1098 = vld [vmem:[#allocation3 + $0x6a0] sm:$0xff]
    %v1099 = vld [vmem:[#allocation3 + $0x6a8] sm:$0xff]
    %v1100 = vld [vmem:[#allocation3 + $0x6b0] sm:$0xff]
    %v1101 = vld [vmem:[#allocation3 + $0x6b8] sm:$0xff]
    %v1102 = vld [vmem:[#allocation3 + $0x6c0] sm:$0xff]
    %v1103 = vld [vmem:[#allocation3 + $0x6c8] sm:$0xff]
    %v1104 = vld [vmem:[#allocation3 + $0x6d0] sm:$0xff]
    %v1105 = vld [vmem:[#allocation3 + $0x6d8] sm:$0xff]
    %v1106 = vld [vmem:[#allocation3 + $0x6e0] sm:$0xff]
    %v1107 = vld [vmem:[#allocation3 + $0x6e8] sm:$0xff]
    %v1108 = vld [vmem:[#allocation3 + $0x6f0] sm:$0xff]
    %v1109 = vld [vmem:[#allocation3 + $0x6f8] sm:$0xff]
    %v1110 = vld [vmem:[#allocation3 + $0x700] sm:$0xff]
    %v1111 = vld [vmem:[#allocation3 + $0x708] sm:$0xff]
    %v1112 = vld [vmem:[#allocation3 + $0x710] sm:$0xff]
    %v1113 = vld [vmem:[#allocation3 + $0x718] sm:$0xff]
    %v1114 = vld [vmem:[#allocation3 + $0x720] sm:$0xff]
    %v1115 = vld [vmem:[#allocation3 + $0x728] sm:$0xff]
    %v1116 = vld [vmem:[#allocation3 + $0x730] sm:$0xff]
    %v1117 = vld [vmem:[#allocation3 + $0x738] sm:$0xff]
    %v1118 = vld [vmem:[#allocation3 + $0x740] sm:$0xff]
    %v1119 = vld [vmem:[#allocation3 + $0x748] sm:$0xff]
    %v1120 = vld [vmem:[#allocation3 + $0x750] sm:$0xff]
    %v1121 = vld [vmem:[#allocation3 + $0x758] sm:$0xff]
    %v1122 = vld [vmem:[#allocation3 + $0x760] sm:$0xff]
    %v1123 = vld [vmem:[#allocation3 + $0x768] sm:$0xff]
    %v1124 = vld [vmem:[#allocation3 + $0x770] sm:$0xff]
    %v1125 = vld [vmem:[#allocation3 + $0x778] sm:$0xff]
    %v1126 = vld [vmem:[#allocation3 + $0x780] sm:$0xff]
    %v1127 = vld [vmem:[#allocation3 + $0x788] sm:$0xff]
    %v1128 = vld [vmem:[#allocation3 + $0x790] sm:$0xff]
    %v1129 = vld [vmem:[#allocation3 + $0x798] sm:$0xff]
    %v1130 = vld [vmem:[#allocation3 + $0x7a0] sm:$0xff]
    %v1131 = vld [vmem:[#allocation3 + $0x7a8] sm:$0xff]
    %v1132 = vld [vmem:[#allocation3 + $0x7b0] sm:$0xff]
    %v1133 = vld [vmem:[#allocation3 + $0x7b8] sm:$0xff]
    %v1134 = vld [vmem:[#allocation3 + $0x7c0] sm:$0xff]
    %v1135 = vld [vmem:[#allocation3 + $0x7c8] sm:$0xff]
    %v1136 = vld [vmem:[#allocation3 + $0x7d0] sm:$0xff]
    %v1137 = vld [vmem:[#allocation3 + $0x7d8] sm:$0xff]
    %v1138 = vld [vmem:[#allocation3 + $0x7e0] sm:$0xff]
    %v1139 = vld [vmem:[#allocation3 + $0x7e8] sm:$0xff]
    %v1140 = vld [vmem:[#allocation3 + $0x7f0] sm:$0xff]
    %v1141 = vld [vmem:[#allocation3 + $0x7f8] sm:$0xff]
    %1142 = vmatprep.subr.mxu0 %v1079
    %1143 = vmatpush1.msra.mxu0 %v1078
    %1144 = vmatprep.subr.mxu0 %v1081
    %1145 = vmatpush1.msra.mxu0 %v1080
    %1146 = vmatprep.subr.mxu0 %v1083
    %1147 = vmatpush1.msra.mxu0 %v1082
    %1148 = vmatprep.subr.mxu0 %v1085
    %1149 = vmatpush1.msra.mxu0 %v1084
    %1150 = vmatprep.subr.mxu0 %v1087
    %1151 = vmatpush1.msra.mxu0 %v1086
    %1152 = vmatprep.subr.mxu0 %v1089
    %1153 = vmatpush1.msra.mxu0 %v1088
    %1154 = vmatprep.subr.mxu0 %v1091
    %1155 = vmatpush1.msra.mxu0 %v1090
    %1156 = vmatprep.subr.mxu0 %v1093
    %1157 = vmatpush1.msra.mxu0 %v1092
    %1158 = vmatprep.subr.mxu0 %v1095
    %1159 = vmatpush1.msra.mxu0 %v1094
    %1160 = vmatprep.subr.mxu0 %v1097
    %1161 = vmatpush1.msra.mxu0 %v1096
    %1162 = vmatprep.subr.mxu0 %v1099
    %1163 = vmatpush1.msra.mxu0 %v1098
    %1164 = vmatprep.subr.mxu0 %v1101
    %1165 = vmatpush1.msra.mxu0 %v1100
    %1166 = vmatprep.subr.mxu0 %v1103
    %1167 = vmatpush1.msra.mxu0 %v1102
    %1168 = vmatprep.subr.mxu0 %v1105
    %1169 = vmatpush1.msra.mxu0 %v1104
    %1170 = vmatprep.subr.mxu0 %v1107
    %1171 = vmatpush1.msra.mxu0 %v1106
    %1172 = vmatprep.subr.mxu0 %v1109
    %1173 = vmatpush1.msra.mxu0 %v1108
    %1174 = vmatprep.subr.mxu0 %v1111
    %1175 = vmatpush1.msra.mxu0 %v1110
    %1176 = vmatprep.subr.mxu0 %v1113
    %1177 = vmatpush1.msra.mxu0 %v1112
    %1178 = vmatprep.subr.mxu0 %v1115
    %1179 = vmatpush1.msra.mxu0 %v1114
    %1180 = vmatprep.subr.mxu0 %v1117
    %1181 = vmatpush1.msra.mxu0 %v1116
    %1182 = vmatprep.subr.mxu0 %v1119
    %1183 = vmatpush1.msra.mxu0 %v1118
    %1184 = vmatprep.subr.mxu0 %v1121
    %1185 = vmatpush1.msra.mxu0 %v1120
    %1186 = vmatprep.subr.mxu0 %v1123
    %1187 = vmatpush1.msra.mxu0 %v1122
    %1188 = vmatprep.subr.mxu0 %v1125
    %1189 = vmatpush1.msra.mxu0 %v1124
    %1190 = vmatprep.subr.mxu0 %v1127
    %1191 = vmatpush1.msra.mxu0 %v1126
    %1192 = vmatprep.subr.mxu0 %v1129
    %1193 = vmatpush1.msra.mxu0 %v1128
    %1194 = vmatprep.subr.mxu0 %v1131
    %1195 = vmatpush1.msra.mxu0 %v1130
    %1196 = vmatprep.subr.mxu0 %v1133
    %1197 = vmatpush1.msra.mxu0 %v1132
    %1198 = vmatprep.subr.mxu0 %v1135
    %1199 = vmatpush1.msra.mxu0 %v1134
    %1200 = vmatprep.subr.mxu0 %v1137
    %1201 = vmatpush1.msra.mxu0 %v1136
    %1202 = vmatprep.subr.mxu0 %v1139
    %1203 = vmatpush1.msra.mxu0 %v1138
    %1204 = vmatprep.subr.mxu0 %v1141
    %1205 = vmatpush1.msra.mxu0 %v1140
    %1206 = vmatprep.mubr.f32.mxu0 %v587
    %1207 = vmatmul.mubr.f32.gmra.mrb[0].mxu0 %v585
    %v1208 = vpop.f32.mrb[0].mxu0
    %v1209 = vadd.f32 0.0, %v1208
    %v1210 = vpop.f32.mrb[0].mxu0
    %v1211 = vadd.f32 0.0, %v1210
    %1212 = vmatprep.mubr.f32.mxu0 %v593
    %1213 = vmatmul.mubr.f32.gmra.mrb[0].mxu0 %v591
    %v1214 = vpop.f32.mrb[0].mxu0
    %v1215 = vadd.f32 0.0, %v1214
    %v1216 = vpop.f32.mrb[0].mxu0
    %v1217 = vadd.f32 0.0, %v1216
    %1218 = vmatprep.mubr.f32.mxu0 %v599
    %1219 = vmatmul.mubr.f32.gmra.mrb[0].mxu0 %v597
    %v1220 = vpop.f32.mrb[0].mxu0
    %v1221 = vadd.f32 0.0, %v1220
    %v1222 = vpop.f32.mrb[0].mxu0
    %v1223 = vadd.f32 0.0, %v1222
    %1224 = vmatprep.mubr.f32.mxu0 %v605
    %1225 = vmatmul.mubr.f32.gmra.mrb[0].mxu0 %v603
    %v1226 = vpop.f32.mrb[0].mxu0
    %v1227 = vadd.f32 0.0, %v1226
    %v1228 = vpop.f32.mrb[0].mxu0
    %v1229 = vadd.f32 0.0, %v1228
    %1230 = vdwg.mxu0
    %v1231 = vadd.f32 %v1070, %v1209
    %v1232 = vadd.f32 %v1071, %v1211
    %v1233 = vadd.f32 %v1072, %v1215
    %v1234 = vadd.f32 %v1073, %v1217
    %v1235 = vadd.f32 %v1074, %v1221
    %v1236 = vadd.f32 %v1075, %v1223
    %v1237 = vadd.f32 %v1076, %v1227
    %v1238 = vadd.f32 %v1077, %v1229
    %v1239 = vld [vmem:[#allocation15] sm:$0x3]
    %v1241 = vlaneseq
    %v1242 = vshrl.u32 %v1241, 7
    %v1243 = vsub.s32 0, %v1242
    %v1244 = vrot.slane %v1239, %v1243
    %v1245 = vlaneseq
    %v1246 = vshrl.u32 %v1245, 7
    %v1247 = vsub.s32 1, %v1246
    %v1248 = vrot.slane %v1239, %v1247
    %v1251 = vadd.f32 %v1231, %v1244
    %v1252 = vadd.f32 %v1232, %v1248
    %v1253 = vadd.f32 %v1233, %v1244
    %v1254 = vadd.f32 %v1234, %v1248
    %v1255 = vadd.f32 %v1235, %v1244
    %v1256 = vadd.f32 %v1236, %v1248
    %v1257 = vadd.f32 %v1237, %v1244
    %v1258 = vadd.f32 %v1238, %v1248
    %v1259 = vmax.f32 %v1251, 0.0
    %v1260 = vmax.f32 %v1252, 0.0
    %v1261 = vmax.f32 %v1253, 0.0
    %v1262 = vmax.f32 %v1254, 0.0
    %v1263 = vmax.f32 %v1255, 0.0
    %v1264 = vmax.f32 %v1256, 0.0
    %v1265 = vmax.f32 %v1257, 0.0
    %v1266 = vmax.f32 %v1258, 0.0
    %1267 = vmatprep.subr.mxu0 %v1260
    %1268 = vmatpush1.msra.mxu0 %v1259
    %1269 = vmatprep.subr.mxu0 %v1262
    %1270 = vmatpush1.msra.mxu0 %v1261
    %1271 = vmatprep.subr.mxu0 %v1264
    %1272 = vmatpush1.msra.mxu0 %v1263
    %1273 = vmatprep.subr.mxu0 %v1266
    %1274 = vmatpush1.msra.mxu0 %v1265
    %1275 = vmatprep.subr.mxu0 0.0
    %1276 = vmatpush1.msra.mxu0 0.0
    %1277 = vmatprep.subr.mxu0 0.0
    %1278 = vmatpush1.msra.mxu0 0.0
    %1279 = vmatprep.subr.mxu0 0.0
    %1280 = vmatpush1.msra.mxu0 0.0
    %1281 = vmatprep.subr.mxu0 0.0
    %1282 = vmatpush1.msra.mxu0 0.0
    %1283 = vmatprep.subr.mxu0 0.0
    %1284 = vmatpush1.msra.mxu0 0.0
    %1285 = vmatprep.subr.mxu0 0.0
    %1286 = vmatpush1.msra.mxu0 0.0
    %1287 = vmatprep.subr.mxu0 0.0
    %1288 = vmatpush1.msra.mxu0 0.0
    %1289 = vmatprep.subr.mxu0 0.0
    %1290 = vmatpush1.msra.mxu0 0.0
    %1291 = vmatprep.subr.mxu0 0.0
    %1292 = vmatpush1.msra.mxu0 0.0
    %1293 = vmatprep.subr.mxu0 0.0
    %1294 = vmatpush1.msra.mxu0 0.0
    %1295 = vmatprep.subr.mxu0 0.0
    %1296 = vmatpush1.msra.mxu0 0.0
    %1297 = vmatprep.subr.mxu0 0.0
    %1298 = vmatpush1.msra.mxu0 0.0
    %1299 = vmatprep.subr.mxu0 0.0
    %1300 = vmatpush1.msra.mxu0 0.0
    %1301 = vmatprep.subr.mxu0 0.0
    %1302 = vmatpush1.msra.mxu0 0.0
    %1303 = vmatprep.subr.mxu0 0.0
    %1304 = vmatpush1.msra.mxu0 0.0
    %1305 = vmatprep.subr.mxu0 0.0
    %1306 = vmatpush1.msra.mxu0 0.0
    %1307 = vmatprep.subr.mxu0 0.0
    %1308 = vmatpush1.msra.mxu0 0.0
    %1309 = vmatprep.subr.mxu0 0.0
    %1310 = vmatpush1.msra.mxu0 0.0
    %1311 = vmatprep.subr.mxu0 0.0
    %1312 = vmatpush1.msra.mxu0 0.0
    %1313 = vmatprep.subr.mxu0 0.0
    %1314 = vmatpush1.msra.mxu0 0.0
    %1315 = vmatprep.subr.mxu0 0.0
    %1316 = vmatpush1.msra.mxu0 0.0
    %1317 = vmatprep.subr.mxu0 0.0
    %1318 = vmatpush1.msra.mxu0 0.0
    %1319 = vmatprep.subr.mxu0 0.0
    %1320 = vmatpush1.msra.mxu0 0.0
    %1321 = vmatprep.subr.mxu0 0.0
    %1322 = vmatpush1.msra.mxu0 0.0
    %1323 = vmatprep.subr.mxu0 0.0
    %1324 = vmatpush1.msra.mxu0 0.0
    %1325 = vmatprep.subr.mxu0 0.0
    %1326 = vmatpush1.msra.mxu0 0.0
    %1327 = vmatprep.subr.mxu0 0.0
    %1328 = vmatpush1.msra.mxu0 0.0
    %1329 = vmatprep.subr.mxu0 0.0
    %1330 = vmatpush1.msra.mxu0 0.0
    %1331 = vmatprep.mubr.f32.mxu0 0.0
    %1332 = vmatmul.mubr.f32.gmra.mrb[0].mxu0 %v399
    %v1333 = vpop.f32.mrb[0].mxu0
    %v1334 = vadd.f32 0.0, %v1333
    %v1335 = vpop.f32.mrb[0].mxu0
    %v1336 = vadd.f32 0.0, %v1335
    %1337 = vmatprep.mubr.f32.mxu0 0.0
    %1338 = vmatmul.mubr.f32.gmra.mrb[0].mxu0 %v402
    %v1339 = vpop.f32.mrb[0].mxu0
    %v1340 = vadd.f32 0.0, %v1339
    %v1341 = vpop.f32.mrb[0].mxu0
    %v1342 = vadd.f32 0.0, %v1341
    %1343 = vmatprep.mubr.f32.mxu0 0.0
    %1344 = vmatmul.mubr.f32.gmra.mrb[0].mxu0 %v405
    %v1345 = vpop.f32.mrb[0].mxu0
    %v1346 = vadd.f32 0.0, %v1345
    %v1347 = vpop.f32.mrb[0].mxu0
    %v1348 = vadd.f32 0.0, %v1347
    %1349 = vmatprep.mubr.f32.mxu0 0.0
    %1350 = vmatmul.mubr.f32.gmra.mrb[0].mxu0 %v408
    %v1351 = vpop.f32.mrb[0].mxu0
    %v1352 = vadd.f32 0.0, %v1351
    %v1353 = vpop.f32.mrb[0].mxu0
    %v1354 = vadd.f32 0.0, %v1353
    %1355 = vmatprep.mubr.f32.mxu0 0.0
    %1356 = vmatmul.mubr.f32.gmra.mrb[0].mxu0 %v411
    %v1357 = vpop.f32.mrb[0].mxu0
    %v1358 = vadd.f32 0.0, %v1357
    %v1359 = vpop.f32.mrb[0].mxu0
    %v1360 = vadd.f32 0.0, %v1359
    %1361 = vmatprep.mubr.f32.mxu0 0.0
    %1362 = vmatmul.mubr.f32.gmra.mrb[0].mxu0 %v414
    %v1363 = vpop.f32.mrb[0].mxu0
    %v1364 = vadd.f32 0.0, %v1363
    %v1365 = vpop.f32.mrb[0].mxu0
    %v1366 = vadd.f32 0.0, %v1365
    %1367 = vmatprep.mubr.f32.mxu0 0.0
    %1368 = vmatmul.mubr.f32.gmra.mrb[0].mxu0 %v417
    %v1369 = vpop.f32.mrb[0].mxu0
    %v1370 = vadd.f32 0.0, %v1369
    %v1371 = vpop.f32.mrb[0].mxu0
    %v1372 = vadd.f32 0.0, %v1371
    %1373 = vmatprep.mubr.f32.mxu0 0.0
    %1374 = vmatmul.mubr.f32.gmra.mrb[0].mxu0 %v420
    %v1375 = vpop.f32.mrb[0].mxu0
    %v1376 = vadd.f32 0.0, %v1375
    %v1377 = vpop.f32.mrb[0].mxu0
    %v1378 = vadd.f32 0.0, %v1377
    %1379 = vmatprep.mubr.f32.mxu0 0.0
    %1380 = vmatmul.mubr.f32.gmra.mrb[0].mxu0 %v423
    %v1381 = vpop.f32.mrb[0].mxu0
    %v1382 = vadd.f32 0.0, %v1381
    %v1383 = vpop.f32.mrb[0].mxu0
    %v1384 = vadd.f32 0.0, %v1383
    %1385 = vmatprep.mubr.f32.mxu0 0.0
    %1386 = vmatmul.mubr.f32.gmra.mrb[0].mxu0 %v426
    %v1387 = vpop.f32.mrb[0].mxu0
    %v1388 = vadd.f32 0.0, %v1387
    %v1389 = vpop.f32.mrb[0].mxu0
    %v1390 = vadd.f32 0.0, %v1389
    %1391 = vmatprep.mubr.f32.mxu0 0.0
    %1392 = vmatmul.mubr.f32.gmra.mrb[0].mxu0 %v429
    %v1393 = vpop.f32.mrb[0].mxu0
    %v1394 = vadd.f32 0.0, %v1393
    %v1395 = vpop.f32.mrb[0].mxu0
    %v1396 = vadd.f32 0.0, %v1395
    %1397 = vmatprep.mubr.f32.mxu0 0.0
    %1398 = vmatmul.mubr.f32.gmra.mrb[0].mxu0 %v432
    %v1399 = vpop.f32.mrb[0].mxu0
    %v1400 = vadd.f32 0.0, %v1399
    %v1401 = vpop.f32.mrb[0].mxu0
    %v1402 = vadd.f32 0.0, %v1401
    %1403 = vmatprep.mubr.f32.mxu0 0.0
    %1404 = vmatmul.mubr.f32.gmra.mrb[0].mxu0 %v435
    %v1405 = vpop.f32.mrb[0].mxu0
    %v1406 = vadd.f32 0.0, %v1405
    %v1407 = vpop.f32.mrb[0].mxu0
    %v1408 = vadd.f32 0.0, %v1407
    %1409 = vmatprep.mubr.f32.mxu0 0.0
    %1410 = vmatmul.mubr.f32.gmra.mrb[0].mxu0 %v438
    %v1411 = vpop.f32.mrb[0].mxu0
    %v1412 = vadd.f32 0.0, %v1411
    %v1413 = vpop.f32.mrb[0].mxu0
    %v1414 = vadd.f32 0.0, %v1413
    %1415 = vmatprep.mubr.f32.mxu0 0.0
    %1416 = vmatmul.mubr.f32.gmra.mrb[0].mxu0 %v441
    %v1417 = vpop.f32.mrb[0].mxu0
    %v1418 = vadd.f32 0.0, %v1417
    %v1419 = vpop.f32.mrb[0].mxu0
    %v1420 = vadd.f32 0.0, %v1419
    %1421 = vmatprep.mubr.f32.mxu0 0.0
    %1422 = vmatmul.mubr.f32.gmra.mrb[0].mxu0 %v444
    %v1423 = vpop.f32.mrb[0].mxu0
    %v1424 = vadd.f32 0.0, %v1423
    %v1425 = vpop.f32.mrb[0].mxu0
    %v1426 = vadd.f32 0.0, %v1425
    %1427 = vdwg.mxu0
    %s1428 = sshll.u32 %s608, 4
    %1429 = dma.done %s172, %s1428
    %v1430 = vld [vmem:[#allocation4] sm:$0xff]
    %v1431 = vld [vmem:[#allocation4 + $0x8] sm:$0xff]
    %v1432 = vld [vmem:[#allocation4 + $0x10] sm:$0xff]
    %v1433 = vld [vmem:[#allocation4 + $0x18] sm:$0xff]
    %v1434 = vld [vmem:[#allocation4 + $0x20] sm:$0xff]
    %v1435 = vld [vmem:[#allocation4 + $0x28] sm:$0xff]
    %v1436 = vld [vmem:[#allocation4 + $0x30] sm:$0xff]
    %v1437 = vld [vmem:[#allocation4 + $0x38] sm:$0xff]
    %v1438 = vld [vmem:[#allocation4 + $0x40] sm:$0xff]
    %v1439 = vld [vmem:[#allocation4 + $0x48] sm:$0xff]
    %v1440 = vld [vmem:[#allocation4 + $0x50] sm:$0xff]
    %v1441 = vld [vmem:[#allocation4 + $0x58] sm:$0xff]
    %v1442 = vld [vmem:[#allocation4 + $0x60] sm:$0xff]
    %v1443 = vld [vmem:[#allocation4 + $0x68] sm:$0xff]
    %v1444 = vld [vmem:[#allocation4 + $0x70] sm:$0xff]
    %v1445 = vld [vmem:[#allocation4 + $0x78] sm:$0xff]
    %v1446 = vld [vmem:[#allocation4 + $0x80] sm:$0xff]
    %v1447 = vld [vmem:[#allocation4 + $0x88] sm:$0xff]
    %v1448 = vld [vmem:[#allocation4 + $0x90] sm:$0xff]
    %v1449 = vld [vmem:[#allocation4 + $0x98] sm:$0xff]
    %v1450 = vld [vmem:[#allocation4 + $0xa0] sm:$0xff]
    %v1451 = vld [vmem:[#allocation4 + $0xa8] sm:$0xff]
    %v1452 = vld [vmem:[#allocation4 + $0xb0] sm:$0xff]
    %v1453 = vld [vmem:[#allocation4 + $0xb8] sm:$0xff]
    %v1454 = vld [vmem:[#allocation4 + $0xc0] sm:$0xff]
    %v1455 = vld [vmem:[#allocation4 + $0xc8] sm:$0xff]
    %v1456 = vld [vmem:[#allocation4 + $0xd0] sm:$0xff]
    %v1457 = vld [vmem:[#allocation4 + $0xd8] sm:$0xff]
    %v1458 = vld [vmem:[#allocation4 + $0xe0] sm:$0xff]
    %v1459 = vld [vmem:[#allocation4 + $0xe8] sm:$0xff]
    %v1460 = vld [vmem:[#allocation4 + $0xf0] sm:$0xff]
    %v1461 = vld [vmem:[#allocation4 + $0xf8] sm:$0xff]
    %v1462 = vld [vmem:[#allocation4 + $0x100] sm:$0xff]
    %v1463 = vld [vmem:[#allocation4 + $0x108] sm:$0xff]
    %v1464 = vld [vmem:[#allocation4 + $0x110] sm:$0xff]
    %v1465 = vld [vmem:[#allocation4 + $0x118] sm:$0xff]
    %v1466 = vld [vmem:[#allocation4 + $0x120] sm:$0xff]
    %v1467 = vld [vmem:[#allocation4 + $0x128] sm:$0xff]
    %v1468 = vld [vmem:[#allocation4 + $0x130] sm:$0xff]
    %v1469 = vld [vmem:[#allocation4 + $0x138] sm:$0xff]
    %v1470 = vld [vmem:[#allocation4 + $0x140] sm:$0xff]
    %v1471 = vld [vmem:[#allocation4 + $0x148] sm:$0xff]
    %v1472 = vld [vmem:[#allocation4 + $0x150] sm:$0xff]
    %v1473 = vld [vmem:[#allocation4 + $0x158] sm:$0xff]
    %v1474 = vld [vmem:[#allocation4 + $0x160] sm:$0xff]
    %v1475 = vld [vmem:[#allocation4 + $0x168] sm:$0xff]
    %v1476 = vld [vmem:[#allocation4 + $0x170] sm:$0xff]
    %v1477 = vld [vmem:[#allocation4 + $0x178] sm:$0xff]
    %v1478 = vld [vmem:[#allocation4 + $0x180] sm:$0xff]
    %v1479 = vld [vmem:[#allocation4 + $0x188] sm:$0xff]
    %v1480 = vld [vmem:[#allocation4 + $0x190] sm:$0xff]
    %v1481 = vld [vmem:[#allocation4 + $0x198] sm:$0xff]
    %v1482 = vld [vmem:[#allocation4 + $0x1a0] sm:$0xff]
    %v1483 = vld [vmem:[#allocation4 + $0x1a8] sm:$0xff]
    %v1484 = vld [vmem:[#allocation4 + $0x1b0] sm:$0xff]
    %v1485 = vld [vmem:[#allocation4 + $0x1b8] sm:$0xff]
    %v1486 = vld [vmem:[#allocation4 + $0x1c0] sm:$0xff]
    %v1487 = vld [vmem:[#allocation4 + $0x1c8] sm:$0xff]
    %v1488 = vld [vmem:[#allocation4 + $0x1d0] sm:$0xff]
    %v1489 = vld [vmem:[#allocation4 + $0x1d8] sm:$0xff]
    %v1490 = vld [vmem:[#allocation4 + $0x1e0] sm:$0xff]
    %v1491 = vld [vmem:[#allocation4 + $0x1e8] sm:$0xff]
    %v1492 = vld [vmem:[#allocation4 + $0x1f0] sm:$0xff]
    %v1493 = vld [vmem:[#allocation4 + $0x1f8] sm:$0xff]
    %v1494 = vld [vmem:[#allocation4 + $0x200] sm:$0xff]
    %v1495 = vld [vmem:[#allocation4 + $0x208] sm:$0xff]
    %v1496 = vld [vmem:[#allocation4 + $0x210] sm:$0xff]
    %v1497 = vld [vmem:[#allocation4 + $0x218] sm:$0xff]
    %v1498 = vld [vmem:[#allocation4 + $0x220] sm:$0xff]
    %v1499 = vld [vmem:[#allocation4 + $0x228] sm:$0xff]
    %v1500 = vld [vmem:[#allocation4 + $0x230] sm:$0xff]
    %v1501 = vld [vmem:[#allocation4 + $0x238] sm:$0xff]
    %v1502 = vld [vmem:[#allocation4 + $0x240] sm:$0xff]
    %v1503 = vld [vmem:[#allocation4 + $0x248] sm:$0xff]
    %v1504 = vld [vmem:[#allocation4 + $0x250] sm:$0xff]
    %v1505 = vld [vmem:[#allocation4 + $0x258] sm:$0xff]
    %v1506 = vld [vmem:[#allocation4 + $0x260] sm:$0xff]
    %v1507 = vld [vmem:[#allocation4 + $0x268] sm:$0xff]
    %v1508 = vld [vmem:[#allocation4 + $0x270] sm:$0xff]
    %v1509 = vld [vmem:[#allocation4 + $0x278] sm:$0xff]
    %v1510 = vld [vmem:[#allocation4 + $0x280] sm:$0xff]
    %v1511 = vld [vmem:[#allocation4 + $0x288] sm:$0xff]
    %v1512 = vld [vmem:[#allocation4 + $0x290] sm:$0xff]
    %v1513 = vld [vmem:[#allocation4 + $0x298] sm:$0xff]
    %v1514 = vld [vmem:[#allocation4 + $0x2a0] sm:$0xff]
    %v1515 = vld [vmem:[#allocation4 + $0x2a8] sm:$0xff]
    %v1516 = vld [vmem:[#allocation4 + $0x2b0] sm:$0xff]
    %v1517 = vld [vmem:[#allocation4 + $0x2b8] sm:$0xff]
    %v1518 = vld [vmem:[#allocation4 + $0x2c0] sm:$0xff]
    %v1519 = vld [vmem:[#allocation4 + $0x2c8] sm:$0xff]
    %v1520 = vld [vmem:[#allocation4 + $0x2d0] sm:$0xff]
    %v1521 = vld [vmem:[#allocation4 + $0x2d8] sm:$0xff]
    %v1522 = vld [vmem:[#allocation4 + $0x2e0] sm:$0xff]
    %v1523 = vld [vmem:[#allocation4 + $0x2e8] sm:$0xff]
    %v1524 = vld [vmem:[#allocation4 + $0x2f0] sm:$0xff]
    %v1525 = vld [vmem:[#allocation4 + $0x2f8] sm:$0xff]
    %v1526 = vld [vmem:[#allocation4 + $0x300] sm:$0xff]
    %v1527 = vld [vmem:[#allocation4 + $0x308] sm:$0xff]
    %v1528 = vld [vmem:[#allocation4 + $0x310] sm:$0xff]
    %v1529 = vld [vmem:[#allocation4 + $0x318] sm:$0xff]
    %v1530 = vld [vmem:[#allocation4 + $0x320] sm:$0xff]
    %v1531 = vld [vmem:[#allocation4 + $0x328] sm:$0xff]
    %v1532 = vld [vmem:[#allocation4 + $0x330] sm:$0xff]
    %v1533 = vld [vmem:[#allocation4 + $0x338] sm:$0xff]
    %v1534 = vld [vmem:[#allocation4 + $0x340] sm:$0xff]
    %v1535 = vld [vmem:[#allocation4 + $0x348] sm:$0xff]
    %v1536 = vld [vmem:[#allocation4 + $0x350] sm:$0xff]
    %v1537 = vld [vmem:[#allocation4 + $0x358] sm:$0xff]
    %v1538 = vld [vmem:[#allocation4 + $0x360] sm:$0xff]
    %v1539 = vld [vmem:[#allocation4 + $0x368] sm:$0xff]
    %v1540 = vld [vmem:[#allocation4 + $0x370] sm:$0xff]
    %v1541 = vld [vmem:[#allocation4 + $0x378] sm:$0xff]
    %v1542 = vld [vmem:[#allocation4 + $0x380] sm:$0xff]
    %v1543 = vld [vmem:[#allocation4 + $0x388] sm:$0xff]
    %v1544 = vld [vmem:[#allocation4 + $0x390] sm:$0xff]
    %v1545 = vld [vmem:[#allocation4 + $0x398] sm:$0xff]
    %v1546 = vld [vmem:[#allocation4 + $0x3a0] sm:$0xff]
    %v1547 = vld [vmem:[#allocation4 + $0x3a8] sm:$0xff]
    %v1548 = vld [vmem:[#allocation4 + $0x3b0] sm:$0xff]
    %v1549 = vld [vmem:[#allocation4 + $0x3b8] sm:$0xff]
    %v1550 = vld [vmem:[#allocation4 + $0x3c0] sm:$0xff]
    %v1551 = vld [vmem:[#allocation4 + $0x3c8] sm:$0xff]
    %v1552 = vld [vmem:[#allocation4 + $0x3d0] sm:$0xff]
    %v1553 = vld [vmem:[#allocation4 + $0x3d8] sm:$0xff]
    %v1554 = vld [vmem:[#allocation4 + $0x3e0] sm:$0xff]
    %v1555 = vld [vmem:[#allocation4 + $0x3e8] sm:$0xff]
    %v1556 = vld [vmem:[#allocation4 + $0x3f0] sm:$0xff]
    %v1557 = vld [vmem:[#allocation4 + $0x3f8] sm:$0xff]
    %1558 = vmatprep.subr.mxu0 %v1495
    %1559 = vmatpush1.msra.mxu0 %v1494
    %1560 = vmatprep.subr.mxu0 %v1497
    %1561 = vmatpush1.msra.mxu0 %v1496
    %1562 = vmatprep.subr.mxu0 %v1499
    %1563 = vmatpush1.msra.mxu0 %v1498
    %1564 = vmatprep.subr.mxu0 %v1501
    %1565 = vmatpush1.msra.mxu0 %v1500
    %1566 = vmatprep.subr.mxu0 %v1503
    %1567 = vmatpush1.msra.mxu0 %v1502
    %1568 = vmatprep.subr.mxu0 %v1505
    %1569 = vmatpush1.msra.mxu0 %v1504
    %1570 = vmatprep.subr.mxu0 %v1507
    %1571 = vmatpush1.msra.mxu0 %v1506
    %1572 = vmatprep.subr.mxu0 %v1509
    %1573 = vmatpush1.msra.mxu0 %v1508
    %1574 = vmatprep.subr.mxu0 %v1511
    %1575 = vmatpush1.msra.mxu0 %v1510
    %1576 = vmatprep.subr.mxu0 %v1513
    %1577 = vmatpush1.msra.mxu0 %v1512
    %1578 = vmatprep.subr.mxu0 %v1515
    %1579 = vmatpush1.msra.mxu0 %v1514
    %1580 = vmatprep.subr.mxu0 %v1517
    %1581 = vmatpush1.msra.mxu0 %v1516
    %1582 = vmatprep.subr.mxu0 %v1519
    %1583 = vmatpush1.msra.mxu0 %v1518
    %1584 = vmatprep.subr.mxu0 %v1521
    %1585 = vmatpush1.msra.mxu0 %v1520
    %1586 = vmatprep.subr.mxu0 %v1523
    %1587 = vmatpush1.msra.mxu0 %v1522
    %1588 = vmatprep.subr.mxu0 %v1525
    %1589 = vmatpush1.msra.mxu0 %v1524
    %1590 = vmatprep.subr.mxu0 %v1527
    %1591 = vmatpush1.msra.mxu0 %v1526
    %1592 = vmatprep.subr.mxu0 %v1529
    %1593 = vmatpush1.msra.mxu0 %v1528
    %1594 = vmatprep.subr.mxu0 %v1531
    %1595 = vmatpush1.msra.mxu0 %v1530
    %1596 = vmatprep.subr.mxu0 %v1533
    %1597 = vmatpush1.msra.mxu0 %v1532
    %1598 = vmatprep.subr.mxu0 %v1535
    %1599 = vmatpush1.msra.mxu0 %v1534
    %1600 = vmatprep.subr.mxu0 %v1537
    %1601 = vmatpush1.msra.mxu0 %v1536
    %1602 = vmatprep.subr.mxu0 %v1539
    %1603 = vmatpush1.msra.mxu0 %v1538
    %1604 = vmatprep.subr.mxu0 %v1541
    %1605 = vmatpush1.msra.mxu0 %v1540
    %1606 = vmatprep.subr.mxu0 %v1543
    %1607 = vmatpush1.msra.mxu0 %v1542
    %1608 = vmatprep.subr.mxu0 %v1545
    %1609 = vmatpush1.msra.mxu0 %v1544
    %1610 = vmatprep.subr.mxu0 %v1547
    %1611 = vmatpush1.msra.mxu0 %v1546
    %1612 = vmatprep.subr.mxu0 %v1549
    %1613 = vmatpush1.msra.mxu0 %v1548
    %1614 = vmatprep.subr.mxu0 %v1551
    %1615 = vmatpush1.msra.mxu0 %v1550
    %1616 = vmatprep.subr.mxu0 %v1553
    %1617 = vmatpush1.msra.mxu0 %v1552
    %1618 = vmatprep.subr.mxu0 %v1555
    %1619 = vmatpush1.msra.mxu0 %v1554
    %1620 = vmatprep.subr.mxu0 %v1557
    %1621 = vmatpush1.msra.mxu0 %v1556
    %1622 = vmatprep.mubr.f32.mxu0 %v1360
    %1623 = vmatmul.mubr.f32.gmra.mrb[0].mxu0 %v1358
    %v1624 = vpop.f32.mrb[0].mxu0
    %v1625 = vadd.f32 0.0, %v1624
    %v1626 = vpop.f32.mrb[0].mxu0
    %v1627 = vadd.f32 0.0, %v1626
    %1628 = vmatprep.mubr.f32.mxu0 %v1366
    %1629 = vmatmul.mubr.f32.gmra.mrb[0].mxu0 %v1364
    %v1630 = vpop.f32.mrb[0].mxu0
    %v1631 = vadd.f32 0.0, %v1630
    %v1632 = vpop.f32.mrb[0].mxu0
    %v1633 = vadd.f32 0.0, %v1632
    %1634 = vmatprep.mubr.f32.mxu0 %v1372
    %1635 = vmatmul.mubr.f32.gmra.mrb[0].mxu0 %v1370
    %v1636 = vpop.f32.mrb[0].mxu0
    %v1637 = vadd.f32 0.0, %v1636
    %v1638 = vpop.f32.mrb[0].mxu0
    %v1639 = vadd.f32 0.0, %v1638
    %1640 = vmatprep.mubr.f32.mxu0 %v1378
    %1641 = vmatmul.mubr.f32.gmra.mrb[0].mxu0 %v1376
    %v1642 = vpop.f32.mrb[0].mxu0
    %v1643 = vadd.f32 0.0, %v1642
    %v1644 = vpop.f32.mrb[0].mxu0
    %v1645 = vadd.f32 0.0, %v1644
    %1646 = vdwg.mxu0
    %1647 = vmatprep.subr.mxu0 %v1431
    %1648 = vmatpush1.msra.mxu0 %v1430
    %1649 = vmatprep.subr.mxu0 %v1433
    %1650 = vmatpush1.msra.mxu0 %v1432
    %1651 = vmatprep.subr.mxu0 %v1435
    %1652 = vmatpush1.msra.mxu0 %v1434
    %1653 = vmatprep.subr.mxu0 %v1437
    %1654 = vmatpush1.msra.mxu0 %v1436
    %1655 = vmatprep.subr.mxu0 %v1439
    %1656 = vmatpush1.msra.mxu0 %v1438
    %1657 = vmatprep.subr.mxu0 %v1441
    %1658 = vmatpush1.msra.mxu0 %v1440
    %1659 = vmatprep.subr.mxu0 %v1443
    %1660 = vmatpush1.msra.mxu0 %v1442
    %1661 = vmatprep.subr.mxu0 %v1445
    %1662 = vmatpush1.msra.mxu0 %v1444
    %1663 = vmatprep.subr.mxu0 %v1447
    %1664 = vmatpush1.msra.mxu0 %v1446
    %1665 = vmatprep.subr.mxu0 %v1449
    %1666 = vmatpush1.msra.mxu0 %v1448
    %1667 = vmatprep.subr.mxu0 %v1451
    %1668 = vmatpush1.msra.mxu0 %v1450
    %1669 = vmatprep.subr.mxu0 %v1453
    %1670 = vmatpush1.msra.mxu0 %v1452
    %1671 = vmatprep.subr.mxu0 %v1455
    %1672 = vmatpush1.msra.mxu0 %v1454
    %1673 = vmatprep.subr.mxu0 %v1457
    %1674 = vmatpush1.msra.mxu0 %v1456
    %1675 = vmatprep.subr.mxu0 %v1459
    %1676 = vmatpush1.msra.mxu0 %v1458
    %1677 = vmatprep.subr.mxu0 %v1461
    %1678 = vmatpush1.msra.mxu0 %v1460
    %1679 = vmatprep.subr.mxu0 %v1463
    %1680 = vmatpush1.msra.mxu0 %v1462
    %1681 = vmatprep.subr.mxu0 %v1465
    %1682 = vmatpush1.msra.mxu0 %v1464
    %1683 = vmatprep.subr.mxu0 %v1467
    %1684 = vmatpush1.msra.mxu0 %v1466
    %1685 = vmatprep.subr.mxu0 %v1469
    %1686 = vmatpush1.msra.mxu0 %v1468
    %1687 = vmatprep.subr.mxu0 %v1471
    %1688 = vmatpush1.msra.mxu0 %v1470
    %1689 = vmatprep.subr.mxu0 %v1473
    %1690 = vmatpush1.msra.mxu0 %v1472
    %1691 = vmatprep.subr.mxu0 %v1475
    %1692 = vmatpush1.msra.mxu0 %v1474
    %1693 = vmatprep.subr.mxu0 %v1477
    %1694 = vmatpush1.msra.mxu0 %v1476
    %1695 = vmatprep.subr.mxu0 %v1479
    %1696 = vmatpush1.msra.mxu0 %v1478
    %1697 = vmatprep.subr.mxu0 %v1481
    %1698 = vmatpush1.msra.mxu0 %v1480
    %1699 = vmatprep.subr.mxu0 %v1483
    %1700 = vmatpush1.msra.mxu0 %v1482
    %1701 = vmatprep.subr.mxu0 %v1485
    %1702 = vmatpush1.msra.mxu0 %v1484
    %1703 = vmatprep.subr.mxu0 %v1487
    %1704 = vmatpush1.msra.mxu0 %v1486
    %1705 = vmatprep.subr.mxu0 %v1489
    %1706 = vmatpush1.msra.mxu0 %v1488
    %1707 = vmatprep.subr.mxu0 %v1491
    %1708 = vmatpush1.msra.mxu0 %v1490
    %1709 = vmatprep.subr.mxu0 %v1493
    %1710 = vmatpush1.msra.mxu0 %v1492
    %1711 = vmatprep.mubr.f32.mxu0 %v1336
    %1712 = vmatmul.mubr.f32.gmra.mrb[0].mxu0 %v1334
    %v1713 = vpop.f32.mrb[0].mxu0
    %v1714 = vadd.f32 %v1625, %v1713
    %v1715 = vpop.f32.mrb[0].mxu0
    %v1716 = vadd.f32 %v1627, %v1715
    %1717 = vmatprep.mubr.f32.mxu0 %v1342
    %1718 = vmatmul.mubr.f32.gmra.mrb[0].mxu0 %v1340
    %v1719 = vpop.f32.mrb[0].mxu0
    %v1720 = vadd.f32 %v1631, %v1719
    %v1721 = vpop.f32.mrb[0].mxu0
    %v1722 = vadd.f32 %v1633, %v1721
    %1723 = vmatprep.mubr.f32.mxu0 %v1348
    %1724 = vmatmul.mubr.f32.gmra.mrb[0].mxu0 %v1346
    %v1725 = vpop.f32.mrb[0].mxu0
    %v1726 = vadd.f32 %v1637, %v1725
    %v1727 = vpop.f32.mrb[0].mxu0
    %v1728 = vadd.f32 %v1639, %v1727
    %1729 = vmatprep.mubr.f32.mxu0 %v1354
    %1730 = vmatmul.mubr.f32.gmra.mrb[0].mxu0 %v1352
    %v1731 = vpop.f32.mrb[0].mxu0
    %v1732 = vadd.f32 %v1643, %v1731
    %v1733 = vpop.f32.mrb[0].mxu0
    %v1734 = vadd.f32 %v1645, %v1733
    %1735 = vdwg.mxu0
    %v1736 = vld [vmem:[#allocation4 + $0x400] sm:$0xff]
    %v1737 = vld [vmem:[#allocation4 + $0x408] sm:$0xff]
    %v1738 = vld [vmem:[#allocation4 + $0x410] sm:$0xff]
    %v1739 = vld [vmem:[#allocation4 + $0x418] sm:$0xff]
    %v1740 = vld [vmem:[#allocation4 + $0x420] sm:$0xff]
    %v1741 = vld [vmem:[#allocation4 + $0x428] sm:$0xff]
    %v1742 = vld [vmem:[#allocation4 + $0x430] sm:$0xff]
    %v1743 = vld [vmem:[#allocation4 + $0x438] sm:$0xff]
    %v1744 = vld [vmem:[#allocation4 + $0x440] sm:$0xff]
    %v1745 = vld [vmem:[#allocation4 + $0x448] sm:$0xff]
    %v1746 = vld [vmem:[#allocation4 + $0x450] sm:$0xff]
    %v1747 = vld [vmem:[#allocation4 + $0x458] sm:$0xff]
    %v1748 = vld [vmem:[#allocation4 + $0x460] sm:$0xff]
    %v1749 = vld [vmem:[#allocation4 + $0x468] sm:$0xff]
    %v1750 = vld [vmem:[#allocation4 + $0x470] sm:$0xff]
    %v1751 = vld [vmem:[#allocation4 + $0x478] sm:$0xff]
    %v1752 = vld [vmem:[#allocation4 + $0x480] sm:$0xff]
    %v1753 = vld [vmem:[#allocation4 + $0x488] sm:$0xff]
    %v1754 = vld [vmem:[#allocation4 + $0x490] sm:$0xff]
    %v1755 = vld [vmem:[#allocation4 + $0x498] sm:$0xff]
    %v1756 = vld [vmem:[#allocation4 + $0x4a0] sm:$0xff]
    %v1757 = vld [vmem:[#allocation4 + $0x4a8] sm:$0xff]
    %v1758 = vld [vmem:[#allocation4 + $0x4b0] sm:$0xff]
    %v1759 = vld [vmem:[#allocation4 + $0x4b8] sm:$0xff]
    %v1760 = vld [vmem:[#allocation4 + $0x4c0] sm:$0xff]
    %v1761 = vld [vmem:[#allocation4 + $0x4c8] sm:$0xff]
    %v1762 = vld [vmem:[#allocation4 + $0x4d0] sm:$0xff]
    %v1763 = vld [vmem:[#allocation4 + $0x4d8] sm:$0xff]
    %v1764 = vld [vmem:[#allocation4 + $0x4e0] sm:$0xff]
    %v1765 = vld [vmem:[#allocation4 + $0x4e8] sm:$0xff]
    %v1766 = vld [vmem:[#allocation4 + $0x4f0] sm:$0xff]
    %v1767 = vld [vmem:[#allocation4 + $0x4f8] sm:$0xff]
    %v1768 = vld [vmem:[#allocation4 + $0x500] sm:$0xff]
    %v1769 = vld [vmem:[#allocation4 + $0x508] sm:$0xff]
    %v1770 = vld [vmem:[#allocation4 + $0x510] sm:$0xff]
    %v1771 = vld [vmem:[#allocation4 + $0x518] sm:$0xff]
    %v1772 = vld [vmem:[#allocation4 + $0x520] sm:$0xff]
    %v1773 = vld [vmem:[#allocation4 + $0x528] sm:$0xff]
    %v1774 = vld [vmem:[#allocation4 + $0x530] sm:$0xff]
    %v1775 = vld [vmem:[#allocation4 + $0x538] sm:$0xff]
    %v1776 = vld [vmem:[#allocation4 + $0x540] sm:$0xff]
    %v1777 = vld [vmem:[#allocation4 + $0x548] sm:$0xff]
    %v1778 = vld [vmem:[#allocation4 + $0x550] sm:$0xff]
    %v1779 = vld [vmem:[#allocation4 + $0x558] sm:$0xff]
    %v1780 = vld [vmem:[#allocation4 + $0x560] sm:$0xff]
    %v1781 = vld [vmem:[#allocation4 + $0x568] sm:$0xff]
    %v1782 = vld [vmem:[#allocation4 + $0x570] sm:$0xff]
    %v1783 = vld [vmem:[#allocation4 + $0x578] sm:$0xff]
    %v1784 = vld [vmem:[#allocation4 + $0x580] sm:$0xff]
    %v1785 = vld [vmem:[#allocation4 + $0x588] sm:$0xff]
    %v1786 = vld [vmem:[#allocation4 + $0x590] sm:$0xff]
    %v1787 = vld [vmem:[#allocation4 + $0x598] sm:$0xff]
    %v1788 = vld [vmem:[#allocation4 + $0x5a0] sm:$0xff]
    %v1789 = vld [vmem:[#allocation4 + $0x5a8] sm:$0xff]
    %v1790 = vld [vmem:[#allocation4 + $0x5b0] sm:$0xff]
    %v1791 = vld [vmem:[#allocation4 + $0x5b8] sm:$0xff]
    %v1792 = vld [vmem:[#allocation4 + $0x5c0] sm:$0xff]
    %v1793 = vld [vmem:[#allocation4 + $0x5c8] sm:$0xff]
    %v1794 = vld [vmem:[#allocation4 + $0x5d0] sm:$0xff]
    %v1795 = vld [vmem:[#allocation4 + $0x5d8] sm:$0xff]
    %v1796 = vld [vmem:[#allocation4 + $0x5e0] sm:$0xff]
    %v1797 = vld [vmem:[#allocation4 + $0x5e8] sm:$0xff]
    %v1798 = vld [vmem:[#allocation4 + $0x5f0] sm:$0xff]
    %v1799 = vld [vmem:[#allocation4 + $0x5f8] sm:$0xff]
    %1800 = vmatprep.subr.mxu0 %v1737
    %1801 = vmatpush1.msra.mxu0 %v1736
    %1802 = vmatprep.subr.mxu0 %v1739
    %1803 = vmatpush1.msra.mxu0 %v1738
    %1804 = vmatprep.subr.mxu0 %v1741
    %1805 = vmatpush1.msra.mxu0 %v1740
    %1806 = vmatprep.subr.mxu0 %v1743
    %1807 = vmatpush1.msra.mxu0 %v1742
    %1808 = vmatprep.subr.mxu0 %v1745
    %1809 = vmatpush1.msra.mxu0 %v1744
    %1810 = vmatprep.subr.mxu0 %v1747
    %1811 = vmatpush1.msra.mxu0 %v1746
    %1812 = vmatprep.subr.mxu0 %v1749
    %1813 = vmatpush1.msra.mxu0 %v1748
    %1814 = vmatprep.subr.mxu0 %v1751
    %1815 = vmatpush1.msra.mxu0 %v1750
    %1816 = vmatprep.subr.mxu0 %v1753
    %1817 = vmatpush1.msra.mxu0 %v1752
    %1818 = vmatprep.subr.mxu0 %v1755
    %1819 = vmatpush1.msra.mxu0 %v1754
    %1820 = vmatprep.subr.mxu0 %v1757
    %1821 = vmatpush1.msra.mxu0 %v1756
    %1822 = vmatprep.subr.mxu0 %v1759
    %1823 = vmatpush1.msra.mxu0 %v1758
    %1824 = vmatprep.subr.mxu0 %v1761
    %1825 = vmatpush1.msra.mxu0 %v1760
    %1826 = vmatprep.subr.mxu0 %v1763
    %1827 = vmatpush1.msra.mxu0 %v1762
    %1828 = vmatprep.subr.mxu0 %v1765
    %1829 = vmatpush1.msra.mxu0 %v1764
    %1830 = vmatprep.subr.mxu0 %v1767
    %1831 = vmatpush1.msra.mxu0 %v1766
    %1832 = vmatprep.subr.mxu0 %v1769
    %1833 = vmatpush1.msra.mxu0 %v1768
    %1834 = vmatprep.subr.mxu0 %v1771
    %1835 = vmatpush1.msra.mxu0 %v1770
    %1836 = vmatprep.subr.mxu0 %v1773
    %1837 = vmatpush1.msra.mxu0 %v1772
    %1838 = vmatprep.subr.mxu0 %v1775
    %1839 = vmatpush1.msra.mxu0 %v1774
    %1840 = vmatprep.subr.mxu0 %v1777
    %1841 = vmatpush1.msra.mxu0 %v1776
    %1842 = vmatprep.subr.mxu0 %v1779
    %1843 = vmatpush1.msra.mxu0 %v1778
    %1844 = vmatprep.subr.mxu0 %v1781
    %1845 = vmatpush1.msra.mxu0 %v1780
    %1846 = vmatprep.subr.mxu0 %v1783
    %1847 = vmatpush1.msra.mxu0 %v1782
    %1848 = vmatprep.subr.mxu0 %v1785
    %1849 = vmatpush1.msra.mxu0 %v1784
    %1850 = vmatprep.subr.mxu0 %v1787
    %1851 = vmatpush1.msra.mxu0 %v1786
    %1852 = vmatprep.subr.mxu0 %v1789
    %1853 = vmatpush1.msra.mxu0 %v1788
    %1854 = vmatprep.subr.mxu0 %v1791
    %1855 = vmatpush1.msra.mxu0 %v1790
    %1856 = vmatprep.subr.mxu0 %v1793
    %1857 = vmatpush1.msra.mxu0 %v1792
    %1858 = vmatprep.subr.mxu0 %v1795
    %1859 = vmatpush1.msra.mxu0 %v1794
    %1860 = vmatprep.subr.mxu0 %v1797
    %1861 = vmatpush1.msra.mxu0 %v1796
    %1862 = vmatprep.subr.mxu0 %v1799
    %1863 = vmatpush1.msra.mxu0 %v1798
    %1864 = vmatprep.mubr.f32.mxu0 %v1384
    %1865 = vmatmul.mubr.f32.gmra.mrb[0].mxu0 %v1382
    %v1866 = vpop.f32.mrb[0].mxu0
    %v1867 = vadd.f32 0.0, %v1866
    %v1868 = vpop.f32.mrb[0].mxu0
    %v1869 = vadd.f32 0.0, %v1868
    %1870 = vmatprep.mubr.f32.mxu0 %v1390
    %1871 = vmatmul.mubr.f32.gmra.mrb[0].mxu0 %v1388
    %v1872 = vpop.f32.mrb[0].mxu0
    %v1873 = vadd.f32 0.0, %v1872
    %v1874 = vpop.f32.mrb[0].mxu0
    %v1875 = vadd.f32 0.0, %v1874
    %1876 = vmatprep.mubr.f32.mxu0 %v1396
    %1877 = vmatmul.mubr.f32.gmra.mrb[0].mxu0 %v1394
    %v1878 = vpop.f32.mrb[0].mxu0
    %v1879 = vadd.f32 0.0, %v1878
    %v1880 = vpop.f32.mrb[0].mxu0
    %v1881 = vadd.f32 0.0, %v1880
    %1882 = vmatprep.mubr.f32.mxu0 %v1402
    %1883 = vmatmul.mubr.f32.gmra.mrb[0].mxu0 %v1400
    %v1884 = vpop.f32.mrb[0].mxu0
    %v1885 = vadd.f32 0.0, %v1884
    %v1886 = vpop.f32.mrb[0].mxu0
    %v1887 = vadd.f32 0.0, %v1886
    %1888 = vdwg.mxu0
    %v1889 = vadd.f32 %v1714, %v1867
    %v1890 = vadd.f32 %v1716, %v1869
    %v1891 = vadd.f32 %v1720, %v1873
    %v1892 = vadd.f32 %v1722, %v1875
    %v1893 = vadd.f32 %v1726, %v1879
    %v1894 = vadd.f32 %v1728, %v1881
    %v1895 = vadd.f32 %v1732, %v1885
    %v1896 = vadd.f32 %v1734, %v1887
    %v1897 = vld [vmem:[#allocation4 + $0x600] sm:$0xff]
    %v1898 = vld [vmem:[#allocation4 + $0x608] sm:$0xff]
    %v1899 = vld [vmem:[#allocation4 + $0x610] sm:$0xff]
    %v1900 = vld [vmem:[#allocation4 + $0x618] sm:$0xff]
    %v1901 = vld [vmem:[#allocation4 + $0x620] sm:$0xff]
    %v1902 = vld [vmem:[#allocation4 + $0x628] sm:$0xff]
    %v1903 = vld [vmem:[#allocation4 + $0x630] sm:$0xff]
    %v1904 = vld [vmem:[#allocation4 + $0x638] sm:$0xff]
    %v1905 = vld [vmem:[#allocation4 + $0x640] sm:$0xff]
    %v1906 = vld [vmem:[#allocation4 + $0x648] sm:$0xff]
    %v1907 = vld [vmem:[#allocation4 + $0x650] sm:$0xff]
    %v1908 = vld [vmem:[#allocation4 + $0x658] sm:$0xff]
    %v1909 = vld [vmem:[#allocation4 + $0x660] sm:$0xff]
    %v1910 = vld [vmem:[#allocation4 + $0x668] sm:$0xff]
    %v1911 = vld [vmem:[#allocation4 + $0x670] sm:$0xff]
    %v1912 = vld [vmem:[#allocation4 + $0x678] sm:$0xff]
    %v1913 = vld [vmem:[#allocation4 + $0x680] sm:$0xff]
    %v1914 = vld [vmem:[#allocation4 + $0x688] sm:$0xff]
    %v1915 = vld [vmem:[#allocation4 + $0x690] sm:$0xff]
    %v1916 = vld [vmem:[#allocation4 + $0x698] sm:$0xff]
    %v1917 = vld [vmem:[#allocation4 + $0x6a0] sm:$0xff]
    %v1918 = vld [vmem:[#allocation4 + $0x6a8] sm:$0xff]
    %v1919 = vld [vmem:[#allocation4 + $0x6b0] sm:$0xff]
    %v1920 = vld [vmem:[#allocation4 + $0x6b8] sm:$0xff]
    %v1921 = vld [vmem:[#allocation4 + $0x6c0] sm:$0xff]
    %v1922 = vld [vmem:[#allocation4 + $0x6c8] sm:$0xff]
    %v1923 = vld [vmem:[#allocation4 + $0x6d0] sm:$0xff]
    %v1924 = vld [vmem:[#allocation4 + $0x6d8] sm:$0xff]
    %v1925 = vld [vmem:[#allocation4 + $0x6e0] sm:$0xff]
    %v1926 = vld [vmem:[#allocation4 + $0x6e8] sm:$0xff]
    %v1927 = vld [vmem:[#allocation4 + $0x6f0] sm:$0xff]
    %v1928 = vld [vmem:[#allocation4 + $0x6f8] sm:$0xff]
    %v1929 = vld [vmem:[#allocation4 + $0x700] sm:$0xff]
    %v1930 = vld [vmem:[#allocation4 + $0x708] sm:$0xff]
    %v1931 = vld [vmem:[#allocation4 + $0x710] sm:$0xff]
    %v1932 = vld [vmem:[#allocation4 + $0x718] sm:$0xff]
    %v1933 = vld [vmem:[#allocation4 + $0x720] sm:$0xff]
    %v1934 = vld [vmem:[#allocation4 + $0x728] sm:$0xff]
    %v1935 = vld [vmem:[#allocation4 + $0x730] sm:$0xff]
    %v1936 = vld [vmem:[#allocation4 + $0x738] sm:$0xff]
    %v1937 = vld [vmem:[#allocation4 + $0x740] sm:$0xff]
    %v1938 = vld [vmem:[#allocation4 + $0x748] sm:$0xff]
    %v1939 = vld [vmem:[#allocation4 + $0x750] sm:$0xff]
    %v1940 = vld [vmem:[#allocation4 + $0x758] sm:$0xff]
    %v1941 = vld [vmem:[#allocation4 + $0x760] sm:$0xff]
    %v1942 = vld [vmem:[#allocation4 + $0x768] sm:$0xff]
    %v1943 = vld [vmem:[#allocation4 + $0x770] sm:$0xff]
    %v1944 = vld [vmem:[#allocation4 + $0x778] sm:$0xff]
    %v1945 = vld [vmem:[#allocation4 + $0x780] sm:$0xff]
    %v1946 = vld [vmem:[#allocation4 + $0x788] sm:$0xff]
    %v1947 = vld [vmem:[#allocation4 + $0x790] sm:$0xff]
    %v1948 = vld [vmem:[#allocation4 + $0x798] sm:$0xff]
    %v1949 = vld [vmem:[#allocation4 + $0x7a0] sm:$0xff]
    %v1950 = vld [vmem:[#allocation4 + $0x7a8] sm:$0xff]
    %v1951 = vld [vmem:[#allocation4 + $0x7b0] sm:$0xff]
    %v1952 = vld [vmem:[#allocation4 + $0x7b8] sm:$0xff]
    %v1953 = vld [vmem:[#allocation4 + $0x7c0] sm:$0xff]
    %v1954 = vld [vmem:[#allocation4 + $0x7c8] sm:$0xff]
    %v1955 = vld [vmem:[#allocation4 + $0x7d0] sm:$0xff]
    %v1956 = vld [vmem:[#allocation4 + $0x7d8] sm:$0xff]
    %v1957 = vld [vmem:[#allocation4 + $0x7e0] sm:$0xff]
    %v1958 = vld [vmem:[#allocation4 + $0x7e8] sm:$0xff]
    %v1959 = vld [vmem:[#allocation4 + $0x7f0] sm:$0xff]
    %v1960 = vld [vmem:[#allocation4 + $0x7f8] sm:$0xff]
    %1961 = vmatprep.subr.mxu0 %v1898
    %1962 = vmatpush1.msra.mxu0 %v1897
    %1963 = vmatprep.subr.mxu0 %v1900
    %1964 = vmatpush1.msra.mxu0 %v1899
    %1965 = vmatprep.subr.mxu0 %v1902
    %1966 = vmatpush1.msra.mxu0 %v1901
    %1967 = vmatprep.subr.mxu0 %v1904
    %1968 = vmatpush1.msra.mxu0 %v1903
    %1969 = vmatprep.subr.mxu0 %v1906
    %1970 = vmatpush1.msra.mxu0 %v1905
    %1971 = vmatprep.subr.mxu0 %v1908
    %1972 = vmatpush1.msra.mxu0 %v1907
    %1973 = vmatprep.subr.mxu0 %v1910
    %1974 = vmatpush1.msra.mxu0 %v1909
    %1975 = vmatprep.subr.mxu0 %v1912
    %1976 = vmatpush1.msra.mxu0 %v1911
    %1977 = vmatprep.subr.mxu0 %v1914
    %1978 = vmatpush1.msra.mxu0 %v1913
    %1979 = vmatprep.subr.mxu0 %v1916
    %1980 = vmatpush1.msra.mxu0 %v1915
    %1981 = vmatprep.subr.mxu0 %v1918
    %1982 = vmatpush1.msra.mxu0 %v1917
    %1983 = vmatprep.subr.mxu0 %v1920
    %1984 = vmatpush1.msra.mxu0 %v1919
    %1985 = vmatprep.subr.mxu0 %v1922
    %1986 = vmatpush1.msra.mxu0 %v1921
    %1987 = vmatprep.subr.mxu0 %v1924
    %1988 = vmatpush1.msra.mxu0 %v1923
    %1989 = vmatprep.subr.mxu0 %v1926
    %1990 = vmatpush1.msra.mxu0 %v1925
    %1991 = vmatprep.subr.mxu0 %v1928
    %1992 = vmatpush1.msra.mxu0 %v1927
    %1993 = vmatprep.subr.mxu0 %v1930
    %1994 = vmatpush1.msra.mxu0 %v1929
    %1995 = vmatprep.subr.mxu0 %v1932
    %1996 = vmatpush1.msra.mxu0 %v1931
    %1997 = vmatprep.subr.mxu0 %v1934
    %1998 = vmatpush1.msra.mxu0 %v1933
    %1999 = vmatprep.subr.mxu0 %v1936
    %2000 = vmatpush1.msra.mxu0 %v1935
    %2001 = vmatprep.subr.mxu0 %v1938
    %2002 = vmatpush1.msra.mxu0 %v1937
    %2003 = vmatprep.subr.mxu0 %v1940
    %2004 = vmatpush1.msra.mxu0 %v1939
    %2005 = vmatprep.subr.mxu0 %v1942
    %2006 = vmatpush1.msra.mxu0 %v1941
    %2007 = vmatprep.subr.mxu0 %v1944
    %2008 = vmatpush1.msra.mxu0 %v1943
    %2009 = vmatprep.subr.mxu0 %v1946
    %2010 = vmatpush1.msra.mxu0 %v1945
    %2011 = vmatprep.subr.mxu0 %v1948
    %2012 = vmatpush1.msra.mxu0 %v1947
    %2013 = vmatprep.subr.mxu0 %v1950
    %2014 = vmatpush1.msra.mxu0 %v1949
    %2015 = vmatprep.subr.mxu0 %v1952
    %2016 = vmatpush1.msra.mxu0 %v1951
    %2017 = vmatprep.subr.mxu0 %v1954
    %2018 = vmatpush1.msra.mxu0 %v1953
    %2019 = vmatprep.subr.mxu0 %v1956
    %2020 = vmatpush1.msra.mxu0 %v1955
    %2021 = vmatprep.subr.mxu0 %v1958
    %2022 = vmatpush1.msra.mxu0 %v1957
    %2023 = vmatprep.subr.mxu0 %v1960
    %2024 = vmatpush1.msra.mxu0 %v1959
    %2025 = vmatprep.mubr.f32.mxu0 %v1408
    %2026 = vmatmul.mubr.f32.gmra.mrb[0].mxu0 %v1406
    %v2027 = vpop.f32.mrb[0].mxu0
    %v2028 = vadd.f32 0.0, %v2027
    %v2029 = vpop.f32.mrb[0].mxu0
    %v2030 = vadd.f32 0.0, %v2029
    %2031 = vmatprep.mubr.f32.mxu0 %v1414
    %2032 = vmatmul.mubr.f32.gmra.mrb[0].mxu0 %v1412
    %v2033 = vpop.f32.mrb[0].mxu0
    %v2034 = vadd.f32 0.0, %v2033
    %v2035 = vpop.f32.mrb[0].mxu0
    %v2036 = vadd.f32 0.0, %v2035
    %2037 = vmatprep.mubr.f32.mxu0 %v1420
    %2038 = vmatmul.mubr.f32.gmra.mrb[0].mxu0 %v1418
    %v2039 = vpop.f32.mrb[0].mxu0
    %v2040 = vadd.f32 0.0, %v2039
    %v2041 = vpop.f32.mrb[0].mxu0
    %v2042 = vadd.f32 0.0, %v2041
    %2043 = vmatprep.mubr.f32.mxu0 %v1426
    %2044 = vmatmul.mubr.f32.gmra.mrb[0].mxu0 %v1424
    %v2045 = vpop.f32.mrb[0].mxu0
    %v2046 = vadd.f32 0.0, %v2045
    %v2047 = vpop.f32.mrb[0].mxu0
    %v2048 = vadd.f32 0.0, %v2047
    %2049 = vdwg.mxu0
    %v2050 = vadd.f32 %v1889, %v2028
    %v2051 = vadd.f32 %v1890, %v2030
    %v2052 = vadd.f32 %v1891, %v2034
    %v2053 = vadd.f32 %v1892, %v2036
    %v2054 = vadd.f32 %v1893, %v2040
    %v2055 = vadd.f32 %v1894, %v2042
    %v2056 = vadd.f32 %v1895, %v2046
    %v2057 = vadd.f32 %v1896, %v2048
    %v2058 = vld [vmem:[#allocation16] sm:$0x3]
    %v2060 = vlaneseq
    %v2061 = vshrl.u32 %v2060, 7
    %v2062 = vsub.s32 0, %v2061
    %v2063 = vrot.slane %v2058, %v2062
    %v2064 = vlaneseq
    %v2065 = vshrl.u32 %v2064, 7
    %v2066 = vsub.s32 1, %v2065
    %v2067 = vrot.slane %v2058, %v2066
    %v2070 = vadd.f32 %v2050, %v2063
    %v2071 = vadd.f32 %v2051, %v2067
    %v2072 = vadd.f32 %v2052, %v2063
    %v2073 = vadd.f32 %v2053, %v2067
    %v2074 = vadd.f32 %v2054, %v2063
    %v2075 = vadd.f32 %v2055, %v2067
    %v2076 = vadd.f32 %v2056, %v2063
    %v2077 = vadd.f32 %v2057, %v2067
    %v2078 = vmax.f32 %v2070, 0.0
    %v2079 = vmax.f32 %v2071, 0.0
    %v2080 = vmax.f32 %v2072, 0.0
    %v2081 = vmax.f32 %v2073, 0.0
    %v2082 = vmax.f32 %v2074, 0.0
    %v2083 = vmax.f32 %v2075, 0.0
    %v2084 = vmax.f32 %v2076, 0.0
    %v2085 = vmax.f32 %v2077, 0.0
    %2086 = vmatprep.subr.mxu0 %v2079
    %2087 = vmatpush1.msra.mxu0 %v2078
    %2088 = vmatprep.subr.mxu0 %v2081
    %2089 = vmatpush1.msra.mxu0 %v2080
    %2090 = vmatprep.subr.mxu0 %v2083
    %2091 = vmatpush1.msra.mxu0 %v2082
    %2092 = vmatprep.subr.mxu0 %v2085
    %2093 = vmatpush1.msra.mxu0 %v2084
    %2094 = vmatprep.subr.mxu0 0.0
    %2095 = vmatpush1.msra.mxu0 0.0
    %2096 = vmatprep.subr.mxu0 0.0
    %2097 = vmatpush1.msra.mxu0 0.0
    %2098 = vmatprep.subr.mxu0 0.0
    %2099 = vmatpush1.msra.mxu0 0.0
    %2100 = vmatprep.subr.mxu0 0.0
    %2101 = vmatpush1.msra.mxu0 0.0
    %2102 = vmatprep.subr.mxu0 0.0
    %2103 = vmatpush1.msra.mxu0 0.0
    %2104 = vmatprep.subr.mxu0 0.0
    %2105 = vmatpush1.msra.mxu0 0.0
    %2106 = vmatprep.subr.mxu0 0.0
    %2107 = vmatpush1.msra.mxu0 0.0
    %2108 = vmatprep.subr.mxu0 0.0
    %2109 = vmatpush1.msra.mxu0 0.0
    %2110 = vmatprep.subr.mxu0 0.0
    %2111 = vmatpush1.msra.mxu0 0.0
    %2112 = vmatprep.subr.mxu0 0.0
    %2113 = vmatpush1.msra.mxu0 0.0
    %2114 = vmatprep.subr.mxu0 0.0
    %2115 = vmatpush1.msra.mxu0 0.0
    %2116 = vmatprep.subr.mxu0 0.0
    %2117 = vmatpush1.msra.mxu0 0.0
    %2118 = vmatprep.subr.mxu0 0.0
    %2119 = vmatpush1.msra.mxu0 0.0
    %2120 = vmatprep.subr.mxu0 0.0
    %2121 = vmatpush1.msra.mxu0 0.0
    %2122 = vmatprep.subr.mxu0 0.0
    %2123 = vmatpush1.msra.mxu0 0.0
    %2124 = vmatprep.subr.mxu0 0.0
    %2125 = vmatpush1.msra.mxu0 0.0
    %2126 = vmatprep.subr.mxu0 0.0
    %2127 = vmatpush1.msra.mxu0 0.0
    %2128 = vmatprep.subr.mxu0 0.0
    %2129 = vmatpush1.msra.mxu0 0.0
    %2130 = vmatprep.subr.mxu0 0.0
    %2131 = vmatpush1.msra.mxu0 0.0
    %2132 = vmatprep.subr.mxu0 0.0
    %2133 = vmatpush1.msra.mxu0 0.0
    %2134 = vmatprep.subr.mxu0 0.0
    %2135 = vmatpush1.msra.mxu0 0.0
    %2136 = vmatprep.subr.mxu0 0.0
    %2137 = vmatpush1.msra.mxu0 0.0
    %2138 = vmatprep.subr.mxu0 0.0
    %2139 = vmatpush1.msra.mxu0 0.0
    %2140 = vmatprep.subr.mxu0 0.0
    %2141 = vmatpush1.msra.mxu0 0.0
    %2142 = vmatprep.subr.mxu0 0.0
    %2143 = vmatpush1.msra.mxu0 0.0
    %2144 = vmatprep.subr.mxu0 0.0
    %2145 = vmatpush1.msra.mxu0 0.0
    %2146 = vmatprep.subr.mxu0 0.0
    %2147 = vmatpush1.msra.mxu0 0.0
    %2148 = vmatprep.subr.mxu0 0.0
    %2149 = vmatpush1.msra.mxu0 0.0
    %2150 = vmatprep.mubr.f32.mxu0 0.0
    %2151 = vmatmul.mubr.f32.gmra.mrb[0].mxu0 %v399
    %v2152 = vpop.f32.mrb[0].mxu0
    %v2153 = vadd.f32 0.0, %v2152
    %v2154 = vpop.f32.mrb[0].mxu0
    %v2155 = vadd.f32 0.0, %v2154
    %2156 = vmatprep.mubr.f32.mxu0 0.0
    %2157 = vmatmul.mubr.f32.gmra.mrb[0].mxu0 %v402
    %v2158 = vpop.f32.mrb[0].mxu0
    %v2159 = vadd.f32 0.0, %v2158
    %v2160 = vpop.f32.mrb[0].mxu0
    %v2161 = vadd.f32 0.0, %v2160
    %2162 = vmatprep.mubr.f32.mxu0 0.0
    %2163 = vmatmul.mubr.f32.gmra.mrb[0].mxu0 %v405
    %v2164 = vpop.f32.mrb[0].mxu0
    %v2165 = vadd.f32 0.0, %v2164
    %v2166 = vpop.f32.mrb[0].mxu0
    %v2167 = vadd.f32 0.0, %v2166
    %2168 = vmatprep.mubr.f32.mxu0 0.0
    %2169 = vmatmul.mubr.f32.gmra.mrb[0].mxu0 %v408
    %v2170 = vpop.f32.mrb[0].mxu0
    %v2171 = vadd.f32 0.0, %v2170
    %v2172 = vpop.f32.mrb[0].mxu0
    %v2173 = vadd.f32 0.0, %v2172
    %2174 = vmatprep.mubr.f32.mxu0 0.0
    %2175 = vmatmul.mubr.f32.gmra.mrb[0].mxu0 %v411
    %v2176 = vpop.f32.mrb[0].mxu0
    %v2177 = vadd.f32 0.0, %v2176
    %v2178 = vpop.f32.mrb[0].mxu0
    %v2179 = vadd.f32 0.0, %v2178
    %2180 = vmatprep.mubr.f32.mxu0 0.0
    %2181 = vmatmul.mubr.f32.gmra.mrb[0].mxu0 %v414
    %v2182 = vpop.f32.mrb[0].mxu0
    %v2183 = vadd.f32 0.0, %v2182
    %v2184 = vpop.f32.mrb[0].mxu0
    %v2185 = vadd.f32 0.0, %v2184
    %2186 = vmatprep.mubr.f32.mxu0 0.0
    %2187 = vmatmul.mubr.f32.gmra.mrb[0].mxu0 %v417
    %v2188 = vpop.f32.mrb[0].mxu0
    %v2189 = vadd.f32 0.0, %v2188
    %v2190 = vpop.f32.mrb[0].mxu0
    %v2191 = vadd.f32 0.0, %v2190
    %2192 = vmatprep.mubr.f32.mxu0 0.0
    %2193 = vmatmul.mubr.f32.gmra.mrb[0].mxu0 %v420
    %v2194 = vpop.f32.mrb[0].mxu0
    %v2195 = vadd.f32 0.0, %v2194
    %v2196 = vpop.f32.mrb[0].mxu0
    %v2197 = vadd.f32 0.0, %v2196
    %2198 = vmatprep.mubr.f32.mxu0 0.0
    %2199 = vmatmul.mubr.f32.gmra.mrb[0].mxu0 %v423
    %v2200 = vpop.f32.mrb[0].mxu0
    %v2201 = vadd.f32 0.0, %v2200
    %v2202 = vpop.f32.mrb[0].mxu0
    %v2203 = vadd.f32 0.0, %v2202
    %2204 = vmatprep.mubr.f32.mxu0 0.0
    %2205 = vmatmul.mubr.f32.gmra.mrb[0].mxu0 %v426
    %v2206 = vpop.f32.mrb[0].mxu0
    %v2207 = vadd.f32 0.0, %v2206
    %v2208 = vpop.f32.mrb[0].mxu0
    %v2209 = vadd.f32 0.0, %v2208
    %2210 = vmatprep.mubr.f32.mxu0 0.0
    %2211 = vmatmul.mubr.f32.gmra.mrb[0].mxu0 %v429
    %v2212 = vpop.f32.mrb[0].mxu0
    %v2213 = vadd.f32 0.0, %v2212
    %v2214 = vpop.f32.mrb[0].mxu0
    %v2215 = vadd.f32 0.0, %v2214
    %2216 = vmatprep.mubr.f32.mxu0 0.0
    %2217 = vmatmul.mubr.f32.gmra.mrb[0].mxu0 %v432
    %v2218 = vpop.f32.mrb[0].mxu0
    %v2219 = vadd.f32 0.0, %v2218
    %v2220 = vpop.f32.mrb[0].mxu0
    %v2221 = vadd.f32 0.0, %v2220
    %2222 = vmatprep.mubr.f32.mxu0 0.0
    %2223 = vmatmul.mubr.f32.gmra.mrb[0].mxu0 %v435
    %v2224 = vpop.f32.mrb[0].mxu0
    %v2225 = vadd.f32 0.0, %v2224
    %v2226 = vpop.f32.mrb[0].mxu0
    %v2227 = vadd.f32 0.0, %v2226
    %2228 = vmatprep.mubr.f32.mxu0 0.0
    %2229 = vmatmul.mubr.f32.gmra.mrb[0].mxu0 %v438
    %v2230 = vpop.f32.mrb[0].mxu0
    %v2231 = vadd.f32 0.0, %v2230
    %v2232 = vpop.f32.mrb[0].mxu0
    %v2233 = vadd.f32 0.0, %v2232
    %2234 = vmatprep.mubr.f32.mxu0 0.0
    %2235 = vmatmul.mubr.f32.gmra.mrb[0].mxu0 %v441
    %v2236 = vpop.f32.mrb[0].mxu0
    %v2237 = vadd.f32 0.0, %v2236
    %v2238 = vpop.f32.mrb[0].mxu0
    %v2239 = vadd.f32 0.0, %v2238
    %2240 = vmatprep.mubr.f32.mxu0 0.0
    %2241 = vmatmul.mubr.f32.gmra.mrb[0].mxu0 %v444
    %v2242 = vpop.f32.mrb[0].mxu0
    %v2243 = vadd.f32 0.0, %v2242
    %v2244 = vpop.f32.mrb[0].mxu0
    %v2245 = vadd.f32 0.0, %v2244
    %2246 = vdwg.mxu0
    %s2247 = smul.u32 8, 256
    %s2248 = smul.u32 %s2247, 2
    %s2249 = sshll.u32 %s2248, 4
    %2250 = dma.done %s184, %s2249
    %v2251 = vld [vmem:[#allocation5] sm:$0xff]
    %v2252 = vld [vmem:[#allocation5 + $0x8] sm:$0xff]
    %v2253 = vld [vmem:[#allocation5 + $0x10] sm:$0xff]
    %v2254 = vld [vmem:[#allocation5 + $0x18] sm:$0xff]
    %v2255 = vld [vmem:[#allocation5 + $0x20] sm:$0xff]
    %v2256 = vld [vmem:[#allocation5 + $0x28] sm:$0xff]
    %v2257 = vld [vmem:[#allocation5 + $0x30] sm:$0xff]
    %v2258 = vld [vmem:[#allocation5 + $0x38] sm:$0xff]
    %v2259 = vld [vmem:[#allocation5 + $0x40] sm:$0xff]
    %v2260 = vld [vmem:[#allocation5 + $0x48] sm:$0xff]
    %v2261 = vld [vmem:[#allocation5 + $0x50] sm:$0xff]
    %v2262 = vld [vmem:[#allocation5 + $0x58] sm:$0xff]
    %v2263 = vld [vmem:[#allocation5 + $0x60] sm:$0xff]
    %v2264 = vld [vmem:[#allocation5 + $0x68] sm:$0xff]
    %v2265 = vld [vmem:[#allocation5 + $0x70] sm:$0xff]
    %v2266 = vld [vmem:[#allocation5 + $0x78] sm:$0xff]
    %v2267 = vld [vmem:[#allocation5 + $0x80] sm:$0xff]
    %v2268 = vld [vmem:[#allocation5 + $0x88] sm:$0xff]
    %v2269 = vld [vmem:[#allocation5 + $0x90] sm:$0xff]
    %v2270 = vld [vmem:[#allocation5 + $0x98] sm:$0xff]
    %v2271 = vld [vmem:[#allocation5 + $0xa0] sm:$0xff]
    %v2272 = vld [vmem:[#allocation5 + $0xa8] sm:$0xff]
    %v2273 = vld [vmem:[#allocation5 + $0xb0] sm:$0xff]
    %v2274 = vld [vmem:[#allocation5 + $0xb8] sm:$0xff]
    %v2275 = vld [vmem:[#allocation5 + $0xc0] sm:$0xff]
    %v2276 = vld [vmem:[#allocation5 + $0xc8] sm:$0xff]
    %v2277 = vld [vmem:[#allocation5 + $0xd0] sm:$0xff]
    %v2278 = vld [vmem:[#allocation5 + $0xd8] sm:$0xff]
    %v2279 = vld [vmem:[#allocation5 + $0xe0] sm:$0xff]
    %v2280 = vld [vmem:[#allocation5 + $0xe8] sm:$0xff]
    %v2281 = vld [vmem:[#allocation5 + $0xf0] sm:$0xff]
    %v2282 = vld [vmem:[#allocation5 + $0xf8] sm:$0xff]
    %v2283 = vld [vmem:[#allocation5 + $0x100] sm:$0xff]
    %v2284 = vld [vmem:[#allocation5 + $0x108] sm:$0xff]
    %v2285 = vld [vmem:[#allocation5 + $0x110] sm:$0xff]
    %v2286 = vld [vmem:[#allocation5 + $0x118] sm:$0xff]
    %v2287 = vld [vmem:[#allocation5 + $0x120] sm:$0xff]
    %v2288 = vld [vmem:[#allocation5 + $0x128] sm:$0xff]
    %v2289 = vld [vmem:[#allocation5 + $0x130] sm:$0xff]
    %v2290 = vld [vmem:[#allocation5 + $0x138] sm:$0xff]
    %v2291 = vld [vmem:[#allocation5 + $0x140] sm:$0xff]
    %v2292 = vld [vmem:[#allocation5 + $0x148] sm:$0xff]
    %v2293 = vld [vmem:[#allocation5 + $0x150] sm:$0xff]
    %v2294 = vld [vmem:[#allocation5 + $0x158] sm:$0xff]
    %v2295 = vld [vmem:[#allocation5 + $0x160] sm:$0xff]
    %v2296 = vld [vmem:[#allocation5 + $0x168] sm:$0xff]
    %v2297 = vld [vmem:[#allocation5 + $0x170] sm:$0xff]
    %v2298 = vld [vmem:[#allocation5 + $0x178] sm:$0xff]
    %v2299 = vld [vmem:[#allocation5 + $0x180] sm:$0xff]
    %v2300 = vld [vmem:[#allocation5 + $0x188] sm:$0xff]
    %v2301 = vld [vmem:[#allocation5 + $0x190] sm:$0xff]
    %v2302 = vld [vmem:[#allocation5 + $0x198] sm:$0xff]
    %v2303 = vld [vmem:[#allocation5 + $0x1a0] sm:$0xff]
    %v2304 = vld [vmem:[#allocation5 + $0x1a8] sm:$0xff]
    %v2305 = vld [vmem:[#allocation5 + $0x1b0] sm:$0xff]
    %v2306 = vld [vmem:[#allocation5 + $0x1b8] sm:$0xff]
    %v2307 = vld [vmem:[#allocation5 + $0x1c0] sm:$0xff]
    %v2308 = vld [vmem:[#allocation5 + $0x1c8] sm:$0xff]
    %v2309 = vld [vmem:[#allocation5 + $0x1d0] sm:$0xff]
    %v2310 = vld [vmem:[#allocation5 + $0x1d8] sm:$0xff]
    %v2311 = vld [vmem:[#allocation5 + $0x1e0] sm:$0xff]
    %v2312 = vld [vmem:[#allocation5 + $0x1e8] sm:$0xff]
    %v2313 = vld [vmem:[#allocation5 + $0x1f0] sm:$0xff]
    %v2314 = vld [vmem:[#allocation5 + $0x1f8] sm:$0xff]
    %v2315 = vld [vmem:[#allocation5 + $0x200] sm:$0xff]
    %v2316 = vld [vmem:[#allocation5 + $0x208] sm:$0xff]
    %v2317 = vld [vmem:[#allocation5 + $0x210] sm:$0xff]
    %v2318 = vld [vmem:[#allocation5 + $0x218] sm:$0xff]
    %v2319 = vld [vmem:[#allocation5 + $0x220] sm:$0xff]
    %v2320 = vld [vmem:[#allocation5 + $0x228] sm:$0xff]
    %v2321 = vld [vmem:[#allocation5 + $0x230] sm:$0xff]
    %v2322 = vld [vmem:[#allocation5 + $0x238] sm:$0xff]
    %v2323 = vld [vmem:[#allocation5 + $0x240] sm:$0xff]
    %v2324 = vld [vmem:[#allocation5 + $0x248] sm:$0xff]
    %v2325 = vld [vmem:[#allocation5 + $0x250] sm:$0xff]
    %v2326 = vld [vmem:[#allocation5 + $0x258] sm:$0xff]
    %v2327 = vld [vmem:[#allocation5 + $0x260] sm:$0xff]
    %v2328 = vld [vmem:[#allocation5 + $0x268] sm:$0xff]
    %v2329 = vld [vmem:[#allocation5 + $0x270] sm:$0xff]
    %v2330 = vld [vmem:[#allocation5 + $0x278] sm:$0xff]
    %v2331 = vld [vmem:[#allocation5 + $0x280] sm:$0xff]
    %v2332 = vld [vmem:[#allocation5 + $0x288] sm:$0xff]
    %v2333 = vld [vmem:[#allocation5 + $0x290] sm:$0xff]
    %v2334 = vld [vmem:[#allocation5 + $0x298] sm:$0xff]
    %v2335 = vld [vmem:[#allocation5 + $0x2a0] sm:$0xff]
    %v2336 = vld [vmem:[#allocation5 + $0x2a8] sm:$0xff]
    %v2337 = vld [vmem:[#allocation5 + $0x2b0] sm:$0xff]
    %v2338 = vld [vmem:[#allocation5 + $0x2b8] sm:$0xff]
    %v2339 = vld [vmem:[#allocation5 + $0x2c0] sm:$0xff]
    %v2340 = vld [vmem:[#allocation5 + $0x2c8] sm:$0xff]
    %v2341 = vld [vmem:[#allocation5 + $0x2d0] sm:$0xff]
    %v2342 = vld [vmem:[#allocation5 + $0x2d8] sm:$0xff]
    %v2343 = vld [vmem:[#allocation5 + $0x2e0] sm:$0xff]
    %v2344 = vld [vmem:[#allocation5 + $0x2e8] sm:$0xff]
    %v2345 = vld [vmem:[#allocation5 + $0x2f0] sm:$0xff]
    %v2346 = vld [vmem:[#allocation5 + $0x2f8] sm:$0xff]
    %v2347 = vld [vmem:[#allocation5 + $0x300] sm:$0xff]
    %v2348 = vld [vmem:[#allocation5 + $0x308] sm:$0xff]
    %v2349 = vld [vmem:[#allocation5 + $0x310] sm:$0xff]
    %v2350 = vld [vmem:[#allocation5 + $0x318] sm:$0xff]
    %v2351 = vld [vmem:[#allocation5 + $0x320] sm:$0xff]
    %v2352 = vld [vmem:[#allocation5 + $0x328] sm:$0xff]
    %v2353 = vld [vmem:[#allocation5 + $0x330] sm:$0xff]
    %v2354 = vld [vmem:[#allocation5 + $0x338] sm:$0xff]
    %v2355 = vld [vmem:[#allocation5 + $0x340] sm:$0xff]
    %v2356 = vld [vmem:[#allocation5 + $0x348] sm:$0xff]
    %v2357 = vld [vmem:[#allocation5 + $0x350] sm:$0xff]
    %v2358 = vld [vmem:[#allocation5 + $0x358] sm:$0xff]
    %v2359 = vld [vmem:[#allocation5 + $0x360] sm:$0xff]
    %v2360 = vld [vmem:[#allocation5 + $0x368] sm:$0xff]
    %v2361 = vld [vmem:[#allocation5 + $0x370] sm:$0xff]
    %v2362 = vld [vmem:[#allocation5 + $0x378] sm:$0xff]
    %v2363 = vld [vmem:[#allocation5 + $0x380] sm:$0xff]
    %v2364 = vld [vmem:[#allocation5 + $0x388] sm:$0xff]
    %v2365 = vld [vmem:[#allocation5 + $0x390] sm:$0xff]
    %v2366 = vld [vmem:[#allocation5 + $0x398] sm:$0xff]
    %v2367 = vld [vmem:[#allocation5 + $0x3a0] sm:$0xff]
    %v2368 = vld [vmem:[#allocation5 + $0x3a8] sm:$0xff]
    %v2369 = vld [vmem:[#allocation5 + $0x3b0] sm:$0xff]
    %v2370 = vld [vmem:[#allocation5 + $0x3b8] sm:$0xff]
    %v2371 = vld [vmem:[#allocation5 + $0x3c0] sm:$0xff]
    %v2372 = vld [vmem:[#allocation5 + $0x3c8] sm:$0xff]
    %v2373 = vld [vmem:[#allocation5 + $0x3d0] sm:$0xff]
    %v2374 = vld [vmem:[#allocation5 + $0x3d8] sm:$0xff]
    %v2375 = vld [vmem:[#allocation5 + $0x3e0] sm:$0xff]
    %v2376 = vld [vmem:[#allocation5 + $0x3e8] sm:$0xff]
    %v2377 = vld [vmem:[#allocation5 + $0x3f0] sm:$0xff]
    %v2378 = vld [vmem:[#allocation5 + $0x3f8] sm:$0xff]
    %2379 = vmatprep.subr.mxu0 %v2316
    %2380 = vmatpush1.msra.mxu0 %v2315
    %2381 = vmatprep.subr.mxu0 %v2318
    %2382 = vmatpush1.msra.mxu0 %v2317
    %2383 = vmatprep.subr.mxu0 %v2320
    %2384 = vmatpush1.msra.mxu0 %v2319
    %2385 = vmatprep.subr.mxu0 %v2322
    %2386 = vmatpush1.msra.mxu0 %v2321
    %2387 = vmatprep.subr.mxu0 %v2324
    %2388 = vmatpush1.msra.mxu0 %v2323
    %2389 = vmatprep.subr.mxu0 %v2326
    %2390 = vmatpush1.msra.mxu0 %v2325
    %2391 = vmatprep.subr.mxu0 %v2328
    %2392 = vmatpush1.msra.mxu0 %v2327
    %2393 = vmatprep.subr.mxu0 %v2330
    %2394 = vmatpush1.msra.mxu0 %v2329
    %2395 = vmatprep.subr.mxu0 %v2332
    %2396 = vmatpush1.msra.mxu0 %v2331
    %2397 = vmatprep.subr.mxu0 %v2334
    %2398 = vmatpush1.msra.mxu0 %v2333
    %2399 = vmatprep.subr.mxu0 %v2336
    %2400 = vmatpush1.msra.mxu0 %v2335
    %2401 = vmatprep.subr.mxu0 %v2338
    %2402 = vmatpush1.msra.mxu0 %v2337
    %2403 = vmatprep.subr.mxu0 %v2340
    %2404 = vmatpush1.msra.mxu0 %v2339
    %2405 = vmatprep.subr.mxu0 %v2342
    %2406 = vmatpush1.msra.mxu0 %v2341
    %2407 = vmatprep.subr.mxu0 %v2344
    %2408 = vmatpush1.msra.mxu0 %v2343
    %2409 = vmatprep.subr.mxu0 %v2346
    %2410 = vmatpush1.msra.mxu0 %v2345
    %2411 = vmatprep.subr.mxu0 %v2348
    %2412 = vmatpush1.msra.mxu0 %v2347
    %2413 = vmatprep.subr.mxu0 %v2350
    %2414 = vmatpush1.msra.mxu0 %v2349
    %2415 = vmatprep.subr.mxu0 %v2352
    %2416 = vmatpush1.msra.mxu0 %v2351
    %2417 = vmatprep.subr.mxu0 %v2354
    %2418 = vmatpush1.msra.mxu0 %v2353
    %2419 = vmatprep.subr.mxu0 %v2356
    %2420 = vmatpush1.msra.mxu0 %v2355
    %2421 = vmatprep.subr.mxu0 %v2358
    %2422 = vmatpush1.msra.mxu0 %v2357
    %2423 = vmatprep.subr.mxu0 %v2360
    %2424 = vmatpush1.msra.mxu0 %v2359
    %2425 = vmatprep.subr.mxu0 %v2362
    %2426 = vmatpush1.msra.mxu0 %v2361
    %2427 = vmatprep.subr.mxu0 %v2364
    %2428 = vmatpush1.msra.mxu0 %v2363
    %2429 = vmatprep.subr.mxu0 %v2366
    %2430 = vmatpush1.msra.mxu0 %v2365
    %2431 = vmatprep.subr.mxu0 %v2368
    %2432 = vmatpush1.msra.mxu0 %v2367
    %2433 = vmatprep.subr.mxu0 %v2370
    %2434 = vmatpush1.msra.mxu0 %v2369
    %2435 = vmatprep.subr.mxu0 %v2372
    %2436 = vmatpush1.msra.mxu0 %v2371
    %2437 = vmatprep.subr.mxu0 %v2374
    %2438 = vmatpush1.msra.mxu0 %v2373
    %2439 = vmatprep.subr.mxu0 %v2376
    %2440 = vmatpush1.msra.mxu0 %v2375
    %2441 = vmatprep.subr.mxu0 %v2378
    %2442 = vmatpush1.msra.mxu0 %v2377
    %2443 = vmatprep.mubr.f32.mxu0 %v1336
    %2444 = vmatmul.mubr.f32.gmra.mrb[0].mxu0 %v1334
    %v2445 = vpop.f32.mrb[0].mxu0
    %v2446 = vadd.f32 0.0, %v2445
    %v2447 = vpop.f32.mrb[0].mxu0
    %v2448 = vadd.f32 0.0, %v2447
    %2449 = vmatprep.mubr.f32.mxu0 %v1342
    %2450 = vmatmul.mubr.f32.gmra.mrb[0].mxu0 %v1340
    %v2451 = vpop.f32.mrb[0].mxu0
    %v2452 = vadd.f32 0.0, %v2451
    %v2453 = vpop.f32.mrb[0].mxu0
    %v2454 = vadd.f32 0.0, %v2453
    %2455 = vmatprep.mubr.f32.mxu0 %v1348
    %2456 = vmatmul.mubr.f32.gmra.mrb[0].mxu0 %v1346
    %v2457 = vpop.f32.mrb[0].mxu0
    %v2458 = vadd.f32 0.0, %v2457
    %v2459 = vpop.f32.mrb[0].mxu0
    %v2460 = vadd.f32 0.0, %v2459
    %2461 = vmatprep.mubr.f32.mxu0 %v1354
    %2462 = vmatmul.mubr.f32.gmra.mrb[0].mxu0 %v1352
    %v2463 = vpop.f32.mrb[0].mxu0
    %v2464 = vadd.f32 0.0, %v2463
    %v2465 = vpop.f32.mrb[0].mxu0
    %v2466 = vadd.f32 0.0, %v2465
    %2467 = vdwg.mxu0
    %2468 = vmatprep.subr.mxu0 %v2252
    %2469 = vmatpush1.msra.mxu0 %v2251
    %2470 = vmatprep.subr.mxu0 %v2254
    %2471 = vmatpush1.msra.mxu0 %v2253
    %2472 = vmatprep.subr.mxu0 %v2256
    %2473 = vmatpush1.msra.mxu0 %v2255
    %2474 = vmatprep.subr.mxu0 %v2258
    %2475 = vmatpush1.msra.mxu0 %v2257
    %2476 = vmatprep.subr.mxu0 %v2260
    %2477 = vmatpush1.msra.mxu0 %v2259
    %2478 = vmatprep.subr.mxu0 %v2262
    %2479 = vmatpush1.msra.mxu0 %v2261
    %2480 = vmatprep.subr.mxu0 %v2264
    %2481 = vmatpush1.msra.mxu0 %v2263
    %2482 = vmatprep.subr.mxu0 %v2266
    %2483 = vmatpush1.msra.mxu0 %v2265
    %2484 = vmatprep.subr.mxu0 %v2268
    %2485 = vmatpush1.msra.mxu0 %v2267
    %2486 = vmatprep.subr.mxu0 %v2270
    %2487 = vmatpush1.msra.mxu0 %v2269
    %2488 = vmatprep.subr.mxu0 %v2272
    %2489 = vmatpush1.msra.mxu0 %v2271
    %2490 = vmatprep.subr.mxu0 %v2274
    %2491 = vmatpush1.msra.mxu0 %v2273
    %2492 = vmatprep.subr.mxu0 %v2276
    %2493 = vmatpush1.msra.mxu0 %v2275
    %2494 = vmatprep.subr.mxu0 %v2278
    %2495 = vmatpush1.msra.mxu0 %v2277
    %2496 = vmatprep.subr.mxu0 %v2280
    %2497 = vmatpush1.msra.mxu0 %v2279
    %2498 = vmatprep.subr.mxu0 %v2282
    %2499 = vmatpush1.msra.mxu0 %v2281
    %2500 = vmatprep.subr.mxu0 %v2284
    %2501 = vmatpush1.msra.mxu0 %v2283
    %2502 = vmatprep.subr.mxu0 %v2286
    %2503 = vmatpush1.msra.mxu0 %v2285
    %2504 = vmatprep.subr.mxu0 %v2288
    %2505 = vmatpush1.msra.mxu0 %v2287
    %2506 = vmatprep.subr.mxu0 %v2290
    %2507 = vmatpush1.msra.mxu0 %v2289
    %2508 = vmatprep.subr.mxu0 %v2292
    %2509 = vmatpush1.msra.mxu0 %v2291
    %2510 = vmatprep.subr.mxu0 %v2294
    %2511 = vmatpush1.msra.mxu0 %v2293
    %2512 = vmatprep.subr.mxu0 %v2296
    %2513 = vmatpush1.msra.mxu0 %v2295
    %2514 = vmatprep.subr.mxu0 %v2298
    %2515 = vmatpush1.msra.mxu0 %v2297
    %2516 = vmatprep.subr.mxu0 %v2300
    %2517 = vmatpush1.msra.mxu0 %v2299
    %2518 = vmatprep.subr.mxu0 %v2302
    %2519 = vmatpush1.msra.mxu0 %v2301
    %2520 = vmatprep.subr.mxu0 %v2304
    %2521 = vmatpush1.msra.mxu0 %v2303
    %2522 = vmatprep.subr.mxu0 %v2306
    %2523 = vmatpush1.msra.mxu0 %v2305
    %2524 = vmatprep.subr.mxu0 %v2308
    %2525 = vmatpush1.msra.mxu0 %v2307
    %2526 = vmatprep.subr.mxu0 %v2310
    %2527 = vmatpush1.msra.mxu0 %v2309
    %2528 = vmatprep.subr.mxu0 %v2312
    %2529 = vmatpush1.msra.mxu0 %v2311
    %2530 = vmatprep.subr.mxu0 %v2314
    %2531 = vmatpush1.msra.mxu0 %v2313
    %2532 = vmatprep.mubr.f32.mxu0 %v2155
    %2533 = vmatmul.mubr.f32.gmra.mrb[0].mxu0 %v2153
    %v2534 = vpop.f32.mrb[0].mxu0
    %v2535 = vadd.f32 %v2446, %v2534
    %v2536 = vpop.f32.mrb[0].mxu0
    %v2537 = vadd.f32 %v2448, %v2536
    %2538 = vmatprep.mubr.f32.mxu0 %v2161
    %2539 = vmatmul.mubr.f32.gmra.mrb[0].mxu0 %v2159
    %v2540 = vpop.f32.mrb[0].mxu0
    %v2541 = vadd.f32 %v2452, %v2540
    %v2542 = vpop.f32.mrb[0].mxu0
    %v2543 = vadd.f32 %v2454, %v2542
    %2544 = vmatprep.mubr.f32.mxu0 %v2167
    %2545 = vmatmul.mubr.f32.gmra.mrb[0].mxu0 %v2165
    %v2546 = vpop.f32.mrb[0].mxu0
    %v2547 = vadd.f32 %v2458, %v2546
    %v2548 = vpop.f32.mrb[0].mxu0
    %v2549 = vadd.f32 %v2460, %v2548
    %2550 = vmatprep.mubr.f32.mxu0 %v2173
    %2551 = vmatmul.mubr.f32.gmra.mrb[0].mxu0 %v2171
    %v2552 = vpop.f32.mrb[0].mxu0
    %v2553 = vadd.f32 %v2464, %v2552
    %v2554 = vpop.f32.mrb[0].mxu0
    %v2555 = vadd.f32 %v2466, %v2554
    %2556 = vdwg.mxu0
    %v2557 = vld [vmem:[#allocation5 + $0x400] sm:$0xff]
    %v2558 = vld [vmem:[#allocation5 + $0x408] sm:$0xff]
    %v2559 = vld [vmem:[#allocation5 + $0x410] sm:$0xff]
    %v2560 = vld [vmem:[#allocation5 + $0x418] sm:$0xff]
    %v2561 = vld [vmem:[#allocation5 + $0x420] sm:$0xff]
    %v2562 = vld [vmem:[#allocation5 + $0x428] sm:$0xff]
    %v2563 = vld [vmem:[#allocation5 + $0x430] sm:$0xff]
    %v2564 = vld [vmem:[#allocation5 + $0x438] sm:$0xff]
    %v2565 = vld [vmem:[#allocation5 + $0x440] sm:$0xff]
    %v2566 = vld [vmem:[#allocation5 + $0x448] sm:$0xff]
    %v2567 = vld [vmem:[#allocation5 + $0x450] sm:$0xff]
    %v2568 = vld [vmem:[#allocation5 + $0x458] sm:$0xff]
    %v2569 = vld [vmem:[#allocation5 + $0x460] sm:$0xff]
    %v2570 = vld [vmem:[#allocation5 + $0x468] sm:$0xff]
    %v2571 = vld [vmem:[#allocation5 + $0x470] sm:$0xff]
    %v2572 = vld [vmem:[#allocation5 + $0x478] sm:$0xff]
    %v2573 = vld [vmem:[#allocation5 + $0x480] sm:$0xff]
    %v2574 = vld [vmem:[#allocation5 + $0x488] sm:$0xff]
    %v2575 = vld [vmem:[#allocation5 + $0x490] sm:$0xff]
    %v2576 = vld [vmem:[#allocation5 + $0x498] sm:$0xff]
    %v2577 = vld [vmem:[#allocation5 + $0x4a0] sm:$0xff]
    %v2578 = vld [vmem:[#allocation5 + $0x4a8] sm:$0xff]
    %v2579 = vld [vmem:[#allocation5 + $0x4b0] sm:$0xff]
    %v2580 = vld [vmem:[#allocation5 + $0x4b8] sm:$0xff]
    %v2581 = vld [vmem:[#allocation5 + $0x4c0] sm:$0xff]
    %v2582 = vld [vmem:[#allocation5 + $0x4c8] sm:$0xff]
    %v2583 = vld [vmem:[#allocation5 + $0x4d0] sm:$0xff]
    %v2584 = vld [vmem:[#allocation5 + $0x4d8] sm:$0xff]
    %v2585 = vld [vmem:[#allocation5 + $0x4e0] sm:$0xff]
    %v2586 = vld [vmem:[#allocation5 + $0x4e8] sm:$0xff]
    %v2587 = vld [vmem:[#allocation5 + $0x4f0] sm:$0xff]
    %v2588 = vld [vmem:[#allocation5 + $0x4f8] sm:$0xff]
    %v2589 = vld [vmem:[#allocation5 + $0x500] sm:$0xff]
    %v2590 = vld [vmem:[#allocation5 + $0x508] sm:$0xff]
    %v2591 = vld [vmem:[#allocation5 + $0x510] sm:$0xff]
    %v2592 = vld [vmem:[#allocation5 + $0x518] sm:$0xff]
    %v2593 = vld [vmem:[#allocation5 + $0x520] sm:$0xff]
    %v2594 = vld [vmem:[#allocation5 + $0x528] sm:$0xff]
    %v2595 = vld [vmem:[#allocation5 + $0x530] sm:$0xff]
    %v2596 = vld [vmem:[#allocation5 + $0x538] sm:$0xff]
    %v2597 = vld [vmem:[#allocation5 + $0x540] sm:$0xff]
    %v2598 = vld [vmem:[#allocation5 + $0x548] sm:$0xff]
    %v2599 = vld [vmem:[#allocation5 + $0x550] sm:$0xff]
    %v2600 = vld [vmem:[#allocation5 + $0x558] sm:$0xff]
    %v2601 = vld [vmem:[#allocation5 + $0x560] sm:$0xff]
    %v2602 = vld [vmem:[#allocation5 + $0x568] sm:$0xff]
    %v2603 = vld [vmem:[#allocation5 + $0x570] sm:$0xff]
    %v2604 = vld [vmem:[#allocation5 + $0x578] sm:$0xff]
    %v2605 = vld [vmem:[#allocation5 + $0x580] sm:$0xff]
    %v2606 = vld [vmem:[#allocation5 + $0x588] sm:$0xff]
    %v2607 = vld [vmem:[#allocation5 + $0x590] sm:$0xff]
    %v2608 = vld [vmem:[#allocation5 + $0x598] sm:$0xff]
    %v2609 = vld [vmem:[#allocation5 + $0x5a0] sm:$0xff]
    %v2610 = vld [vmem:[#allocation5 + $0x5a8] sm:$0xff]
    %v2611 = vld [vmem:[#allocation5 + $0x5b0] sm:$0xff]
    %v2612 = vld [vmem:[#allocation5 + $0x5b8] sm:$0xff]
    %v2613 = vld [vmem:[#allocation5 + $0x5c0] sm:$0xff]
    %v2614 = vld [vmem:[#allocation5 + $0x5c8] sm:$0xff]
    %v2615 = vld [vmem:[#allocation5 + $0x5d0] sm:$0xff]
    %v2616 = vld [vmem:[#allocation5 + $0x5d8] sm:$0xff]
    %v2617 = vld [vmem:[#allocation5 + $0x5e0] sm:$0xff]
    %v2618 = vld [vmem:[#allocation5 + $0x5e8] sm:$0xff]
    %v2619 = vld [vmem:[#allocation5 + $0x5f0] sm:$0xff]
    %v2620 = vld [vmem:[#allocation5 + $0x5f8] sm:$0xff]
    %2621 = vmatprep.subr.mxu0 %v2558
    %2622 = vmatpush1.msra.mxu0 %v2557
    %2623 = vmatprep.subr.mxu0 %v2560
    %2624 = vmatpush1.msra.mxu0 %v2559
    %2625 = vmatprep.subr.mxu0 %v2562
    %2626 = vmatpush1.msra.mxu0 %v2561
    %2627 = vmatprep.subr.mxu0 %v2564
    %2628 = vmatpush1.msra.mxu0 %v2563
    %2629 = vmatprep.subr.mxu0 %v2566
    %2630 = vmatpush1.msra.mxu0 %v2565
    %2631 = vmatprep.subr.mxu0 %v2568
    %2632 = vmatpush1.msra.mxu0 %v2567
    %2633 = vmatprep.subr.mxu0 %v2570
    %2634 = vmatpush1.msra.mxu0 %v2569
    %2635 = vmatprep.subr.mxu0 %v2572
    %2636 = vmatpush1.msra.mxu0 %v2571
    %2637 = vmatprep.subr.mxu0 %v2574
    %2638 = vmatpush1.msra.mxu0 %v2573
    %2639 = vmatprep.subr.mxu0 %v2576
    %2640 = vmatpush1.msra.mxu0 %v2575
    %2641 = vmatprep.subr.mxu0 %v2578
    %2642 = vmatpush1.msra.mxu0 %v2577
    %2643 = vmatprep.subr.mxu0 %v2580
    %2644 = vmatpush1.msra.mxu0 %v2579
    %2645 = vmatprep.subr.mxu0 %v2582
    %2646 = vmatpush1.msra.mxu0 %v2581
    %2647 = vmatprep.subr.mxu0 %v2584
    %2648 = vmatpush1.msra.mxu0 %v2583
    %2649 = vmatprep.subr.mxu0 %v2586
    %2650 = vmatpush1.msra.mxu0 %v2585
    %2651 = vmatprep.subr.mxu0 %v2588
    %2652 = vmatpush1.msra.mxu0 %v2587
    %2653 = vmatprep.subr.mxu0 %v2590
    %2654 = vmatpush1.msra.mxu0 %v2589
    %2655 = vmatprep.subr.mxu0 %v2592
    %2656 = vmatpush1.msra.mxu0 %v2591
    %2657 = vmatprep.subr.mxu0 %v2594
    %2658 = vmatpush1.msra.mxu0 %v2593
    %2659 = vmatprep.subr.mxu0 %v2596
    %2660 = vmatpush1.msra.mxu0 %v2595
    %2661 = vmatprep.subr.mxu0 %v2598
    %2662 = vmatpush1.msra.mxu0 %v2597
    %2663 = vmatprep.subr.mxu0 %v2600
    %2664 = vmatpush1.msra.mxu0 %v2599
    %2665 = vmatprep.subr.mxu0 %v2602
    %2666 = vmatpush1.msra.mxu0 %v2601
    %2667 = vmatprep.subr.mxu0 %v2604
    %2668 = vmatpush1.msra.mxu0 %v2603
    %2669 = vmatprep.subr.mxu0 %v2606
    %2670 = vmatpush1.msra.mxu0 %v2605
    %2671 = vmatprep.subr.mxu0 %v2608
    %2672 = vmatpush1.msra.mxu0 %v2607
    %2673 = vmatprep.subr.mxu0 %v2610
    %2674 = vmatpush1.msra.mxu0 %v2609
    %2675 = vmatprep.subr.mxu0 %v2612
    %2676 = vmatpush1.msra.mxu0 %v2611
    %2677 = vmatprep.subr.mxu0 %v2614
    %2678 = vmatpush1.msra.mxu0 %v2613
    %2679 = vmatprep.subr.mxu0 %v2616
    %2680 = vmatpush1.msra.mxu0 %v2615
    %2681 = vmatprep.subr.mxu0 %v2618
    %2682 = vmatpush1.msra.mxu0 %v2617
    %2683 = vmatprep.subr.mxu0 %v2620
    %2684 = vmatpush1.msra.mxu0 %v2619
    %2685 = vmatprep.mubr.f32.mxu0 %v2179
    %2686 = vmatmul.mubr.f32.gmra.mrb[0].mxu0 %v2177
    %v2687 = vpop.f32.mrb[0].mxu0
    %v2688 = vadd.f32 0.0, %v2687
    %v2689 = vpop.f32.mrb[0].mxu0
    %v2690 = vadd.f32 0.0, %v2689
    %2691 = vmatprep.mubr.f32.mxu0 %v2185
    %2692 = vmatmul.mubr.f32.gmra.mrb[0].mxu0 %v2183
    %v2693 = vpop.f32.mrb[0].mxu0
    %v2694 = vadd.f32 0.0, %v2693
    %v2695 = vpop.f32.mrb[0].mxu0
    %v2696 = vadd.f32 0.0, %v2695
    %2697 = vmatprep.mubr.f32.mxu0 %v2191
    %2698 = vmatmul.mubr.f32.gmra.mrb[0].mxu0 %v2189
    %v2699 = vpop.f32.mrb[0].mxu0
    %v2700 = vadd.f32 0.0, %v2699
    %v2701 = vpop.f32.mrb[0].mxu0
    %v2702 = vadd.f32 0.0, %v2701
    %2703 = vmatprep.mubr.f32.mxu0 %v2197
    %2704 = vmatmul.mubr.f32.gmra.mrb[0].mxu0 %v2195
    %v2705 = vpop.f32.mrb[0].mxu0
    %v2706 = vadd.f32 0.0, %v2705
    %v2707 = vpop.f32.mrb[0].mxu0
    %v2708 = vadd.f32 0.0, %v2707
    %2709 = vdwg.mxu0
    %v2710 = vadd.f32 %v2535, %v2688
    %v2711 = vadd.f32 %v2537, %v2690
    %v2712 = vadd.f32 %v2541, %v2694
    %v2713 = vadd.f32 %v2543, %v2696
    %v2714 = vadd.f32 %v2547, %v2700
    %v2715 = vadd.f32 %v2549, %v2702
    %v2716 = vadd.f32 %v2553, %v2706
    %v2717 = vadd.f32 %v2555, %v2708
    %v2718 = vld [vmem:[#allocation5 + $0x600] sm:$0xff]
    %v2719 = vld [vmem:[#allocation5 + $0x608] sm:$0xff]
    %v2720 = vld [vmem:[#allocation5 + $0x610] sm:$0xff]
    %v2721 = vld [vmem:[#allocation5 + $0x618] sm:$0xff]
    %v2722 = vld [vmem:[#allocation5 + $0x620] sm:$0xff]
    %v2723 = vld [vmem:[#allocation5 + $0x628] sm:$0xff]
    %v2724 = vld [vmem:[#allocation5 + $0x630] sm:$0xff]
    %v2725 = vld [vmem:[#allocation5 + $0x638] sm:$0xff]
    %v2726 = vld [vmem:[#allocation5 + $0x640] sm:$0xff]
    %v2727 = vld [vmem:[#allocation5 + $0x648] sm:$0xff]
    %v2728 = vld [vmem:[#allocation5 + $0x650] sm:$0xff]
    %v2729 = vld [vmem:[#allocation5 + $0x658] sm:$0xff]
    %v2730 = vld [vmem:[#allocation5 + $0x660] sm:$0xff]
    %v2731 = vld [vmem:[#allocation5 + $0x668] sm:$0xff]
    %v2732 = vld [vmem:[#allocation5 + $0x670] sm:$0xff]
    %v2733 = vld [vmem:[#allocation5 + $0x678] sm:$0xff]
    %v2734 = vld [vmem:[#allocation5 + $0x680] sm:$0xff]
    %v2735 = vld [vmem:[#allocation5 + $0x688] sm:$0xff]
    %v2736 = vld [vmem:[#allocation5 + $0x690] sm:$0xff]
    %v2737 = vld [vmem:[#allocation5 + $0x698] sm:$0xff]
    %v2738 = vld [vmem:[#allocation5 + $0x6a0] sm:$0xff]
    %v2739 = vld [vmem:[#allocation5 + $0x6a8] sm:$0xff]
    %v2740 = vld [vmem:[#allocation5 + $0x6b0] sm:$0xff]
    %v2741 = vld [vmem:[#allocation5 + $0x6b8] sm:$0xff]
    %v2742 = vld [vmem:[#allocation5 + $0x6c0] sm:$0xff]
    %v2743 = vld [vmem:[#allocation5 + $0x6c8] sm:$0xff]
    %v2744 = vld [vmem:[#allocation5 + $0x6d0] sm:$0xff]
    %v2745 = vld [vmem:[#allocation5 + $0x6d8] sm:$0xff]
    %v2746 = vld [vmem:[#allocation5 + $0x6e0] sm:$0xff]
    %v2747 = vld [vmem:[#allocation5 + $0x6e8] sm:$0xff]
    %v2748 = vld [vmem:[#allocation5 + $0x6f0] sm:$0xff]
    %v2749 = vld [vmem:[#allocation5 + $0x6f8] sm:$0xff]
    %v2750 = vld [vmem:[#allocation5 + $0x700] sm:$0xff]
    %v2751 = vld [vmem:[#allocation5 + $0x708] sm:$0xff]
    %v2752 = vld [vmem:[#allocation5 + $0x710] sm:$0xff]
    %v2753 = vld [vmem:[#allocation5 + $0x718] sm:$0xff]
    %v2754 = vld [vmem:[#allocation5 + $0x720] sm:$0xff]
    %v2755 = vld [vmem:[#allocation5 + $0x728] sm:$0xff]
    %v2756 = vld [vmem:[#allocation5 + $0x730] sm:$0xff]
    %v2757 = vld [vmem:[#allocation5 + $0x738] sm:$0xff]
    %v2758 = vld [vmem:[#allocation5 + $0x740] sm:$0xff]
    %v2759 = vld [vmem:[#allocation5 + $0x748] sm:$0xff]
    %v2760 = vld [vmem:[#allocation5 + $0x750] sm:$0xff]
    %v2761 = vld [vmem:[#allocation5 + $0x758] sm:$0xff]
    %v2762 = vld [vmem:[#allocation5 + $0x760] sm:$0xff]
    %v2763 = vld [vmem:[#allocation5 + $0x768] sm:$0xff]
    %v2764 = vld [vmem:[#allocation5 + $0x770] sm:$0xff]
    %v2765 = vld [vmem:[#allocation5 + $0x778] sm:$0xff]
    %v2766 = vld [vmem:[#allocation5 + $0x780] sm:$0xff]
    %v2767 = vld [vmem:[#allocation5 + $0x788] sm:$0xff]
    %v2768 = vld [vmem:[#allocation5 + $0x790] sm:$0xff]
    %v2769 = vld [vmem:[#allocation5 + $0x798] sm:$0xff]
    %v2770 = vld [vmem:[#allocation5 + $0x7a0] sm:$0xff]
    %v2771 = vld [vmem:[#allocation5 + $0x7a8] sm:$0xff]
    %v2772 = vld [vmem:[#allocation5 + $0x7b0] sm:$0xff]
    %v2773 = vld [vmem:[#allocation5 + $0x7b8] sm:$0xff]
    %v2774 = vld [vmem:[#allocation5 + $0x7c0] sm:$0xff]
    %v2775 = vld [vmem:[#allocation5 + $0x7c8] sm:$0xff]
    %v2776 = vld [vmem:[#allocation5 + $0x7d0] sm:$0xff]
    %v2777 = vld [vmem:[#allocation5 + $0x7d8] sm:$0xff]
    %v2778 = vld [vmem:[#allocation5 + $0x7e0] sm:$0xff]
    %v2779 = vld [vmem:[#allocation5 + $0x7e8] sm:$0xff]
    %v2780 = vld [vmem:[#allocation5 + $0x7f0] sm:$0xff]
    %v2781 = vld [vmem:[#allocation5 + $0x7f8] sm:$0xff]
    %2782 = vmatprep.subr.mxu0 %v2719
    %2783 = vmatpush1.msra.mxu0 %v2718
    %2784 = vmatprep.subr.mxu0 %v2721
    %2785 = vmatpush1.msra.mxu0 %v2720
    %2786 = vmatprep.subr.mxu0 %v2723
    %2787 = vmatpush1.msra.mxu0 %v2722
    %2788 = vmatprep.subr.mxu0 %v2725
    %2789 = vmatpush1.msra.mxu0 %v2724
    %2790 = vmatprep.subr.mxu0 %v2727
    %2791 = vmatpush1.msra.mxu0 %v2726
    %2792 = vmatprep.subr.mxu0 %v2729
    %2793 = vmatpush1.msra.mxu0 %v2728
    %2794 = vmatprep.subr.mxu0 %v2731
    %2795 = vmatpush1.msra.mxu0 %v2730
    %2796 = vmatprep.subr.mxu0 %v2733
    %2797 = vmatpush1.msra.mxu0 %v2732
    %2798 = vmatprep.subr.mxu0 %v2735
    %2799 = vmatpush1.msra.mxu0 %v2734
    %2800 = vmatprep.subr.mxu0 %v2737
    %2801 = vmatpush1.msra.mxu0 %v2736
    %2802 = vmatprep.subr.mxu0 %v2739
    %2803 = vmatpush1.msra.mxu0 %v2738
    %2804 = vmatprep.subr.mxu0 %v2741
    %2805 = vmatpush1.msra.mxu0 %v2740
    %2806 = vmatprep.subr.mxu0 %v2743
    %2807 = vmatpush1.msra.mxu0 %v2742
    %2808 = vmatprep.subr.mxu0 %v2745
    %2809 = vmatpush1.msra.mxu0 %v2744
    %2810 = vmatprep.subr.mxu0 %v2747
    %2811 = vmatpush1.msra.mxu0 %v2746
    %2812 = vmatprep.subr.mxu0 %v2749
    %2813 = vmatpush1.msra.mxu0 %v2748
    %2814 = vmatprep.subr.mxu0 %v2751
    %2815 = vmatpush1.msra.mxu0 %v2750
    %2816 = vmatprep.subr.mxu0 %v2753
    %2817 = vmatpush1.msra.mxu0 %v2752
    %2818 = vmatprep.subr.mxu0 %v2755
    %2819 = vmatpush1.msra.mxu0 %v2754
    %2820 = vmatprep.subr.mxu0 %v2757
    %2821 = vmatpush1.msra.mxu0 %v2756
    %2822 = vmatprep.subr.mxu0 %v2759
    %2823 = vmatpush1.msra.mxu0 %v2758
    %2824 = vmatprep.subr.mxu0 %v2761
    %2825 = vmatpush1.msra.mxu0 %v2760
    %2826 = vmatprep.subr.mxu0 %v2763
    %2827 = vmatpush1.msra.mxu0 %v2762
    %2828 = vmatprep.subr.mxu0 %v2765
    %2829 = vmatpush1.msra.mxu0 %v2764
    %2830 = vmatprep.subr.mxu0 %v2767
    %2831 = vmatpush1.msra.mxu0 %v2766
    %2832 = vmatprep.subr.mxu0 %v2769
    %2833 = vmatpush1.msra.mxu0 %v2768
    %2834 = vmatprep.subr.mxu0 %v2771
    %2835 = vmatpush1.msra.mxu0 %v2770
    %2836 = vmatprep.subr.mxu0 %v2773
    %2837 = vmatpush1.msra.mxu0 %v2772
    %2838 = vmatprep.subr.mxu0 %v2775
    %2839 = vmatpush1.msra.mxu0 %v2774
    %2840 = vmatprep.subr.mxu0 %v2777
    %2841 = vmatpush1.msra.mxu0 %v2776
    %2842 = vmatprep.subr.mxu0 %v2779
    %2843 = vmatpush1.msra.mxu0 %v2778
    %2844 = vmatprep.subr.mxu0 %v2781
    %2845 = vmatpush1.msra.mxu0 %v2780
    %2846 = vmatprep.mubr.f32.mxu0 %v1360
    %2847 = vmatmul.mubr.f32.gmra.mrb[0].mxu0 %v1358
    %v2848 = vpop.f32.mrb[0].mxu0
    %v2849 = vadd.f32 0.0, %v2848
    %v2850 = vpop.f32.mrb[0].mxu0
    %v2851 = vadd.f32 0.0, %v2850
    %2852 = vmatprep.mubr.f32.mxu0 %v1366
    %2853 = vmatmul.mubr.f32.gmra.mrb[0].mxu0 %v1364
    %v2854 = vpop.f32.mrb[0].mxu0
    %v2855 = vadd.f32 0.0, %v2854
    %v2856 = vpop.f32.mrb[0].mxu0
    %v2857 = vadd.f32 0.0, %v2856
    %2858 = vmatprep.mubr.f32.mxu0 %v1372
    %2859 = vmatmul.mubr.f32.gmra.mrb[0].mxu0 %v1370
    %v2860 = vpop.f32.mrb[0].mxu0
    %v2861 = vadd.f32 0.0, %v2860
    %v2862 = vpop.f32.mrb[0].mxu0
    %v2863 = vadd.f32 0.0, %v2862
    %2864 = vmatprep.mubr.f32.mxu0 %v1378
    %2865 = vmatmul.mubr.f32.gmra.mrb[0].mxu0 %v1376
    %v2866 = vpop.f32.mrb[0].mxu0
    %v2867 = vadd.f32 0.0, %v2866
    %v2868 = vpop.f32.mrb[0].mxu0
    %v2869 = vadd.f32 0.0, %v2868
    %2870 = vdwg.mxu0
    %v2871 = vadd.f32 %v2710, %v2849
    %v2872 = vadd.f32 %v2711, %v2851
    %v2873 = vadd.f32 %v2712, %v2855
    %v2874 = vadd.f32 %v2713, %v2857
    %v2875 = vadd.f32 %v2714, %v2861
    %v2876 = vadd.f32 %v2715, %v2863
    %v2877 = vadd.f32 %v2716, %v2867
    %v2878 = vadd.f32 %v2717, %v2869
    %v2879 = vld [vmem:[#allocation5 + $0x800] sm:$0xff]
    %v2880 = vld [vmem:[#allocation5 + $0x808] sm:$0xff]
    %v2881 = vld [vmem:[#allocation5 + $0x810] sm:$0xff]
    %v2882 = vld [vmem:[#allocation5 + $0x818] sm:$0xff]
    %v2883 = vld [vmem:[#allocation5 + $0x820] sm:$0xff]
    %v2884 = vld [vmem:[#allocation5 + $0x828] sm:$0xff]
    %v2885 = vld [vmem:[#allocation5 + $0x830] sm:$0xff]
    %v2886 = vld [vmem:[#allocation5 + $0x838] sm:$0xff]
    %v2887 = vld [vmem:[#allocation5 + $0x840] sm:$0xff]
    %v2888 = vld [vmem:[#allocation5 + $0x848] sm:$0xff]
    %v2889 = vld [vmem:[#allocation5 + $0x850] sm:$0xff]
    %v2890 = vld [vmem:[#allocation5 + $0x858] sm:$0xff]
    %v2891 = vld [vmem:[#allocation5 + $0x860] sm:$0xff]
    %v2892 = vld [vmem:[#allocation5 + $0x868] sm:$0xff]
    %v2893 = vld [vmem:[#allocation5 + $0x870] sm:$0xff]
    %v2894 = vld [vmem:[#allocation5 + $0x878] sm:$0xff]
    %v2895 = vld [vmem:[#allocation5 + $0x880] sm:$0xff]
    %v2896 = vld [vmem:[#allocation5 + $0x888] sm:$0xff]
    %v2897 = vld [vmem:[#allocation5 + $0x890] sm:$0xff]
    %v2898 = vld [vmem:[#allocation5 + $0x898] sm:$0xff]
    %v2899 = vld [vmem:[#allocation5 + $0x8a0] sm:$0xff]
    %v2900 = vld [vmem:[#allocation5 + $0x8a8] sm:$0xff]
    %v2901 = vld [vmem:[#allocation5 + $0x8b0] sm:$0xff]
    %v2902 = vld [vmem:[#allocation5 + $0x8b8] sm:$0xff]
    %v2903 = vld [vmem:[#allocation5 + $0x8c0] sm:$0xff]
    %v2904 = vld [vmem:[#allocation5 + $0x8c8] sm:$0xff]
    %v2905 = vld [vmem:[#allocation5 + $0x8d0] sm:$0xff]
    %v2906 = vld [vmem:[#allocation5 + $0x8d8] sm:$0xff]
    %v2907 = vld [vmem:[#allocation5 + $0x8e0] sm:$0xff]
    %v2908 = vld [vmem:[#allocation5 + $0x8e8] sm:$0xff]
    %v2909 = vld [vmem:[#allocation5 + $0x8f0] sm:$0xff]
    %v2910 = vld [vmem:[#allocation5 + $0x8f8] sm:$0xff]
    %v2911 = vld [vmem:[#allocation5 + $0x900] sm:$0xff]
    %v2912 = vld [vmem:[#allocation5 + $0x908] sm:$0xff]
    %v2913 = vld [vmem:[#allocation5 + $0x910] sm:$0xff]
    %v2914 = vld [vmem:[#allocation5 + $0x918] sm:$0xff]
    %v2915 = vld [vmem:[#allocation5 + $0x920] sm:$0xff]
    %v2916 = vld [vmem:[#allocation5 + $0x928] sm:$0xff]
    %v2917 = vld [vmem:[#allocation5 + $0x930] sm:$0xff]
    %v2918 = vld [vmem:[#allocation5 + $0x938] sm:$0xff]
    %v2919 = vld [vmem:[#allocation5 + $0x940] sm:$0xff]
    %v2920 = vld [vmem:[#allocation5 + $0x948] sm:$0xff]
    %v2921 = vld [vmem:[#allocation5 + $0x950] sm:$0xff]
    %v2922 = vld [vmem:[#allocation5 + $0x958] sm:$0xff]
    %v2923 = vld [vmem:[#allocation5 + $0x960] sm:$0xff]
    %v2924 = vld [vmem:[#allocation5 + $0x968] sm:$0xff]
    %v2925 = vld [vmem:[#allocation5 + $0x970] sm:$0xff]
    %v2926 = vld [vmem:[#allocation5 + $0x978] sm:$0xff]
    %v2927 = vld [vmem:[#allocation5 + $0x980] sm:$0xff]
    %v2928 = vld [vmem:[#allocation5 + $0x988] sm:$0xff]
    %v2929 = vld [vmem:[#allocation5 + $0x990] sm:$0xff]
    %v2930 = vld [vmem:[#allocation5 + $0x998] sm:$0xff]
    %v2931 = vld [vmem:[#allocation5 + $0x9a0] sm:$0xff]
    %v2932 = vld [vmem:[#allocation5 + $0x9a8] sm:$0xff]
    %v2933 = vld [vmem:[#allocation5 + $0x9b0] sm:$0xff]
    %v2934 = vld [vmem:[#allocation5 + $0x9b8] sm:$0xff]
    %v2935 = vld [vmem:[#allocation5 + $0x9c0] sm:$0xff]
    %v2936 = vld [vmem:[#allocation5 + $0x9c8] sm:$0xff]
    %v2937 = vld [vmem:[#allocation5 + $0x9d0] sm:$0xff]
    %v2938 = vld [vmem:[#allocation5 + $0x9d8] sm:$0xff]
    %v2939 = vld [vmem:[#allocation5 + $0x9e0] sm:$0xff]
    %v2940 = vld [vmem:[#allocation5 + $0x9e8] sm:$0xff]
    %v2941 = vld [vmem:[#allocation5 + $0x9f0] sm:$0xff]
    %v2942 = vld [vmem:[#allocation5 + $0x9f8] sm:$0xff]
    %2943 = vmatprep.subr.mxu0 %v2880
    %2944 = vmatpush1.msra.mxu0 %v2879
    %2945 = vmatprep.subr.mxu0 %v2882
    %2946 = vmatpush1.msra.mxu0 %v2881
    %2947 = vmatprep.subr.mxu0 %v2884
    %2948 = vmatpush1.msra.mxu0 %v2883
    %2949 = vmatprep.subr.mxu0 %v2886
    %2950 = vmatpush1.msra.mxu0 %v2885
    %2951 = vmatprep.subr.mxu0 %v2888
    %2952 = vmatpush1.msra.mxu0 %v2887
    %2953 = vmatprep.subr.mxu0 %v2890
    %2954 = vmatpush1.msra.mxu0 %v2889
    %2955 = vmatprep.subr.mxu0 %v2892
    %2956 = vmatpush1.msra.mxu0 %v2891
    %2957 = vmatprep.subr.mxu0 %v2894
    %2958 = vmatpush1.msra.mxu0 %v2893
    %2959 = vmatprep.subr.mxu0 %v2896
    %2960 = vmatpush1.msra.mxu0 %v2895
    %2961 = vmatprep.subr.mxu0 %v2898
    %2962 = vmatpush1.msra.mxu0 %v2897
    %2963 = vmatprep.subr.mxu0 %v2900
    %2964 = vmatpush1.msra.mxu0 %v2899
    %2965 = vmatprep.subr.mxu0 %v2902
    %2966 = vmatpush1.msra.mxu0 %v2901
    %2967 = vmatprep.subr.mxu0 %v2904
    %2968 = vmatpush1.msra.mxu0 %v2903
    %2969 = vmatprep.subr.mxu0 %v2906
    %2970 = vmatpush1.msra.mxu0 %v2905
    %2971 = vmatprep.subr.mxu0 %v2908
    %2972 = vmatpush1.msra.mxu0 %v2907
    %2973 = vmatprep.subr.mxu0 %v2910
    %2974 = vmatpush1.msra.mxu0 %v2909
    %2975 = vmatprep.subr.mxu0 %v2912
    %2976 = vmatpush1.msra.mxu0 %v2911
    %2977 = vmatprep.subr.mxu0 %v2914
    %2978 = vmatpush1.msra.mxu0 %v2913
    %2979 = vmatprep.subr.mxu0 %v2916
    %2980 = vmatpush1.msra.mxu0 %v2915
    %2981 = vmatprep.subr.mxu0 %v2918
    %2982 = vmatpush1.msra.mxu0 %v2917
    %2983 = vmatprep.subr.mxu0 %v2920
    %2984 = vmatpush1.msra.mxu0 %v2919
    %2985 = vmatprep.subr.mxu0 %v2922
    %2986 = vmatpush1.msra.mxu0 %v2921
    %2987 = vmatprep.subr.mxu0 %v2924
    %2988 = vmatpush1.msra.mxu0 %v2923
    %2989 = vmatprep.subr.mxu0 %v2926
    %2990 = vmatpush1.msra.mxu0 %v2925
    %2991 = vmatprep.subr.mxu0 %v2928
    %2992 = vmatpush1.msra.mxu0 %v2927
    %2993 = vmatprep.subr.mxu0 %v2930
    %2994 = vmatpush1.msra.mxu0 %v2929
    %2995 = vmatprep.subr.mxu0 %v2932
    %2996 = vmatpush1.msra.mxu0 %v2931
    %2997 = vmatprep.subr.mxu0 %v2934
    %2998 = vmatpush1.msra.mxu0 %v2933
    %2999 = vmatprep.subr.mxu0 %v2936
    %3000 = vmatpush1.msra.mxu0 %v2935
    %3001 = vmatprep.subr.mxu0 %v2938
    %3002 = vmatpush1.msra.mxu0 %v2937
    %3003 = vmatprep.subr.mxu0 %v2940
    %3004 = vmatpush1.msra.mxu0 %v2939
    %3005 = vmatprep.subr.mxu0 %v2942
    %3006 = vmatpush1.msra.mxu0 %v2941
    %3007 = vmatprep.mubr.f32.mxu0 %v2203
    %3008 = vmatmul.mubr.f32.gmra.mrb[0].mxu0 %v2201
    %v3009 = vpop.f32.mrb[0].mxu0
    %v3010 = vadd.f32 0.0, %v3009
    %v3011 = vpop.f32.mrb[0].mxu0
    %v3012 = vadd.f32 0.0, %v3011
    %3013 = vmatprep.mubr.f32.mxu0 %v2209
    %3014 = vmatmul.mubr.f32.gmra.mrb[0].mxu0 %v2207
    %v3015 = vpop.f32.mrb[0].mxu0
    %v3016 = vadd.f32 0.0, %v3015
    %v3017 = vpop.f32.mrb[0].mxu0
    %v3018 = vadd.f32 0.0, %v3017
    %3019 = vmatprep.mubr.f32.mxu0 %v2215
    %3020 = vmatmul.mubr.f32.gmra.mrb[0].mxu0 %v2213
    %v3021 = vpop.f32.mrb[0].mxu0
    %v3022 = vadd.f32 0.0, %v3021
    %v3023 = vpop.f32.mrb[0].mxu0
    %v3024 = vadd.f32 0.0, %v3023
    %3025 = vmatprep.mubr.f32.mxu0 %v2221
    %3026 = vmatmul.mubr.f32.gmra.mrb[0].mxu0 %v2219
    %v3027 = vpop.f32.mrb[0].mxu0
    %v3028 = vadd.f32 0.0, %v3027
    %v3029 = vpop.f32.mrb[0].mxu0
    %v3030 = vadd.f32 0.0, %v3029
    %3031 = vdwg.mxu0
    %v3032 = vadd.f32 %v2871, %v3010
    %v3033 = vadd.f32 %v2872, %v3012
    %v3034 = vadd.f32 %v2873, %v3016
    %v3035 = vadd.f32 %v2874, %v3018
    %v3036 = vadd.f32 %v2875, %v3022
    %v3037 = vadd.f32 %v2876, %v3024
    %v3038 = vadd.f32 %v2877, %v3028
    %v3039 = vadd.f32 %v2878, %v3030
    %v3040 = vld [vmem:[#allocation5 + $0xa00] sm:$0xff]
    %v3041 = vld [vmem:[#allocation5 + $0xa08] sm:$0xff]
    %v3042 = vld [vmem:[#allocation5 + $0xa10] sm:$0xff]
    %v3043 = vld [vmem:[#allocation5 + $0xa18] sm:$0xff]
    %v3044 = vld [vmem:[#allocation5 + $0xa20] sm:$0xff]
    %v3045 = vld [vmem:[#allocation5 + $0xa28] sm:$0xff]
    %v3046 = vld [vmem:[#allocation5 + $0xa30] sm:$0xff]
    %v3047 = vld [vmem:[#allocation5 + $0xa38] sm:$0xff]
    %v3048 = vld [vmem:[#allocation5 + $0xa40] sm:$0xff]
    %v3049 = vld [vmem:[#allocation5 + $0xa48] sm:$0xff]
    %v3050 = vld [vmem:[#allocation5 + $0xa50] sm:$0xff]
    %v3051 = vld [vmem:[#allocation5 + $0xa58] sm:$0xff]
    %v3052 = vld [vmem:[#allocation5 + $0xa60] sm:$0xff]
    %v3053 = vld [vmem:[#allocation5 + $0xa68] sm:$0xff]
    %v3054 = vld [vmem:[#allocation5 + $0xa70] sm:$0xff]
    %v3055 = vld [vmem:[#allocation5 + $0xa78] sm:$0xff]
    %v3056 = vld [vmem:[#allocation5 + $0xa80] sm:$0xff]
    %v3057 = vld [vmem:[#allocation5 + $0xa88] sm:$0xff]
    %v3058 = vld [vmem:[#allocation5 + $0xa90] sm:$0xff]
    %v3059 = vld [vmem:[#allocation5 + $0xa98] sm:$0xff]
    %v3060 = vld [vmem:[#allocation5 + $0xaa0] sm:$0xff]
    %v3061 = vld [vmem:[#allocation5 + $0xaa8] sm:$0xff]
    %v3062 = vld [vmem:[#allocation5 + $0xab0] sm:$0xff]
    %v3063 = vld [vmem:[#allocation5 + $0xab8] sm:$0xff]
    %v3064 = vld [vmem:[#allocation5 + $0xac0] sm:$0xff]
    %v3065 = vld [vmem:[#allocation5 + $0xac8] sm:$0xff]
    %v3066 = vld [vmem:[#allocation5 + $0xad0] sm:$0xff]
    %v3067 = vld [vmem:[#allocation5 + $0xad8] sm:$0xff]
    %v3068 = vld [vmem:[#allocation5 + $0xae0] sm:$0xff]
    %v3069 = vld [vmem:[#allocation5 + $0xae8] sm:$0xff]
    %v3070 = vld [vmem:[#allocation5 + $0xaf0] sm:$0xff]
    %v3071 = vld [vmem:[#allocation5 + $0xaf8] sm:$0xff]
    %v3072 = vld [vmem:[#allocation5 + $0xb00] sm:$0xff]
    %v3073 = vld [vmem:[#allocation5 + $0xb08] sm:$0xff]
    %v3074 = vld [vmem:[#allocation5 + $0xb10] sm:$0xff]
    %v3075 = vld [vmem:[#allocation5 + $0xb18] sm:$0xff]
    %v3076 = vld [vmem:[#allocation5 + $0xb20] sm:$0xff]
    %v3077 = vld [vmem:[#allocation5 + $0xb28] sm:$0xff]
    %v3078 = vld [vmem:[#allocation5 + $0xb30] sm:$0xff]
    %v3079 = vld [vmem:[#allocation5 + $0xb38] sm:$0xff]
    %v3080 = vld [vmem:[#allocation5 + $0xb40] sm:$0xff]
    %v3081 = vld [vmem:[#allocation5 + $0xb48] sm:$0xff]
    %v3082 = vld [vmem:[#allocation5 + $0xb50] sm:$0xff]
    %v3083 = vld [vmem:[#allocation5 + $0xb58] sm:$0xff]
    %v3084 = vld [vmem:[#allocation5 + $0xb60] sm:$0xff]
    %v3085 = vld [vmem:[#allocation5 + $0xb68] sm:$0xff]
    %v3086 = vld [vmem:[#allocation5 + $0xb70] sm:$0xff]
    %v3087 = vld [vmem:[#allocation5 + $0xb78] sm:$0xff]
    %v3088 = vld [vmem:[#allocation5 + $0xb80] sm:$0xff]
    %v3089 = vld [vmem:[#allocation5 + $0xb88] sm:$0xff]
    %v3090 = vld [vmem:[#allocation5 + $0xb90] sm:$0xff]
    %v3091 = vld [vmem:[#allocation5 + $0xb98] sm:$0xff]
    %v3092 = vld [vmem:[#allocation5 + $0xba0] sm:$0xff]
    %v3093 = vld [vmem:[#allocation5 + $0xba8] sm:$0xff]
    %v3094 = vld [vmem:[#allocation5 + $0xbb0] sm:$0xff]
    %v3095 = vld [vmem:[#allocation5 + $0xbb8] sm:$0xff]
    %v3096 = vld [vmem:[#allocation5 + $0xbc0] sm:$0xff]
    %v3097 = vld [vmem:[#allocation5 + $0xbc8] sm:$0xff]
    %v3098 = vld [vmem:[#allocation5 + $0xbd0] sm:$0xff]
    %v3099 = vld [vmem:[#allocation5 + $0xbd8] sm:$0xff]
    %v3100 = vld [vmem:[#allocation5 + $0xbe0] sm:$0xff]
    %v3101 = vld [vmem:[#allocation5 + $0xbe8] sm:$0xff]
    %v3102 = vld [vmem:[#allocation5 + $0xbf0] sm:$0xff]
    %v3103 = vld [vmem:[#allocation5 + $0xbf8] sm:$0xff]
    %3104 = vmatprep.subr.mxu0 %v3041
    %3105 = vmatpush1.msra.mxu0 %v3040
    %3106 = vmatprep.subr.mxu0 %v3043
    %3107 = vmatpush1.msra.mxu0 %v3042
    %3108 = vmatprep.subr.mxu0 %v3045
    %3109 = vmatpush1.msra.mxu0 %v3044
    %3110 = vmatprep.subr.mxu0 %v3047
    %3111 = vmatpush1.msra.mxu0 %v3046
    %3112 = vmatprep.subr.mxu0 %v3049
    %3113 = vmatpush1.msra.mxu0 %v3048
    %3114 = vmatprep.subr.mxu0 %v3051
    %3115 = vmatpush1.msra.mxu0 %v3050
    %3116 = vmatprep.subr.mxu0 %v3053
    %3117 = vmatpush1.msra.mxu0 %v3052
    %3118 = vmatprep.subr.mxu0 %v3055
    %3119 = vmatpush1.msra.mxu0 %v3054
    %3120 = vmatprep.subr.mxu0 %v3057
    %3121 = vmatpush1.msra.mxu0 %v3056
    %3122 = vmatprep.subr.mxu0 %v3059
    %3123 = vmatpush1.msra.mxu0 %v3058
    %3124 = vmatprep.subr.mxu0 %v3061
    %3125 = vmatpush1.msra.mxu0 %v3060
    %3126 = vmatprep.subr.mxu0 %v3063
    %3127 = vmatpush1.msra.mxu0 %v3062
    %3128 = vmatprep.subr.mxu0 %v3065
    %3129 = vmatpush1.msra.mxu0 %v3064
    %3130 = vmatprep.subr.mxu0 %v3067
    %3131 = vmatpush1.msra.mxu0 %v3066
    %3132 = vmatprep.subr.mxu0 %v3069
    %3133 = vmatpush1.msra.mxu0 %v3068
    %3134 = vmatprep.subr.mxu0 %v3071
    %3135 = vmatpush1.msra.mxu0 %v3070
    %3136 = vmatprep.subr.mxu0 %v3073
    %3137 = vmatpush1.msra.mxu0 %v3072
    %3138 = vmatprep.subr.mxu0 %v3075
    %3139 = vmatpush1.msra.mxu0 %v3074
    %3140 = vmatprep.subr.mxu0 %v3077
    %3141 = vmatpush1.msra.mxu0 %v3076
    %3142 = vmatprep.subr.mxu0 %v3079
    %3143 = vmatpush1.msra.mxu0 %v3078
    %3144 = vmatprep.subr.mxu0 %v3081
    %3145 = vmatpush1.msra.mxu0 %v3080
    %3146 = vmatprep.subr.mxu0 %v3083
    %3147 = vmatpush1.msra.mxu0 %v3082
    %3148 = vmatprep.subr.mxu0 %v3085
    %3149 = vmatpush1.msra.mxu0 %v3084
    %3150 = vmatprep.subr.mxu0 %v3087
    %3151 = vmatpush1.msra.mxu0 %v3086
    %3152 = vmatprep.subr.mxu0 %v3089
    %3153 = vmatpush1.msra.mxu0 %v3088
    %3154 = vmatprep.subr.mxu0 %v3091
    %3155 = vmatpush1.msra.mxu0 %v3090
    %3156 = vmatprep.subr.mxu0 %v3093
    %3157 = vmatpush1.msra.mxu0 %v3092
    %3158 = vmatprep.subr.mxu0 %v3095
    %3159 = vmatpush1.msra.mxu0 %v3094
    %3160 = vmatprep.subr.mxu0 %v3097
    %3161 = vmatpush1.msra.mxu0 %v3096
    %3162 = vmatprep.subr.mxu0 %v3099
    %3163 = vmatpush1.msra.mxu0 %v3098
    %3164 = vmatprep.subr.mxu0 %v3101
    %3165 = vmatpush1.msra.mxu0 %v3100
    %3166 = vmatprep.subr.mxu0 %v3103
    %3167 = vmatpush1.msra.mxu0 %v3102
    %3168 = vmatprep.mubr.f32.mxu0 %v1384
    %3169 = vmatmul.mubr.f32.gmra.mrb[0].mxu0 %v1382
    %v3170 = vpop.f32.mrb[0].mxu0
    %v3171 = vadd.f32 0.0, %v3170
    %v3172 = vpop.f32.mrb[0].mxu0
    %v3173 = vadd.f32 0.0, %v3172
    %3174 = vmatprep.mubr.f32.mxu0 %v1390
    %3175 = vmatmul.mubr.f32.gmra.mrb[0].mxu0 %v1388
    %v3176 = vpop.f32.mrb[0].mxu0
    %v3177 = vadd.f32 0.0, %v3176
    %v3178 = vpop.f32.mrb[0].mxu0
    %v3179 = vadd.f32 0.0, %v3178
    %3180 = vmatprep.mubr.f32.mxu0 %v1396
    %3181 = vmatmul.mubr.f32.gmra.mrb[0].mxu0 %v1394
    %v3182 = vpop.f32.mrb[0].mxu0
    %v3183 = vadd.f32 0.0, %v3182
    %v3184 = vpop.f32.mrb[0].mxu0
    %v3185 = vadd.f32 0.0, %v3184
    %3186 = vmatprep.mubr.f32.mxu0 %v1402
    %3187 = vmatmul.mubr.f32.gmra.mrb[0].mxu0 %v1400
    %v3188 = vpop.f32.mrb[0].mxu0
    %v3189 = vadd.f32 0.0, %v3188
    %v3190 = vpop.f32.mrb[0].mxu0
    %v3191 = vadd.f32 0.0, %v3190
    %3192 = vdwg.mxu0
    %v3193 = vadd.f32 %v3032, %v3171
    %v3194 = vadd.f32 %v3033, %v3173
    %v3195 = vadd.f32 %v3034, %v3177
    %v3196 = vadd.f32 %v3035, %v3179
    %v3197 = vadd.f32 %v3036, %v3183
    %v3198 = vadd.f32 %v3037, %v3185
    %v3199 = vadd.f32 %v3038, %v3189
    %v3200 = vadd.f32 %v3039, %v3191
    %v3201 = vld [vmem:[#allocation5 + $0xc00] sm:$0xff]
    %v3202 = vld [vmem:[#allocation5 + $0xc08] sm:$0xff]
    %v3203 = vld [vmem:[#allocation5 + $0xc10] sm:$0xff]
    %v3204 = vld [vmem:[#allocation5 + $0xc18] sm:$0xff]
    %v3205 = vld [vmem:[#allocation5 + $0xc20] sm:$0xff]
    %v3206 = vld [vmem:[#allocation5 + $0xc28] sm:$0xff]
    %v3207 = vld [vmem:[#allocation5 + $0xc30] sm:$0xff]
    %v3208 = vld [vmem:[#allocation5 + $0xc38] sm:$0xff]
    %v3209 = vld [vmem:[#allocation5 + $0xc40] sm:$0xff]
    %v3210 = vld [vmem:[#allocation5 + $0xc48] sm:$0xff]
    %v3211 = vld [vmem:[#allocation5 + $0xc50] sm:$0xff]
    %v3212 = vld [vmem:[#allocation5 + $0xc58] sm:$0xff]
    %v3213 = vld [vmem:[#allocation5 + $0xc60] sm:$0xff]
    %v3214 = vld [vmem:[#allocation5 + $0xc68] sm:$0xff]
    %v3215 = vld [vmem:[#allocation5 + $0xc70] sm:$0xff]
    %v3216 = vld [vmem:[#allocation5 + $0xc78] sm:$0xff]
    %v3217 = vld [vmem:[#allocation5 + $0xc80] sm:$0xff]
    %v3218 = vld [vmem:[#allocation5 + $0xc88] sm:$0xff]
    %v3219 = vld [vmem:[#allocation5 + $0xc90] sm:$0xff]
    %v3220 = vld [vmem:[#allocation5 + $0xc98] sm:$0xff]
    %v3221 = vld [vmem:[#allocation5 + $0xca0] sm:$0xff]
    %v3222 = vld [vmem:[#allocation5 + $0xca8] sm:$0xff]
    %v3223 = vld [vmem:[#allocation5 + $0xcb0] sm:$0xff]
    %v3224 = vld [vmem:[#allocation5 + $0xcb8] sm:$0xff]
    %v3225 = vld [vmem:[#allocation5 + $0xcc0] sm:$0xff]
    %v3226 = vld [vmem:[#allocation5 + $0xcc8] sm:$0xff]
    %v3227 = vld [vmem:[#allocation5 + $0xcd0] sm:$0xff]
    %v3228 = vld [vmem:[#allocation5 + $0xcd8] sm:$0xff]
    %v3229 = vld [vmem:[#allocation5 + $0xce0] sm:$0xff]
    %v3230 = vld [vmem:[#allocation5 + $0xce8] sm:$0xff]
    %v3231 = vld [vmem:[#allocation5 + $0xcf0] sm:$0xff]
    %v3232 = vld [vmem:[#allocation5 + $0xcf8] sm:$0xff]
    %v3233 = vld [vmem:[#allocation5 + $0xd00] sm:$0xff]
    %v3234 = vld [vmem:[#allocation5 + $0xd08] sm:$0xff]
    %v3235 = vld [vmem:[#allocation5 + $0xd10] sm:$0xff]
    %v3236 = vld [vmem:[#allocation5 + $0xd18] sm:$0xff]
    %v3237 = vld [vmem:[#allocation5 + $0xd20] sm:$0xff]
    %v3238 = vld [vmem:[#allocation5 + $0xd28] sm:$0xff]
    %v3239 = vld [vmem:[#allocation5 + $0xd30] sm:$0xff]
    %v3240 = vld [vmem:[#allocation5 + $0xd38] sm:$0xff]
    %v3241 = vld [vmem:[#allocation5 + $0xd40] sm:$0xff]
    %v3242 = vld [vmem:[#allocation5 + $0xd48] sm:$0xff]
    %v3243 = vld [vmem:[#allocation5 + $0xd50] sm:$0xff]
    %v3244 = vld [vmem:[#allocation5 + $0xd58] sm:$0xff]
    %v3245 = vld [vmem:[#allocation5 + $0xd60] sm:$0xff]
    %v3246 = vld [vmem:[#allocation5 + $0xd68] sm:$0xff]
    %v3247 = vld [vmem:[#allocation5 + $0xd70] sm:$0xff]
    %v3248 = vld [vmem:[#allocation5 + $0xd78] sm:$0xff]
    %v3249 = vld [vmem:[#allocation5 + $0xd80] sm:$0xff]
    %v3250 = vld [vmem:[#allocation5 + $0xd88] sm:$0xff]
    %v3251 = vld [vmem:[#allocation5 + $0xd90] sm:$0xff]
    %v3252 = vld [vmem:[#allocation5 + $0xd98] sm:$0xff]
    %v3253 = vld [vmem:[#allocation5 + $0xda0] sm:$0xff]
    %v3254 = vld [vmem:[#allocation5 + $0xda8] sm:$0xff]
    %v3255 = vld [vmem:[#allocation5 + $0xdb0] sm:$0xff]
    %v3256 = vld [vmem:[#allocation5 + $0xdb8] sm:$0xff]
    %v3257 = vld [vmem:[#allocation5 + $0xdc0] sm:$0xff]
    %v3258 = vld [vmem:[#allocation5 + $0xdc8] sm:$0xff]
    %v3259 = vld [vmem:[#allocation5 + $0xdd0] sm:$0xff]
    %v3260 = vld [vmem:[#allocation5 + $0xdd8] sm:$0xff]
    %v3261 = vld [vmem:[#allocation5 + $0xde0] sm:$0xff]
    %v3262 = vld [vmem:[#allocation5 + $0xde8] sm:$0xff]
    %v3263 = vld [vmem:[#allocation5 + $0xdf0] sm:$0xff]
    %v3264 = vld [vmem:[#allocation5 + $0xdf8] sm:$0xff]
    %3265 = vmatprep.subr.mxu0 %v3202
    %3266 = vmatpush1.msra.mxu0 %v3201
    %3267 = vmatprep.subr.mxu0 %v3204
    %3268 = vmatpush1.msra.mxu0 %v3203
    %3269 = vmatprep.subr.mxu0 %v3206
    %3270 = vmatpush1.msra.mxu0 %v3205
    %3271 = vmatprep.subr.mxu0 %v3208
    %3272 = vmatpush1.msra.mxu0 %v3207
    %3273 = vmatprep.subr.mxu0 %v3210
    %3274 = vmatpush1.msra.mxu0 %v3209
    %3275 = vmatprep.subr.mxu0 %v3212
    %3276 = vmatpush1.msra.mxu0 %v3211
    %3277 = vmatprep.subr.mxu0 %v3214
    %3278 = vmatpush1.msra.mxu0 %v3213
    %3279 = vmatprep.subr.mxu0 %v3216
    %3280 = vmatpush1.msra.mxu0 %v3215
    %3281 = vmatprep.subr.mxu0 %v3218
    %3282 = vmatpush1.msra.mxu0 %v3217
    %3283 = vmatprep.subr.mxu0 %v3220
    %3284 = vmatpush1.msra.mxu0 %v3219
    %3285 = vmatprep.subr.mxu0 %v3222
    %3286 = vmatpush1.msra.mxu0 %v3221
    %3287 = vmatprep.subr.mxu0 %v3224
    %3288 = vmatpush1.msra.mxu0 %v3223
    %3289 = vmatprep.subr.mxu0 %v3226
    %3290 = vmatpush1.msra.mxu0 %v3225
    %3291 = vmatprep.subr.mxu0 %v3228
    %3292 = vmatpush1.msra.mxu0 %v3227
    %3293 = vmatprep.subr.mxu0 %v3230
    %3294 = vmatpush1.msra.mxu0 %v3229
    %3295 = vmatprep.subr.mxu0 %v3232
    %3296 = vmatpush1.msra.mxu0 %v3231
    %3297 = vmatprep.subr.mxu0 %v3234
    %3298 = vmatpush1.msra.mxu0 %v3233
    %3299 = vmatprep.subr.mxu0 %v3236
    %3300 = vmatpush1.msra.mxu0 %v3235
    %3301 = vmatprep.subr.mxu0 %v3238
    %3302 = vmatpush1.msra.mxu0 %v3237
    %3303 = vmatprep.subr.mxu0 %v3240
    %3304 = vmatpush1.msra.mxu0 %v3239
    %3305 = vmatprep.subr.mxu0 %v3242
    %3306 = vmatpush1.msra.mxu0 %v3241
    %3307 = vmatprep.subr.mxu0 %v3244
    %3308 = vmatpush1.msra.mxu0 %v3243
    %3309 = vmatprep.subr.mxu0 %v3246
    %3310 = vmatpush1.msra.mxu0 %v3245
    %3311 = vmatprep.subr.mxu0 %v3248
    %3312 = vmatpush1.msra.mxu0 %v3247
    %3313 = vmatprep.subr.mxu0 %v3250
    %3314 = vmatpush1.msra.mxu0 %v3249
    %3315 = vmatprep.subr.mxu0 %v3252
    %3316 = vmatpush1.msra.mxu0 %v3251
    %3317 = vmatprep.subr.mxu0 %v3254
    %3318 = vmatpush1.msra.mxu0 %v3253
    %3319 = vmatprep.subr.mxu0 %v3256
    %3320 = vmatpush1.msra.mxu0 %v3255
    %3321 = vmatprep.subr.mxu0 %v3258
    %3322 = vmatpush1.msra.mxu0 %v3257
    %3323 = vmatprep.subr.mxu0 %v3260
    %3324 = vmatpush1.msra.mxu0 %v3259
    %3325 = vmatprep.subr.mxu0 %v3262
    %3326 = vmatpush1.msra.mxu0 %v3261
    %3327 = vmatprep.subr.mxu0 %v3264
    %3328 = vmatpush1.msra.mxu0 %v3263
    %3329 = vmatprep.mubr.f32.mxu0 %v2227
    %3330 = vmatmul.mubr.f32.gmra.mrb[0].mxu0 %v2225
    %v3331 = vpop.f32.mrb[0].mxu0
    %v3332 = vadd.f32 0.0, %v3331
    %v3333 = vpop.f32.mrb[0].mxu0
    %v3334 = vadd.f32 0.0, %v3333
    %3335 = vmatprep.mubr.f32.mxu0 %v2233
    %3336 = vmatmul.mubr.f32.gmra.mrb[0].mxu0 %v2231
    %v3337 = vpop.f32.mrb[0].mxu0
    %v3338 = vadd.f32 0.0, %v3337
    %v3339 = vpop.f32.mrb[0].mxu0
    %v3340 = vadd.f32 0.0, %v3339
    %3341 = vmatprep.mubr.f32.mxu0 %v2239
    %3342 = vmatmul.mubr.f32.gmra.mrb[0].mxu0 %v2237
    %v3343 = vpop.f32.mrb[0].mxu0
    %v3344 = vadd.f32 0.0, %v3343
    %v3345 = vpop.f32.mrb[0].mxu0
    %v3346 = vadd.f32 0.0, %v3345
    %3347 = vmatprep.mubr.f32.mxu0 %v2245
    %3348 = vmatmul.mubr.f32.gmra.mrb[0].mxu0 %v2243
    %v3349 = vpop.f32.mrb[0].mxu0
    %v3350 = vadd.f32 0.0, %v3349
    %v3351 = vpop.f32.mrb[0].mxu0
    %v3352 = vadd.f32 0.0, %v3351
    %3353 = vdwg.mxu0
    %v3354 = vadd.f32 %v3193, %v3332
    %v3355 = vadd.f32 %v3194, %v3334
    %v3356 = vadd.f32 %v3195, %v3338
    %v3357 = vadd.f32 %v3196, %v3340
    %v3358 = vadd.f32 %v3197, %v3344
    %v3359 = vadd.f32 %v3198, %v3346
    %v3360 = vadd.f32 %v3199, %v3350
    %v3361 = vadd.f32 %v3200, %v3352
    %v3362 = vld [vmem:[#allocation5 + $0xe00] sm:$0xff]
    %v3363 = vld [vmem:[#allocation5 + $0xe08] sm:$0xff]
    %v3364 = vld [vmem:[#allocation5 + $0xe10] sm:$0xff]
    %v3365 = vld [vmem:[#allocation5 + $0xe18] sm:$0xff]
    %v3366 = vld [vmem:[#allocation5 + $0xe20] sm:$0xff]
    %v3367 = vld [vmem:[#allocation5 + $0xe28] sm:$0xff]
    %v3368 = vld [vmem:[#allocation5 + $0xe30] sm:$0xff]
    %v3369 = vld [vmem:[#allocation5 + $0xe38] sm:$0xff]
    %v3370 = vld [vmem:[#allocation5 + $0xe40] sm:$0xff]
    %v3371 = vld [vmem:[#allocation5 + $0xe48] sm:$0xff]
    %v3372 = vld [vmem:[#allocation5 + $0xe50] sm:$0xff]
    %v3373 = vld [vmem:[#allocation5 + $0xe58] sm:$0xff]
    %v3374 = vld [vmem:[#allocation5 + $0xe60] sm:$0xff]
    %v3375 = vld [vmem:[#allocation5 + $0xe68] sm:$0xff]
    %v3376 = vld [vmem:[#allocation5 + $0xe70] sm:$0xff]
    %v3377 = vld [vmem:[#allocation5 + $0xe78] sm:$0xff]
    %v3378 = vld [vmem:[#allocation5 + $0xe80] sm:$0xff]
    %v3379 = vld [vmem:[#allocation5 + $0xe88] sm:$0xff]
    %v3380 = vld [vmem:[#allocation5 + $0xe90] sm:$0xff]
    %v3381 = vld [vmem:[#allocation5 + $0xe98] sm:$0xff]
    %v3382 = vld [vmem:[#allocation5 + $0xea0] sm:$0xff]
    %v3383 = vld [vmem:[#allocation5 + $0xea8] sm:$0xff]
    %v3384 = vld [vmem:[#allocation5 + $0xeb0] sm:$0xff]
    %v3385 = vld [vmem:[#allocation5 + $0xeb8] sm:$0xff]
    %v3386 = vld [vmem:[#allocation5 + $0xec0] sm:$0xff]
    %v3387 = vld [vmem:[#allocation5 + $0xec8] sm:$0xff]
    %v3388 = vld [vmem:[#allocation5 + $0xed0] sm:$0xff]
    %v3389 = vld [vmem:[#allocation5 + $0xed8] sm:$0xff]
    %v3390 = vld [vmem:[#allocation5 + $0xee0] sm:$0xff]
    %v3391 = vld [vmem:[#allocation5 + $0xee8] sm:$0xff]
    %v3392 = vld [vmem:[#allocation5 + $0xef0] sm:$0xff]
    %v3393 = vld [vmem:[#allocation5 + $0xef8] sm:$0xff]
    %v3394 = vld [vmem:[#allocation5 + $0xf00] sm:$0xff]
    %v3395 = vld [vmem:[#allocation5 + $0xf08] sm:$0xff]
    %v3396 = vld [vmem:[#allocation5 + $0xf10] sm:$0xff]
    %v3397 = vld [vmem:[#allocation5 + $0xf18] sm:$0xff]
    %v3398 = vld [vmem:[#allocation5 + $0xf20] sm:$0xff]
    %v3399 = vld [vmem:[#allocation5 + $0xf28] sm:$0xff]
    %v3400 = vld [vmem:[#allocation5 + $0xf30] sm:$0xff]
    %v3401 = vld [vmem:[#allocation5 + $0xf38] sm:$0xff]
    %v3402 = vld [vmem:[#allocation5 + $0xf40] sm:$0xff]
    %v3403 = vld [vmem:[#allocation5 + $0xf48] sm:$0xff]
    %v3404 = vld [vmem:[#allocation5 + $0xf50] sm:$0xff]
    %v3405 = vld [vmem:[#allocation5 + $0xf58] sm:$0xff]
    %v3406 = vld [vmem:[#allocation5 + $0xf60] sm:$0xff]
    %v3407 = vld [vmem:[#allocation5 + $0xf68] sm:$0xff]
    %v3408 = vld [vmem:[#allocation5 + $0xf70] sm:$0xff]
    %v3409 = vld [vmem:[#allocation5 + $0xf78] sm:$0xff]
    %v3410 = vld [vmem:[#allocation5 + $0xf80] sm:$0xff]
    %v3411 = vld [vmem:[#allocation5 + $0xf88] sm:$0xff]
    %v3412 = vld [vmem:[#allocation5 + $0xf90] sm:$0xff]
    %v3413 = vld [vmem:[#allocation5 + $0xf98] sm:$0xff]
    %v3414 = vld [vmem:[#allocation5 + $0xfa0] sm:$0xff]
    %v3415 = vld [vmem:[#allocation5 + $0xfa8] sm:$0xff]
    %v3416 = vld [vmem:[#allocation5 + $0xfb0] sm:$0xff]
    %v3417 = vld [vmem:[#allocation5 + $0xfb8] sm:$0xff]
    %v3418 = vld [vmem:[#allocation5 + $0xfc0] sm:$0xff]
    %v3419 = vld [vmem:[#allocation5 + $0xfc8] sm:$0xff]
    %v3420 = vld [vmem:[#allocation5 + $0xfd0] sm:$0xff]
    %v3421 = vld [vmem:[#allocation5 + $0xfd8] sm:$0xff]
    %v3422 = vld [vmem:[#allocation5 + $0xfe0] sm:$0xff]
    %v3423 = vld [vmem:[#allocation5 + $0xfe8] sm:$0xff]
    %v3424 = vld [vmem:[#allocation5 + $0xff0] sm:$0xff]
    %v3425 = vld [vmem:[#allocation5 + $0xff8] sm:$0xff]
    %3426 = vmatprep.subr.mxu0 %v3363
    %3427 = vmatpush1.msra.mxu0 %v3362
    %3428 = vmatprep.subr.mxu0 %v3365
    %3429 = vmatpush1.msra.mxu0 %v3364
    %3430 = vmatprep.subr.mxu0 %v3367
    %3431 = vmatpush1.msra.mxu0 %v3366
    %3432 = vmatprep.subr.mxu0 %v3369
    %3433 = vmatpush1.msra.mxu0 %v3368
    %3434 = vmatprep.subr.mxu0 %v3371
    %3435 = vmatpush1.msra.mxu0 %v3370
    %3436 = vmatprep.subr.mxu0 %v3373
    %3437 = vmatpush1.msra.mxu0 %v3372
    %3438 = vmatprep.subr.mxu0 %v3375
    %3439 = vmatpush1.msra.mxu0 %v3374
    %3440 = vmatprep.subr.mxu0 %v3377
    %3441 = vmatpush1.msra.mxu0 %v3376
    %3442 = vmatprep.subr.mxu0 %v3379
    %3443 = vmatpush1.msra.mxu0 %v3378
    %3444 = vmatprep.subr.mxu0 %v3381
    %3445 = vmatpush1.msra.mxu0 %v3380
    %3446 = vmatprep.subr.mxu0 %v3383
    %3447 = vmatpush1.msra.mxu0 %v3382
    %3448 = vmatprep.subr.mxu0 %v3385
    %3449 = vmatpush1.msra.mxu0 %v3384
    %3450 = vmatprep.subr.mxu0 %v3387
    %3451 = vmatpush1.msra.mxu0 %v3386
    %3452 = vmatprep.subr.mxu0 %v3389
    %3453 = vmatpush1.msra.mxu0 %v3388
    %3454 = vmatprep.subr.mxu0 %v3391
    %3455 = vmatpush1.msra.mxu0 %v3390
    %3456 = vmatprep.subr.mxu0 %v3393
    %3457 = vmatpush1.msra.mxu0 %v3392
    %3458 = vmatprep.subr.mxu0 %v3395
    %3459 = vmatpush1.msra.mxu0 %v3394
    %3460 = vmatprep.subr.mxu0 %v3397
    %3461 = vmatpush1.msra.mxu0 %v3396
    %3462 = vmatprep.subr.mxu0 %v3399
    %3463 = vmatpush1.msra.mxu0 %v3398
    %3464 = vmatprep.subr.mxu0 %v3401
    %3465 = vmatpush1.msra.mxu0 %v3400
    %3466 = vmatprep.subr.mxu0 %v3403
    %3467 = vmatpush1.msra.mxu0 %v3402
    %3468 = vmatprep.subr.mxu0 %v3405
    %3469 = vmatpush1.msra.mxu0 %v3404
    %3470 = vmatprep.subr.mxu0 %v3407
    %3471 = vmatpush1.msra.mxu0 %v3406
    %3472 = vmatprep.subr.mxu0 %v3409
    %3473 = vmatpush1.msra.mxu0 %v3408
    %3474 = vmatprep.subr.mxu0 %v3411
    %3475 = vmatpush1.msra.mxu0 %v3410
    %3476 = vmatprep.subr.mxu0 %v3413
    %3477 = vmatpush1.msra.mxu0 %v3412
    %3478 = vmatprep.subr.mxu0 %v3415
    %3479 = vmatpush1.msra.mxu0 %v3414
    %3480 = vmatprep.subr.mxu0 %v3417
    %3481 = vmatpush1.msra.mxu0 %v3416
    %3482 = vmatprep.subr.mxu0 %v3419
    %3483 = vmatpush1.msra.mxu0 %v3418
    %3484 = vmatprep.subr.mxu0 %v3421
    %3485 = vmatpush1.msra.mxu0 %v3420
    %3486 = vmatprep.subr.mxu0 %v3423
    %3487 = vmatpush1.msra.mxu0 %v3422
    %3488 = vmatprep.subr.mxu0 %v3425
    %3489 = vmatpush1.msra.mxu0 %v3424
    %3490 = vmatprep.mubr.f32.mxu0 %v1408
    %3491 = vmatmul.mubr.f32.gmra.mrb[0].mxu0 %v1406
    %v3492 = vpop.f32.mrb[0].mxu0
    %v3493 = vadd.f32 0.0, %v3492
    %v3494 = vpop.f32.mrb[0].mxu0
    %v3495 = vadd.f32 0.0, %v3494
    %3496 = vmatprep.mubr.f32.mxu0 %v1414
    %3497 = vmatmul.mubr.f32.gmra.mrb[0].mxu0 %v1412
    %v3498 = vpop.f32.mrb[0].mxu0
    %v3499 = vadd.f32 0.0, %v3498
    %v3500 = vpop.f32.mrb[0].mxu0
    %v3501 = vadd.f32 0.0, %v3500
    %3502 = vmatprep.mubr.f32.mxu0 %v1420
    %3503 = vmatmul.mubr.f32.gmra.mrb[0].mxu0 %v1418
    %v3504 = vpop.f32.mrb[0].mxu0
    %v3505 = vadd.f32 0.0, %v3504
    %v3506 = vpop.f32.mrb[0].mxu0
    %v3507 = vadd.f32 0.0, %v3506
    %3508 = vmatprep.mubr.f32.mxu0 %v1426
    %3509 = vmatmul.mubr.f32.gmra.mrb[0].mxu0 %v1424
    %v3510 = vpop.f32.mrb[0].mxu0
    %v3511 = vadd.f32 0.0, %v3510
    %v3512 = vpop.f32.mrb[0].mxu0
    %v3513 = vadd.f32 0.0, %v3512
    %3514 = vdwg.mxu0
    %v3515 = vadd.f32 %v3354, %v3493
    %v3516 = vadd.f32 %v3355, %v3495
    %v3517 = vadd.f32 %v3356, %v3499
    %v3518 = vadd.f32 %v3357, %v3501
    %v3519 = vadd.f32 %v3358, %v3505
    %v3520 = vadd.f32 %v3359, %v3507
    %v3521 = vadd.f32 %v3360, %v3511
    %v3522 = vadd.f32 %v3361, %v3513
    %v3523 = vld [vmem:[#allocation18] sm:$0x3]
    %v3525 = vlaneseq
    %v3526 = vshrl.u32 %v3525, 7
    %v3527 = vsub.s32 0, %v3526
    %v3528 = vrot.slane %v3523, %v3527
    %v3529 = vlaneseq
    %v3530 = vshrl.u32 %v3529, 7
    %v3531 = vsub.s32 1, %v3530
    %v3532 = vrot.slane %v3523, %v3531
    %v3535 = vadd.f32 %v3515, %v3528
    %v3536 = vadd.f32 %v3516, %v3532
    %v3537 = vadd.f32 %v3517, %v3528
    %v3538 = vadd.f32 %v3518, %v3532
    %v3539 = vadd.f32 %v3519, %v3528
    %v3540 = vadd.f32 %v3520, %v3532
    %v3541 = vadd.f32 %v3521, %v3528
    %v3542 = vadd.f32 %v3522, %v3532
    %v3543 = vmax.f32 %v3535, 0.0
    %v3544 = vmax.f32 %v3536, 0.0
    %v3545 = vmax.f32 %v3537, 0.0
    %v3546 = vmax.f32 %v3538, 0.0
    %v3547 = vmax.f32 %v3539, 0.0
    %v3548 = vmax.f32 %v3540, 0.0
    %v3549 = vmax.f32 %v3541, 0.0
    %v3550 = vmax.f32 %v3542, 0.0
    %s3551 = smul.u32 512, 1
    %s3552 = sshll.u32 %s3551, 4
    %3553 = dma.done %s196, %s3552
    %v3554 = vld [vmem:[#allocation6] sm:$0xff]
    %v3555 = vld [vmem:[#allocation6 + $0x8] sm:$0xff]
    %v3556 = vld [vmem:[#allocation6 + $0x10] sm:$0xff]
    %v3557 = vld [vmem:[#allocation6 + $0x18] sm:$0xff]
    %v3558 = vld [vmem:[#allocation6 + $0x20] sm:$0xff]
    %v3559 = vld [vmem:[#allocation6 + $0x28] sm:$0xff]
    %v3560 = vld [vmem:[#allocation6 + $0x30] sm:$0xff]
    %v3561 = vld [vmem:[#allocation6 + $0x38] sm:$0xff]
    %v3562 = vld [vmem:[#allocation6 + $0x40] sm:$0xff]
    %v3563 = vld [vmem:[#allocation6 + $0x48] sm:$0xff]
    %v3564 = vld [vmem:[#allocation6 + $0x50] sm:$0xff]
    %v3565 = vld [vmem:[#allocation6 + $0x58] sm:$0xff]
    %v3566 = vld [vmem:[#allocation6 + $0x60] sm:$0xff]
    %v3567 = vld [vmem:[#allocation6 + $0x68] sm:$0xff]
    %v3568 = vld [vmem:[#allocation6 + $0x70] sm:$0xff]
    %v3569 = vld [vmem:[#allocation6 + $0x78] sm:$0xff]
    %v3570 = vld [vmem:[#allocation6 + $0x80] sm:$0xff]
    %v3571 = vld [vmem:[#allocation6 + $0x88] sm:$0xff]
    %v3572 = vld [vmem:[#allocation6 + $0x90] sm:$0xff]
    %v3573 = vld [vmem:[#allocation6 + $0x98] sm:$0xff]
    %v3574 = vld [vmem:[#allocation6 + $0xa0] sm:$0xff]
    %v3575 = vld [vmem:[#allocation6 + $0xa8] sm:$0xff]
    %v3576 = vld [vmem:[#allocation6 + $0xb0] sm:$0xff]
    %v3577 = vld [vmem:[#allocation6 + $0xb8] sm:$0xff]
    %v3578 = vld [vmem:[#allocation6 + $0xc0] sm:$0xff]
    %v3579 = vld [vmem:[#allocation6 + $0xc8] sm:$0xff]
    %v3580 = vld [vmem:[#allocation6 + $0xd0] sm:$0xff]
    %v3581 = vld [vmem:[#allocation6 + $0xd8] sm:$0xff]
    %v3582 = vld [vmem:[#allocation6 + $0xe0] sm:$0xff]
    %v3583 = vld [vmem:[#allocation6 + $0xe8] sm:$0xff]
    %v3584 = vld [vmem:[#allocation6 + $0xf0] sm:$0xff]
    %v3585 = vld [vmem:[#allocation6 + $0xf8] sm:$0xff]
    %v3586 = vld [vmem:[#allocation6 + $0x100] sm:$0xff]
    %v3587 = vld [vmem:[#allocation6 + $0x108] sm:$0xff]
    %v3588 = vld [vmem:[#allocation6 + $0x110] sm:$0xff]
    %v3589 = vld [vmem:[#allocation6 + $0x118] sm:$0xff]
    %v3590 = vld [vmem:[#allocation6 + $0x120] sm:$0xff]
    %v3591 = vld [vmem:[#allocation6 + $0x128] sm:$0xff]
    %v3592 = vld [vmem:[#allocation6 + $0x130] sm:$0xff]
    %v3593 = vld [vmem:[#allocation6 + $0x138] sm:$0xff]
    %v3594 = vld [vmem:[#allocation6 + $0x140] sm:$0xff]
    %v3595 = vld [vmem:[#allocation6 + $0x148] sm:$0xff]
    %v3596 = vld [vmem:[#allocation6 + $0x150] sm:$0xff]
    %v3597 = vld [vmem:[#allocation6 + $0x158] sm:$0xff]
    %v3598 = vld [vmem:[#allocation6 + $0x160] sm:$0xff]
    %v3599 = vld [vmem:[#allocation6 + $0x168] sm:$0xff]
    %v3600 = vld [vmem:[#allocation6 + $0x170] sm:$0xff]
    %v3601 = vld [vmem:[#allocation6 + $0x178] sm:$0xff]
    %v3602 = vld [vmem:[#allocation6 + $0x180] sm:$0xff]
    %v3603 = vld [vmem:[#allocation6 + $0x188] sm:$0xff]
    %v3604 = vld [vmem:[#allocation6 + $0x190] sm:$0xff]
    %v3605 = vld [vmem:[#allocation6 + $0x198] sm:$0xff]
    %v3606 = vld [vmem:[#allocation6 + $0x1a0] sm:$0xff]
    %v3607 = vld [vmem:[#allocation6 + $0x1a8] sm:$0xff]
    %v3608 = vld [vmem:[#allocation6 + $0x1b0] sm:$0xff]
    %v3609 = vld [vmem:[#allocation6 + $0x1b8] sm:$0xff]
    %v3610 = vld [vmem:[#allocation6 + $0x1c0] sm:$0xff]
    %v3611 = vld [vmem:[#allocation6 + $0x1c8] sm:$0xff]
    %v3612 = vld [vmem:[#allocation6 + $0x1d0] sm:$0xff]
    %v3613 = vld [vmem:[#allocation6 + $0x1d8] sm:$0xff]
    %v3614 = vld [vmem:[#allocation6 + $0x1e0] sm:$0xff]
    %v3615 = vld [vmem:[#allocation6 + $0x1e8] sm:$0xff]
    %v3616 = vld [vmem:[#allocation6 + $0x1f0] sm:$0xff]
    %v3617 = vld [vmem:[#allocation6 + $0x1f8] sm:$0xff]
    %3618 = vmatprep.subr.mxu0 0.0
    %3619 = vmatpush1.msra.mxu0 %v3586
    %3620 = vmatprep.subr.mxu0 0.0
    %3621 = vmatpush1.msra.mxu0 %v3587
    %3622 = vmatprep.subr.mxu0 0.0
    %3623 = vmatpush1.msra.mxu0 %v3588
    %3624 = vmatprep.subr.mxu0 0.0
    %3625 = vmatpush1.msra.mxu0 %v3589
    %3626 = vmatprep.subr.mxu0 0.0
    %3627 = vmatpush1.msra.mxu0 %v3590
    %3628 = vmatprep.subr.mxu0 0.0
    %3629 = vmatpush1.msra.mxu0 %v3591
    %3630 = vmatprep.subr.mxu0 0.0
    %3631 = vmatpush1.msra.mxu0 %v3592
    %3632 = vmatprep.subr.mxu0 0.0
    %3633 = vmatpush1.msra.mxu0 %v3593
    %3634 = vmatprep.subr.mxu0 0.0
    %3635 = vmatpush1.msra.mxu0 %v3594
    %3636 = vmatprep.subr.mxu0 0.0
    %3637 = vmatpush1.msra.mxu0 %v3595
    %3638 = vmatprep.subr.mxu0 0.0
    %3639 = vmatpush1.msra.mxu0 %v3596
    %3640 = vmatprep.subr.mxu0 0.0
    %3641 = vmatpush1.msra.mxu0 %v3597
    %3642 = vmatprep.subr.mxu0 0.0
    %3643 = vmatpush1.msra.mxu0 %v3598
    %3644 = vmatprep.subr.mxu0 0.0
    %3645 = vmatpush1.msra.mxu0 %v3599
    %3646 = vmatprep.subr.mxu0 0.0
    %3647 = vmatpush1.msra.mxu0 %v3600
    %3648 = vmatprep.subr.mxu0 0.0
    %3649 = vmatpush1.msra.mxu0 %v3601
    %3650 = vmatprep.subr.mxu0 0.0
    %3651 = vmatpush1.msra.mxu0 %v3602
    %3652 = vmatprep.subr.mxu0 0.0
    %3653 = vmatpush1.msra.mxu0 %v3603
    %3654 = vmatprep.subr.mxu0 0.0
    %3655 = vmatpush1.msra.mxu0 %v3604
    %3656 = vmatprep.subr.mxu0 0.0
    %3657 = vmatpush1.msra.mxu0 %v3605
    %3658 = vmatprep.subr.mxu0 0.0
    %3659 = vmatpush1.msra.mxu0 %v3606
    %3660 = vmatprep.subr.mxu0 0.0
    %3661 = vmatpush1.msra.mxu0 %v3607
    %3662 = vmatprep.subr.mxu0 0.0
    %3663 = vmatpush1.msra.mxu0 %v3608
    %3664 = vmatprep.subr.mxu0 0.0
    %3665 = vmatpush1.msra.mxu0 %v3609
    %3666 = vmatprep.subr.mxu0 0.0
    %3667 = vmatpush1.msra.mxu0 %v3610
    %3668 = vmatprep.subr.mxu0 0.0
    %3669 = vmatpush1.msra.mxu0 %v3611
    %3670 = vmatprep.subr.mxu0 0.0
    %3671 = vmatpush1.msra.mxu0 %v3612
    %3672 = vmatprep.subr.mxu0 0.0
    %3673 = vmatpush1.msra.mxu0 %v3613
    %3674 = vmatprep.subr.mxu0 0.0
    %3675 = vmatpush1.msra.mxu0 %v3614
    %3676 = vmatprep.subr.mxu0 0.0
    %3677 = vmatpush1.msra.mxu0 %v3615
    %3678 = vmatprep.subr.mxu0 0.0
    %3679 = vmatpush1.msra.mxu0 %v3616
    %3680 = vmatprep.subr.mxu0 0.0
    %3681 = vmatpush1.msra.mxu0 %v3617
    %3682 = vmatprep.mubr.f32.mxu0 %v1260
    %3683 = vmatmul.mubr.f32.gmra.mrb[0].mxu0 %v1259
    %v3684 = vpop.f32.mrb[0].mxu0
    %v3685 = vadd.f32 0.0, %v3684
    %v3686 = vpop.f32.mrb[0].mxu0
    %3687 = vmatprep.mubr.f32.mxu0 %v1262
    %3688 = vmatmul.mubr.f32.gmra.mrb[0].mxu0 %v1261
    %v3689 = vpop.f32.mrb[0].mxu0
    %v3690 = vadd.f32 0.0, %v3689
    %v3691 = vpop.f32.mrb[0].mxu0
    %3692 = vmatprep.mubr.f32.mxu0 %v1264
    %3693 = vmatmul.mubr.f32.gmra.mrb[0].mxu0 %v1263
    %v3694 = vpop.f32.mrb[0].mxu0
    %v3695 = vadd.f32 0.0, %v3694
    %v3696 = vpop.f32.mrb[0].mxu0
    %3697 = vmatprep.mubr.f32.mxu0 %v1266
    %3698 = vmatmul.mubr.f32.gmra.mrb[0].mxu0 %v1265
    %v3699 = vpop.f32.mrb[0].mxu0
    %v3700 = vadd.f32 0.0, %v3699
    %v3701 = vpop.f32.mrb[0].mxu0
    %3702 = vdwg.mxu0
    %3703 = vmatprep.subr.mxu0 0.0
    %3704 = vmatpush1.msra.mxu0 %v3554
    %3705 = vmatprep.subr.mxu0 0.0
    %3706 = vmatpush1.msra.mxu0 %v3555
    %3707 = vmatprep.subr.mxu0 0.0
    %3708 = vmatpush1.msra.mxu0 %v3556
    %3709 = vmatprep.subr.mxu0 0.0
    %3710 = vmatpush1.msra.mxu0 %v3557
    %3711 = vmatprep.subr.mxu0 0.0
    %3712 = vmatpush1.msra.mxu0 %v3558
    %3713 = vmatprep.subr.mxu0 0.0
    %3714 = vmatpush1.msra.mxu0 %v3559
    %3715 = vmatprep.subr.mxu0 0.0
    %3716 = vmatpush1.msra.mxu0 %v3560
    %3717 = vmatprep.subr.mxu0 0.0
    %3718 = vmatpush1.msra.mxu0 %v3561
    %3719 = vmatprep.subr.mxu0 0.0
    %3720 = vmatpush1.msra.mxu0 %v3562
    %3721 = vmatprep.subr.mxu0 0.0
    %3722 = vmatpush1.msra.mxu0 %v3563
    %3723 = vmatprep.subr.mxu0 0.0
    %3724 = vmatpush1.msra.mxu0 %v3564
    %3725 = vmatprep.subr.mxu0 0.0
    %3726 = vmatpush1.msra.mxu0 %v3565
    %3727 = vmatprep.subr.mxu0 0.0
    %3728 = vmatpush1.msra.mxu0 %v3566
    %3729 = vmatprep.subr.mxu0 0.0
    %3730 = vmatpush1.msra.mxu0 %v3567
    %3731 = vmatprep.subr.mxu0 0.0
    %3732 = vmatpush1.msra.mxu0 %v3568
    %3733 = vmatprep.subr.mxu0 0.0
    %3734 = vmatpush1.msra.mxu0 %v3569
    %3735 = vmatprep.subr.mxu0 0.0
    %3736 = vmatpush1.msra.mxu0 %v3570
    %3737 = vmatprep.subr.mxu0 0.0
    %3738 = vmatpush1.msra.mxu0 %v3571
    %3739 = vmatprep.subr.mxu0 0.0
    %3740 = vmatpush1.msra.mxu0 %v3572
    %3741 = vmatprep.subr.mxu0 0.0
    %3742 = vmatpush1.msra.mxu0 %v3573
    %3743 = vmatprep.subr.mxu0 0.0
    %3744 = vmatpush1.msra.mxu0 %v3574
    %3745 = vmatprep.subr.mxu0 0.0
    %3746 = vmatpush1.msra.mxu0 %v3575
    %3747 = vmatprep.subr.mxu0 0.0
    %3748 = vmatpush1.msra.mxu0 %v3576
    %3749 = vmatprep.subr.mxu0 0.0
    %3750 = vmatpush1.msra.mxu0 %v3577
    %3751 = vmatprep.subr.mxu0 0.0
    %3752 = vmatpush1.msra.mxu0 %v3578
    %3753 = vmatprep.subr.mxu0 0.0
    %3754 = vmatpush1.msra.mxu0 %v3579
    %3755 = vmatprep.subr.mxu0 0.0
    %3756 = vmatpush1.msra.mxu0 %v3580
    %3757 = vmatprep.subr.mxu0 0.0
    %3758 = vmatpush1.msra.mxu0 %v3581
    %3759 = vmatprep.subr.mxu0 0.0
    %3760 = vmatpush1.msra.mxu0 %v3582
    %3761 = vmatprep.subr.mxu0 0.0
    %3762 = vmatpush1.msra.mxu0 %v3583
    %3763 = vmatprep.subr.mxu0 0.0
    %3764 = vmatpush1.msra.mxu0 %v3584
    %3765 = vmatprep.subr.mxu0 0.0
    %3766 = vmatpush1.msra.mxu0 %v3585
    %3767 = vmatprep.mubr.f32.mxu0 %v3544
    %3768 = vmatmul.mubr.f32.gmra.mrb[0].mxu0 %v3543
    %v3769 = vpop.f32.mrb[0].mxu0
    %v3770 = vadd.f32 %v3685, %v3769
    %v3771 = vpop.f32.mrb[0].mxu0
    %3772 = vmatprep.mubr.f32.mxu0 %v3546
    %3773 = vmatmul.mubr.f32.gmra.mrb[0].mxu0 %v3545
    %v3774 = vpop.f32.mrb[0].mxu0
    %v3775 = vadd.f32 %v3690, %v3774
    %v3776 = vpop.f32.mrb[0].mxu0
    %3777 = vmatprep.mubr.f32.mxu0 %v3548
    %3778 = vmatmul.mubr.f32.gmra.mrb[0].mxu0 %v3547
    %v3779 = vpop.f32.mrb[0].mxu0
    %v3780 = vadd.f32 %v3695, %v3779
    %v3781 = vpop.f32.mrb[0].mxu0
    %3782 = vmatprep.mubr.f32.mxu0 %v3550
    %3783 = vmatmul.mubr.f32.gmra.mrb[0].mxu0 %v3549
    %v3784 = vpop.f32.mrb[0].mxu0
    %v3785 = vadd.f32 %v3700, %v3784
    %v3786 = vpop.f32.mrb[0].mxu0
    %3787 = vdwg.mxu0
    %v3788 = vld [vmem:[#allocation19] sm:$0x1]
    %v3790 = vlaneseq
    %v3791 = vshrl.u32 %v3790, 7
    %v3792 = vsub.s32 0, %v3791
    %v3793 = vrot.slane %v3788, %v3792
    %v3795 = vadd.f32 %v3770, %v3793
    %v3796 = vadd.f32 %v3775, %v3793
    %v3797 = vadd.f32 %v3780, %v3793
    %v3798 = vadd.f32 %v3785, %v3793
    %v3799 = vmax.f32 %v3795, 0.0
    %v3800 = vmax.f32 %v3796, 0.0
    %v3801 = vmax.f32 %v3797, 0.0
    %v3802 = vmax.f32 %v3798, 0.0
    %3803 = vmatprep.subr.mxu0 0.0
    %3804 = vmatpush1.msra.mxu0 %v3799
    %3805 = vmatprep.subr.mxu0 0.0
    %3806 = vmatpush1.msra.mxu0 %v3800
    %3807 = vmatprep.subr.mxu0 0.0
    %3808 = vmatpush1.msra.mxu0 %v3801
    %3809 = vmatprep.subr.mxu0 0.0
    %3810 = vmatpush1.msra.mxu0 %v3802
    %3811 = vmatprep.subr.mxu0 0.0
    %3812 = vmatpush1.msra.mxu0 0.0
    %3813 = vmatprep.subr.mxu0 0.0
    %3814 = vmatpush1.msra.mxu0 0.0
    %3815 = vmatprep.subr.mxu0 0.0
    %3816 = vmatpush1.msra.mxu0 0.0
    %3817 = vmatprep.subr.mxu0 0.0
    %3818 = vmatpush1.msra.mxu0 0.0
    %3819 = vmatprep.subr.mxu0 0.0
    %3820 = vmatpush1.msra.mxu0 0.0
    %3821 = vmatprep.subr.mxu0 0.0
    %3822 = vmatpush1.msra.mxu0 0.0
    %3823 = vmatprep.subr.mxu0 0.0
    %3824 = vmatpush1.msra.mxu0 0.0
    %3825 = vmatprep.subr.mxu0 0.0
    %3826 = vmatpush1.msra.mxu0 0.0
    %3827 = vmatprep.subr.mxu0 0.0
    %3828 = vmatpush1.msra.mxu0 0.0
    %3829 = vmatprep.subr.mxu0 0.0
    %3830 = vmatpush1.msra.mxu0 0.0
    %3831 = vmatprep.subr.mxu0 0.0
    %3832 = vmatpush1.msra.mxu0 0.0
    %3833 = vmatprep.subr.mxu0 0.0
    %3834 = vmatpush1.msra.mxu0 0.0
    %3835 = vmatprep.subr.mxu0 0.0
    %3836 = vmatpush1.msra.mxu0 0.0
    %3837 = vmatprep.subr.mxu0 0.0
    %3838 = vmatpush1.msra.mxu0 0.0
    %3839 = vmatprep.subr.mxu0 0.0
    %3840 = vmatpush1.msra.mxu0 0.0
    %3841 = vmatprep.subr.mxu0 0.0
    %3842 = vmatpush1.msra.mxu0 0.0
    %3843 = vmatprep.subr.mxu0 0.0
    %3844 = vmatpush1.msra.mxu0 0.0
    %3845 = vmatprep.subr.mxu0 0.0
    %3846 = vmatpush1.msra.mxu0 0.0
    %3847 = vmatprep.subr.mxu0 0.0
    %3848 = vmatpush1.msra.mxu0 0.0
    %3849 = vmatprep.subr.mxu0 0.0
    %3850 = vmatpush1.msra.mxu0 0.0
    %3851 = vmatprep.subr.mxu0 0.0
    %3852 = vmatpush1.msra.mxu0 0.0
    %3853 = vmatprep.subr.mxu0 0.0
    %3854 = vmatpush1.msra.mxu0 0.0
    %3855 = vmatprep.subr.mxu0 0.0
    %3856 = vmatpush1.msra.mxu0 0.0
    %3857 = vmatprep.subr.mxu0 0.0
    %3858 = vmatpush1.msra.mxu0 0.0
    %3859 = vmatprep.subr.mxu0 0.0
    %3860 = vmatpush1.msra.mxu0 0.0
    %3861 = vmatprep.subr.mxu0 0.0
    %3862 = vmatpush1.msra.mxu0 0.0
    %3863 = vmatprep.subr.mxu0 0.0
    %3864 = vmatpush1.msra.mxu0 0.0
    %3865 = vmatprep.subr.mxu0 0.0
    %3866 = vmatpush1.msra.mxu0 0.0
    %3867 = vmatprep.mubr.f32.mxu0 0.0
    %3868 = vmatmul.mubr.f32.gmra.mrb[0].mxu0 %v399
    %v3869 = vpop.f32.mrb[0].mxu0
    %v3870 = vadd.f32 0.0, %v3869
    %v3871 = vpop.f32.mrb[0].mxu0
    %3872 = vmatprep.mubr.f32.mxu0 0.0
    %3873 = vmatmul.mubr.f32.gmra.mrb[0].mxu0 %v402
    %v3874 = vpop.f32.mrb[0].mxu0
    %v3875 = vadd.f32 0.0, %v3874
    %v3876 = vpop.f32.mrb[0].mxu0
    %3877 = vmatprep.mubr.f32.mxu0 0.0
    %3878 = vmatmul.mubr.f32.gmra.mrb[0].mxu0 %v405
    %v3879 = vpop.f32.mrb[0].mxu0
    %v3880 = vadd.f32 0.0, %v3879
    %v3881 = vpop.f32.mrb[0].mxu0
    %3882 = vmatprep.mubr.f32.mxu0 0.0
    %3883 = vmatmul.mubr.f32.gmra.mrb[0].mxu0 %v408
    %v3884 = vpop.f32.mrb[0].mxu0
    %v3885 = vadd.f32 0.0, %v3884
    %v3886 = vpop.f32.mrb[0].mxu0
    %3887 = vmatprep.mubr.f32.mxu0 0.0
    %3888 = vmatmul.mubr.f32.gmra.mrb[0].mxu0 %v411
    %v3889 = vpop.f32.mrb[0].mxu0
    %v3890 = vadd.f32 0.0, %v3889
    %v3891 = vpop.f32.mrb[0].mxu0
    %3892 = vmatprep.mubr.f32.mxu0 0.0
    %3893 = vmatmul.mubr.f32.gmra.mrb[0].mxu0 %v414
    %v3894 = vpop.f32.mrb[0].mxu0
    %v3895 = vadd.f32 0.0, %v3894
    %v3896 = vpop.f32.mrb[0].mxu0
    %3897 = vmatprep.mubr.f32.mxu0 0.0
    %3898 = vmatmul.mubr.f32.gmra.mrb[0].mxu0 %v417
    %v3899 = vpop.f32.mrb[0].mxu0
    %v3900 = vadd.f32 0.0, %v3899
    %v3901 = vpop.f32.mrb[0].mxu0
    %3902 = vmatprep.mubr.f32.mxu0 0.0
    %3903 = vmatmul.mubr.f32.gmra.mrb[0].mxu0 %v420
    %v3904 = vpop.f32.mrb[0].mxu0
    %v3905 = vadd.f32 0.0, %v3904
    %v3906 = vpop.f32.mrb[0].mxu0
    %3907 = vmatprep.mubr.f32.mxu0 0.0
    %3908 = vmatmul.mubr.f32.gmra.mrb[0].mxu0 %v423
    %v3909 = vpop.f32.mrb[0].mxu0
    %v3910 = vadd.f32 0.0, %v3909
    %v3911 = vpop.f32.mrb[0].mxu0
    %3912 = vmatprep.mubr.f32.mxu0 0.0
    %3913 = vmatmul.mubr.f32.gmra.mrb[0].mxu0 %v426
    %v3914 = vpop.f32.mrb[0].mxu0
    %v3915 = vadd.f32 0.0, %v3914
    %v3916 = vpop.f32.mrb[0].mxu0
    %3917 = vmatprep.mubr.f32.mxu0 0.0
    %3918 = vmatmul.mubr.f32.gmra.mrb[0].mxu0 %v429
    %v3919 = vpop.f32.mrb[0].mxu0
    %v3920 = vadd.f32 0.0, %v3919
    %v3921 = vpop.f32.mrb[0].mxu0
    %3922 = vmatprep.mubr.f32.mxu0 0.0
    %3923 = vmatmul.mubr.f32.gmra.mrb[0].mxu0 %v432
    %v3924 = vpop.f32.mrb[0].mxu0
    %v3925 = vadd.f32 0.0, %v3924
    %v3926 = vpop.f32.mrb[0].mxu0
    %3927 = vmatprep.mubr.f32.mxu0 0.0
    %3928 = vmatmul.mubr.f32.gmra.mrb[0].mxu0 %v435
    %v3929 = vpop.f32.mrb[0].mxu0
    %v3930 = vadd.f32 0.0, %v3929
    %v3931 = vpop.f32.mrb[0].mxu0
    %3932 = vmatprep.mubr.f32.mxu0 0.0
    %3933 = vmatmul.mubr.f32.gmra.mrb[0].mxu0 %v438
    %v3934 = vpop.f32.mrb[0].mxu0
    %v3935 = vadd.f32 0.0, %v3934
    %v3936 = vpop.f32.mrb[0].mxu0
    %3937 = vmatprep.mubr.f32.mxu0 0.0
    %3938 = vmatmul.mubr.f32.gmra.mrb[0].mxu0 %v441
    %v3939 = vpop.f32.mrb[0].mxu0
    %v3940 = vadd.f32 0.0, %v3939
    %v3941 = vpop.f32.mrb[0].mxu0
    %3942 = vmatprep.mubr.f32.mxu0 0.0
    %3943 = vmatmul.mubr.f32.gmra.mrb[0].mxu0 %v444
    %v3944 = vpop.f32.mrb[0].mxu0
    %v3945 = vadd.f32 0.0, %v3944
    %v3946 = vpop.f32.mrb[0].mxu0
    %3947 = vdwg.mxu0
    %s3948 = sshll.u32 %s3551, 4
    %3949 = dma.done %s208, %s3948
    %v3950 = vld [vmem:[#allocation7] sm:$0xff]
    %v3951 = vld [vmem:[#allocation7 + $0x8] sm:$0xff]
    %v3952 = vld [vmem:[#allocation7 + $0x10] sm:$0xff]
    %v3953 = vld [vmem:[#allocation7 + $0x18] sm:$0xff]
    %v3954 = vld [vmem:[#allocation7 + $0x20] sm:$0xff]
    %v3955 = vld [vmem:[#allocation7 + $0x28] sm:$0xff]
    %v3956 = vld [vmem:[#allocation7 + $0x30] sm:$0xff]
    %v3957 = vld [vmem:[#allocation7 + $0x38] sm:$0xff]
    %v3958 = vld [vmem:[#allocation7 + $0x40] sm:$0xff]
    %v3959 = vld [vmem:[#allocation7 + $0x48] sm:$0xff]
    %v3960 = vld [vmem:[#allocation7 + $0x50] sm:$0xff]
    %v3961 = vld [vmem:[#allocation7 + $0x58] sm:$0xff]
    %v3962 = vld [vmem:[#allocation7 + $0x60] sm:$0xff]
    %v3963 = vld [vmem:[#allocation7 + $0x68] sm:$0xff]
    %v3964 = vld [vmem:[#allocation7 + $0x70] sm:$0xff]
    %v3965 = vld [vmem:[#allocation7 + $0x78] sm:$0xff]
    %v3966 = vld [vmem:[#allocation7 + $0x80] sm:$0xff]
    %v3967 = vld [vmem:[#allocation7 + $0x88] sm:$0xff]
    %v3968 = vld [vmem:[#allocation7 + $0x90] sm:$0xff]
    %v3969 = vld [vmem:[#allocation7 + $0x98] sm:$0xff]
    %v3970 = vld [vmem:[#allocation7 + $0xa0] sm:$0xff]
    %v3971 = vld [vmem:[#allocation7 + $0xa8] sm:$0xff]
    %v3972 = vld [vmem:[#allocation7 + $0xb0] sm:$0xff]
    %v3973 = vld [vmem:[#allocation7 + $0xb8] sm:$0xff]
    %v3974 = vld [vmem:[#allocation7 + $0xc0] sm:$0xff]
    %v3975 = vld [vmem:[#allocation7 + $0xc8] sm:$0xff]
    %v3976 = vld [vmem:[#allocation7 + $0xd0] sm:$0xff]
    %v3977 = vld [vmem:[#allocation7 + $0xd8] sm:$0xff]
    %v3978 = vld [vmem:[#allocation7 + $0xe0] sm:$0xff]
    %v3979 = vld [vmem:[#allocation7 + $0xe8] sm:$0xff]
    %v3980 = vld [vmem:[#allocation7 + $0xf0] sm:$0xff]
    %v3981 = vld [vmem:[#allocation7 + $0xf8] sm:$0xff]
    %3982 = vmatprep.subr.mxu0 0.0
    %3983 = vmatpush1.msra.mxu0 %v3966
    %3984 = vmatprep.subr.mxu0 0.0
    %3985 = vmatpush1.msra.mxu0 %v3967
    %3986 = vmatprep.subr.mxu0 0.0
    %3987 = vmatpush1.msra.mxu0 %v3968
    %3988 = vmatprep.subr.mxu0 0.0
    %3989 = vmatpush1.msra.mxu0 %v3969
    %3990 = vmatprep.subr.mxu0 0.0
    %3991 = vmatpush1.msra.mxu0 %v3970
    %3992 = vmatprep.subr.mxu0 0.0
    %3993 = vmatpush1.msra.mxu0 %v3971
    %3994 = vmatprep.subr.mxu0 0.0
    %3995 = vmatpush1.msra.mxu0 %v3972
    %3996 = vmatprep.subr.mxu0 0.0
    %3997 = vmatpush1.msra.mxu0 %v3973
    %3998 = vmatprep.subr.mxu0 0.0
    %3999 = vmatpush1.msra.mxu0 %v3974
    %4000 = vmatprep.subr.mxu0 0.0
    %4001 = vmatpush1.msra.mxu0 %v3975
    %4002 = vmatprep.subr.mxu0 0.0
    %4003 = vmatpush1.msra.mxu0 %v3976
    %4004 = vmatprep.subr.mxu0 0.0
    %4005 = vmatpush1.msra.mxu0 %v3977
    %4006 = vmatprep.subr.mxu0 0.0
    %4007 = vmatpush1.msra.mxu0 %v3978
    %4008 = vmatprep.subr.mxu0 0.0
    %4009 = vmatpush1.msra.mxu0 %v3979
    %4010 = vmatprep.subr.mxu0 0.0
    %4011 = vmatpush1.msra.mxu0 %v3980
    %4012 = vmatprep.subr.mxu0 0.0
    %4013 = vmatpush1.msra.mxu0 %v3981
    %4014 = vmatprep.subr.mxu0 0.0
    %4015 = vmatpush1.msra.mxu0 0.0
    %4016 = vmatprep.subr.mxu0 0.0
    %4017 = vmatpush1.msra.mxu0 0.0
    %4018 = vmatprep.subr.mxu0 0.0
    %4019 = vmatpush1.msra.mxu0 0.0
    %4020 = vmatprep.subr.mxu0 0.0
    %4021 = vmatpush1.msra.mxu0 0.0
    %4022 = vmatprep.subr.mxu0 0.0
    %4023 = vmatpush1.msra.mxu0 0.0
    %4024 = vmatprep.subr.mxu0 0.0
    %4025 = vmatpush1.msra.mxu0 0.0
    %4026 = vmatprep.subr.mxu0 0.0
    %4027 = vmatpush1.msra.mxu0 0.0
    %4028 = vmatprep.subr.mxu0 0.0
    %4029 = vmatpush1.msra.mxu0 0.0
    %4030 = vmatprep.subr.mxu0 0.0
    %4031 = vmatpush1.msra.mxu0 0.0
    %4032 = vmatprep.subr.mxu0 0.0
    %4033 = vmatpush1.msra.mxu0 0.0
    %4034 = vmatprep.subr.mxu0 0.0
    %4035 = vmatpush1.msra.mxu0 0.0
    %4036 = vmatprep.subr.mxu0 0.0
    %4037 = vmatpush1.msra.mxu0 0.0
    %4038 = vmatprep.subr.mxu0 0.0
    %4039 = vmatpush1.msra.mxu0 0.0
    %4040 = vmatprep.subr.mxu0 0.0
    %4041 = vmatpush1.msra.mxu0 0.0
    %4042 = vmatprep.subr.mxu0 0.0
    %4043 = vmatpush1.msra.mxu0 0.0
    %4044 = vmatprep.subr.mxu0 0.0
    %4045 = vmatpush1.msra.mxu0 0.0
    %4046 = vmatprep.mubr.f32.mxu0 0.0
    %4047 = vmatmul.mubr.f32.gmra.mrb[0].mxu0 %v3890
    %v4048 = vpop.f32.mrb[0].mxu0
    %v4049 = vadd.f32 0.0, %v4048
    %v4050 = vpop.f32.mrb[0].mxu0
    %4051 = vmatprep.mubr.f32.mxu0 0.0
    %4052 = vmatmul.mubr.f32.gmra.mrb[0].mxu0 %v3895
    %v4053 = vpop.f32.mrb[0].mxu0
    %v4054 = vadd.f32 0.0, %v4053
    %v4055 = vpop.f32.mrb[0].mxu0
    %4056 = vmatprep.mubr.f32.mxu0 0.0
    %4057 = vmatmul.mubr.f32.gmra.mrb[0].mxu0 %v3900
    %v4058 = vpop.f32.mrb[0].mxu0
    %v4059 = vadd.f32 0.0, %v4058
    %v4060 = vpop.f32.mrb[0].mxu0
    %4061 = vmatprep.mubr.f32.mxu0 0.0
    %4062 = vmatmul.mubr.f32.gmra.mrb[0].mxu0 %v3905
    %v4063 = vpop.f32.mrb[0].mxu0
    %v4064 = vadd.f32 0.0, %v4063
    %v4065 = vpop.f32.mrb[0].mxu0
    %4066 = vdwg.mxu0
    %4067 = vmatprep.subr.mxu0 0.0
    %4068 = vmatpush1.msra.mxu0 %v3950
    %4069 = vmatprep.subr.mxu0 0.0
    %4070 = vmatpush1.msra.mxu0 %v3951
    %4071 = vmatprep.subr.mxu0 0.0
    %4072 = vmatpush1.msra.mxu0 %v3952
    %4073 = vmatprep.subr.mxu0 0.0
    %4074 = vmatpush1.msra.mxu0 %v3953
    %4075 = vmatprep.subr.mxu0 0.0
    %4076 = vmatpush1.msra.mxu0 %v3954
    %4077 = vmatprep.subr.mxu0 0.0
    %4078 = vmatpush1.msra.mxu0 %v3955
    %4079 = vmatprep.subr.mxu0 0.0
    %4080 = vmatpush1.msra.mxu0 %v3956
    %4081 = vmatprep.subr.mxu0 0.0
    %4082 = vmatpush1.msra.mxu0 %v3957
    %4083 = vmatprep.subr.mxu0 0.0
    %4084 = vmatpush1.msra.mxu0 %v3958
    %4085 = vmatprep.subr.mxu0 0.0
    %4086 = vmatpush1.msra.mxu0 %v3959
    %4087 = vmatprep.subr.mxu0 0.0
    %4088 = vmatpush1.msra.mxu0 %v3960
    %4089 = vmatprep.subr.mxu0 0.0
    %4090 = vmatpush1.msra.mxu0 %v3961
    %4091 = vmatprep.subr.mxu0 0.0
    %4092 = vmatpush1.msra.mxu0 %v3962
    %4093 = vmatprep.subr.mxu0 0.0
    %4094 = vmatpush1.msra.mxu0 %v3963
    %4095 = vmatprep.subr.mxu0 0.0
    %4096 = vmatpush1.msra.mxu0 %v3964
    %4097 = vmatprep.subr.mxu0 0.0
    %4098 = vmatpush1.msra.mxu0 %v3965
    %4099 = vmatprep.subr.mxu0 0.0
    %4100 = vmatpush1.msra.mxu0 0.0
    %4101 = vmatprep.subr.mxu0 0.0
    %4102 = vmatpush1.msra.mxu0 0.0
    %4103 = vmatprep.subr.mxu0 0.0
    %4104 = vmatpush1.msra.mxu0 0.0
    %4105 = vmatprep.subr.mxu0 0.0
    %4106 = vmatpush1.msra.mxu0 0.0
    %4107 = vmatprep.subr.mxu0 0.0
    %4108 = vmatpush1.msra.mxu0 0.0
    %4109 = vmatprep.subr.mxu0 0.0
    %4110 = vmatpush1.msra.mxu0 0.0
    %4111 = vmatprep.subr.mxu0 0.0
    %4112 = vmatpush1.msra.mxu0 0.0
    %4113 = vmatprep.subr.mxu0 0.0
    %4114 = vmatpush1.msra.mxu0 0.0
    %4115 = vmatprep.subr.mxu0 0.0
    %4116 = vmatpush1.msra.mxu0 0.0
    %4117 = vmatprep.subr.mxu0 0.0
    %4118 = vmatpush1.msra.mxu0 0.0
    %4119 = vmatprep.subr.mxu0 0.0
    %4120 = vmatpush1.msra.mxu0 0.0
    %4121 = vmatprep.subr.mxu0 0.0
    %4122 = vmatpush1.msra.mxu0 0.0
    %4123 = vmatprep.subr.mxu0 0.0
    %4124 = vmatpush1.msra.mxu0 0.0
    %4125 = vmatprep.subr.mxu0 0.0
    %4126 = vmatpush1.msra.mxu0 0.0
    %4127 = vmatprep.subr.mxu0 0.0
    %4128 = vmatpush1.msra.mxu0 0.0
    %4129 = vmatprep.subr.mxu0 0.0
    %4130 = vmatpush1.msra.mxu0 0.0
    %4131 = vmatprep.mubr.f32.mxu0 0.0
    %4132 = vmatmul.mubr.f32.gmra.mrb[0].mxu0 %v3870
    %v4133 = vpop.f32.mrb[0].mxu0
    %v4134 = vadd.f32 %v4049, %v4133
    %v4135 = vpop.f32.mrb[0].mxu0
    %4136 = vmatprep.mubr.f32.mxu0 0.0
    %4137 = vmatmul.mubr.f32.gmra.mrb[0].mxu0 %v3875
    %v4138 = vpop.f32.mrb[0].mxu0
    %v4139 = vadd.f32 %v4054, %v4138
    %v4140 = vpop.f32.mrb[0].mxu0
    %4141 = vmatprep.mubr.f32.mxu0 0.0
    %4142 = vmatmul.mubr.f32.gmra.mrb[0].mxu0 %v3880
    %v4143 = vpop.f32.mrb[0].mxu0
    %v4144 = vadd.f32 %v4059, %v4143
    %v4145 = vpop.f32.mrb[0].mxu0
    %4146 = vmatprep.mubr.f32.mxu0 0.0
    %4147 = vmatmul.mubr.f32.gmra.mrb[0].mxu0 %v3885
    %v4148 = vpop.f32.mrb[0].mxu0
    %v4149 = vadd.f32 %v4064, %v4148
    %v4150 = vpop.f32.mrb[0].mxu0
    %4151 = vdwg.mxu0
    %v4152 = vld [vmem:[#allocation7 + $0x100] sm:$0xff]
    %v4153 = vld [vmem:[#allocation7 + $0x108] sm:$0xff]
    %v4154 = vld [vmem:[#allocation7 + $0x110] sm:$0xff]
    %v4155 = vld [vmem:[#allocation7 + $0x118] sm:$0xff]
    %v4156 = vld [vmem:[#allocation7 + $0x120] sm:$0xff]
    %v4157 = vld [vmem:[#allocation7 + $0x128] sm:$0xff]
    %v4158 = vld [vmem:[#allocation7 + $0x130] sm:$0xff]
    %v4159 = vld [vmem:[#allocation7 + $0x138] sm:$0xff]
    %v4160 = vld [vmem:[#allocation7 + $0x140] sm:$0xff]
    %v4161 = vld [vmem:[#allocation7 + $0x148] sm:$0xff]
    %v4162 = vld [vmem:[#allocation7 + $0x150] sm:$0xff]
    %v4163 = vld [vmem:[#allocation7 + $0x158] sm:$0xff]
    %v4164 = vld [vmem:[#allocation7 + $0x160] sm:$0xff]
    %v4165 = vld [vmem:[#allocation7 + $0x168] sm:$0xff]
    %v4166 = vld [vmem:[#allocation7 + $0x170] sm:$0xff]
    %v4167 = vld [vmem:[#allocation7 + $0x178] sm:$0xff]
    %4168 = vmatprep.subr.mxu0 0.0
    %4169 = vmatpush1.msra.mxu0 %v4152
    %4170 = vmatprep.subr.mxu0 0.0
    %4171 = vmatpush1.msra.mxu0 %v4153
    %4172 = vmatprep.subr.mxu0 0.0
    %4173 = vmatpush1.msra.mxu0 %v4154
    %4174 = vmatprep.subr.mxu0 0.0
    %4175 = vmatpush1.msra.mxu0 %v4155
    %4176 = vmatprep.subr.mxu0 0.0
    %4177 = vmatpush1.msra.mxu0 %v4156
    %4178 = vmatprep.subr.mxu0 0.0
    %4179 = vmatpush1.msra.mxu0 %v4157
    %4180 = vmatprep.subr.mxu0 0.0
    %4181 = vmatpush1.msra.mxu0 %v4158
    %4182 = vmatprep.subr.mxu0 0.0
    %4183 = vmatpush1.msra.mxu0 %v4159
    %4184 = vmatprep.subr.mxu0 0.0
    %4185 = vmatpush1.msra.mxu0 %v4160
    %4186 = vmatprep.subr.mxu0 0.0
    %4187 = vmatpush1.msra.mxu0 %v4161
    %4188 = vmatprep.subr.mxu0 0.0
    %4189 = vmatpush1.msra.mxu0 %v4162
    %4190 = vmatprep.subr.mxu0 0.0
    %4191 = vmatpush1.msra.mxu0 %v4163
    %4192 = vmatprep.subr.mxu0 0.0
    %4193 = vmatpush1.msra.mxu0 %v4164
    %4194 = vmatprep.subr.mxu0 0.0
    %4195 = vmatpush1.msra.mxu0 %v4165
    %4196 = vmatprep.subr.mxu0 0.0
    %4197 = vmatpush1.msra.mxu0 %v4166
    %4198 = vmatprep.subr.mxu0 0.0
    %4199 = vmatpush1.msra.mxu0 %v4167
    %4200 = vmatprep.subr.mxu0 0.0
    %4201 = vmatpush1.msra.mxu0 0.0
    %4202 = vmatprep.subr.mxu0 0.0
    %4203 = vmatpush1.msra.mxu0 0.0
    %4204 = vmatprep.subr.mxu0 0.0
    %4205 = vmatpush1.msra.mxu0 0.0
    %4206 = vmatprep.subr.mxu0 0.0
    %4207 = vmatpush1.msra.mxu0 0.0
    %4208 = vmatprep.subr.mxu0 0.0
    %4209 = vmatpush1.msra.mxu0 0.0
    %4210 = vmatprep.subr.mxu0 0.0
    %4211 = vmatpush1.msra.mxu0 0.0
    %4212 = vmatprep.subr.mxu0 0.0
    %4213 = vmatpush1.msra.mxu0 0.0
    %4214 = vmatprep.subr.mxu0 0.0
    %4215 = vmatpush1.msra.mxu0 0.0
    %4216 = vmatprep.subr.mxu0 0.0
    %4217 = vmatpush1.msra.mxu0 0.0
    %4218 = vmatprep.subr.mxu0 0.0
    %4219 = vmatpush1.msra.mxu0 0.0
    %4220 = vmatprep.subr.mxu0 0.0
    %4221 = vmatpush1.msra.mxu0 0.0
    %4222 = vmatprep.subr.mxu0 0.0
    %4223 = vmatpush1.msra.mxu0 0.0
    %4224 = vmatprep.subr.mxu0 0.0
    %4225 = vmatpush1.msra.mxu0 0.0
    %4226 = vmatprep.subr.mxu0 0.0
    %4227 = vmatpush1.msra.mxu0 0.0
    %4228 = vmatprep.subr.mxu0 0.0
    %4229 = vmatpush1.msra.mxu0 0.0
    %4230 = vmatprep.subr.mxu0 0.0
    %4231 = vmatpush1.msra.mxu0 0.0
    %4232 = vmatprep.mubr.f32.mxu0 0.0
    %4233 = vmatmul.mubr.f32.gmra.mrb[0].mxu0 %v3910
    %v4234 = vpop.f32.mrb[0].mxu0
    %v4235 = vadd.f32 0.0, %v4234
    %v4236 = vpop.f32.mrb[0].mxu0
    %4237 = vmatprep.mubr.f32.mxu0 0.0
    %4238 = vmatmul.mubr.f32.gmra.mrb[0].mxu0 %v3915
    %v4239 = vpop.f32.mrb[0].mxu0
    %v4240 = vadd.f32 0.0, %v4239
    %v4241 = vpop.f32.mrb[0].mxu0
    %4242 = vmatprep.mubr.f32.mxu0 0.0
    %4243 = vmatmul.mubr.f32.gmra.mrb[0].mxu0 %v3920
    %v4244 = vpop.f32.mrb[0].mxu0
    %v4245 = vadd.f32 0.0, %v4244
    %v4246 = vpop.f32.mrb[0].mxu0
    %4247 = vmatprep.mubr.f32.mxu0 0.0
    %4248 = vmatmul.mubr.f32.gmra.mrb[0].mxu0 %v3925
    %v4249 = vpop.f32.mrb[0].mxu0
    %v4250 = vadd.f32 0.0, %v4249
    %v4251 = vpop.f32.mrb[0].mxu0
    %4252 = vdwg.mxu0
    %v4253 = vadd.f32 %v4134, %v4235
    %v4254 = vadd.f32 %v4139, %v4240
    %v4255 = vadd.f32 %v4144, %v4245
    %v4256 = vadd.f32 %v4149, %v4250
    %v4257 = vld [vmem:[#allocation7 + $0x180] sm:$0xff]
    %v4258 = vld [vmem:[#allocation7 + $0x188] sm:$0xff]
    %v4259 = vld [vmem:[#allocation7 + $0x190] sm:$0xff]
    %v4260 = vld [vmem:[#allocation7 + $0x198] sm:$0xff]
    %v4261 = vld [vmem:[#allocation7 + $0x1a0] sm:$0xff]
    %v4262 = vld [vmem:[#allocation7 + $0x1a8] sm:$0xff]
    %v4263 = vld [vmem:[#allocation7 + $0x1b0] sm:$0xff]
    %v4264 = vld [vmem:[#allocation7 + $0x1b8] sm:$0xff]
    %v4265 = vld [vmem:[#allocation7 + $0x1c0] sm:$0xff]
    %v4266 = vld [vmem:[#allocation7 + $0x1c8] sm:$0xff]
    %v4267 = vld [vmem:[#allocation7 + $0x1d0] sm:$0xff]
    %v4268 = vld [vmem:[#allocation7 + $0x1d8] sm:$0xff]
    %v4269 = vld [vmem:[#allocation7 + $0x1e0] sm:$0xff]
    %v4270 = vld [vmem:[#allocation7 + $0x1e8] sm:$0xff]
    %v4271 = vld [vmem:[#allocation7 + $0x1f0] sm:$0xff]
    %v4272 = vld [vmem:[#allocation7 + $0x1f8] sm:$0xff]
    %4273 = vmatprep.subr.mxu0 0.0
    %4274 = vmatpush1.msra.mxu0 %v4257
    %4275 = vmatprep.subr.mxu0 0.0
    %4276 = vmatpush1.msra.mxu0 %v4258
    %4277 = vmatprep.subr.mxu0 0.0
    %4278 = vmatpush1.msra.mxu0 %v4259
    %4279 = vmatprep.subr.mxu0 0.0
    %4280 = vmatpush1.msra.mxu0 %v4260
    %4281 = vmatprep.subr.mxu0 0.0
    %4282 = vmatpush1.msra.mxu0 %v4261
    %4283 = vmatprep.subr.mxu0 0.0
    %4284 = vmatpush1.msra.mxu0 %v4262
    %4285 = vmatprep.subr.mxu0 0.0
    %4286 = vmatpush1.msra.mxu0 %v4263
    %4287 = vmatprep.subr.mxu0 0.0
    %4288 = vmatpush1.msra.mxu0 %v4264
    %4289 = vmatprep.subr.mxu0 0.0
    %4290 = vmatpush1.msra.mxu0 %v4265
    %4291 = vmatprep.subr.mxu0 0.0
    %4292 = vmatpush1.msra.mxu0 %v4266
    %4293 = vmatprep.subr.mxu0 0.0
    %4294 = vmatpush1.msra.mxu0 %v4267
    %4295 = vmatprep.subr.mxu0 0.0
    %4296 = vmatpush1.msra.mxu0 %v4268
    %4297 = vmatprep.subr.mxu0 0.0
    %4298 = vmatpush1.msra.mxu0 %v4269
    %4299 = vmatprep.subr.mxu0 0.0
    %4300 = vmatpush1.msra.mxu0 %v4270
    %4301 = vmatprep.subr.mxu0 0.0
    %4302 = vmatpush1.msra.mxu0 %v4271
    %4303 = vmatprep.subr.mxu0 0.0
    %4304 = vmatpush1.msra.mxu0 %v4272
    %4305 = vmatprep.subr.mxu0 0.0
    %4306 = vmatpush1.msra.mxu0 0.0
    %4307 = vmatprep.subr.mxu0 0.0
    %4308 = vmatpush1.msra.mxu0 0.0
    %4309 = vmatprep.subr.mxu0 0.0
    %4310 = vmatpush1.msra.mxu0 0.0
    %4311 = vmatprep.subr.mxu0 0.0
    %4312 = vmatpush1.msra.mxu0 0.0
    %4313 = vmatprep.subr.mxu0 0.0
    %4314 = vmatpush1.msra.mxu0 0.0
    %4315 = vmatprep.subr.mxu0 0.0
    %4316 = vmatpush1.msra.mxu0 0.0
    %4317 = vmatprep.subr.mxu0 0.0
    %4318 = vmatpush1.msra.mxu0 0.0
    %4319 = vmatprep.subr.mxu0 0.0
    %4320 = vmatpush1.msra.mxu0 0.0
    %4321 = vmatprep.subr.mxu0 0.0
    %4322 = vmatpush1.msra.mxu0 0.0
    %4323 = vmatprep.subr.mxu0 0.0
    %4324 = vmatpush1.msra.mxu0 0.0
    %4325 = vmatprep.subr.mxu0 0.0
    %4326 = vmatpush1.msra.mxu0 0.0
    %4327 = vmatprep.subr.mxu0 0.0
    %4328 = vmatpush1.msra.mxu0 0.0
    %4329 = vmatprep.subr.mxu0 0.0
    %4330 = vmatpush1.msra.mxu0 0.0
    %4331 = vmatprep.subr.mxu0 0.0
    %4332 = vmatpush1.msra.mxu0 0.0
    %4333 = vmatprep.subr.mxu0 0.0
    %4334 = vmatpush1.msra.mxu0 0.0
    %4335 = vmatprep.subr.mxu0 0.0
    %4336 = vmatpush1.msra.mxu0 0.0
    %4337 = vmatprep.mubr.f32.mxu0 0.0
    %4338 = vmatmul.mubr.f32.gmra.mrb[0].mxu0 %v3930
    %v4339 = vpop.f32.mrb[0].mxu0
    %v4340 = vadd.f32 0.0, %v4339
    %v4341 = vpop.f32.mrb[0].mxu0
    %4342 = vmatprep.mubr.f32.mxu0 0.0
    %4343 = vmatmul.mubr.f32.gmra.mrb[0].mxu0 %v3935
    %v4344 = vpop.f32.mrb[0].mxu0
    %v4345 = vadd.f32 0.0, %v4344
    %v4346 = vpop.f32.mrb[0].mxu0
    %4347 = vmatprep.mubr.f32.mxu0 0.0
    %4348 = vmatmul.mubr.f32.gmra.mrb[0].mxu0 %v3940
    %v4349 = vpop.f32.mrb[0].mxu0
    %v4350 = vadd.f32 0.0, %v4349
    %v4351 = vpop.f32.mrb[0].mxu0
    %4352 = vmatprep.mubr.f32.mxu0 0.0
    %4353 = vmatmul.mubr.f32.gmra.mrb[0].mxu0 %v3945
    %v4354 = vpop.f32.mrb[0].mxu0
    %v4355 = vadd.f32 0.0, %v4354
    %v4356 = vpop.f32.mrb[0].mxu0
    %4357 = vdwg.mxu0
    %v4358 = vadd.f32 %v4253, %v4340
    %v4359 = vadd.f32 %v4254, %v4345
    %v4360 = vadd.f32 %v4255, %v4350
    %v4361 = vadd.f32 %v4256, %v4355
    %v4362 = vld [vmem:[#allocation21] sm:$0x1]
    %v4364 = vlaneseq
    %v4365 = vshrl.u32 %v4364, 7
    %v4366 = vsub.s32 0, %v4365
    %v4367 = vrot.slane %v4362, %v4366
    %v4369 = vadd.f32 %v4358, %v4367
    %v4370 = vadd.f32 %v4359, %v4367
    %v4371 = vadd.f32 %v4360, %v4367
    %v4372 = vadd.f32 %v4361, %v4367
    %v4373 = vmax.f32 %v4369, 0.0
    %v4374 = vmax.f32 %v4370, 0.0
    %v4375 = vmax.f32 %v4371, 0.0
    %v4376 = vmax.f32 %v4372, 0.0
    %4377 = vmatprep.subr.mxu0 0.0
    %4378 = vmatpush1.msra.mxu0 %v4373
    %4379 = vmatprep.subr.mxu0 0.0
    %4380 = vmatpush1.msra.mxu0 %v4374
    %4381 = vmatprep.subr.mxu0 0.0
    %4382 = vmatpush1.msra.mxu0 %v4375
    %4383 = vmatprep.subr.mxu0 0.0
    %4384 = vmatpush1.msra.mxu0 %v4376
    %4385 = vmatprep.subr.mxu0 0.0
    %4386 = vmatpush1.msra.mxu0 0.0
    %4387 = vmatprep.subr.mxu0 0.0
    %4388 = vmatpush1.msra.mxu0 0.0
    %4389 = vmatprep.subr.mxu0 0.0
    %4390 = vmatpush1.msra.mxu0 0.0
    %4391 = vmatprep.subr.mxu0 0.0
    %4392 = vmatpush1.msra.mxu0 0.0
    %4393 = vmatprep.subr.mxu0 0.0
    %4394 = vmatpush1.msra.mxu0 0.0
    %4395 = vmatprep.subr.mxu0 0.0
    %4396 = vmatpush1.msra.mxu0 0.0
    %4397 = vmatprep.subr.mxu0 0.0
    %4398 = vmatpush1.msra.mxu0 0.0
    %4399 = vmatprep.subr.mxu0 0.0
    %4400 = vmatpush1.msra.mxu0 0.0
    %4401 = vmatprep.subr.mxu0 0.0
    %4402 = vmatpush1.msra.mxu0 0.0
    %4403 = vmatprep.subr.mxu0 0.0
    %4404 = vmatpush1.msra.mxu0 0.0
    %4405 = vmatprep.subr.mxu0 0.0
    %4406 = vmatpush1.msra.mxu0 0.0
    %4407 = vmatprep.subr.mxu0 0.0
    %4408 = vmatpush1.msra.mxu0 0.0
    %4409 = vmatprep.subr.mxu0 0.0
    %4410 = vmatpush1.msra.mxu0 0.0
    %4411 = vmatprep.subr.mxu0 0.0
    %4412 = vmatpush1.msra.mxu0 0.0
    %4413 = vmatprep.subr.mxu0 0.0
    %4414 = vmatpush1.msra.mxu0 0.0
    %4415 = vmatprep.subr.mxu0 0.0
    %4416 = vmatpush1.msra.mxu0 0.0
    %4417 = vmatprep.subr.mxu0 0.0
    %4418 = vmatpush1.msra.mxu0 0.0
    %4419 = vmatprep.subr.mxu0 0.0
    %4420 = vmatpush1.msra.mxu0 0.0
    %4421 = vmatprep.subr.mxu0 0.0
    %4422 = vmatpush1.msra.mxu0 0.0
    %4423 = vmatprep.subr.mxu0 0.0
    %4424 = vmatpush1.msra.mxu0 0.0
    %4425 = vmatprep.subr.mxu0 0.0
    %4426 = vmatpush1.msra.mxu0 0.0
    %4427 = vmatprep.subr.mxu0 0.0
    %4428 = vmatpush1.msra.mxu0 0.0
    %4429 = vmatprep.subr.mxu0 0.0
    %4430 = vmatpush1.msra.mxu0 0.0
    %4431 = vmatprep.subr.mxu0 0.0
    %4432 = vmatpush1.msra.mxu0 0.0
    %4433 = vmatprep.subr.mxu0 0.0
    %4434 = vmatpush1.msra.mxu0 0.0
    %4435 = vmatprep.subr.mxu0 0.0
    %4436 = vmatpush1.msra.mxu0 0.0
    %4437 = vmatprep.subr.mxu0 0.0
    %4438 = vmatpush1.msra.mxu0 0.0
    %4439 = vmatprep.subr.mxu0 0.0
    %4440 = vmatpush1.msra.mxu0 0.0
    %4441 = vmatprep.mubr.f32.mxu0 0.0
    %4442 = vmatmul.mubr.f32.gmra.mrb[0].mxu0 %v399
    %v4443 = vpop.f32.mrb[0].mxu0
    %v4444 = vadd.f32 0.0, %v4443
    %v4445 = vpop.f32.mrb[0].mxu0
    %4446 = vmatprep.mubr.f32.mxu0 0.0
    %4447 = vmatmul.mubr.f32.gmra.mrb[0].mxu0 %v402
    %v4448 = vpop.f32.mrb[0].mxu0
    %v4449 = vadd.f32 0.0, %v4448
    %v4450 = vpop.f32.mrb[0].mxu0
    %4451 = vmatprep.mubr.f32.mxu0 0.0
    %4452 = vmatmul.mubr.f32.gmra.mrb[0].mxu0 %v405
    %v4453 = vpop.f32.mrb[0].mxu0
    %v4454 = vadd.f32 0.0, %v4453
    %v4455 = vpop.f32.mrb[0].mxu0
    %4456 = vmatprep.mubr.f32.mxu0 0.0
    %4457 = vmatmul.mubr.f32.gmra.mrb[0].mxu0 %v408
    %v4458 = vpop.f32.mrb[0].mxu0
    %v4459 = vadd.f32 0.0, %v4458
    %v4460 = vpop.f32.mrb[0].mxu0
    %4461 = vmatprep.mubr.f32.mxu0 0.0
    %4462 = vmatmul.mubr.f32.gmra.mrb[0].mxu0 %v411
    %v4463 = vpop.f32.mrb[0].mxu0
    %v4464 = vadd.f32 0.0, %v4463
    %v4465 = vpop.f32.mrb[0].mxu0
    %4466 = vmatprep.mubr.f32.mxu0 0.0
    %4467 = vmatmul.mubr.f32.gmra.mrb[0].mxu0 %v414
    %v4468 = vpop.f32.mrb[0].mxu0
    %v4469 = vadd.f32 0.0, %v4468
    %v4470 = vpop.f32.mrb[0].mxu0
    %4471 = vmatprep.mubr.f32.mxu0 0.0
    %4472 = vmatmul.mubr.f32.gmra.mrb[0].mxu0 %v417
    %v4473 = vpop.f32.mrb[0].mxu0
    %v4474 = vadd.f32 0.0, %v4473
    %v4475 = vpop.f32.mrb[0].mxu0
    %4476 = vmatprep.mubr.f32.mxu0 0.0
    %4477 = vmatmul.mubr.f32.gmra.mrb[0].mxu0 %v420
    %v4478 = vpop.f32.mrb[0].mxu0
    %v4479 = vadd.f32 0.0, %v4478
    %v4480 = vpop.f32.mrb[0].mxu0
    %4481 = vmatprep.mubr.f32.mxu0 0.0
    %4482 = vmatmul.mubr.f32.gmra.mrb[0].mxu0 %v423
    %v4483 = vpop.f32.mrb[0].mxu0
    %v4484 = vadd.f32 0.0, %v4483
    %v4485 = vpop.f32.mrb[0].mxu0
    %4486 = vmatprep.mubr.f32.mxu0 0.0
    %4487 = vmatmul.mubr.f32.gmra.mrb[0].mxu0 %v426
    %v4488 = vpop.f32.mrb[0].mxu0
    %v4489 = vadd.f32 0.0, %v4488
    %v4490 = vpop.f32.mrb[0].mxu0
    %4491 = vmatprep.mubr.f32.mxu0 0.0
    %4492 = vmatmul.mubr.f32.gmra.mrb[0].mxu0 %v429
    %v4493 = vpop.f32.mrb[0].mxu0
    %v4494 = vadd.f32 0.0, %v4493
    %v4495 = vpop.f32.mrb[0].mxu0
    %4496 = vmatprep.mubr.f32.mxu0 0.0
    %4497 = vmatmul.mubr.f32.gmra.mrb[0].mxu0 %v432
    %v4498 = vpop.f32.mrb[0].mxu0
    %v4499 = vadd.f32 0.0, %v4498
    %v4500 = vpop.f32.mrb[0].mxu0
    %4501 = vmatprep.mubr.f32.mxu0 0.0
    %4502 = vmatmul.mubr.f32.gmra.mrb[0].mxu0 %v435
    %v4503 = vpop.f32.mrb[0].mxu0
    %v4504 = vadd.f32 0.0, %v4503
    %v4505 = vpop.f32.mrb[0].mxu0
    %4506 = vmatprep.mubr.f32.mxu0 0.0
    %4507 = vmatmul.mubr.f32.gmra.mrb[0].mxu0 %v438
    %v4508 = vpop.f32.mrb[0].mxu0
    %v4509 = vadd.f32 0.0, %v4508
    %v4510 = vpop.f32.mrb[0].mxu0
    %4511 = vmatprep.mubr.f32.mxu0 0.0
    %4512 = vmatmul.mubr.f32.gmra.mrb[0].mxu0 %v441
    %v4513 = vpop.f32.mrb[0].mxu0
    %v4514 = vadd.f32 0.0, %v4513
    %v4515 = vpop.f32.mrb[0].mxu0
    %4516 = vmatprep.mubr.f32.mxu0 0.0
    %4517 = vmatmul.mubr.f32.gmra.mrb[0].mxu0 %v444
    %v4518 = vpop.f32.mrb[0].mxu0
    %v4519 = vadd.f32 0.0, %v4518
    %v4520 = vpop.f32.mrb[0].mxu0
    %4521 = vdwg.mxu0
    %s4522 = sshll.u32 %s3551, 4
    %4523 = dma.done %s220, %s4522
    %v4524 = vld [vmem:[#allocation8] sm:$0xff]
    %v4525 = vld [vmem:[#allocation8 + $0x8] sm:$0xff]
    %v4526 = vld [vmem:[#allocation8 + $0x10] sm:$0xff]
    %v4527 = vld [vmem:[#allocation8 + $0x18] sm:$0xff]
    %v4528 = vld [vmem:[#allocation8 + $0x20] sm:$0xff]
    %v4529 = vld [vmem:[#allocation8 + $0x28] sm:$0xff]
    %v4530 = vld [vmem:[#allocation8 + $0x30] sm:$0xff]
    %v4531 = vld [vmem:[#allocation8 + $0x38] sm:$0xff]
    %v4532 = vld [vmem:[#allocation8 + $0x40] sm:$0xff]
    %v4533 = vld [vmem:[#allocation8 + $0x48] sm:$0xff]
    %v4534 = vld [vmem:[#allocation8 + $0x50] sm:$0xff]
    %v4535 = vld [vmem:[#allocation8 + $0x58] sm:$0xff]
    %v4536 = vld [vmem:[#allocation8 + $0x60] sm:$0xff]
    %v4537 = vld [vmem:[#allocation8 + $0x68] sm:$0xff]
    %v4538 = vld [vmem:[#allocation8 + $0x70] sm:$0xff]
    %v4539 = vld [vmem:[#allocation8 + $0x78] sm:$0xff]
    %v4540 = vld [vmem:[#allocation8 + $0x80] sm:$0xff]
    %v4541 = vld [vmem:[#allocation8 + $0x88] sm:$0xff]
    %v4542 = vld [vmem:[#allocation8 + $0x90] sm:$0xff]
    %v4543 = vld [vmem:[#allocation8 + $0x98] sm:$0xff]
    %v4544 = vld [vmem:[#allocation8 + $0xa0] sm:$0xff]
    %v4545 = vld [vmem:[#allocation8 + $0xa8] sm:$0xff]
    %v4546 = vld [vmem:[#allocation8 + $0xb0] sm:$0xff]
    %v4547 = vld [vmem:[#allocation8 + $0xb8] sm:$0xff]
    %v4548 = vld [vmem:[#allocation8 + $0xc0] sm:$0xff]
    %v4549 = vld [vmem:[#allocation8 + $0xc8] sm:$0xff]
    %v4550 = vld [vmem:[#allocation8 + $0xd0] sm:$0xff]
    %v4551 = vld [vmem:[#allocation8 + $0xd8] sm:$0xff]
    %v4552 = vld [vmem:[#allocation8 + $0xe0] sm:$0xff]
    %v4553 = vld [vmem:[#allocation8 + $0xe8] sm:$0xff]
    %v4554 = vld [vmem:[#allocation8 + $0xf0] sm:$0xff]
    %v4555 = vld [vmem:[#allocation8 + $0xf8] sm:$0xff]
    %4556 = vmatprep.subr.mxu0 0.0
    %4557 = vmatpush1.msra.mxu0 %v4540
    %4558 = vmatprep.subr.mxu0 0.0
    %4559 = vmatpush1.msra.mxu0 %v4541
    %4560 = vmatprep.subr.mxu0 0.0
    %4561 = vmatpush1.msra.mxu0 %v4542
    %4562 = vmatprep.subr.mxu0 0.0
    %4563 = vmatpush1.msra.mxu0 %v4543
    %4564 = vmatprep.subr.mxu0 0.0
    %4565 = vmatpush1.msra.mxu0 %v4544
    %4566 = vmatprep.subr.mxu0 0.0
    %4567 = vmatpush1.msra.mxu0 %v4545
    %4568 = vmatprep.subr.mxu0 0.0
    %4569 = vmatpush1.msra.mxu0 %v4546
    %4570 = vmatprep.subr.mxu0 0.0
    %4571 = vmatpush1.msra.mxu0 %v4547
    %4572 = vmatprep.subr.mxu0 0.0
    %4573 = vmatpush1.msra.mxu0 %v4548
    %4574 = vmatprep.subr.mxu0 0.0
    %4575 = vmatpush1.msra.mxu0 %v4549
    %4576 = vmatprep.subr.mxu0 0.0
    %4577 = vmatpush1.msra.mxu0 %v4550
    %4578 = vmatprep.subr.mxu0 0.0
    %4579 = vmatpush1.msra.mxu0 %v4551
    %4580 = vmatprep.subr.mxu0 0.0
    %4581 = vmatpush1.msra.mxu0 %v4552
    %4582 = vmatprep.subr.mxu0 0.0
    %4583 = vmatpush1.msra.mxu0 %v4553
    %4584 = vmatprep.subr.mxu0 0.0
    %4585 = vmatpush1.msra.mxu0 %v4554
    %4586 = vmatprep.subr.mxu0 0.0
    %4587 = vmatpush1.msra.mxu0 %v4555
    %4588 = vmatprep.subr.mxu0 0.0
    %4589 = vmatpush1.msra.mxu0 0.0
    %4590 = vmatprep.subr.mxu0 0.0
    %4591 = vmatpush1.msra.mxu0 0.0
    %4592 = vmatprep.subr.mxu0 0.0
    %4593 = vmatpush1.msra.mxu0 0.0
    %4594 = vmatprep.subr.mxu0 0.0
    %4595 = vmatpush1.msra.mxu0 0.0
    %4596 = vmatprep.subr.mxu0 0.0
    %4597 = vmatpush1.msra.mxu0 0.0
    %4598 = vmatprep.subr.mxu0 0.0
    %4599 = vmatpush1.msra.mxu0 0.0
    %4600 = vmatprep.subr.mxu0 0.0
    %4601 = vmatpush1.msra.mxu0 0.0
    %4602 = vmatprep.subr.mxu0 0.0
    %4603 = vmatpush1.msra.mxu0 0.0
    %4604 = vmatprep.subr.mxu0 0.0
    %4605 = vmatpush1.msra.mxu0 0.0
    %4606 = vmatprep.subr.mxu0 0.0
    %4607 = vmatpush1.msra.mxu0 0.0
    %4608 = vmatprep.subr.mxu0 0.0
    %4609 = vmatpush1.msra.mxu0 0.0
    %4610 = vmatprep.subr.mxu0 0.0
    %4611 = vmatpush1.msra.mxu0 0.0
    %4612 = vmatprep.subr.mxu0 0.0
    %4613 = vmatpush1.msra.mxu0 0.0
    %4614 = vmatprep.subr.mxu0 0.0
    %4615 = vmatpush1.msra.mxu0 0.0
    %4616 = vmatprep.subr.mxu0 0.0
    %4617 = vmatpush1.msra.mxu0 0.0
    %4618 = vmatprep.subr.mxu0 0.0
    %4619 = vmatpush1.msra.mxu0 0.0
    %4620 = vmatprep.mubr.f32.mxu0 0.0
    %4621 = vmatmul.mubr.f32.gmra.mrb[0].mxu0 %v4464
    %v4622 = vpop.f32.mrb[0].mxu0
    %v4623 = vadd.f32 0.0, %v4622
    %v4624 = vpop.f32.mrb[0].mxu0
    %4625 = vmatprep.mubr.f32.mxu0 0.0
    %4626 = vmatmul.mubr.f32.gmra.mrb[0].mxu0 %v4469
    %v4627 = vpop.f32.mrb[0].mxu0
    %v4628 = vadd.f32 0.0, %v4627
    %v4629 = vpop.f32.mrb[0].mxu0
    %4630 = vmatprep.mubr.f32.mxu0 0.0
    %4631 = vmatmul.mubr.f32.gmra.mrb[0].mxu0 %v4474
    %v4632 = vpop.f32.mrb[0].mxu0
    %v4633 = vadd.f32 0.0, %v4632
    %v4634 = vpop.f32.mrb[0].mxu0
    %4635 = vmatprep.mubr.f32.mxu0 0.0
    %4636 = vmatmul.mubr.f32.gmra.mrb[0].mxu0 %v4479
    %v4637 = vpop.f32.mrb[0].mxu0
    %v4638 = vadd.f32 0.0, %v4637
    %v4639 = vpop.f32.mrb[0].mxu0
    %4640 = vdwg.mxu0
    %4641 = vmatprep.subr.mxu0 0.0
    %4642 = vmatpush1.msra.mxu0 %v4524
    %4643 = vmatprep.subr.mxu0 0.0
    %4644 = vmatpush1.msra.mxu0 %v4525
    %4645 = vmatprep.subr.mxu0 0.0
    %4646 = vmatpush1.msra.mxu0 %v4526
    %4647 = vmatprep.subr.mxu0 0.0
    %4648 = vmatpush1.msra.mxu0 %v4527
    %4649 = vmatprep.subr.mxu0 0.0
    %4650 = vmatpush1.msra.mxu0 %v4528
    %4651 = vmatprep.subr.mxu0 0.0
    %4652 = vmatpush1.msra.mxu0 %v4529
    %4653 = vmatprep.subr.mxu0 0.0
    %4654 = vmatpush1.msra.mxu0 %v4530
    %4655 = vmatprep.subr.mxu0 0.0
    %4656 = vmatpush1.msra.mxu0 %v4531
    %4657 = vmatprep.subr.mxu0 0.0
    %4658 = vmatpush1.msra.mxu0 %v4532
    %4659 = vmatprep.subr.mxu0 0.0
    %4660 = vmatpush1.msra.mxu0 %v4533
    %4661 = vmatprep.subr.mxu0 0.0
    %4662 = vmatpush1.msra.mxu0 %v4534
    %4663 = vmatprep.subr.mxu0 0.0
    %4664 = vmatpush1.msra.mxu0 %v4535
    %4665 = vmatprep.subr.mxu0 0.0
    %4666 = vmatpush1.msra.mxu0 %v4536
    %4667 = vmatprep.subr.mxu0 0.0
    %4668 = vmatpush1.msra.mxu0 %v4537
    %4669 = vmatprep.subr.mxu0 0.0
    %4670 = vmatpush1.msra.mxu0 %v4538
    %4671 = vmatprep.subr.mxu0 0.0
    %4672 = vmatpush1.msra.mxu0 %v4539
    %4673 = vmatprep.subr.mxu0 0.0
    %4674 = vmatpush1.msra.mxu0 0.0
    %4675 = vmatprep.subr.mxu0 0.0
    %4676 = vmatpush1.msra.mxu0 0.0
    %4677 = vmatprep.subr.mxu0 0.0
    %4678 = vmatpush1.msra.mxu0 0.0
    %4679 = vmatprep.subr.mxu0 0.0
    %4680 = vmatpush1.msra.mxu0 0.0
    %4681 = vmatprep.subr.mxu0 0.0
    %4682 = vmatpush1.msra.mxu0 0.0
    %4683 = vmatprep.subr.mxu0 0.0
    %4684 = vmatpush1.msra.mxu0 0.0
    %4685 = vmatprep.subr.mxu0 0.0
    %4686 = vmatpush1.msra.mxu0 0.0
    %4687 = vmatprep.subr.mxu0 0.0
    %4688 = vmatpush1.msra.mxu0 0.0
    %4689 = vmatprep.subr.mxu0 0.0
    %4690 = vmatpush1.msra.mxu0 0.0
    %4691 = vmatprep.subr.mxu0 0.0
    %4692 = vmatpush1.msra.mxu0 0.0
    %4693 = vmatprep.subr.mxu0 0.0
    %4694 = vmatpush1.msra.mxu0 0.0
    %4695 = vmatprep.subr.mxu0 0.0
    %4696 = vmatpush1.msra.mxu0 0.0
    %4697 = vmatprep.subr.mxu0 0.0
    %4698 = vmatpush1.msra.mxu0 0.0
    %4699 = vmatprep.subr.mxu0 0.0
    %4700 = vmatpush1.msra.mxu0 0.0
    %4701 = vmatprep.subr.mxu0 0.0
    %4702 = vmatpush1.msra.mxu0 0.0
    %4703 = vmatprep.subr.mxu0 0.0
    %4704 = vmatpush1.msra.mxu0 0.0
    %4705 = vmatprep.mubr.f32.mxu0 0.0
    %4706 = vmatmul.mubr.f32.gmra.mrb[0].mxu0 %v4444
    %v4707 = vpop.f32.mrb[0].mxu0
    %v4708 = vadd.f32 %v4623, %v4707
    %v4709 = vpop.f32.mrb[0].mxu0
    %4710 = vmatprep.mubr.f32.mxu0 0.0
    %4711 = vmatmul.mubr.f32.gmra.mrb[0].mxu0 %v4449
    %v4712 = vpop.f32.mrb[0].mxu0
    %v4713 = vadd.f32 %v4628, %v4712
    %v4714 = vpop.f32.mrb[0].mxu0
    %4715 = vmatprep.mubr.f32.mxu0 0.0
    %4716 = vmatmul.mubr.f32.gmra.mrb[0].mxu0 %v4454
    %v4717 = vpop.f32.mrb[0].mxu0
    %v4718 = vadd.f32 %v4633, %v4717
    %v4719 = vpop.f32.mrb[0].mxu0
    %4720 = vmatprep.mubr.f32.mxu0 0.0
    %4721 = vmatmul.mubr.f32.gmra.mrb[0].mxu0 %v4459
    %v4722 = vpop.f32.mrb[0].mxu0
    %v4723 = vadd.f32 %v4638, %v4722
    %v4724 = vpop.f32.mrb[0].mxu0
    %4725 = vdwg.mxu0
    %v4726 = vld [vmem:[#allocation8 + $0x100] sm:$0xff]
    %v4727 = vld [vmem:[#allocation8 + $0x108] sm:$0xff]
    %v4728 = vld [vmem:[#allocation8 + $0x110] sm:$0xff]
    %v4729 = vld [vmem:[#allocation8 + $0x118] sm:$0xff]
    %v4730 = vld [vmem:[#allocation8 + $0x120] sm:$0xff]
    %v4731 = vld [vmem:[#allocation8 + $0x128] sm:$0xff]
    %v4732 = vld [vmem:[#allocation8 + $0x130] sm:$0xff]
    %v4733 = vld [vmem:[#allocation8 + $0x138] sm:$0xff]
    %v4734 = vld [vmem:[#allocation8 + $0x140] sm:$0xff]
    %v4735 = vld [vmem:[#allocation8 + $0x148] sm:$0xff]
    %v4736 = vld [vmem:[#allocation8 + $0x150] sm:$0xff]
    %v4737 = vld [vmem:[#allocation8 + $0x158] sm:$0xff]
    %v4738 = vld [vmem:[#allocation8 + $0x160] sm:$0xff]
    %v4739 = vld [vmem:[#allocation8 + $0x168] sm:$0xff]
    %v4740 = vld [vmem:[#allocation8 + $0x170] sm:$0xff]
    %v4741 = vld [vmem:[#allocation8 + $0x178] sm:$0xff]
    %4742 = vmatprep.subr.mxu0 0.0
    %4743 = vmatpush1.msra.mxu0 %v4726
    %4744 = vmatprep.subr.mxu0 0.0
    %4745 = vmatpush1.msra.mxu0 %v4727
    %4746 = vmatprep.subr.mxu0 0.0
    %4747 = vmatpush1.msra.mxu0 %v4728
    %4748 = vmatprep.subr.mxu0 0.0
    %4749 = vmatpush1.msra.mxu0 %v4729
    %4750 = vmatprep.subr.mxu0 0.0
    %4751 = vmatpush1.msra.mxu0 %v4730
    %4752 = vmatprep.subr.mxu0 0.0
    %4753 = vmatpush1.msra.mxu0 %v4731
    %4754 = vmatprep.subr.mxu0 0.0
    %4755 = vmatpush1.msra.mxu0 %v4732
    %4756 = vmatprep.subr.mxu0 0.0
    %4757 = vmatpush1.msra.mxu0 %v4733
    %4758 = vmatprep.subr.mxu0 0.0
    %4759 = vmatpush1.msra.mxu0 %v4734
    %4760 = vmatprep.subr.mxu0 0.0
    %4761 = vmatpush1.msra.mxu0 %v4735
    %4762 = vmatprep.subr.mxu0 0.0
    %4763 = vmatpush1.msra.mxu0 %v4736
    %4764 = vmatprep.subr.mxu0 0.0
    %4765 = vmatpush1.msra.mxu0 %v4737
    %4766 = vmatprep.subr.mxu0 0.0
    %4767 = vmatpush1.msra.mxu0 %v4738
    %4768 = vmatprep.subr.mxu0 0.0
    %4769 = vmatpush1.msra.mxu0 %v4739
    %4770 = vmatprep.subr.mxu0 0.0
    %4771 = vmatpush1.msra.mxu0 %v4740
    %4772 = vmatprep.subr.mxu0 0.0
    %4773 = vmatpush1.msra.mxu0 %v4741
    %4774 = vmatprep.subr.mxu0 0.0
    %4775 = vmatpush1.msra.mxu0 0.0
    %4776 = vmatprep.subr.mxu0 0.0
    %4777 = vmatpush1.msra.mxu0 0.0
    %4778 = vmatprep.subr.mxu0 0.0
    %4779 = vmatpush1.msra.mxu0 0.0
    %4780 = vmatprep.subr.mxu0 0.0
    %4781 = vmatpush1.msra.mxu0 0.0
    %4782 = vmatprep.subr.mxu0 0.0
    %4783 = vmatpush1.msra.mxu0 0.0
    %4784 = vmatprep.subr.mxu0 0.0
    %4785 = vmatpush1.msra.mxu0 0.0
    %4786 = vmatprep.subr.mxu0 0.0
    %4787 = vmatpush1.msra.mxu0 0.0
    %4788 = vmatprep.subr.mxu0 0.0
    %4789 = vmatpush1.msra.mxu0 0.0
    %4790 = vmatprep.subr.mxu0 0.0
    %4791 = vmatpush1.msra.mxu0 0.0
    %4792 = vmatprep.subr.mxu0 0.0
    %4793 = vmatpush1.msra.mxu0 0.0
    %4794 = vmatprep.subr.mxu0 0.0
    %4795 = vmatpush1.msra.mxu0 0.0
    %4796 = vmatprep.subr.mxu0 0.0
    %4797 = vmatpush1.msra.mxu0 0.0
    %4798 = vmatprep.subr.mxu0 0.0
    %4799 = vmatpush1.msra.mxu0 0.0
    %4800 = vmatprep.subr.mxu0 0.0
    %4801 = vmatpush1.msra.mxu0 0.0
    %4802 = vmatprep.subr.mxu0 0.0
    %4803 = vmatpush1.msra.mxu0 0.0
    %4804 = vmatprep.subr.mxu0 0.0
    %4805 = vmatpush1.msra.mxu0 0.0
    %4806 = vmatprep.mubr.f32.mxu0 0.0
    %4807 = vmatmul.mubr.f32.gmra.mrb[0].mxu0 %v4484
    %v4808 = vpop.f32.mrb[0].mxu0
    %v4809 = vadd.f32 0.0, %v4808
    %v4810 = vpop.f32.mrb[0].mxu0
    %4811 = vmatprep.mubr.f32.mxu0 0.0
    %4812 = vmatmul.mubr.f32.gmra.mrb[0].mxu0 %v4489
    %v4813 = vpop.f32.mrb[0].mxu0
    %v4814 = vadd.f32 0.0, %v4813
    %v4815 = vpop.f32.mrb[0].mxu0
    %4816 = vmatprep.mubr.f32.mxu0 0.0
    %4817 = vmatmul.mubr.f32.gmra.mrb[0].mxu0 %v4494
    %v4818 = vpop.f32.mrb[0].mxu0
    %v4819 = vadd.f32 0.0, %v4818
    %v4820 = vpop.f32.mrb[0].mxu0
    %4821 = vmatprep.mubr.f32.mxu0 0.0
    %4822 = vmatmul.mubr.f32.gmra.mrb[0].mxu0 %v4499
    %v4823 = vpop.f32.mrb[0].mxu0
    %v4824 = vadd.f32 0.0, %v4823
    %v4825 = vpop.f32.mrb[0].mxu0
    %4826 = vdwg.mxu0
    %v4827 = vadd.f32 %v4708, %v4809
    %v4828 = vadd.f32 %v4713, %v4814
    %v4829 = vadd.f32 %v4718, %v4819
    %v4830 = vadd.f32 %v4723, %v4824
    %v4831 = vld [vmem:[#allocation8 + $0x180] sm:$0xff]
    %v4832 = vld [vmem:[#allocation8 + $0x188] sm:$0xff]
    %v4833 = vld [vmem:[#allocation8 + $0x190] sm:$0xff]
    %v4834 = vld [vmem:[#allocation8 + $0x198] sm:$0xff]
    %v4835 = vld [vmem:[#allocation8 + $0x1a0] sm:$0xff]
    %v4836 = vld [vmem:[#allocation8 + $0x1a8] sm:$0xff]
    %v4837 = vld [vmem:[#allocation8 + $0x1b0] sm:$0xff]
    %v4838 = vld [vmem:[#allocation8 + $0x1b8] sm:$0xff]
    %v4839 = vld [vmem:[#allocation8 + $0x1c0] sm:$0xff]
    %v4840 = vld [vmem:[#allocation8 + $0x1c8] sm:$0xff]
    %v4841 = vld [vmem:[#allocation8 + $0x1d0] sm:$0xff]
    %v4842 = vld [vmem:[#allocation8 + $0x1d8] sm:$0xff]
    %v4843 = vld [vmem:[#allocation8 + $0x1e0] sm:$0xff]
    %v4844 = vld [vmem:[#allocation8 + $0x1e8] sm:$0xff]
    %v4845 = vld [vmem:[#allocation8 + $0x1f0] sm:$0xff]
    %v4846 = vld [vmem:[#allocation8 + $0x1f8] sm:$0xff]
    %4847 = vmatprep.subr.mxu0 0.0
    %4848 = vmatpush1.msra.mxu0 %v4831
    %4849 = vmatprep.subr.mxu0 0.0
    %4850 = vmatpush1.msra.mxu0 %v4832
    %4851 = vmatprep.subr.mxu0 0.0
    %4852 = vmatpush1.msra.mxu0 %v4833
    %4853 = vmatprep.subr.mxu0 0.0
    %4854 = vmatpush1.msra.mxu0 %v4834
    %4855 = vmatprep.subr.mxu0 0.0
    %4856 = vmatpush1.msra.mxu0 %v4835
    %4857 = vmatprep.subr.mxu0 0.0
    %4858 = vmatpush1.msra.mxu0 %v4836
    %4859 = vmatprep.subr.mxu0 0.0
    %4860 = vmatpush1.msra.mxu0 %v4837
    %4861 = vmatprep.subr.mxu0 0.0
    %4862 = vmatpush1.msra.mxu0 %v4838
    %4863 = vmatprep.subr.mxu0 0.0
    %4864 = vmatpush1.msra.mxu0 %v4839
    %4865 = vmatprep.subr.mxu0 0.0
    %4866 = vmatpush1.msra.mxu0 %v4840
    %4867 = vmatprep.subr.mxu0 0.0
    %4868 = vmatpush1.msra.mxu0 %v4841
    %4869 = vmatprep.subr.mxu0 0.0
    %4870 = vmatpush1.msra.mxu0 %v4842
    %4871 = vmatprep.subr.mxu0 0.0
    %4872 = vmatpush1.msra.mxu0 %v4843
    %4873 = vmatprep.subr.mxu0 0.0
    %4874 = vmatpush1.msra.mxu0 %v4844
    %4875 = vmatprep.subr.mxu0 0.0
    %4876 = vmatpush1.msra.mxu0 %v4845
    %4877 = vmatprep.subr.mxu0 0.0
    %4878 = vmatpush1.msra.mxu0 %v4846
    %4879 = vmatprep.subr.mxu0 0.0
    %4880 = vmatpush1.msra.mxu0 0.0
    %4881 = vmatprep.subr.mxu0 0.0
    %4882 = vmatpush1.msra.mxu0 0.0
    %4883 = vmatprep.subr.mxu0 0.0
    %4884 = vmatpush1.msra.mxu0 0.0
    %4885 = vmatprep.subr.mxu0 0.0
    %4886 = vmatpush1.msra.mxu0 0.0
    %4887 = vmatprep.subr.mxu0 0.0
    %4888 = vmatpush1.msra.mxu0 0.0
    %4889 = vmatprep.subr.mxu0 0.0
    %4890 = vmatpush1.msra.mxu0 0.0
    %4891 = vmatprep.subr.mxu0 0.0
    %4892 = vmatpush1.msra.mxu0 0.0
    %4893 = vmatprep.subr.mxu0 0.0
    %4894 = vmatpush1.msra.mxu0 0.0
    %4895 = vmatprep.subr.mxu0 0.0
    %4896 = vmatpush1.msra.mxu0 0.0
    %4897 = vmatprep.subr.mxu0 0.0
    %4898 = vmatpush1.msra.mxu0 0.0
    %4899 = vmatprep.subr.mxu0 0.0
    %4900 = vmatpush1.msra.mxu0 0.0
    %4901 = vmatprep.subr.mxu0 0.0
    %4902 = vmatpush1.msra.mxu0 0.0
    %4903 = vmatprep.subr.mxu0 0.0
    %4904 = vmatpush1.msra.mxu0 0.0
    %4905 = vmatprep.subr.mxu0 0.0
    %4906 = vmatpush1.msra.mxu0 0.0
    %4907 = vmatprep.subr.mxu0 0.0
    %4908 = vmatpush1.msra.mxu0 0.0
    %4909 = vmatprep.subr.mxu0 0.0
    %4910 = vmatpush1.msra.mxu0 0.0
    %4911 = vmatprep.mubr.f32.mxu0 0.0
    %4912 = vmatmul.mubr.f32.gmra.mrb[0].mxu0 %v4504
    %v4913 = vpop.f32.mrb[0].mxu0
    %v4914 = vadd.f32 0.0, %v4913
    %v4915 = vpop.f32.mrb[0].mxu0
    %4916 = vmatprep.mubr.f32.mxu0 0.0
    %4917 = vmatmul.mubr.f32.gmra.mrb[0].mxu0 %v4509
    %v4918 = vpop.f32.mrb[0].mxu0
    %v4919 = vadd.f32 0.0, %v4918
    %v4920 = vpop.f32.mrb[0].mxu0
    %4921 = vmatprep.mubr.f32.mxu0 0.0
    %4922 = vmatmul.mubr.f32.gmra.mrb[0].mxu0 %v4514
    %v4923 = vpop.f32.mrb[0].mxu0
    %v4924 = vadd.f32 0.0, %v4923
    %v4925 = vpop.f32.mrb[0].mxu0
    %4926 = vmatprep.mubr.f32.mxu0 0.0
    %4927 = vmatmul.mubr.f32.gmra.mrb[0].mxu0 %v4519
    %v4928 = vpop.f32.mrb[0].mxu0
    %v4929 = vadd.f32 0.0, %v4928
    %v4930 = vpop.f32.mrb[0].mxu0
    %4931 = vdwg.mxu0
    %v4932 = vadd.f32 %v4827, %v4914
    %v4933 = vadd.f32 %v4828, %v4919
    %v4934 = vadd.f32 %v4829, %v4924
    %v4935 = vadd.f32 %v4830, %v4929
    %v4936 = vld [vmem:[#allocation22] sm:$0x1]
    %v4938 = vlaneseq
    %v4939 = vshrl.u32 %v4938, 7
    %v4940 = vsub.s32 0, %v4939
    %v4941 = vrot.slane %v4936, %v4940
    %v4943 = vadd.f32 %v4932, %v4941
    %v4944 = vadd.f32 %v4933, %v4941
    %v4945 = vadd.f32 %v4934, %v4941
    %v4946 = vadd.f32 %v4935, %v4941
    %v4947 = vmax.f32 %v4943, 0.0
    %v4948 = vmax.f32 %v4944, 0.0
    %v4949 = vmax.f32 %v4945, 0.0
    %v4950 = vmax.f32 %v4946, 0.0
    %s4951 = smul.u32 128, 1
    %s4952 = sshll.u32 %s4951, 4
    %4953 = dma.done %s232, %s4952
    %v4954 = vld [vmem:[#allocation9] sm:$0xff]
    %v4955 = vld [vmem:[#allocation9 + $0x8] sm:$0xff]
    %v4956 = vld [vmem:[#allocation9 + $0x10] sm:$0xff]
    %v4957 = vld [vmem:[#allocation9 + $0x18] sm:$0xff]
    %v4958 = vld [vmem:[#allocation9 + $0x20] sm:$0xff]
    %v4959 = vld [vmem:[#allocation9 + $0x28] sm:$0xff]
    %v4960 = vld [vmem:[#allocation9 + $0x30] sm:$0xff]
    %v4961 = vld [vmem:[#allocation9 + $0x38] sm:$0xff]
    %v4962 = vld [vmem:[#allocation9 + $0x40] sm:$0xff]
    %v4963 = vld [vmem:[#allocation9 + $0x48] sm:$0xff]
    %v4964 = vld [vmem:[#allocation9 + $0x50] sm:$0xff]
    %v4965 = vld [vmem:[#allocation9 + $0x58] sm:$0xff]
    %v4966 = vld [vmem:[#allocation9 + $0x60] sm:$0xff]
    %v4967 = vld [vmem:[#allocation9 + $0x68] sm:$0xff]
    %v4968 = vld [vmem:[#allocation9 + $0x70] sm:$0xff]
    %v4969 = vld [vmem:[#allocation9 + $0x78] sm:$0xff]
    %v4970 = vld [vmem:[#allocation24] sm:$0x1]
    %v4972 = vlaneseq
    %v4973 = vshrl.u32 %v4972, 7
    %v4974 = vsub.s32 0, %v4973
    %v4975 = vrot.slane %v4970, %v4974
    %4977 = vmatprep.subr.mxu0 0.0
    %4978 = vmatpush1.msra.mxu0 %v4954
    %4979 = vmatprep.subr.mxu0 0.0
    %4980 = vmatpush1.msra.mxu0 %v4955
    %4981 = vmatprep.subr.mxu0 0.0
    %4982 = vmatpush1.msra.mxu0 %v4956
    %4983 = vmatprep.subr.mxu0 0.0
    %4984 = vmatpush1.msra.mxu0 %v4957
    %4985 = vmatprep.subr.mxu0 0.0
    %4986 = vmatpush1.msra.mxu0 %v4958
    %4987 = vmatprep.subr.mxu0 0.0
    %4988 = vmatpush1.msra.mxu0 %v4959
    %4989 = vmatprep.subr.mxu0 0.0
    %4990 = vmatpush1.msra.mxu0 %v4960
    %4991 = vmatprep.subr.mxu0 0.0
    %4992 = vmatpush1.msra.mxu0 %v4961
    %4993 = vmatprep.subr.mxu0 0.0
    %4994 = vmatpush1.msra.mxu0 %v4962
    %4995 = vmatprep.subr.mxu0 0.0
    %4996 = vmatpush1.msra.mxu0 %v4963
    %4997 = vmatprep.subr.mxu0 0.0
    %4998 = vmatpush1.msra.mxu0 %v4964
    %4999 = vmatprep.subr.mxu0 0.0
    %5000 = vmatpush1.msra.mxu0 %v4965
    %5001 = vmatprep.subr.mxu0 0.0
    %5002 = vmatpush1.msra.mxu0 %v4966
    %5003 = vmatprep.subr.mxu0 0.0
    %5004 = vmatpush1.msra.mxu0 %v4967
    %5005 = vmatprep.subr.mxu0 0.0
    %5006 = vmatpush1.msra.mxu0 %v4968
    %5007 = vmatprep.subr.mxu0 0.0
    %5008 = vmatpush1.msra.mxu0 %v4969
    %5009 = vmatprep.subr.mxu0 0.0
    %5010 = vmatpush1.msra.mxu0 0.0
    %5011 = vmatprep.subr.mxu0 0.0
    %5012 = vmatpush1.msra.mxu0 0.0
    %5013 = vmatprep.subr.mxu0 0.0
    %5014 = vmatpush1.msra.mxu0 0.0
    %5015 = vmatprep.subr.mxu0 0.0
    %5016 = vmatpush1.msra.mxu0 0.0
    %5017 = vmatprep.subr.mxu0 0.0
    %5018 = vmatpush1.msra.mxu0 0.0
    %5019 = vmatprep.subr.mxu0 0.0
    %5020 = vmatpush1.msra.mxu0 0.0
    %5021 = vmatprep.subr.mxu0 0.0
    %5022 = vmatpush1.msra.mxu0 0.0
    %5023 = vmatprep.subr.mxu0 0.0
    %5024 = vmatpush1.msra.mxu0 0.0
    %5025 = vmatprep.subr.mxu0 0.0
    %5026 = vmatpush1.msra.mxu0 0.0
    %5027 = vmatprep.subr.mxu0 0.0
    %5028 = vmatpush1.msra.mxu0 0.0
    %5029 = vmatprep.subr.mxu0 0.0
    %5030 = vmatpush1.msra.mxu0 0.0
    %5031 = vmatprep.subr.mxu0 0.0
    %5032 = vmatpush1.msra.mxu0 0.0
    %5033 = vmatprep.subr.mxu0 0.0
    %5034 = vmatpush1.msra.mxu0 0.0
    %5035 = vmatprep.subr.mxu0 0.0
    %5036 = vmatpush1.msra.mxu0 0.0
    %5037 = vmatprep.subr.mxu0 0.0
    %5038 = vmatpush1.msra.mxu0 0.0
    %5039 = vmatprep.subr.mxu0 0.0
    %5040 = vmatpush1.msra.mxu0 0.0
    %5041 = vmatprep.mubr.f32.mxu0 0.0
    %5042 = vmatmul.mubr.f32.gmra.mrb[0].mxu0 %v4947
    %v5043 = vpop.f32.mrb[0].mxu0
    %v5044 = vadd.f32 %v4975, %v5043
    %v5045 = vpop.f32.mrb[0].mxu0
    %5046 = vmatprep.mubr.f32.mxu0 0.0
    %5047 = vmatmul.mubr.f32.gmra.mrb[0].mxu0 %v4948
    %v5048 = vpop.f32.mrb[0].mxu0
    %v5049 = vadd.f32 %v4975, %v5048
    %v5050 = vpop.f32.mrb[0].mxu0
    %5051 = vmatprep.mubr.f32.mxu0 0.0
    %5052 = vmatmul.mubr.f32.gmra.mrb[0].mxu0 %v4949
    %v5053 = vpop.f32.mrb[0].mxu0
    %v5054 = vadd.f32 %v4975, %v5053
    %v5055 = vpop.f32.mrb[0].mxu0
    %5056 = vmatprep.mubr.f32.mxu0 0.0
    %5057 = vmatmul.mubr.f32.gmra.mrb[0].mxu0 %v4950
    %v5058 = vpop.f32.mrb[0].mxu0
    %v5059 = vadd.f32 %v4975, %v5058
    %v5060 = vpop.f32.mrb[0].mxu0
    %5061 = vdwg.mxu0
    %5062 = vst [vmem:[%s18] sm:$0xff] %v5044
    %5063 = vst [vmem:[%s18 + $0x8] sm:$0xff] %v5049
    %5064 = vst [vmem:[%s18 + $0x10] sm:$0xff] %v5054
    %5065 = vst [vmem:[%s18 + $0x18] sm:$0xff] %v5059
    // Predicated region
    $region110: #{model_forward.1} parent=1 // pred_check
      _
    $region111: #{model_forward.1} parent=1 // pred_check_branch
      %5067 = sbr.rel (0) target = $region113
    $region112: #{model_forward.1} parent=1 // pred_region
      _
    $region113: #{model_forward.1} parent=1 // pred_fallthru
      _
    // Predicated region
    $region114: #{model_forward.1} parent=1 // pred_check
      _
    $region115: #{model_forward.1} parent=1 // pred_check_branch
      %5069 = sbr.rel (0) target = $region117
    $region116: #{model_forward.1} parent=1 // pred_region
      _
    $region117: #{model_forward.1} parent=1 // pred_fallthru
      _
    %5070 = vsyncpa [#allocation12], 1
    %5071 = vsyncpa [#allocation14], 1
    %5072 = vsyncpa [#allocation17], 1
    %5073 = vsyncpa [#allocation20], 1
    %5074 = vsyncpa [#allocation23], 1
  %5075 = vsyncmov [#allocation10]
  %s5076 = vpop.sfrf %5075
  %p5077 = scmp.eq.s32.totalorder %s5076, 0
  %p5078 = pneg %p5077
  %5080 = shalt.err (%p5078)
  %s5081 = scalar_lea.sflag [#allocation10], 1
  %5082 = vsyncmov %s5081
  %s5083 = vpop.sfrf %5082
  %p5084 = scmp.eq.s32.totalorder %s5083, 0
  %p5085 = pneg %p5084
  %5087 = shalt.err (%p5085)
  %s5088 = scalar_lea.sflag [#allocation10], 2
  %5089 = vsyncmov %s5088
  %s5090 = vpop.sfrf %5089
  %p5091 = scmp.eq.s32.totalorder %s5090, 0
  %p5092 = pneg %p5091
  %5094 = shalt.err (%p5092)
  %s5095 = scalar_lea.sflag [#allocation10], 3
  %5096 = vsyncmov %s5095
  %s5097 = vpop.sfrf %5096
  %p5098 = scmp.eq.s32.totalorder %s5097, 0
  %p5099 = pneg %p5098
  %5101 = shalt.err (%p5099)
  %s5102 = scalar_lea.sflag [#allocation10], 4
  %5103 = vsyncmov %s5102
  %s5104 = vpop.sfrf %5103
  %p5105 = scmp.eq.s32.totalorder %s5104, 0
  %p5106 = pneg %p5105
  %5108 = shalt.err (%p5106)
  %s5109 = scalar_lea.sflag [#allocation10], 5
  %5110 = vsyncmov %s5109
  %s5111 = vpop.sfrf %5110
  %p5112 = scmp.eq.s32.totalorder %s5111, 0
  %p5113 = pneg %p5112
  %5115 = shalt.err (%p5113)
  %s5116 = scalar_lea.sflag [#allocation10], 6
  %5117 = vsyncmov %s5116
  %s5118 = vpop.sfrf %5117
  %p5119 = scmp.eq.s32.totalorder %s5118, 0
  %p5120 = pneg %p5119
  %5122 = shalt.err (%p5120)
  %s5123 = scalar_lea.sflag [#allocation10], 7
  %5124 = vsyncmov %s5123
  %s5125 = vpop.sfrf %5124
  %p5126 = scmp.eq.s32.totalorder %s5125, 0
  %p5127 = pneg %p5126
  %5129 = shalt.err (%p5127)

</llo_original>
